<compile_context>
chip_gen: v7x
topology: tpu7x:2x2x1
jax: 0.10.0
libtpu: 0.0.40
codegen_flags: <defaults>
</compile_context>

<pallas_src>
import numpy as np
import jax
import jax.numpy as jnp
from jax.experimental import pallas as pl
from jax.experimental.pallas import tpu as pltpu


# ---------------------------------------------------------------------------
# Fused kernel: one invocation = one image, everything in VMEM.
# ---------------------------------------------------------------------------
def _esa_kernel(xc_ref, xd_ref,            # per-image activations
                wcf_ref, bcf_ref,          # fused conv_f . conv1
                w12_ref, b12_ref,          # fused conv2 . conv1  (9 taps stacked)
                psel_ref,                  # (49, S2, Sm) max-pool tap selectors
                tsel_ref,                  # (9,  Sm, Sm) 3x3 pad-1 tap selectors
                wmx_ref, bmx_ref,          # conv_max
                w3a_ref, b3a_ref,          # conv3
                w3b_ref, b3b_ref,          # conv3_
                w4_ref, b4_ref,            # conv4
                up_ref,                    # (Sm, H*W) bilinear upsample matrix
                o_ref):
    f32 = jnp.float32
    xc = xc_ref[0]                                                   # (C,  HW)
    xd = xd_ref[0]                                                   # (9C, S2)

    # c1 = conv2(conv1(x))   (3x3, stride 2, pad 0 fused with the 1x1 conv)
    c1 = jnp.dot(w12_ref[...], xd, preferred_element_type=f32) + b12_ref[...]   # (f, S2)

    # v_max = max_pool2d(c1, kernel=7, stride=3): max over 49 tap selections.
    vmax = jnp.dot(c1, psel_ref[0], preferred_element_type=f32)      # (f, Sm)
    for k in range(1, 49):
        vmax = jnp.maximum(vmax, jnp.dot(c1, psel_ref[k], preferred_element_type=f32))

    # 3x3 pad-1 conv at pooled resolution: sum over 9 (spatial shift, channel mix).
    def conv3x3_small(x, w_ref, b_ref):
        acc = b_ref[...]
        for k in range(9):
            shifted = jnp.dot(x, tsel_ref[k], preferred_element_type=f32)       # (f, Sm)
            acc = acc + jnp.dot(w_ref[k], shifted, preferred_element_type=f32)
        return acc

    v_range = jnp.maximum(conv3x3_small(vmax, wmx_ref, bmx_ref), 0.0)
    c3 = jnp.maximum(conv3x3_small(v_range, w3a_ref, b3a_ref), 0.0)
    c3 = conv3x3_small(c3, w3b_ref, b3b_ref)                         # (f, Sm)

    # bilinear upsample (align_corners=False) back to full resolution.
    c3_up = jnp.dot(c3, up_ref[...], preferred_element_type=f32)     # (f, HW)

    # cf = conv_f(conv1(x))  (two 1x1 convs fused into one matmul)
    cf = jnp.dot(wcf_ref[...], xc, preferred_element_type=f32) + bcf_ref[...]   # (f, HW)

    # c4 = conv4(c3_up + cf);  out = x * sigmoid(c4)
    c4 = jnp.dot(w4_ref[...], c3_up + cf, preferred_element_type=f32) + b4_ref[...]  # (C, HW)
    gate = 1.0 / (1.0 + jnp.exp(-c4))
    o_ref[0] = (xc * gate).astype(o_ref.dtype)


# ---------------------------------------------------------------------------
# Shape-only structural constants (numpy, built once at trace time).
# ---------------------------------------------------------------------------
def _bilinear_matrix(out_size, in_size):
    """PyTorch F.interpolate(mode='bilinear', align_corners=False) 1-D weights."""
    if in_size == 1:
        return np.ones((out_size, 1), np.float32)
    scale = in_size / out_size
    src = np.clip((np.arange(out_size) + 0.5) * scale - 0.5, 0.0, in_size - 1.0)
    x0 = np.clip(np.floor(src).astype(np.int64), 0, in_size - 1)
    x1 = np.minimum(x0 + 1, in_size - 1)
    l1 = (src - x0).astype(np.float32)
    m = np.zeros((out_size, in_size), np.float32)
    m[np.arange(out_size), x0] += 1.0 - l1
    m[np.arange(out_size), x1] += l1
    return m


def _pool_selectors(hi, wi, ho, wo):
    """(49, hi*wi, ho*wo): tap (pi,pj) selects input (3i+pi, 3j+pj) for output (i,j)."""
    sel = np.zeros((49, hi * wi, ho * wo), np.float32)
    for pi in range(7):
        for pj in range(7):
            k = pi * 7 + pj
            for i in range(ho):
                for j in range(wo):
                    sel[k, (3 * i + pi) * wi + (3 * j + pj), i * wo + j] = 1.0
    return sel


def _shift_selectors(h, w):
    """(9, h*w, h*w): tap (di,dj) selects input (i+di-1, j+dj-1), zero-padded."""
    s = h * w
    sel = np.zeros((9, s, s), np.float32)
    for di in range(3):
        for dj in range(3):
            k = di * 3 + dj
            for i in range(h):
                for j in range(w):
                    si, sj = i + di - 1, j + dj - 1
                    if 0 <= si < h and 0 <= sj < w:
                        sel[k, si * w + sj, i * w + j] = 1.0
    return sel


# ---------------------------------------------------------------------------
# ESA forward (NCHW in / NCHW out, matching the PyTorch module).
# ---------------------------------------------------------------------------
def esa_forward(x_nchw, params):
    n, c, h, w = x_nchw.shape
    f = params["conv1_w"].shape[0]
    ho2, wo2 = (h - 3) // 2 + 1, (w - 3) // 2 + 1      # conv2: 3x3, stride 2, pad 0
    hm, wm = (ho2 - 7) // 3 + 1, (wo2 - 7) // 3 + 1    # max_pool2d(7, 3)
    assert hm >= 1 and wm >= 1, "input spatially too small for ESA"
    hw, s2, sm = h * w, ho2 * wo2, hm * wm

    # ---- weights (torch layout (Cout, Cin, kh, kw)), algebraically pre-fused ----
    w1 = params["conv1_w"][:, :, 0, 0]                 # (f, C)
    b1 = params["conv1_b"]
    w2 = params["conv2_w"]                             # (f, f, 3, 3)
    b2 = params["conv2_b"]
    wf = params["conv_f_w"][:, :, 0, 0]
    bf = params["conv_f_b"]

    # conv2 . conv1 : c1 = sum_taps (W2_tap @ W1) x_tap + (b2 + (sum W2_tap) b1)
    w12 = jnp.concatenate(
        [w2[:, :, di, dj] @ w1 for di in range(3) for dj in range(3)], axis=1)   # (f, 9C)
    b12 = (b2 + w2.sum(axis=(2, 3)) @ b1).reshape(f, 1)
    # conv_f . conv1 : cf = (Wf W1) x + (Wf b1 + bf)
    wcf = wf @ w1                                       # (f, C)
    bcf = (bf + wf @ b1).reshape(f, 1)

    def taps9(wk):  # (f, f, 3, 3) -> (9, f, f), tap order (di, dj)
        return jnp.stack([wk[:, :, di, dj] for di in range(3) for dj in range(3)])

    wmx, bmx = taps9(params["conv_max_w"]), params["conv_max_b"].reshape(f, 1)
    w3a, b3a = taps9(params["conv3_w"]), params["conv3_b"].reshape(f, 1)
    w3b, b3b = taps9(params["conv3__w"]), params["conv3__b"].reshape(f, 1)
    w4m = params["conv4_w"][:, :, 0, 0]                 # (C, f)
    b4m = params["conv4_b"].reshape(c, 1)

    # ---- structural constants (VMEM-resident across the grid) ----
    psel = jnp.asarray(_pool_selectors(ho2, wo2, hm, wm))            # (49, S2, Sm)
    tsel = jnp.asarray(_shift_selectors(hm, wm))                     # (9,  Sm, Sm)
    up = jnp.asarray(np.ascontiguousarray(
        np.kron(_bilinear_matrix(h, hm), _bilinear_matrix(w, wm)).T))  # (Sm, HW)
    # TODO(synk): for large H*W replace the kron upsample matrix with a separable
    #             two-pass (H then W) upsample and tile the full-resolution axis.

    # ---- per-image activations: channels-first, flattened spatial (lane-dense) ----
    x_ch = x_nchw.reshape(n, c, hw)                                  # free reshape
    taps = [x_nchw[:, :, di:di + 2 * ho2 - 1:2, dj:dj + 2 * wo2 - 1:2].reshape(n, c, s2)
            for di in range(3) for dj in range(3)]
    x_ds = jnp.concatenate(taps, axis=1)                             # (N, 9C, S2)

    def const(shape):
        return pl.BlockSpec(shape, lambda i: (0,) * len(shape))

    out = pl.pallas_call(
        _esa_kernel,
        out_shape=jax.ShapeDtypeStruct((n, c, hw), x_nchw.dtype),
        grid=(n,),
        in_specs=[
            pl.BlockSpec((1, c, hw), lambda i: (i, 0, 0)),           # x (C, HW)
            pl.BlockSpec((1, 9 * c, s2), lambda i: (i, 0, 0)),       # x taps (9C, S2)
            const((f, c)), const((f, 1)),                            # fused conv_f.conv1
            const((f, 9 * c)), const((f, 1)),                        # fused conv2.conv1
            const((49, s2, sm)),                                     # pool selectors
            const((9, sm, sm)),                                      # conv tap selectors
            const((9, f, f)), const((f, 1)),                         # conv_max
            const((9, f, f)), const((f, 1)),                         # conv3
            const((9, f, f)), const((f, 1)),                         # conv3_
            const((c, f)), const((c, 1)),                            # conv4
            const((sm, hw)),                                         # upsample matrix
        ],
        out_specs=pl.BlockSpec((1, c, hw), lambda i: (i, 0, 0)),
        compiler_params=pltpu.CompilerParams(dimension_semantics=("parallel",)),
    )(x_ch, x_ds, wcf, bcf, w12, b12, psel, tsel,
      wmx, bmx, w3a, b3a, w3b, b3b, w4m, b4m, up)

    return out.reshape(n, c, h, w)                                   # free reshape (NCHW)


# ---------------------------------------------------------------------------
# Parameter init (torch-shaped weights) + smoke test.
# ---------------------------------------------------------------------------
def init_params(key, n_feats):
    f = n_feats // 4
    shapes = {
        "conv1": (f, n_feats, 1, 1),
        "conv_f": (f, f, 1, 1),
        "conv_max": (f, f, 3, 3),
        "conv2": (f, f, 3, 3),
        "conv3": (f, f, 3, 3),
        "conv3_": (f, f, 3, 3),
        "conv4": (n_feats, f, 1, 1),
    }
    params = {}
    keys = jax.random.split(key, 2 * len(shapes))
    for i, (name, shp) in enumerate(shapes.items()):
        params[name + "_w"] = 0.1 * jax.random.normal(keys[2 * i], shp, jnp.float32)
        params[name + "_b"] = 0.1 * jax.random.normal(keys[2 * i + 1], (shp[0],), jnp.float32)
    return params


if __name__ == "__main__":
    key = jax.random.PRNGKey(0)
    k_x, k_p = jax.random.split(key)
    n_feats = 16                                    # f = 4
    x = jax.random.normal(k_x, (2, n_feats, 24, 24), jnp.float32)   # NCHW like PyTorch
    params = init_params(k_p, n_feats)

    y = jax.jit(esa_forward)(x, params)
    jax.block_until_ready(y)
    assert y.shape == x.shape and y.dtype == x.dtype
    print("KERNEL_OK")
</pallas_src>

<mosaic_0001>
module attributes {stable_mosaic.version = 11 : i64} {
  func.func @_esa_kernel(%arg0: i32, %arg1: memref<1x16x576xf32, #tpu.memory_space<vmem>>, %arg2: memref<1x144x121xf32, #tpu.memory_space<vmem>>, %arg3: memref<4x16xf32, #tpu.memory_space<vmem>>, %arg4: memref<4x1xf32, #tpu.memory_space<vmem>>, %arg5: memref<4x144xf32, #tpu.memory_space<vmem>>, %arg6: memref<4x1xf32, #tpu.memory_space<vmem>>, %arg7: memref<49x121x4xf32, #tpu.memory_space<vmem>>, %arg8: memref<9x4x4xf32, #tpu.memory_space<vmem>>, %arg9: memref<9x4x4xf32, #tpu.memory_space<vmem>>, %arg10: memref<4x1xf32, #tpu.memory_space<vmem>>, %arg11: memref<9x4x4xf32, #tpu.memory_space<vmem>>, %arg12: memref<4x1xf32, #tpu.memory_space<vmem>>, %arg13: memref<9x4x4xf32, #tpu.memory_space<vmem>>, %arg14: memref<4x1xf32, #tpu.memory_space<vmem>>, %arg15: memref<16x4xf32, #tpu.memory_space<vmem>>, %arg16: memref<16x1xf32, #tpu.memory_space<vmem>>, %arg17: memref<4x576xf32, #tpu.memory_space<vmem>>, %arg18: memref<1x16x576xf32, #tpu.memory_space<vmem>>) attributes {dimension_semantics = [#tpu.dimension_semantics<parallel>], iteration_bounds = array<i64: 2>, scalar_prefetch = 0 : i64, scratch_operands = 0 : i64, tpu.core_type = #tpu.core_type<tc>, window_params = [{transform_indices = @transform_0, window_bounds = array<i64: 1, 16, 576>}, {transform_indices = @transform_1, window_bounds = array<i64: 1, 144, 121>}, {pipeline_mode = #tpu.pipeline_mode<synchronous>, transform_indices = @transform_2, window_bounds = array<i64: 4, 16>}, {pipeline_mode = #tpu.pipeline_mode<synchronous>, transform_indices = @transform_3, window_bounds = array<i64: 4, 1>}, {pipeline_mode = #tpu.pipeline_mode<synchronous>, transform_indices = @transform_4, window_bounds = array<i64: 4, 144>}, {pipeline_mode = #tpu.pipeline_mode<synchronous>, transform_indices = @transform_5, window_bounds = array<i64: 4, 1>}, {pipeline_mode = #tpu.pipeline_mode<synchronous>, transform_indices = @transform_6, window_bounds = array<i64: 49, 121, 4>}, {pipeline_mode = #tpu.pipeline_mode<synchronous>, transform_indices = @transform_7, window_bounds = array<i64: 9, 4, 4>}, {pipeline_mode = #tpu.pipeline_mode<synchronous>, transform_indices = @transform_8, window_bounds = array<i64: 9, 4, 4>}, {pipeline_mode = #tpu.pipeline_mode<synchronous>, transform_indices = @transform_9, window_bounds = array<i64: 4, 1>}, {pipeline_mode = #tpu.pipeline_mode<synchronous>, transform_indices = @transform_10, window_bounds = array<i64: 9, 4, 4>}, {pipeline_mode = #tpu.pipeline_mode<synchronous>, transform_indices = @transform_11, window_bounds = array<i64: 4, 1>}, {pipeline_mode = #tpu.pipeline_mode<synchronous>, transform_indices = @transform_12, window_bounds = array<i64: 9, 4, 4>}, {pipeline_mode = #tpu.pipeline_mode<synchronous>, transform_indices = @transform_13, window_bounds = array<i64: 4, 1>}, {pipeline_mode = #tpu.pipeline_mode<synchronous>, transform_indices = @transform_14, window_bounds = array<i64: 16, 4>}, {pipeline_mode = #tpu.pipeline_mode<synchronous>, transform_indices = @transform_15, window_bounds = array<i64: 16, 1>}, {pipeline_mode = #tpu.pipeline_mode<synchronous>, transform_indices = @transform_16, window_bounds = array<i64: 4, 576>}, {transform_indices = @transform_17, window_bounds = array<i64: 1, 16, 576>}]} {
    %c0 = arith.constant 0 : index
    %c0_0 = arith.constant 0 : index
    %c0_1 = arith.constant 0 : index
    %0 = vector.load %arg1[%c0, %c0_0, %c0_1] : memref<1x16x576xf32, #tpu.memory_space<vmem>>, vector<1x16x576xf32>
    %1 = vector.shape_cast %0 : vector<1x16x576xf32> to vector<16x576xf32>
    %c0_2 = arith.constant 0 : index
    %c0_3 = arith.constant 0 : index
    %c0_4 = arith.constant 0 : index
    %2 = vector.load %arg2[%c0_2, %c0_3, %c0_4] : memref<1x144x121xf32, #tpu.memory_space<vmem>>, vector<1x144x121xf32>
    %3 = vector.shape_cast %2 : vector<1x144x121xf32> to vector<144x121xf32>
    %c0_5 = arith.constant 0 : index
    %c0_6 = arith.constant 0 : index
    %4 = vector.load %arg5[%c0_5, %c0_6] : memref<4x144xf32, #tpu.memory_space<vmem>>, vector<4x144xf32>
    %cst = arith.constant dense<0.000000e+00> : vector<4x121xf32>
    %5 = tpu.matmul %4, %3, %cst {dimension_numbers = #tpu.dot_dimension_numbers<[1], [0], [0], [1], [0, 0, 1, 1], [], []>} : vector<4x144xf32>, vector<144x121xf32>, vector<4x121xf32> -> vector<4x121xf32>
    %c0_7 = arith.constant 0 : index
    %c0_8 = arith.constant 0 : index
    %6 = vector.load %arg6[%c0_7, %c0_8] : memref<4x1xf32, #tpu.memory_space<vmem>>, vector<4x1xf32>
    %7 = vector.broadcast %6 : vector<4x1xf32> to vector<4x121xf32>
    %8 = arith.addf %5, %7 : vector<4x121xf32>
    %c0_9 = arith.constant 0 : index
    %c0_10 = arith.constant 0 : index
    %c0_11 = arith.constant 0 : index
    %9 = vector.load %arg7[%c0_9, %c0_10, %c0_11] : memref<49x121x4xf32, #tpu.memory_space<vmem>>, vector<1x121x4xf32>
    %10 = vector.shape_cast %9 : vector<1x121x4xf32> to vector<121x4xf32>
    %cst_12 = arith.constant dense<0.000000e+00> : vector<4x4xf32>
    %11 = tpu.matmul %8, %10, %cst_12 {dimension_numbers = #tpu.dot_dimension_numbers<[1], [0], [0], [1], [0, 0, 1, 1], [], []>} : vector<4x121xf32>, vector<121x4xf32>, vector<4x4xf32> -> vector<4x4xf32>
    %c1 = arith.constant 1 : index
    %c0_13 = arith.constant 0 : index
    %c0_14 = arith.constant 0 : index
    %12 = vector.load %arg7[%c1, %c0_13, %c0_14] : memref<49x121x4xf32, #tpu.memory_space<vmem>>, vector<1x121x4xf32>
    %13 = vector.shape_cast %12 : vector<1x121x4xf32> to vector<121x4xf32>
    %cst_15 = arith.constant dense<0.000000e+00> : vector<4x4xf32>
    %14 = tpu.matmul %8, %13, %cst_15 {dimension_numbers = #tpu.dot_dimension_numbers<[1], [0], [0], [1], [0, 0, 1, 1], [], []>} : vector<4x121xf32>, vector<121x4xf32>, vector<4x4xf32> -> vector<4x4xf32>
    %15 = arith.maximumf %11, %14 : vector<4x4xf32>
    %c2 = arith.constant 2 : index
    %c0_16 = arith.constant 0 : index
    %c0_17 = arith.constant 0 : index
    %16 = vector.load %arg7[%c2, %c0_16, %c0_17] : memref<49x121x4xf32, #tpu.memory_space<vmem>>, vector<1x121x4xf32>
    %17 = vector.shape_cast %16 : vector<1x121x4xf32> to vector<121x4xf32>
    %cst_18 = arith.constant dense<0.000000e+00> : vector<4x4xf32>
    %18 = tpu.matmul %8, %17, %cst_18 {dimension_numbers = #tpu.dot_dimension_numbers<[1], [0], [0], [1], [0, 0, 1, 1], [], []>} : vector<4x121xf32>, vector<121x4xf32>, vector<4x4xf32> -> vector<4x4xf32>
    %19 = arith.maximumf %15, %18 : vector<4x4xf32>
    %c3 = arith.constant 3 : index
    %c0_19 = arith.constant 0 : index
    %c0_20 = arith.constant 0 : index
    %20 = vector.load %arg7[%c3, %c0_19, %c0_20] : memref<49x121x4xf32, #tpu.memory_space<vmem>>, vector<1x121x4xf32>
    %21 = vector.shape_cast %20 : vector<1x121x4xf32> to vector<121x4xf32>
    %cst_21 = arith.constant dense<0.000000e+00> : vector<4x4xf32>
    %22 = tpu.matmul %8, %21, %cst_21 {dimension_numbers = #tpu.dot_dimension_numbers<[1], [0], [0], [1], [0, 0, 1, 1], [], []>} : vector<4x121xf32>, vector<121x4xf32>, vector<4x4xf32> -> vector<4x4xf32>
    %23 = arith.maximumf %19, %22 : vector<4x4xf32>
    %c4 = arith.constant 4 : index
    %c0_22 = arith.constant 0 : index
    %c0_23 = arith.constant 0 : index
    %24 = vector.load %arg7[%c4, %c0_22, %c0_23] : memref<49x121x4xf32, #tpu.memory_space<vmem>>, vector<1x121x4xf32>
    %25 = vector.shape_cast %24 : vector<1x121x4xf32> to vector<121x4xf32>
    %cst_24 = arith.constant dense<0.000000e+00> : vector<4x4xf32>
    %26 = tpu.matmul %8, %25, %cst_24 {dimension_numbers = #tpu.dot_dimension_numbers<[1], [0], [0], [1], [0, 0, 1, 1], [], []>} : vector<4x121xf32>, vector<121x4xf32>, vector<4x4xf32> -> vector<4x4xf32>
    %27 = arith.maximumf %23, %26 : vector<4x4xf32>
    %c5 = arith.constant 5 : index
    %c0_25 = arith.constant 0 : index
    %c0_26 = arith.constant 0 : index
    %28 = vector.load %arg7[%c5, %c0_25, %c0_26] : memref<49x121x4xf32, #tpu.memory_space<vmem>>, vector<1x121x4xf32>
    %29 = vector.shape_cast %28 : vector<1x121x4xf32> to vector<121x4xf32>
    %cst_27 = arith.constant dense<0.000000e+00> : vector<4x4xf32>
    %30 = tpu.matmul %8, %29, %cst_27 {dimension_numbers = #tpu.dot_dimension_numbers<[1], [0], [0], [1], [0, 0, 1, 1], [], []>} : vector<4x121xf32>, vector<121x4xf32>, vector<4x4xf32> -> vector<4x4xf32>
    %31 = arith.maximumf %27, %30 : vector<4x4xf32>
    %c6 = arith.constant 6 : index
    %c0_28 = arith.constant 0 : index
    %c0_29 = arith.constant 0 : index
    %32 = vector.load %arg7[%c6, %c0_28, %c0_29] : memref<49x121x4xf32, #tpu.memory_space<vmem>>, vector<1x121x4xf32>
    %33 = vector.shape_cast %32 : vector<1x121x4xf32> to vector<121x4xf32>
    %cst_30 = arith.constant dense<0.000000e+00> : vector<4x4xf32>
    %34 = tpu.matmul %8, %33, %cst_30 {dimension_numbers = #tpu.dot_dimension_numbers<[1], [0], [0], [1], [0, 0, 1, 1], [], []>} : vector<4x121xf32>, vector<121x4xf32>, vector<4x4xf32> -> vector<4x4xf32>
    %35 = arith.maximumf %31, %34 : vector<4x4xf32>
    %c7 = arith.constant 7 : index
    %c0_31 = arith.constant 0 : index
    %c0_32 = arith.constant 0 : index
    %36 = vector.load %arg7[%c7, %c0_31, %c0_32] : memref<49x121x4xf32, #tpu.memory_space<vmem>>, vector<1x121x4xf32>
    %37 = vector.shape_cast %36 : vector<1x121x4xf32> to vector<121x4xf32>
    %cst_33 = arith.constant dense<0.000000e+00> : vector<4x4xf32>
    %38 = tpu.matmul %8, %37, %cst_33 {dimension_numbers = #tpu.dot_dimension_numbers<[1], [0], [0], [1], [0, 0, 1, 1], [], []>} : vector<4x121xf32>, vector<121x4xf32>, vector<4x4xf32> -> vector<4x4xf32>
    %39 = arith.maximumf %35, %38 : vector<4x4xf32>
    %c8 = arith.constant 8 : index
    %c0_34 = arith.constant 0 : index
    %c0_35 = arith.constant 0 : index
    %40 = vector.load %arg7[%c8, %c0_34, %c0_35] : memref<49x121x4xf32, #tpu.memory_space<vmem>>, vector<1x121x4xf32>
    %41 = vector.shape_cast %40 : vector<1x121x4xf32> to vector<121x4xf32>
    %cst_36 = arith.constant dense<0.000000e+00> : vector<4x4xf32>
    %42 = tpu.matmul %8, %41, %cst_36 {dimension_numbers = #tpu.dot_dimension_numbers<[1], [0], [0], [1], [0, 0, 1, 1], [], []>} : vector<4x121xf32>, vector<121x4xf32>, vector<4x4xf32> -> vector<4x4xf32>
    %43 = arith.maximumf %39, %42 : vector<4x4xf32>
    %c9 = arith.constant 9 : index
    %c0_37 = arith.constant 0 : index
    %c0_38 = arith.constant 0 : index
    %44 = vector.load %arg7[%c9, %c0_37, %c0_38] : memref<49x121x4xf32, #tpu.memory_space<vmem>>, vector<1x121x4xf32>
    %45 = vector.shape_cast %44 : vector<1x121x4xf32> to vector<121x4xf32>
    %cst_39 = arith.constant dense<0.000000e+00> : vector<4x4xf32>
    %46 = tpu.matmul %8, %45, %cst_39 {dimension_numbers = #tpu.dot_dimension_numbers<[1], [0], [0], [1], [0, 0, 1, 1], [], []>} : vector<4x121xf32>, vector<121x4xf32>, vector<4x4xf32> -> vector<4x4xf32>
    %47 = arith.maximumf %43, %46 : vector<4x4xf32>
    %c10 = arith.constant 10 : index
    %c0_40 = arith.constant 0 : index
    %c0_41 = arith.constant 0 : index
    %48 = vector.load %arg7[%c10, %c0_40, %c0_41] : memref<49x121x4xf32, #tpu.memory_space<vmem>>, vector<1x121x4xf32>
    %49 = vector.shape_cast %48 : vector<1x121x4xf32> to vector<121x4xf32>
    %cst_42 = arith.constant dense<0.000000e+00> : vector<4x4xf32>
    %50 = tpu.matmul %8, %49, %cst_42 {dimension_numbers = #tpu.dot_dimension_numbers<[1], [0], [0], [1], [0, 0, 1, 1], [], []>} : vector<4x121xf32>, vector<121x4xf32>, vector<4x4xf32> -> vector<4x4xf32>
    %51 = arith.maximumf %47, %50 : vector<4x4xf32>
    %c11 = arith.constant 11 : index
    %c0_43 = arith.constant 0 : index
    %c0_44 = arith.constant 0 : index
    %52 = vector.load %arg7[%c11, %c0_43, %c0_44] : memref<49x121x4xf32, #tpu.memory_space<vmem>>, vector<1x121x4xf32>
    %53 = vector.shape_cast %52 : vector<1x121x4xf32> to vector<121x4xf32>
    %cst_45 = arith.constant dense<0.000000e+00> : vector<4x4xf32>
    %54 = tpu.matmul %8, %53, %cst_45 {dimension_numbers = #tpu.dot_dimension_numbers<[1], [0], [0], [1], [0, 0, 1, 1], [], []>} : vector<4x121xf32>, vector<121x4xf32>, vector<4x4xf32> -> vector<4x4xf32>
    %55 = arith.maximumf %51, %54 : vector<4x4xf32>
    %c12 = arith.constant 12 : index
    %c0_46 = arith.constant 0 : index
    %c0_47 = arith.constant 0 : index
    %56 = vector.load %arg7[%c12, %c0_46, %c0_47] : memref<49x121x4xf32, #tpu.memory_space<vmem>>, vector<1x121x4xf32>
    %57 = vector.shape_cast %56 : vector<1x121x4xf32> to vector<121x4xf32>
    %cst_48 = arith.constant dense<0.000000e+00> : vector<4x4xf32>
    %58 = tpu.matmul %8, %57, %cst_48 {dimension_numbers = #tpu.dot_dimension_numbers<[1], [0], [0], [1], [0, 0, 1, 1], [], []>} : vector<4x121xf32>, vector<121x4xf32>, vector<4x4xf32> -> vector<4x4xf32>
    %59 = arith.maximumf %55, %58 : vector<4x4xf32>
    %c13 = arith.constant 13 : index
    %c0_49 = arith.constant 0 : index
    %c0_50 = arith.constant 0 : index
    %60 = vector.load %arg7[%c13, %c0_49, %c0_50] : memref<49x121x4xf32, #tpu.memory_space<vmem>>, vector<1x121x4xf32>
    %61 = vector.shape_cast %60 : vector<1x121x4xf32> to vector<121x4xf32>
    %cst_51 = arith.constant dense<0.000000e+00> : vector<4x4xf32>
    %62 = tpu.matmul %8, %61, %cst_51 {dimension_numbers = #tpu.dot_dimension_numbers<[1], [0], [0], [1], [0, 0, 1, 1], [], []>} : vector<4x121xf32>, vector<121x4xf32>, vector<4x4xf32> -> vector<4x4xf32>
    %63 = arith.maximumf %59, %62 : vector<4x4xf32>
    %c14 = arith.constant 14 : index
    %c0_52 = arith.constant 0 : index
    %c0_53 = arith.constant 0 : index
    %64 = vector.load %arg7[%c14, %c0_52, %c0_53] : memref<49x121x4xf32, #tpu.memory_space<vmem>>, vector<1x121x4xf32>
    %65 = vector.shape_cast %64 : vector<1x121x4xf32> to vector<121x4xf32>
    %cst_54 = arith.constant dense<0.000000e+00> : vector<4x4xf32>
    %66 = tpu.matmul %8, %65, %cst_54 {dimension_numbers = #tpu.dot_dimension_numbers<[1], [0], [0], [1], [0, 0, 1, 1], [], []>} : vector<4x121xf32>, vector<121x4xf32>, vector<4x4xf32> -> vector<4x4xf32>
    %67 = arith.maximumf %63, %66 : vector<4x4xf32>
    %c15 = arith.constant 15 : index
    %c0_55 = arith.constant 0 : index
    %c0_56 = arith.constant 0 : index
    %68 = vector.load %arg7[%c15, %c0_55, %c0_56] : memref<49x121x4xf32, #tpu.memory_space<vmem>>, vector<1x121x4xf32>
    %69 = vector.shape_cast %68 : vector<1x121x4xf32> to vector<121x4xf32>
    %cst_57 = arith.constant dense<0.000000e+00> : vector<4x4xf32>
    %70 = tpu.matmul %8, %69, %cst_57 {dimension_numbers = #tpu.dot_dimension_numbers<[1], [0], [0], [1], [0, 0, 1, 1], [], []>} : vector<4x121xf32>, vector<121x4xf32>, vector<4x4xf32> -> vector<4x4xf32>
    %71 = arith.maximumf %67, %70 : vector<4x4xf32>
    %c16 = arith.constant 16 : index
    %c0_58 = arith.constant 0 : index
    %c0_59 = arith.constant 0 : index
    %72 = vector.load %arg7[%c16, %c0_58, %c0_59] : memref<49x121x4xf32, #tpu.memory_space<vmem>>, vector<1x121x4xf32>
    %73 = vector.shape_cast %72 : vector<1x121x4xf32> to vector<121x4xf32>
    %cst_60 = arith.constant dense<0.000000e+00> : vector<4x4xf32>
    %74 = tpu.matmul %8, %73, %cst_60 {dimension_numbers = #tpu.dot_dimension_numbers<[1], [0], [0], [1], [0, 0, 1, 1], [], []>} : vector<4x121xf32>, vector<121x4xf32>, vector<4x4xf32> -> vector<4x4xf32>
    %75 = arith.maximumf %71, %74 : vector<4x4xf32>
    %c17 = arith.constant 17 : index
    %c0_61 = arith.constant 0 : index
    %c0_62 = arith.constant 0 : index
    %76 = vector.load %arg7[%c17, %c0_61, %c0_62] : memref<49x121x4xf32, #tpu.memory_space<vmem>>, vector<1x121x4xf32>
    %77 = vector.shape_cast %76 : vector<1x121x4xf32> to vector<121x4xf32>
    %cst_63 = arith.constant dense<0.000000e+00> : vector<4x4xf32>
    %78 = tpu.matmul %8, %77, %cst_63 {dimension_numbers = #tpu.dot_dimension_numbers<[1], [0], [0], [1], [0, 0, 1, 1], [], []>} : vector<4x121xf32>, vector<121x4xf32>, vector<4x4xf32> -> vector<4x4xf32>
    %79 = arith.maximumf %75, %78 : vector<4x4xf32>
    %c18 = arith.constant 18 : index
    %c0_64 = arith.constant 0 : index
    %c0_65 = arith.constant 0 : index
    %80 = vector.load %arg7[%c18, %c0_64, %c0_65] : memref<49x121x4xf32, #tpu.memory_space<vmem>>, vector<1x121x4xf32>
    %81 = vector.shape_cast %80 : vector<1x121x4xf32> to vector<121x4xf32>
    %cst_66 = arith.constant dense<0.000000e+00> : vector<4x4xf32>
    %82 = tpu.matmul %8, %81, %cst_66 {dimension_numbers = #tpu.dot_dimension_numbers<[1], [0], [0], [1], [0, 0, 1, 1], [], []>} : vector<4x121xf32>, vector<121x4xf32>, vector<4x4xf32> -> vector<4x4xf32>
    %83 = arith.maximumf %79, %82 : vector<4x4xf32>
    %c19 = arith.constant 19 : index
    %c0_67 = arith.constant 0 : index
    %c0_68 = arith.constant 0 : index
    %84 = vector.load %arg7[%c19, %c0_67, %c0_68] : memref<49x121x4xf32, #tpu.memory_space<vmem>>, vector<1x121x4xf32>
    %85 = vector.shape_cast %84 : vector<1x121x4xf32> to vector<121x4xf32>
    %cst_69 = arith.constant dense<0.000000e+00> : vector<4x4xf32>
    %86 = tpu.matmul %8, %85, %cst_69 {dimension_numbers = #tpu.dot_dimension_numbers<[1], [0], [0], [1], [0, 0, 1, 1], [], []>} : vector<4x121xf32>, vector<121x4xf32>, vector<4x4xf32> -> vector<4x4xf32>
    %87 = arith.maximumf %83, %86 : vector<4x4xf32>
    %c20 = arith.constant 20 : index
    %c0_70 = arith.constant 0 : index
    %c0_71 = arith.constant 0 : index
    %88 = vector.load %arg7[%c20, %c0_70, %c0_71] : memref<49x121x4xf32, #tpu.memory_space<vmem>>, vector<1x121x4xf32>
    %89 = vector.shape_cast %88 : vector<1x121x4xf32> to vector<121x4xf32>
    %cst_72 = arith.constant dense<0.000000e+00> : vector<4x4xf32>
    %90 = tpu.matmul %8, %89, %cst_72 {dimension_numbers = #tpu.dot_dimension_numbers<[1], [0], [0], [1], [0, 0, 1, 1], [], []>} : vector<4x121xf32>, vector<121x4xf32>, vector<4x4xf32> -> vector<4x4xf32>
    %91 = arith.maximumf %87, %90 : vector<4x4xf32>
    %c21 = arith.constant 21 : index
    %c0_73 = arith.constant 0 : index
    %c0_74 = arith.constant 0 : index
    %92 = vector.load %arg7[%c21, %c0_73, %c0_74] : memref<49x121x4xf32, #tpu.memory_space<vmem>>, vector<1x121x4xf32>
    %93 = vector.shape_cast %92 : vector<1x121x4xf32> to vector<121x4xf32>
    %cst_75 = arith.constant dense<0.000000e+00> : vector<4x4xf32>
    %94 = tpu.matmul %8, %93, %cst_75 {dimension_numbers = #tpu.dot_dimension_numbers<[1], [0], [0], [1], [0, 0, 1, 1], [], []>} : vector<4x121xf32>, vector<121x4xf32>, vector<4x4xf32> -> vector<4x4xf32>
    %95 = arith.maximumf %91, %94 : vector<4x4xf32>
    %c22 = arith.constant 22 : index
    %c0_76 = arith.constant 0 : index
    %c0_77 = arith.constant 0 : index
    %96 = vector.load %arg7[%c22, %c0_76, %c0_77] : memref<49x121x4xf32, #tpu.memory_space<vmem>>, vector<1x121x4xf32>
    %97 = vector.shape_cast %96 : vector<1x121x4xf32> to vector<121x4xf32>
    %cst_78 = arith.constant dense<0.000000e+00> : vector<4x4xf32>
    %98 = tpu.matmul %8, %97, %cst_78 {dimension_numbers = #tpu.dot_dimension_numbers<[1], [0], [0], [1], [0, 0, 1, 1], [], []>} : vector<4x121xf32>, vector<121x4xf32>, vector<4x4xf32> -> vector<4x4xf32>
    %99 = arith.maximumf %95, %98 : vector<4x4xf32>
    %c23 = arith.constant 23 : index
    %c0_79 = arith.constant 0 : index
    %c0_80 = arith.constant 0 : index
    %100 = vector.load %arg7[%c23, %c0_79, %c0_80] : memref<49x121x4xf32, #tpu.memory_space<vmem>>, vector<1x121x4xf32>
    %101 = vector.shape_cast %100 : vector<1x121x4xf32> to vector<121x4xf32>
    %cst_81 = arith.constant dense<0.000000e+00> : vector<4x4xf32>
    %102 = tpu.matmul %8, %101, %cst_81 {dimension_numbers = #tpu.dot_dimension_numbers<[1], [0], [0], [1], [0, 0, 1, 1], [], []>} : vector<4x121xf32>, vector<121x4xf32>, vector<4x4xf32> -> vector<4x4xf32>
    %103 = arith.maximumf %99, %102 : vector<4x4xf32>
    %c24 = arith.constant 24 : index
    %c0_82 = arith.constant 0 : index
    %c0_83 = arith.constant 0 : index
    %104 = vector.load %arg7[%c24, %c0_82, %c0_83] : memref<49x121x4xf32, #tpu.memory_space<vmem>>, vector<1x121x4xf32>
    %105 = vector.shape_cast %104 : vector<1x121x4xf32> to vector<121x4xf32>
    %cst_84 = arith.constant dense<0.000000e+00> : vector<4x4xf32>
    %106 = tpu.matmul %8, %105, %cst_84 {dimension_numbers = #tpu.dot_dimension_numbers<[1], [0], [0], [1], [0, 0, 1, 1], [], []>} : vector<4x121xf32>, vector<121x4xf32>, vector<4x4xf32> -> vector<4x4xf32>
    %107 = arith.maximumf %103, %106 : vector<4x4xf32>
    %c25 = arith.constant 25 : index
    %c0_85 = arith.constant 0 : index
    %c0_86 = arith.constant 0 : index
    %108 = vector.load %arg7[%c25, %c0_85, %c0_86] : memref<49x121x4xf32, #tpu.memory_space<vmem>>, vector<1x121x4xf32>
    %109 = vector.shape_cast %108 : vector<1x121x4xf32> to vector<121x4xf32>
    %cst_87 = arith.constant dense<0.000000e+00> : vector<4x4xf32>
    %110 = tpu.matmul %8, %109, %cst_87 {dimension_numbers = #tpu.dot_dimension_numbers<[1], [0], [0], [1], [0, 0, 1, 1], [], []>} : vector<4x121xf32>, vector<121x4xf32>, vector<4x4xf32> -> vector<4x4xf32>
    %111 = arith.maximumf %107, %110 : vector<4x4xf32>
    %c26 = arith.constant 26 : index
    %c0_88 = arith.constant 0 : index
    %c0_89 = arith.constant 0 : index
    %112 = vector.load %arg7[%c26, %c0_88, %c0_89] : memref<49x121x4xf32, #tpu.memory_space<vmem>>, vector<1x121x4xf32>
    %113 = vector.shape_cast %112 : vector<1x121x4xf32> to vector<121x4xf32>
    %cst_90 = arith.constant dense<0.000000e+00> : vector<4x4xf32>
    %114 = tpu.matmul %8, %113, %cst_90 {dimension_numbers = #tpu.dot_dimension_numbers<[1], [0], [0], [1], [0, 0, 1, 1], [], []>} : vector<4x121xf32>, vector<121x4xf32>, vector<4x4xf32> -> vector<4x4xf32>
    %115 = arith.maximumf %111, %114 : vector<4x4xf32>
    %c27 = arith.constant 27 : index
    %c0_91 = arith.constant 0 : index
    %c0_92 = arith.constant 0 : index
    %116 = vector.load %arg7[%c27, %c0_91, %c0_92] : memref<49x121x4xf32, #tpu.memory_space<vmem>>, vector<1x121x4xf32>
    %117 = vector.shape_cast %116 : vector<1x121x4xf32> to vector<121x4xf32>
    %cst_93 = arith.constant dense<0.000000e+00> : vector<4x4xf32>
    %118 = tpu.matmul %8, %117, %cst_93 {dimension_numbers = #tpu.dot_dimension_numbers<[1], [0], [0], [1], [0, 0, 1, 1], [], []>} : vector<4x121xf32>, vector<121x4xf32>, vector<4x4xf32> -> vector<4x4xf32>
    %119 = arith.maximumf %115, %118 : vector<4x4xf32>
    %c28 = arith.constant 28 : index
    %c0_94 = arith.constant 0 : index
    %c0_95 = arith.constant 0 : index
    %120 = vector.load %arg7[%c28, %c0_94, %c0_95] : memref<49x121x4xf32, #tpu.memory_space<vmem>>, vector<1x121x4xf32>
    %121 = vector.shape_cast %120 : vector<1x121x4xf32> to vector<121x4xf32>
    %cst_96 = arith.constant dense<0.000000e+00> : vector<4x4xf32>
    %122 = tpu.matmul %8, %121, %cst_96 {dimension_numbers = #tpu.dot_dimension_numbers<[1], [0], [0], [1], [0, 0, 1, 1], [], []>} : vector<4x121xf32>, vector<121x4xf32>, vector<4x4xf32> -> vector<4x4xf32>
    %123 = arith.maximumf %119, %122 : vector<4x4xf32>
    %c29 = arith.constant 29 : index
    %c0_97 = arith.constant 0 : index
    %c0_98 = arith.constant 0 : index
    %124 = vector.load %arg7[%c29, %c0_97, %c0_98] : memref<49x121x4xf32, #tpu.memory_space<vmem>>, vector<1x121x4xf32>
    %125 = vector.shape_cast %124 : vector<1x121x4xf32> to vector<121x4xf32>
    %cst_99 = arith.constant dense<0.000000e+00> : vector<4x4xf32>
    %126 = tpu.matmul %8, %125, %cst_99 {dimension_numbers = #tpu.dot_dimension_numbers<[1], [0], [0], [1], [0, 0, 1, 1], [], []>} : vector<4x121xf32>, vector<121x4xf32>, vector<4x4xf32> -> vector<4x4xf32>
    %127 = arith.maximumf %123, %126 : vector<4x4xf32>
    %c30 = arith.constant 30 : index
    %c0_100 = arith.constant 0 : index
    %c0_101 = arith.constant 0 : index
    %128 = vector.load %arg7[%c30, %c0_100, %c0_101] : memref<49x121x4xf32, #tpu.memory_space<vmem>>, vector<1x121x4xf32>
    %129 = vector.shape_cast %128 : vector<1x121x4xf32> to vector<121x4xf32>
    %cst_102 = arith.constant dense<0.000000e+00> : vector<4x4xf32>
    %130 = tpu.matmul %8, %129, %cst_102 {dimension_numbers = #tpu.dot_dimension_numbers<[1], [0], [0], [1], [0, 0, 1, 1], [], []>} : vector<4x121xf32>, vector<121x4xf32>, vector<4x4xf32> -> vector<4x4xf32>
    %131 = arith.maximumf %127, %130 : vector<4x4xf32>
    %c31 = arith.constant 31 : index
    %c0_103 = arith.constant 0 : index
    %c0_104 = arith.constant 0 : index
    %132 = vector.load %arg7[%c31, %c0_103, %c0_104] : memref<49x121x4xf32, #tpu.memory_space<vmem>>, vector<1x121x4xf32>
    %133 = vector.shape_cast %132 : vector<1x121x4xf32> to vector<121x4xf32>
    %cst_105 = arith.constant dense<0.000000e+00> : vector<4x4xf32>
    %134 = tpu.matmul %8, %133, %cst_105 {dimension_numbers = #tpu.dot_dimension_numbers<[1], [0], [0], [1], [0, 0, 1, 1], [], []>} : vector<4x121xf32>, vector<121x4xf32>, vector<4x4xf32> -> vector<4x4xf32>
    %135 = arith.maximumf %131, %134 : vector<4x4xf32>
    %c32 = arith.constant 32 : index
    %c0_106 = arith.constant 0 : index
    %c0_107 = arith.constant 0 : index
    %136 = vector.load %arg7[%c32, %c0_106, %c0_107] : memref<49x121x4xf32, #tpu.memory_space<vmem>>, vector<1x121x4xf32>
    %137 = vector.shape_cast %136 : vector<1x121x4xf32> to vector<121x4xf32>
    %cst_108 = arith.constant dense<0.000000e+00> : vector<4x4xf32>
    %138 = tpu.matmul %8, %137, %cst_108 {dimension_numbers = #tpu.dot_dimension_numbers<[1], [0], [0], [1], [0, 0, 1, 1], [], []>} : vector<4x121xf32>, vector<121x4xf32>, vector<4x4xf32> -> vector<4x4xf32>
    %139 = arith.maximumf %135, %138 : vector<4x4xf32>
    %c33 = arith.constant 33 : index
    %c0_109 = arith.constant 0 : index
    %c0_110 = arith.constant 0 : index
    %140 = vector.load %arg7[%c33, %c0_109, %c0_110] : memref<49x121x4xf32, #tpu.memory_space<vmem>>, vector<1x121x4xf32>
    %141 = vector.shape_cast %140 : vector<1x121x4xf32> to vector<121x4xf32>
    %cst_111 = arith.constant dense<0.000000e+00> : vector<4x4xf32>
    %142 = tpu.matmul %8, %141, %cst_111 {dimension_numbers = #tpu.dot_dimension_numbers<[1], [0], [0], [1], [0, 0, 1, 1], [], []>} : vector<4x121xf32>, vector<121x4xf32>, vector<4x4xf32> -> vector<4x4xf32>
    %143 = arith.maximumf %139, %142 : vector<4x4xf32>
    %c34 = arith.constant 34 : index
    %c0_112 = arith.constant 0 : index
    %c0_113 = arith.constant 0 : index
    %144 = vector.load %arg7[%c34, %c0_112, %c0_113] : memref<49x121x4xf32, #tpu.memory_space<vmem>>, vector<1x121x4xf32>
    %145 = vector.shape_cast %144 : vector<1x121x4xf32> to vector<121x4xf32>
    %cst_114 = arith.constant dense<0.000000e+00> : vector<4x4xf32>
    %146 = tpu.matmul %8, %145, %cst_114 {dimension_numbers = #tpu.dot_dimension_numbers<[1], [0], [0], [1], [0, 0, 1, 1], [], []>} : vector<4x121xf32>, vector<121x4xf32>, vector<4x4xf32> -> vector<4x4xf32>
    %147 = arith.maximumf %143, %146 : vector<4x4xf32>
    %c35 = arith.constant 35 : index
    %c0_115 = arith.constant 0 : index
    %c0_116 = arith.constant 0 : index
    %148 = vector.load %arg7[%c35, %c0_115, %c0_116] : memref<49x121x4xf32, #tpu.memory_space<vmem>>, vector<1x121x4xf32>
    %149 = vector.shape_cast %148 : vector<1x121x4xf32> to vector<121x4xf32>
    %cst_117 = arith.constant dense<0.000000e+00> : vector<4x4xf32>
    %150 = tpu.matmul %8, %149, %cst_117 {dimension_numbers = #tpu.dot_dimension_numbers<[1], [0], [0], [1], [0, 0, 1, 1], [], []>} : vector<4x121xf32>, vector<121x4xf32>, vector<4x4xf32> -> vector<4x4xf32>
    %151 = arith.maximumf %147, %150 : vector<4x4xf32>
    %c36 = arith.constant 36 : index
    %c0_118 = arith.constant 0 : index
    %c0_119 = arith.constant 0 : index
    %152 = vector.load %arg7[%c36, %c0_118, %c0_119] : memref<49x121x4xf32, #tpu.memory_space<vmem>>, vector<1x121x4xf32>
    %153 = vector.shape_cast %152 : vector<1x121x4xf32> to vector<121x4xf32>
    %cst_120 = arith.constant dense<0.000000e+00> : vector<4x4xf32>
    %154 = tpu.matmul %8, %153, %cst_120 {dimension_numbers = #tpu.dot_dimension_numbers<[1], [0], [0], [1], [0, 0, 1, 1], [], []>} : vector<4x121xf32>, vector<121x4xf32>, vector<4x4xf32> -> vector<4x4xf32>
    %155 = arith.maximumf %151, %154 : vector<4x4xf32>
    %c37 = arith.constant 37 : index
    %c0_121 = arith.constant 0 : index
    %c0_122 = arith.constant 0 : index
    %156 = vector.load %arg7[%c37, %c0_121, %c0_122] : memref<49x121x4xf32, #tpu.memory_space<vmem>>, vector<1x121x4xf32>
    %157 = vector.shape_cast %156 : vector<1x121x4xf32> to vector<121x4xf32>
    %cst_123 = arith.constant dense<0.000000e+00> : vector<4x4xf32>
    %158 = tpu.matmul %8, %157, %cst_123 {dimension_numbers = #tpu.dot_dimension_numbers<[1], [0], [0], [1], [0, 0, 1, 1], [], []>} : vector<4x121xf32>, vector<121x4xf32>, vector<4x4xf32> -> vector<4x4xf32>
    %159 = arith.maximumf %155, %158 : vector<4x4xf32>
    %c38 = arith.constant 38 : index
    %c0_124 = arith.constant 0 : index
    %c0_125 = arith.constant 0 : index
    %160 = vector.load %arg7[%c38, %c0_124, %c0_125] : memref<49x121x4xf32, #tpu.memory_space<vmem>>, vector<1x121x4xf32>
    %161 = vector.shape_cast %160 : vector<1x121x4xf32> to vector<121x4xf32>
    %cst_126 = arith.constant dense<0.000000e+00> : vector<4x4xf32>
    %162 = tpu.matmul %8, %161, %cst_126 {dimension_numbers = #tpu.dot_dimension_numbers<[1], [0], [0], [1], [0, 0, 1, 1], [], []>} : vector<4x121xf32>, vector<121x4xf32>, vector<4x4xf32> -> vector<4x4xf32>
    %163 = arith.maximumf %159, %162 : vector<4x4xf32>
    %c39 = arith.constant 39 : index
    %c0_127 = arith.constant 0 : index
    %c0_128 = arith.constant 0 : index
    %164 = vector.load %arg7[%c39, %c0_127, %c0_128] : memref<49x121x4xf32, #tpu.memory_space<vmem>>, vector<1x121x4xf32>
    %165 = vector.shape_cast %164 : vector<1x121x4xf32> to vector<121x4xf32>
    %cst_129 = arith.constant dense<0.000000e+00> : vector<4x4xf32>
    %166 = tpu.matmul %8, %165, %cst_129 {dimension_numbers = #tpu.dot_dimension_numbers<[1], [0], [0], [1], [0, 0, 1, 1], [], []>} : vector<4x121xf32>, vector<121x4xf32>, vector<4x4xf32> -> vector<4x4xf32>
    %167 = arith.maximumf %163, %166 : vector<4x4xf32>
    %c40 = arith.constant 40 : index
    %c0_130 = arith.constant 0 : index
    %c0_131 = arith.constant 0 : index
    %168 = vector.load %arg7[%c40, %c0_130, %c0_131] : memref<49x121x4xf32, #tpu.memory_space<vmem>>, vector<1x121x4xf32>
    %169 = vector.shape_cast %168 : vector<1x121x4xf32> to vector<121x4xf32>
    %cst_132 = arith.constant dense<0.000000e+00> : vector<4x4xf32>
    %170 = tpu.matmul %8, %169, %cst_132 {dimension_numbers = #tpu.dot_dimension_numbers<[1], [0], [0], [1], [0, 0, 1, 1], [], []>} : vector<4x121xf32>, vector<121x4xf32>, vector<4x4xf32> -> vector<4x4xf32>
    %171 = arith.maximumf %167, %170 : vector<4x4xf32>
    %c41 = arith.constant 41 : index
    %c0_133 = arith.constant 0 : index
    %c0_134 = arith.constant 0 : index
    %172 = vector.load %arg7[%c41, %c0_133, %c0_134] : memref<49x121x4xf32, #tpu.memory_space<vmem>>, vector<1x121x4xf32>
    %173 = vector.shape_cast %172 : vector<1x121x4xf32> to vector<121x4xf32>
    %cst_135 = arith.constant dense<0.000000e+00> : vector<4x4xf32>
    %174 = tpu.matmul %8, %173, %cst_135 {dimension_numbers = #tpu.dot_dimension_numbers<[1], [0], [0], [1], [0, 0, 1, 1], [], []>} : vector<4x121xf32>, vector<121x4xf32>, vector<4x4xf32> -> vector<4x4xf32>
    %175 = arith.maximumf %171, %174 : vector<4x4xf32>
    %c42 = arith.constant 42 : index
    %c0_136 = arith.constant 0 : index
    %c0_137 = arith.constant 0 : index
    %176 = vector.load %arg7[%c42, %c0_136, %c0_137] : memref<49x121x4xf32, #tpu.memory_space<vmem>>, vector<1x121x4xf32>
    %177 = vector.shape_cast %176 : vector<1x121x4xf32> to vector<121x4xf32>
    %cst_138 = arith.constant dense<0.000000e+00> : vector<4x4xf32>
    %178 = tpu.matmul %8, %177, %cst_138 {dimension_numbers = #tpu.dot_dimension_numbers<[1], [0], [0], [1], [0, 0, 1, 1], [], []>} : vector<4x121xf32>, vector<121x4xf32>, vector<4x4xf32> -> vector<4x4xf32>
    %179 = arith.maximumf %175, %178 : vector<4x4xf32>
    %c43 = arith.constant 43 : index
    %c0_139 = arith.constant 0 : index
    %c0_140 = arith.constant 0 : index
    %180 = vector.load %arg7[%c43, %c0_139, %c0_140] : memref<49x121x4xf32, #tpu.memory_space<vmem>>, vector<1x121x4xf32>
    %181 = vector.shape_cast %180 : vector<1x121x4xf32> to vector<121x4xf32>
    %cst_141 = arith.constant dense<0.000000e+00> : vector<4x4xf32>
    %182 = tpu.matmul %8, %181, %cst_141 {dimension_numbers = #tpu.dot_dimension_numbers<[1], [0], [0], [1], [0, 0, 1, 1], [], []>} : vector<4x121xf32>, vector<121x4xf32>, vector<4x4xf32> -> vector<4x4xf32>
    %183 = arith.maximumf %179, %182 : vector<4x4xf32>
    %c44 = arith.constant 44 : index
    %c0_142 = arith.constant 0 : index
    %c0_143 = arith.constant 0 : index
    %184 = vector.load %arg7[%c44, %c0_142, %c0_143] : memref<49x121x4xf32, #tpu.memory_space<vmem>>, vector<1x121x4xf32>
    %185 = vector.shape_cast %184 : vector<1x121x4xf32> to vector<121x4xf32>
    %cst_144 = arith.constant dense<0.000000e+00> : vector<4x4xf32>
    %186 = tpu.matmul %8, %185, %cst_144 {dimension_numbers = #tpu.dot_dimension_numbers<[1], [0], [0], [1], [0, 0, 1, 1], [], []>} : vector<4x121xf32>, vector<121x4xf32>, vector<4x4xf32> -> vector<4x4xf32>
    %187 = arith.maximumf %183, %186 : vector<4x4xf32>
    %c45 = arith.constant 45 : index
    %c0_145 = arith.constant 0 : index
    %c0_146 = arith.constant 0 : index
    %188 = vector.load %arg7[%c45, %c0_145, %c0_146] : memref<49x121x4xf32, #tpu.memory_space<vmem>>, vector<1x121x4xf32>
    %189 = vector.shape_cast %188 : vector<1x121x4xf32> to vector<121x4xf32>
    %cst_147 = arith.constant dense<0.000000e+00> : vector<4x4xf32>
    %190 = tpu.matmul %8, %189, %cst_147 {dimension_numbers = #tpu.dot_dimension_numbers<[1], [0], [0], [1], [0, 0, 1, 1], [], []>} : vector<4x121xf32>, vector<121x4xf32>, vector<4x4xf32> -> vector<4x4xf32>
    %191 = arith.maximumf %187, %190 : vector<4x4xf32>
    %c46 = arith.constant 46 : index
    %c0_148 = arith.constant 0 : index
    %c0_149 = arith.constant 0 : index
    %192 = vector.load %arg7[%c46, %c0_148, %c0_149] : memref<49x121x4xf32, #tpu.memory_space<vmem>>, vector<1x121x4xf32>
    %193 = vector.shape_cast %192 : vector<1x121x4xf32> to vector<121x4xf32>
    %cst_150 = arith.constant dense<0.000000e+00> : vector<4x4xf32>
    %194 = tpu.matmul %8, %193, %cst_150 {dimension_numbers = #tpu.dot_dimension_numbers<[1], [0], [0], [1], [0, 0, 1, 1], [], []>} : vector<4x121xf32>, vector<121x4xf32>, vector<4x4xf32> -> vector<4x4xf32>
    %195 = arith.maximumf %191, %194 : vector<4x4xf32>
    %c47 = arith.constant 47 : index
    %c0_151 = arith.constant 0 : index
    %c0_152 = arith.constant 0 : index
    %196 = vector.load %arg7[%c47, %c0_151, %c0_152] : memref<49x121x4xf32, #tpu.memory_space<vmem>>, vector<1x121x4xf32>
    %197 = vector.shape_cast %196 : vector<1x121x4xf32> to vector<121x4xf32>
    %cst_153 = arith.constant dense<0.000000e+00> : vector<4x4xf32>
    %198 = tpu.matmul %8, %197, %cst_153 {dimension_numbers = #tpu.dot_dimension_numbers<[1], [0], [0], [1], [0, 0, 1, 1], [], []>} : vector<4x121xf32>, vector<121x4xf32>, vector<4x4xf32> -> vector<4x4xf32>
    %199 = arith.maximumf %195, %198 : vector<4x4xf32>
    %c48 = arith.constant 48 : index
    %c0_154 = arith.constant 0 : index
    %c0_155 = arith.constant 0 : index
    %200 = vector.load %arg7[%c48, %c0_154, %c0_155] : memref<49x121x4xf32, #tpu.memory_space<vmem>>, vector<1x121x4xf32>
    %201 = vector.shape_cast %200 : vector<1x121x4xf32> to vector<121x4xf32>
    %cst_156 = arith.constant dense<0.000000e+00> : vector<4x4xf32>
    %202 = tpu.matmul %8, %201, %cst_156 {dimension_numbers = #tpu.dot_dimension_numbers<[1], [0], [0], [1], [0, 0, 1, 1], [], []>} : vector<4x121xf32>, vector<121x4xf32>, vector<4x4xf32> -> vector<4x4xf32>
    %203 = arith.maximumf %199, %202 : vector<4x4xf32>
    %c0_157 = arith.constant 0 : index
    %c0_158 = arith.constant 0 : index
    %204 = vector.load %arg10[%c0_157, %c0_158] : memref<4x1xf32, #tpu.memory_space<vmem>>, vector<4x1xf32>
    %c0_159 = arith.constant 0 : index
    %c0_160 = arith.constant 0 : index
    %c0_161 = arith.constant 0 : index
    %205 = vector.load %arg8[%c0_159, %c0_160, %c0_161] : memref<9x4x4xf32, #tpu.memory_space<vmem>>, vector<1x4x4xf32>
    %206 = vector.shape_cast %205 : vector<1x4x4xf32> to vector<4x4xf32>
    %cst_162 = arith.constant dense<0.000000e+00> : vector<4x4xf32>
    %207 = tpu.matmul %203, %206, %cst_162 {dimension_numbers = #tpu.dot_dimension_numbers<[1], [0], [0], [1], [0, 0, 1, 1], [], []>} : vector<4x4xf32>, vector<4x4xf32>, vector<4x4xf32> -> vector<4x4xf32>
    %c0_163 = arith.constant 0 : index
    %c0_164 = arith.constant 0 : index
    %c0_165 = arith.constant 0 : index
    %208 = vector.load %arg9[%c0_163, %c0_164, %c0_165] : memref<9x4x4xf32, #tpu.memory_space<vmem>>, vector<1x4x4xf32>
    %209 = vector.shape_cast %208 : vector<1x4x4xf32> to vector<4x4xf32>
    %cst_166 = arith.constant dense<0.000000e+00> : vector<4x4xf32>
    %210 = tpu.matmul %209, %207, %cst_166 {dimension_numbers = #tpu.dot_dimension_numbers<[1], [0], [0], [1], [0, 0, 1, 1], [], []>} : vector<4x4xf32>, vector<4x4xf32>, vector<4x4xf32> -> vector<4x4xf32>
    %211 = vector.broadcast %204 : vector<4x1xf32> to vector<4x4xf32>
    %212 = arith.addf %211, %210 : vector<4x4xf32>
    %c1_167 = arith.constant 1 : index
    %c0_168 = arith.constant 0 : index
    %c0_169 = arith.constant 0 : index
    %213 = vector.load %arg8[%c1_167, %c0_168, %c0_169] : memref<9x4x4xf32, #tpu.memory_space<vmem>>, vector<1x4x4xf32>
    %214 = vector.shape_cast %213 : vector<1x4x4xf32> to vector<4x4xf32>
    %cst_170 = arith.constant dense<0.000000e+00> : vector<4x4xf32>
    %215 = tpu.matmul %203, %214, %cst_170 {dimension_numbers = #tpu.dot_dimension_numbers<[1], [0], [0], [1], [0, 0, 1, 1], [], []>} : vector<4x4xf32>, vector<4x4xf32>, vector<4x4xf32> -> vector<4x4xf32>
    %c1_171 = arith.constant 1 : index
    %c0_172 = arith.constant 0 : index
    %c0_173 = arith.constant 0 : index
    %216 = vector.load %arg9[%c1_171, %c0_172, %c0_173] : memref<9x4x4xf32, #tpu.memory_space<vmem>>, vector<1x4x4xf32>
    %217 = vector.shape_cast %216 : vector<1x4x4xf32> to vector<4x4xf32>
    %cst_174 = arith.constant dense<0.000000e+00> : vector<4x4xf32>
    %218 = tpu.matmul %217, %215, %cst_174 {dimension_numbers = #tpu.dot_dimension_numbers<[1], [0], [0], [1], [0, 0, 1, 1], [], []>} : vector<4x4xf32>, vector<4x4xf32>, vector<4x4xf32> -> vector<4x4xf32>
    %219 = arith.addf %212, %218 : vector<4x4xf32>
    %c2_175 = arith.constant 2 : index
    %c0_176 = arith.constant 0 : index
    %c0_177 = arith.constant 0 : index
    %220 = vector.load %arg8[%c2_175, %c0_176, %c0_177] : memref<9x4x4xf32, #tpu.memory_space<vmem>>, vector<1x4x4xf32>
    %221 = vector.shape_cast %220 : vector<1x4x4xf32> to vector<4x4xf32>
    %cst_178 = arith.constant dense<0.000000e+00> : vector<4x4xf32>
    %222 = tpu.matmul %203, %221, %cst_178 {dimension_numbers = #tpu.dot_dimension_numbers<[1], [0], [0], [1], [0, 0, 1, 1], [], []>} : vector<4x4xf32>, vector<4x4xf32>, vector<4x4xf32> -> vector<4x4xf32>
    %c2_179 = arith.constant 2 : index
    %c0_180 = arith.constant 0 : index
    %c0_181 = arith.constant 0 : index
    %223 = vector.load %arg9[%c2_179, %c0_180, %c0_181] : memref<9x4x4xf32, #tpu.memory_space<vmem>>, vector<1x4x4xf32>
    %224 = vector.shape_cast %223 : vector<1x4x4xf32> to vector<4x4xf32>
    %cst_182 = arith.constant dense<0.000000e+00> : vector<4x4xf32>
    %225 = tpu.matmul %224, %222, %cst_182 {dimension_numbers = #tpu.dot_dimension_numbers<[1], [0], [0], [1], [0, 0, 1, 1], [], []>} : vector<4x4xf32>, vector<4x4xf32>, vector<4x4xf32> -> vector<4x4xf32>
    %226 = arith.addf %219, %225 : vector<4x4xf32>
    %c3_183 = arith.constant 3 : index
    %c0_184 = arith.constant 0 : index
    %c0_185 = arith.constant 0 : index
    %227 = vector.load %arg8[%c3_183, %c0_184, %c0_185] : memref<9x4x4xf32, #tpu.memory_space<vmem>>, vector<1x4x4xf32>
    %228 = vector.shape_cast %227 : vector<1x4x4xf32> to vector<4x4xf32>
    %cst_186 = arith.constant dense<0.000000e+00> : vector<4x4xf32>
    %229 = tpu.matmul %203, %228, %cst_186 {dimension_numbers = #tpu.dot_dimension_numbers<[1], [0], [0], [1], [0, 0, 1, 1], [], []>} : vector<4x4xf32>, vector<4x4xf32>, vector<4x4xf32> -> vector<4x4xf32>
    %c3_187 = arith.constant 3 : index
    %c0_188 = arith.constant 0 : index
    %c0_189 = arith.constant 0 : index
    %230 = vector.load %arg9[%c3_187, %c0_188, %c0_189] : memref<9x4x4xf32, #tpu.memory_space<vmem>>, vector<1x4x4xf32>
    %231 = vector.shape_cast %230 : vector<1x4x4xf32> to vector<4x4xf32>
    %cst_190 = arith.constant dense<0.000000e+00> : vector<4x4xf32>
    %232 = tpu.matmul %231, %229, %cst_190 {dimension_numbers = #tpu.dot_dimension_numbers<[1], [0], [0], [1], [0, 0, 1, 1], [], []>} : vector<4x4xf32>, vector<4x4xf32>, vector<4x4xf32> -> vector<4x4xf32>
    %233 = arith.addf %226, %232 : vector<4x4xf32>
    %c4_191 = arith.constant 4 : index
    %c0_192 = arith.constant 0 : index
    %c0_193 = arith.constant 0 : index
    %234 = vector.load %arg8[%c4_191, %c0_192, %c0_193] : memref<9x4x4xf32, #tpu.memory_space<vmem>>, vector<1x4x4xf32>
    %235 = vector.shape_cast %234 : vector<1x4x4xf32> to vector<4x4xf32>
    %cst_194 = arith.constant dense<0.000000e+00> : vector<4x4xf32>
    %236 = tpu.matmul %203, %235, %cst_194 {dimension_numbers = #tpu.dot_dimension_numbers<[1], [0], [0], [1], [0, 0, 1, 1], [], []>} : vector<4x4xf32>, vector<4x4xf32>, vector<4x4xf32> -> vector<4x4xf32>
    %c4_195 = arith.constant 4 : index
    %c0_196 = arith.constant 0 : index
    %c0_197 = arith.constant 0 : index
    %237 = vector.load %arg9[%c4_195, %c0_196, %c0_197] : memref<9x4x4xf32, #tpu.memory_space<vmem>>, vector<1x4x4xf32>
    %238 = vector.shape_cast %237 : vector<1x4x4xf32> to vector<4x4xf32>
    %cst_198 = arith.constant dense<0.000000e+00> : vector<4x4xf32>
    %239 = tpu.matmul %238, %236, %cst_198 {dimension_numbers = #tpu.dot_dimension_numbers<[1], [0], [0], [1], [0, 0, 1, 1], [], []>} : vector<4x4xf32>, vector<4x4xf32>, vector<4x4xf32> -> vector<4x4xf32>
    %240 = arith.addf %233, %239 : vector<4x4xf32>
    %c5_199 = arith.constant 5 : index
    %c0_200 = arith.constant 0 : index
    %c0_201 = arith.constant 0 : index
    %241 = vector.load %arg8[%c5_199, %c0_200, %c0_201] : memref<9x4x4xf32, #tpu.memory_space<vmem>>, vector<1x4x4xf32>
    %242 = vector.shape_cast %241 : vector<1x4x4xf32> to vector<4x4xf32>
    %cst_202 = arith.constant dense<0.000000e+00> : vector<4x4xf32>
    %243 = tpu.matmul %203, %242, %cst_202 {dimension_numbers = #tpu.dot_dimension_numbers<[1], [0], [0], [1], [0, 0, 1, 1], [], []>} : vector<4x4xf32>, vector<4x4xf32>, vector<4x4xf32> -> vector<4x4xf32>
    %c5_203 = arith.constant 5 : index
    %c0_204 = arith.constant 0 : index
    %c0_205 = arith.constant 0 : index
    %244 = vector.load %arg9[%c5_203, %c0_204, %c0_205] : memref<9x4x4xf32, #tpu.memory_space<vmem>>, vector<1x4x4xf32>
    %245 = vector.shape_cast %244 : vector<1x4x4xf32> to vector<4x4xf32>
    %cst_206 = arith.constant dense<0.000000e+00> : vector<4x4xf32>
    %246 = tpu.matmul %245, %243, %cst_206 {dimension_numbers = #tpu.dot_dimension_numbers<[1], [0], [0], [1], [0, 0, 1, 1], [], []>} : vector<4x4xf32>, vector<4x4xf32>, vector<4x4xf32> -> vector<4x4xf32>
    %247 = arith.addf %240, %246 : vector<4x4xf32>
    %c6_207 = arith.constant 6 : index
    %c0_208 = arith.constant 0 : index
    %c0_209 = arith.constant 0 : index
    %248 = vector.load %arg8[%c6_207, %c0_208, %c0_209] : memref<9x4x4xf32, #tpu.memory_space<vmem>>, vector<1x4x4xf32>
    %249 = vector.shape_cast %248 : vector<1x4x4xf32> to vector<4x4xf32>
    %cst_210 = arith.constant dense<0.000000e+00> : vector<4x4xf32>
    %250 = tpu.matmul %203, %249, %cst_210 {dimension_numbers = #tpu.dot_dimension_numbers<[1], [0], [0], [1], [0, 0, 1, 1], [], []>} : vector<4x4xf32>, vector<4x4xf32>, vector<4x4xf32> -> vector<4x4xf32>
    %c6_211 = arith.constant 6 : index
    %c0_212 = arith.constant 0 : index
    %c0_213 = arith.constant 0 : index
    %251 = vector.load %arg9[%c6_211, %c0_212, %c0_213] : memref<9x4x4xf32, #tpu.memory_space<vmem>>, vector<1x4x4xf32>
    %252 = vector.shape_cast %251 : vector<1x4x4xf32> to vector<4x4xf32>
    %cst_214 = arith.constant dense<0.000000e+00> : vector<4x4xf32>
    %253 = tpu.matmul %252, %250, %cst_214 {dimension_numbers = #tpu.dot_dimension_numbers<[1], [0], [0], [1], [0, 0, 1, 1], [], []>} : vector<4x4xf32>, vector<4x4xf32>, vector<4x4xf32> -> vector<4x4xf32>
    %254 = arith.addf %247, %253 : vector<4x4xf32>
    %c7_215 = arith.constant 7 : index
    %c0_216 = arith.constant 0 : index
    %c0_217 = arith.constant 0 : index
    %255 = vector.load %arg8[%c7_215, %c0_216, %c0_217] : memref<9x4x4xf32, #tpu.memory_space<vmem>>, vector<1x4x4xf32>
    %256 = vector.shape_cast %255 : vector<1x4x4xf32> to vector<4x4xf32>
    %cst_218 = arith.constant dense<0.000000e+00> : vector<4x4xf32>
    %257 = tpu.matmul %203, %256, %cst_218 {dimension_numbers = #tpu.dot_dimension_numbers<[1], [0], [0], [1], [0, 0, 1, 1], [], []>} : vector<4x4xf32>, vector<4x4xf32>, vector<4x4xf32> -> vector<4x4xf32>
    %c7_219 = arith.constant 7 : index
    %c0_220 = arith.constant 0 : index
    %c0_221 = arith.constant 0 : index
    %258 = vector.load %arg9[%c7_219, %c0_220, %c0_221] : memref<9x4x4xf32, #tpu.memory_space<vmem>>, vector<1x4x4xf32>
    %259 = vector.shape_cast %258 : vector<1x4x4xf32> to vector<4x4xf32>
    %cst_222 = arith.constant dense<0.000000e+00> : vector<4x4xf32>
    %260 = tpu.matmul %259, %257, %cst_222 {dimension_numbers = #tpu.dot_dimension_numbers<[1], [0], [0], [1], [0, 0, 1, 1], [], []>} : vector<4x4xf32>, vector<4x4xf32>, vector<4x4xf32> -> vector<4x4xf32>
    %261 = arith.addf %254, %260 : vector<4x4xf32>
    %c8_223 = arith.constant 8 : index
    %c0_224 = arith.constant 0 : index
    %c0_225 = arith.constant 0 : index
    %262 = vector.load %arg8[%c8_223, %c0_224, %c0_225] : memref<9x4x4xf32, #tpu.memory_space<vmem>>, vector<1x4x4xf32>
    %263 = vector.shape_cast %262 : vector<1x4x4xf32> to vector<4x4xf32>
    %cst_226 = arith.constant dense<0.000000e+00> : vector<4x4xf32>
    %264 = tpu.matmul %203, %263, %cst_226 {dimension_numbers = #tpu.dot_dimension_numbers<[1], [0], [0], [1], [0, 0, 1, 1], [], []>} : vector<4x4xf32>, vector<4x4xf32>, vector<4x4xf32> -> vector<4x4xf32>
    %c8_227 = arith.constant 8 : index
    %c0_228 = arith.constant 0 : index
    %c0_229 = arith.constant 0 : index
    %265 = vector.load %arg9[%c8_227, %c0_228, %c0_229] : memref<9x4x4xf32, #tpu.memory_space<vmem>>, vector<1x4x4xf32>
    %266 = vector.shape_cast %265 : vector<1x4x4xf32> to vector<4x4xf32>
    %cst_230 = arith.constant dense<0.000000e+00> : vector<4x4xf32>
    %267 = tpu.matmul %266, %264, %cst_230 {dimension_numbers = #tpu.dot_dimension_numbers<[1], [0], [0], [1], [0, 0, 1, 1], [], []>} : vector<4x4xf32>, vector<4x4xf32>, vector<4x4xf32> -> vector<4x4xf32>
    %268 = arith.addf %261, %267 : vector<4x4xf32>
    %cst_231 = arith.constant 0.000000e+00 : f32
    %269 = vector.broadcast %cst_231 : f32 to vector<4x4xf32>
    %270 = arith.maximumf %268, %269 : vector<4x4xf32>
    %c0_232 = arith.constant 0 : index
    %c0_233 = arith.constant 0 : index
    %271 = vector.load %arg12[%c0_232, %c0_233] : memref<4x1xf32, #tpu.memory_space<vmem>>, vector<4x1xf32>
    %c0_234 = arith.constant 0 : index
    %c0_235 = arith.constant 0 : index
    %c0_236 = arith.constant 0 : index
    %272 = vector.load %arg8[%c0_234, %c0_235, %c0_236] : memref<9x4x4xf32, #tpu.memory_space<vmem>>, vector<1x4x4xf32>
    %273 = vector.shape_cast %272 : vector<1x4x4xf32> to vector<4x4xf32>
    %cst_237 = arith.constant dense<0.000000e+00> : vector<4x4xf32>
    %274 = tpu.matmul %270, %273, %cst_237 {dimension_numbers = #tpu.dot_dimension_numbers<[1], [0], [0], [1], [0, 0, 1, 1], [], []>} : vector<4x4xf32>, vector<4x4xf32>, vector<4x4xf32> -> vector<4x4xf32>
    %c0_238 = arith.constant 0 : index
    %c0_239 = arith.constant 0 : index
    %c0_240 = arith.constant 0 : index
    %275 = vector.load %arg11[%c0_238, %c0_239, %c0_240] : memref<9x4x4xf32, #tpu.memory_space<vmem>>, vector<1x4x4xf32>
    %276 = vector.shape_cast %275 : vector<1x4x4xf32> to vector<4x4xf32>
    %cst_241 = arith.constant dense<0.000000e+00> : vector<4x4xf32>
    %277 = tpu.matmul %276, %274, %cst_241 {dimension_numbers = #tpu.dot_dimension_numbers<[1], [0], [0], [1], [0, 0, 1, 1], [], []>} : vector<4x4xf32>, vector<4x4xf32>, vector<4x4xf32> -> vector<4x4xf32>
    %278 = vector.broadcast %271 : vector<4x1xf32> to vector<4x4xf32>
    %279 = arith.addf %278, %277 : vector<4x4xf32>
    %c1_242 = arith.constant 1 : index
    %c0_243 = arith.constant 0 : index
    %c0_244 = arith.constant 0 : index
    %280 = vector.load %arg8[%c1_242, %c0_243, %c0_244] : memref<9x4x4xf32, #tpu.memory_space<vmem>>, vector<1x4x4xf32>
    %281 = vector.shape_cast %280 : vector<1x4x4xf32> to vector<4x4xf32>
    %cst_245 = arith.constant dense<0.000000e+00> : vector<4x4xf32>
    %282 = tpu.matmul %270, %281, %cst_245 {dimension_numbers = #tpu.dot_dimension_numbers<[1], [0], [0], [1], [0, 0, 1, 1], [], []>} : vector<4x4xf32>, vector<4x4xf32>, vector<4x4xf32> -> vector<4x4xf32>
    %c1_246 = arith.constant 1 : index
    %c0_247 = arith.constant 0 : index
    %c0_248 = arith.constant 0 : index
    %283 = vector.load %arg11[%c1_246, %c0_247, %c0_248] : memref<9x4x4xf32, #tpu.memory_space<vmem>>, vector<1x4x4xf32>
    %284 = vector.shape_cast %283 : vector<1x4x4xf32> to vector<4x4xf32>
    %cst_249 = arith.constant dense<0.000000e+00> : vector<4x4xf32>
    %285 = tpu.matmul %284, %282, %cst_249 {dimension_numbers = #tpu.dot_dimension_numbers<[1], [0], [0], [1], [0, 0, 1, 1], [], []>} : vector<4x4xf32>, vector<4x4xf32>, vector<4x4xf32> -> vector<4x4xf32>
    %286 = arith.addf %279, %285 : vector<4x4xf32>
    %c2_250 = arith.constant 2 : index
    %c0_251 = arith.constant 0 : index
    %c0_252 = arith.constant 0 : index
    %287 = vector.load %arg8[%c2_250, %c0_251, %c0_252] : memref<9x4x4xf32, #tpu.memory_space<vmem>>, vector<1x4x4xf32>
    %288 = vector.shape_cast %287 : vector<1x4x4xf32> to vector<4x4xf32>
    %cst_253 = arith.constant dense<0.000000e+00> : vector<4x4xf32>
    %289 = tpu.matmul %270, %288, %cst_253 {dimension_numbers = #tpu.dot_dimension_numbers<[1], [0], [0], [1], [0, 0, 1, 1], [], []>} : vector<4x4xf32>, vector<4x4xf32>, vector<4x4xf32> -> vector<4x4xf32>
    %c2_254 = arith.constant 2 : index
    %c0_255 = arith.constant 0 : index
    %c0_256 = arith.constant 0 : index
    %290 = vector.load %arg11[%c2_254, %c0_255, %c0_256] : memref<9x4x4xf32, #tpu.memory_space<vmem>>, vector<1x4x4xf32>
    %291 = vector.shape_cast %290 : vector<1x4x4xf32> to vector<4x4xf32>
    %cst_257 = arith.constant dense<0.000000e+00> : vector<4x4xf32>
    %292 = tpu.matmul %291, %289, %cst_257 {dimension_numbers = #tpu.dot_dimension_numbers<[1], [0], [0], [1], [0, 0, 1, 1], [], []>} : vector<4x4xf32>, vector<4x4xf32>, vector<4x4xf32> -> vector<4x4xf32>
    %293 = arith.addf %286, %292 : vector<4x4xf32>
    %c3_258 = arith.constant 3 : index
    %c0_259 = arith.constant 0 : index
    %c0_260 = arith.constant 0 : index
    %294 = vector.load %arg8[%c3_258, %c0_259, %c0_260] : memref<9x4x4xf32, #tpu.memory_space<vmem>>, vector<1x4x4xf32>
    %295 = vector.shape_cast %294 : vector<1x4x4xf32> to vector<4x4xf32>
    %cst_261 = arith.constant dense<0.000000e+00> : vector<4x4xf32>
    %296 = tpu.matmul %270, %295, %cst_261 {dimension_numbers = #tpu.dot_dimension_numbers<[1], [0], [0], [1], [0, 0, 1, 1], [], []>} : vector<4x4xf32>, vector<4x4xf32>, vector<4x4xf32> -> vector<4x4xf32>
    %c3_262 = arith.constant 3 : index
    %c0_263 = arith.constant 0 : index
    %c0_264 = arith.constant 0 : index
    %297 = vector.load %arg11[%c3_262, %c0_263, %c0_264] : memref<9x4x4xf32, #tpu.memory_space<vmem>>, vector<1x4x4xf32>
    %298 = vector.shape_cast %297 : vector<1x4x4xf32> to vector<4x4xf32>
    %cst_265 = arith.constant dense<0.000000e+00> : vector<4x4xf32>
    %299 = tpu.matmul %298, %296, %cst_265 {dimension_numbers = #tpu.dot_dimension_numbers<[1], [0], [0], [1], [0, 0, 1, 1], [], []>} : vector<4x4xf32>, vector<4x4xf32>, vector<4x4xf32> -> vector<4x4xf32>
    %300 = arith.addf %293, %299 : vector<4x4xf32>
    %c4_266 = arith.constant 4 : index
    %c0_267 = arith.constant 0 : index
    %c0_268 = arith.constant 0 : index
    %301 = vector.load %arg8[%c4_266, %c0_267, %c0_268] : memref<9x4x4xf32, #tpu.memory_space<vmem>>, vector<1x4x4xf32>
    %302 = vector.shape_cast %301 : vector<1x4x4xf32> to vector<4x4xf32>
    %cst_269 = arith.constant dense<0.000000e+00> : vector<4x4xf32>
    %303 = tpu.matmul %270, %302, %cst_269 {dimension_numbers = #tpu.dot_dimension_numbers<[1], [0], [0], [1], [0, 0, 1, 1], [], []>} : vector<4x4xf32>, vector<4x4xf32>, vector<4x4xf32> -> vector<4x4xf32>
    %c4_270 = arith.constant 4 : index
    %c0_271 = arith.constant 0 : index
    %c0_272 = arith.constant 0 : index
    %304 = vector.load %arg11[%c4_270, %c0_271, %c0_272] : memref<9x4x4xf32, #tpu.memory_space<vmem>>, vector<1x4x4xf32>
    %305 = vector.shape_cast %304 : vector<1x4x4xf32> to vector<4x4xf32>
    %cst_273 = arith.constant dense<0.000000e+00> : vector<4x4xf32>
    %306 = tpu.matmul %305, %303, %cst_273 {dimension_numbers = #tpu.dot_dimension_numbers<[1], [0], [0], [1], [0, 0, 1, 1], [], []>} : vector<4x4xf32>, vector<4x4xf32>, vector<4x4xf32> -> vector<4x4xf32>
    %307 = arith.addf %300, %306 : vector<4x4xf32>
    %c5_274 = arith.constant 5 : index
    %c0_275 = arith.constant 0 : index
    %c0_276 = arith.constant 0 : index
    %308 = vector.load %arg8[%c5_274, %c0_275, %c0_276] : memref<9x4x4xf32, #tpu.memory_space<vmem>>, vector<1x4x4xf32>
    %309 = vector.shape_cast %308 : vector<1x4x4xf32> to vector<4x4xf32>
    %cst_277 = arith.constant dense<0.000000e+00> : vector<4x4xf32>
    %310 = tpu.matmul %270, %309, %cst_277 {dimension_numbers = #tpu.dot_dimension_numbers<[1], [0], [0], [1], [0, 0, 1, 1], [], []>} : vector<4x4xf32>, vector<4x4xf32>, vector<4x4xf32> -> vector<4x4xf32>
    %c5_278 = arith.constant 5 : index
    %c0_279 = arith.constant 0 : index
    %c0_280 = arith.constant 0 : index
    %311 = vector.load %arg11[%c5_278, %c0_279, %c0_280] : memref<9x4x4xf32, #tpu.memory_space<vmem>>, vector<1x4x4xf32>
    %312 = vector.shape_cast %311 : vector<1x4x4xf32> to vector<4x4xf32>
    %cst_281 = arith.constant dense<0.000000e+00> : vector<4x4xf32>
    %313 = tpu.matmul %312, %310, %cst_281 {dimension_numbers = #tpu.dot_dimension_numbers<[1], [0], [0], [1], [0, 0, 1, 1], [], []>} : vector<4x4xf32>, vector<4x4xf32>, vector<4x4xf32> -> vector<4x4xf32>
    %314 = arith.addf %307, %313 : vector<4x4xf32>
    %c6_282 = arith.constant 6 : index
    %c0_283 = arith.constant 0 : index
    %c0_284 = arith.constant 0 : index
    %315 = vector.load %arg8[%c6_282, %c0_283, %c0_284] : memref<9x4x4xf32, #tpu.memory_space<vmem>>, vector<1x4x4xf32>
    %316 = vector.shape_cast %315 : vector<1x4x4xf32> to vector<4x4xf32>
    %cst_285 = arith.constant dense<0.000000e+00> : vector<4x4xf32>
    %317 = tpu.matmul %270, %316, %cst_285 {dimension_numbers = #tpu.dot_dimension_numbers<[1], [0], [0], [1], [0, 0, 1, 1], [], []>} : vector<4x4xf32>, vector<4x4xf32>, vector<4x4xf32> -> vector<4x4xf32>
    %c6_286 = arith.constant 6 : index
    %c0_287 = arith.constant 0 : index
    %c0_288 = arith.constant 0 : index
    %318 = vector.load %arg11[%c6_286, %c0_287, %c0_288] : memref<9x4x4xf32, #tpu.memory_space<vmem>>, vector<1x4x4xf32>
    %319 = vector.shape_cast %318 : vector<1x4x4xf32> to vector<4x4xf32>
    %cst_289 = arith.constant dense<0.000000e+00> : vector<4x4xf32>
    %320 = tpu.matmul %319, %317, %cst_289 {dimension_numbers = #tpu.dot_dimension_numbers<[1], [0], [0], [1], [0, 0, 1, 1], [], []>} : vector<4x4xf32>, vector<4x4xf32>, vector<4x4xf32> -> vector<4x4xf32>
    %321 = arith.addf %314, %320 : vector<4x4xf32>
    %c7_290 = arith.constant 7 : index
    %c0_291 = arith.constant 0 : index
    %c0_292 = arith.constant 0 : index
    %322 = vector.load %arg8[%c7_290, %c0_291, %c0_292] : memref<9x4x4xf32, #tpu.memory_space<vmem>>, vector<1x4x4xf32>
    %323 = vector.shape_cast %322 : vector<1x4x4xf32> to vector<4x4xf32>
    %cst_293 = arith.constant dense<0.000000e+00> : vector<4x4xf32>
    %324 = tpu.matmul %270, %323, %cst_293 {dimension_numbers = #tpu.dot_dimension_numbers<[1], [0], [0], [1], [0, 0, 1, 1], [], []>} : vector<4x4xf32>, vector<4x4xf32>, vector<4x4xf32> -> vector<4x4xf32>
    %c7_294 = arith.constant 7 : index
    %c0_295 = arith.constant 0 : index
    %c0_296 = arith.constant 0 : index
    %325 = vector.load %arg11[%c7_294, %c0_295, %c0_296] : memref<9x4x4xf32, #tpu.memory_space<vmem>>, vector<1x4x4xf32>
    %326 = vector.shape_cast %325 : vector<1x4x4xf32> to vector<4x4xf32>
    %cst_297 = arith.constant dense<0.000000e+00> : vector<4x4xf32>
    %327 = tpu.matmul %326, %324, %cst_297 {dimension_numbers = #tpu.dot_dimension_numbers<[1], [0], [0], [1], [0, 0, 1, 1], [], []>} : vector<4x4xf32>, vector<4x4xf32>, vector<4x4xf32> -> vector<4x4xf32>
    %328 = arith.addf %321, %327 : vector<4x4xf32>
    %c8_298 = arith.constant 8 : index
    %c0_299 = arith.constant 0 : index
    %c0_300 = arith.constant 0 : index
    %329 = vector.load %arg8[%c8_298, %c0_299, %c0_300] : memref<9x4x4xf32, #tpu.memory_space<vmem>>, vector<1x4x4xf32>
    %330 = vector.shape_cast %329 : vector<1x4x4xf32> to vector<4x4xf32>
    %cst_301 = arith.constant dense<0.000000e+00> : vector<4x4xf32>
    %331 = tpu.matmul %270, %330, %cst_301 {dimension_numbers = #tpu.dot_dimension_numbers<[1], [0], [0], [1], [0, 0, 1, 1], [], []>} : vector<4x4xf32>, vector<4x4xf32>, vector<4x4xf32> -> vector<4x4xf32>
    %c8_302 = arith.constant 8 : index
    %c0_303 = arith.constant 0 : index
    %c0_304 = arith.constant 0 : index
    %332 = vector.load %arg11[%c8_302, %c0_303, %c0_304] : memref<9x4x4xf32, #tpu.memory_space<vmem>>, vector<1x4x4xf32>
    %333 = vector.shape_cast %332 : vector<1x4x4xf32> to vector<4x4xf32>
    %cst_305 = arith.constant dense<0.000000e+00> : vector<4x4xf32>
    %334 = tpu.matmul %333, %331, %cst_305 {dimension_numbers = #tpu.dot_dimension_numbers<[1], [0], [0], [1], [0, 0, 1, 1], [], []>} : vector<4x4xf32>, vector<4x4xf32>, vector<4x4xf32> -> vector<4x4xf32>
    %335 = arith.addf %328, %334 : vector<4x4xf32>
    %cst_306 = arith.constant 0.000000e+00 : f32
    %336 = vector.broadcast %cst_306 : f32 to vector<4x4xf32>
    %337 = arith.maximumf %335, %336 : vector<4x4xf32>
    %c0_307 = arith.constant 0 : index
    %c0_308 = arith.constant 0 : index
    %338 = vector.load %arg14[%c0_307, %c0_308] : memref<4x1xf32, #tpu.memory_space<vmem>>, vector<4x1xf32>
    %c0_309 = arith.constant 0 : index
    %c0_310 = arith.constant 0 : index
    %c0_311 = arith.constant 0 : index
    %339 = vector.load %arg8[%c0_309, %c0_310, %c0_311] : memref<9x4x4xf32, #tpu.memory_space<vmem>>, vector<1x4x4xf32>
    %340 = vector.shape_cast %339 : vector<1x4x4xf32> to vector<4x4xf32>
    %cst_312 = arith.constant dense<0.000000e+00> : vector<4x4xf32>
    %341 = tpu.matmul %337, %340, %cst_312 {dimension_numbers = #tpu.dot_dimension_numbers<[1], [0], [0], [1], [0, 0, 1, 1], [], []>} : vector<4x4xf32>, vector<4x4xf32>, vector<4x4xf32> -> vector<4x4xf32>
    %c0_313 = arith.constant 0 : index
    %c0_314 = arith.constant 0 : index
    %c0_315 = arith.constant 0 : index
    %342 = vector.load %arg13[%c0_313, %c0_314, %c0_315] : memref<9x4x4xf32, #tpu.memory_space<vmem>>, vector<1x4x4xf32>
    %343 = vector.shape_cast %342 : vector<1x4x4xf32> to vector<4x4xf32>
    %cst_316 = arith.constant dense<0.000000e+00> : vector<4x4xf32>
    %344 = tpu.matmul %343, %341, %cst_316 {dimension_numbers = #tpu.dot_dimension_numbers<[1], [0], [0], [1], [0, 0, 1, 1], [], []>} : vector<4x4xf32>, vector<4x4xf32>, vector<4x4xf32> -> vector<4x4xf32>
    %345 = vector.broadcast %338 : vector<4x1xf32> to vector<4x4xf32>
    %346 = arith.addf %345, %344 : vector<4x4xf32>
    %c1_317 = arith.constant 1 : index
    %c0_318 = arith.constant 0 : index
    %c0_319 = arith.constant 0 : index
    %347 = vector.load %arg8[%c1_317, %c0_318, %c0_319] : memref<9x4x4xf32, #tpu.memory_space<vmem>>, vector<1x4x4xf32>
    %348 = vector.shape_cast %347 : vector<1x4x4xf32> to vector<4x4xf32>
    %cst_320 = arith.constant dense<0.000000e+00> : vector<4x4xf32>
    %349 = tpu.matmul %337, %348, %cst_320 {dimension_numbers = #tpu.dot_dimension_numbers<[1], [0], [0], [1], [0, 0, 1, 1], [], []>} : vector<4x4xf32>, vector<4x4xf32>, vector<4x4xf32> -> vector<4x4xf32>
    %c1_321 = arith.constant 1 : index
    %c0_322 = arith.constant 0 : index
    %c0_323 = arith.constant 0 : index
    %350 = vector.load %arg13[%c1_321, %c0_322, %c0_323] : memref<9x4x4xf32, #tpu.memory_space<vmem>>, vector<1x4x4xf32>
    %351 = vector.shape_cast %350 : vector<1x4x4xf32> to vector<4x4xf32>
    %cst_324 = arith.constant dense<0.000000e+00> : vector<4x4xf32>
    %352 = tpu.matmul %351, %349, %cst_324 {dimension_numbers = #tpu.dot_dimension_numbers<[1], [0], [0], [1], [0, 0, 1, 1], [], []>} : vector<4x4xf32>, vector<4x4xf32>, vector<4x4xf32> -> vector<4x4xf32>
    %353 = arith.addf %346, %352 : vector<4x4xf32>
    %c2_325 = arith.constant 2 : index
    %c0_326 = arith.constant 0 : index
    %c0_327 = arith.constant 0 : index
    %354 = vector.load %arg8[%c2_325, %c0_326, %c0_327] : memref<9x4x4xf32, #tpu.memory_space<vmem>>, vector<1x4x4xf32>
    %355 = vector.shape_cast %354 : vector<1x4x4xf32> to vector<4x4xf32>
    %cst_328 = arith.constant dense<0.000000e+00> : vector<4x4xf32>
    %356 = tpu.matmul %337, %355, %cst_328 {dimension_numbers = #tpu.dot_dimension_numbers<[1], [0], [0], [1], [0, 0, 1, 1], [], []>} : vector<4x4xf32>, vector<4x4xf32>, vector<4x4xf32> -> vector<4x4xf32>
    %c2_329 = arith.constant 2 : index
    %c0_330 = arith.constant 0 : index
    %c0_331 = arith.constant 0 : index
    %357 = vector.load %arg13[%c2_329, %c0_330, %c0_331] : memref<9x4x4xf32, #tpu.memory_space<vmem>>, vector<1x4x4xf32>
    %358 = vector.shape_cast %357 : vector<1x4x4xf32> to vector<4x4xf32>
    %cst_332 = arith.constant dense<0.000000e+00> : vector<4x4xf32>
    %359 = tpu.matmul %358, %356, %cst_332 {dimension_numbers = #tpu.dot_dimension_numbers<[1], [0], [0], [1], [0, 0, 1, 1], [], []>} : vector<4x4xf32>, vector<4x4xf32>, vector<4x4xf32> -> vector<4x4xf32>
    %360 = arith.addf %353, %359 : vector<4x4xf32>
    %c3_333 = arith.constant 3 : index
    %c0_334 = arith.constant 0 : index
    %c0_335 = arith.constant 0 : index
    %361 = vector.load %arg8[%c3_333, %c0_334, %c0_335] : memref<9x4x4xf32, #tpu.memory_space<vmem>>, vector<1x4x4xf32>
    %362 = vector.shape_cast %361 : vector<1x4x4xf32> to vector<4x4xf32>
    %cst_336 = arith.constant dense<0.000000e+00> : vector<4x4xf32>
    %363 = tpu.matmul %337, %362, %cst_336 {dimension_numbers = #tpu.dot_dimension_numbers<[1], [0], [0], [1], [0, 0, 1, 1], [], []>} : vector<4x4xf32>, vector<4x4xf32>, vector<4x4xf32> -> vector<4x4xf32>
    %c3_337 = arith.constant 3 : index
    %c0_338 = arith.constant 0 : index
    %c0_339 = arith.constant 0 : index
    %364 = vector.load %arg13[%c3_337, %c0_338, %c0_339] : memref<9x4x4xf32, #tpu.memory_space<vmem>>, vector<1x4x4xf32>
    %365 = vector.shape_cast %364 : vector<1x4x4xf32> to vector<4x4xf32>
    %cst_340 = arith.constant dense<0.000000e+00> : vector<4x4xf32>
    %366 = tpu.matmul %365, %363, %cst_340 {dimension_numbers = #tpu.dot_dimension_numbers<[1], [0], [0], [1], [0, 0, 1, 1], [], []>} : vector<4x4xf32>, vector<4x4xf32>, vector<4x4xf32> -> vector<4x4xf32>
    %367 = arith.addf %360, %366 : vector<4x4xf32>
    %c4_341 = arith.constant 4 : index
    %c0_342 = arith.constant 0 : index
    %c0_343 = arith.constant 0 : index
    %368 = vector.load %arg8[%c4_341, %c0_342, %c0_343] : memref<9x4x4xf32, #tpu.memory_space<vmem>>, vector<1x4x4xf32>
    %369 = vector.shape_cast %368 : vector<1x4x4xf32> to vector<4x4xf32>
    %cst_344 = arith.constant dense<0.000000e+00> : vector<4x4xf32>
    %370 = tpu.matmul %337, %369, %cst_344 {dimension_numbers = #tpu.dot_dimension_numbers<[1], [0], [0], [1], [0, 0, 1, 1], [], []>} : vector<4x4xf32>, vector<4x4xf32>, vector<4x4xf32> -> vector<4x4xf32>
    %c4_345 = arith.constant 4 : index
    %c0_346 = arith.constant 0 : index
    %c0_347 = arith.constant 0 : index
    %371 = vector.load %arg13[%c4_345, %c0_346, %c0_347] : memref<9x4x4xf32, #tpu.memory_space<vmem>>, vector<1x4x4xf32>
    %372 = vector.shape_cast %371 : vector<1x4x4xf32> to vector<4x4xf32>
    %cst_348 = arith.constant dense<0.000000e+00> : vector<4x4xf32>
    %373 = tpu.matmul %372, %370, %cst_348 {dimension_numbers = #tpu.dot_dimension_numbers<[1], [0], [0], [1], [0, 0, 1, 1], [], []>} : vector<4x4xf32>, vector<4x4xf32>, vector<4x4xf32> -> vector<4x4xf32>
    %374 = arith.addf %367, %373 : vector<4x4xf32>
    %c5_349 = arith.constant 5 : index
    %c0_350 = arith.constant 0 : index
    %c0_351 = arith.constant 0 : index
    %375 = vector.load %arg8[%c5_349, %c0_350, %c0_351] : memref<9x4x4xf32, #tpu.memory_space<vmem>>, vector<1x4x4xf32>
    %376 = vector.shape_cast %375 : vector<1x4x4xf32> to vector<4x4xf32>
    %cst_352 = arith.constant dense<0.000000e+00> : vector<4x4xf32>
    %377 = tpu.matmul %337, %376, %cst_352 {dimension_numbers = #tpu.dot_dimension_numbers<[1], [0], [0], [1], [0, 0, 1, 1], [], []>} : vector<4x4xf32>, vector<4x4xf32>, vector<4x4xf32> -> vector<4x4xf32>
    %c5_353 = arith.constant 5 : index
    %c0_354 = arith.constant 0 : index
    %c0_355 = arith.constant 0 : index
    %378 = vector.load %arg13[%c5_353, %c0_354, %c0_355] : memref<9x4x4xf32, #tpu.memory_space<vmem>>, vector<1x4x4xf32>
    %379 = vector.shape_cast %378 : vector<1x4x4xf32> to vector<4x4xf32>
    %cst_356 = arith.constant dense<0.000000e+00> : vector<4x4xf32>
    %380 = tpu.matmul %379, %377, %cst_356 {dimension_numbers = #tpu.dot_dimension_numbers<[1], [0], [0], [1], [0, 0, 1, 1], [], []>} : vector<4x4xf32>, vector<4x4xf32>, vector<4x4xf32> -> vector<4x4xf32>
    %381 = arith.addf %374, %380 : vector<4x4xf32>
    %c6_357 = arith.constant 6 : index
    %c0_358 = arith.constant 0 : index
    %c0_359 = arith.constant 0 : index
    %382 = vector.load %arg8[%c6_357, %c0_358, %c0_359] : memref<9x4x4xf32, #tpu.memory_space<vmem>>, vector<1x4x4xf32>
    %383 = vector.shape_cast %382 : vector<1x4x4xf32> to vector<4x4xf32>
    %cst_360 = arith.constant dense<0.000000e+00> : vector<4x4xf32>
    %384 = tpu.matmul %337, %383, %cst_360 {dimension_numbers = #tpu.dot_dimension_numbers<[1], [0], [0], [1], [0, 0, 1, 1], [], []>} : vector<4x4xf32>, vector<4x4xf32>, vector<4x4xf32> -> vector<4x4xf32>
    %c6_361 = arith.constant 6 : index
    %c0_362 = arith.constant 0 : index
    %c0_363 = arith.constant 0 : index
    %385 = vector.load %arg13[%c6_361, %c0_362, %c0_363] : memref<9x4x4xf32, #tpu.memory_space<vmem>>, vector<1x4x4xf32>
    %386 = vector.shape_cast %385 : vector<1x4x4xf32> to vector<4x4xf32>
    %cst_364 = arith.constant dense<0.000000e+00> : vector<4x4xf32>
    %387 = tpu.matmul %386, %384, %cst_364 {dimension_numbers = #tpu.dot_dimension_numbers<[1], [0], [0], [1], [0, 0, 1, 1], [], []>} : vector<4x4xf32>, vector<4x4xf32>, vector<4x4xf32> -> vector<4x4xf32>
    %388 = arith.addf %381, %387 : vector<4x4xf32>
    %c7_365 = arith.constant 7 : index
    %c0_366 = arith.constant 0 : index
    %c0_367 = arith.constant 0 : index
    %389 = vector.load %arg8[%c7_365, %c0_366, %c0_367] : memref<9x4x4xf32, #tpu.memory_space<vmem>>, vector<1x4x4xf32>
    %390 = vector.shape_cast %389 : vector<1x4x4xf32> to vector<4x4xf32>
    %cst_368 = arith.constant dense<0.000000e+00> : vector<4x4xf32>
    %391 = tpu.matmul %337, %390, %cst_368 {dimension_numbers = #tpu.dot_dimension_numbers<[1], [0], [0], [1], [0, 0, 1, 1], [], []>} : vector<4x4xf32>, vector<4x4xf32>, vector<4x4xf32> -> vector<4x4xf32>
    %c7_369 = arith.constant 7 : index
    %c0_370 = arith.constant 0 : index
    %c0_371 = arith.constant 0 : index
    %392 = vector.load %arg13[%c7_369, %c0_370, %c0_371] : memref<9x4x4xf32, #tpu.memory_space<vmem>>, vector<1x4x4xf32>
    %393 = vector.shape_cast %392 : vector<1x4x4xf32> to vector<4x4xf32>
    %cst_372 = arith.constant dense<0.000000e+00> : vector<4x4xf32>
    %394 = tpu.matmul %393, %391, %cst_372 {dimension_numbers = #tpu.dot_dimension_numbers<[1], [0], [0], [1], [0, 0, 1, 1], [], []>} : vector<4x4xf32>, vector<4x4xf32>, vector<4x4xf32> -> vector<4x4xf32>
    %395 = arith.addf %388, %394 : vector<4x4xf32>
    %c8_373 = arith.constant 8 : index
    %c0_374 = arith.constant 0 : index
    %c0_375 = arith.constant 0 : index
    %396 = vector.load %arg8[%c8_373, %c0_374, %c0_375] : memref<9x4x4xf32, #tpu.memory_space<vmem>>, vector<1x4x4xf32>
    %397 = vector.shape_cast %396 : vector<1x4x4xf32> to vector<4x4xf32>
    %cst_376 = arith.constant dense<0.000000e+00> : vector<4x4xf32>
    %398 = tpu.matmul %337, %397, %cst_376 {dimension_numbers = #tpu.dot_dimension_numbers<[1], [0], [0], [1], [0, 0, 1, 1], [], []>} : vector<4x4xf32>, vector<4x4xf32>, vector<4x4xf32> -> vector<4x4xf32>
    %c8_377 = arith.constant 8 : index
    %c0_378 = arith.constant 0 : index
    %c0_379 = arith.constant 0 : index
    %399 = vector.load %arg13[%c8_377, %c0_378, %c0_379] : memref<9x4x4xf32, #tpu.memory_space<vmem>>, vector<1x4x4xf32>
    %400 = vector.shape_cast %399 : vector<1x4x4xf32> to vector<4x4xf32>
    %cst_380 = arith.constant dense<0.000000e+00> : vector<4x4xf32>
    %401 = tpu.matmul %400, %398, %cst_380 {dimension_numbers = #tpu.dot_dimension_numbers<[1], [0], [0], [1], [0, 0, 1, 1], [], []>} : vector<4x4xf32>, vector<4x4xf32>, vector<4x4xf32> -> vector<4x4xf32>
    %402 = arith.addf %395, %401 : vector<4x4xf32>
    %c0_381 = arith.constant 0 : index
    %c0_382 = arith.constant 0 : index
    %403 = vector.load %arg17[%c0_381, %c0_382] : memref<4x576xf32, #tpu.memory_space<vmem>>, vector<4x576xf32>
    %cst_383 = arith.constant dense<0.000000e+00> : vector<4x576xf32>
    %404 = tpu.matmul %402, %403, %cst_383 {dimension_numbers = #tpu.dot_dimension_numbers<[1], [0], [0], [1], [0, 0, 1, 1], [], []>} : vector<4x4xf32>, vector<4x576xf32>, vector<4x576xf32> -> vector<4x576xf32>
    %c0_384 = arith.constant 0 : index
    %c0_385 = arith.constant 0 : index
    %405 = vector.load %arg3[%c0_384, %c0_385] : memref<4x16xf32, #tpu.memory_space<vmem>>, vector<4x16xf32>
    %cst_386 = arith.constant dense<0.000000e+00> : vector<4x576xf32>
    %406 = tpu.matmul %405, %1, %cst_386 {dimension_numbers = #tpu.dot_dimension_numbers<[1], [0], [0], [1], [0, 0, 1, 1], [], []>} : vector<4x16xf32>, vector<16x576xf32>, vector<4x576xf32> -> vector<4x576xf32>
    %c0_387 = arith.constant 0 : index
    %c0_388 = arith.constant 0 : index
    %407 = vector.load %arg4[%c0_387, %c0_388] : memref<4x1xf32, #tpu.memory_space<vmem>>, vector<4x1xf32>
    %408 = vector.broadcast %407 : vector<4x1xf32> to vector<4x576xf32>
    %409 = arith.addf %406, %408 : vector<4x576xf32>
    %c0_389 = arith.constant 0 : index
    %c0_390 = arith.constant 0 : index
    %410 = vector.load %arg15[%c0_389, %c0_390] : memref<16x4xf32, #tpu.memory_space<vmem>>, vector<16x4xf32>
    %411 = arith.addf %404, %409 : vector<4x576xf32>
    %cst_391 = arith.constant dense<0.000000e+00> : vector<16x576xf32>
    %412 = tpu.matmul %410, %411, %cst_391 {dimension_numbers = #tpu.dot_dimension_numbers<[1], [0], [0], [1], [0, 0, 1, 1], [], []>} : vector<16x4xf32>, vector<4x576xf32>, vector<16x576xf32> -> vector<16x576xf32>
    %c0_392 = arith.constant 0 : index
    %c0_393 = arith.constant 0 : index
    %413 = vector.load %arg16[%c0_392, %c0_393] : memref<16x1xf32, #tpu.memory_space<vmem>>, vector<16x1xf32>
    %414 = vector.broadcast %413 : vector<16x1xf32> to vector<16x576xf32>
    %415 = arith.addf %412, %414 : vector<16x576xf32>
    %cst_394 = arith.constant 0.000000e+00 : f32
    %416 = vector.broadcast %cst_394 : f32 to vector<16x576xf32>
    %417 = arith.subf %416, %415 : vector<16x576xf32>
    %418 = math.exp %417 : vector<16x576xf32>
    %cst_395 = arith.constant 1.000000e+00 : f32
    %419 = vector.broadcast %cst_395 : f32 to vector<16x576xf32>
    %420 = arith.addf %419, %418 : vector<16x576xf32>
    %cst_396 = arith.constant 1.000000e+00 : f32
    %421 = vector.broadcast %cst_396 : f32 to vector<16x576xf32>
    %422 = arith.divf %421, %420 : vector<16x576xf32>
    %423 = arith.mulf %1, %422 : vector<16x576xf32>
    %c0_397 = arith.constant 0 : index
    %c0_398 = arith.constant 0 : index
    %c0_399 = arith.constant 0 : index
    %424 = vector.load %arg18[%c0_397, %c0_398, %c0_399] : memref<1x16x576xf32, #tpu.memory_space<vmem>>, vector<1x16x576xf32>
    %425 = vector.shape_cast %424 : vector<1x16x576xf32> to vector<16x576xf32>
    %426 = vector.shape_cast %423 : vector<16x576xf32> to vector<1x16x576xf32>
    tpu.vector_store %arg18[%c0_397, %c0_398, %c0_399], %426 {strides = array<i32>} : memref<1x16x576xf32, #tpu.memory_space<vmem>>, vector<1x16x576xf32>,
    return
  }
  func.func @transform_0(%arg0: i32) -> (i32, i32, i32) {
    %c0_i32 = arith.constant 0 : i32
    %c0_i32_0 = arith.constant 0 : i32
    %c0_i32_1 = arith.constant 0 : i32
    return %arg0, %c0_i32, %c0_i32_0 : i32, i32, i32
  }
  func.func @transform_1(%arg0: i32) -> (i32, i32, i32) {
    %c0_i32 = arith.constant 0 : i32
    %c0_i32_0 = arith.constant 0 : i32
    %c0_i32_1 = arith.constant 0 : i32
    return %arg0, %c0_i32, %c0_i32_0 : i32, i32, i32
  }
  func.func @transform_2(%arg0: i32) -> (i32, i32) {
    %c0_i32 = arith.constant 0 : i32
    %c0_i32_0 = arith.constant 0 : i32
    %c0_i32_1 = arith.constant 0 : i32
    return %c0_i32, %c0_i32_0 : i32, i32
  }
  func.func @transform_3(%arg0: i32) -> (i32, i32) {
    %c0_i32 = arith.constant 0 : i32
    %c0_i32_0 = arith.constant 0 : i32
    %c0_i32_1 = arith.constant 0 : i32
    return %c0_i32, %c0_i32_0 : i32, i32
  }
  func.func @transform_4(%arg0: i32) -> (i32, i32) {
    %c0_i32 = arith.constant 0 : i32
    %c0_i32_0 = arith.constant 0 : i32
    %c0_i32_1 = arith.constant 0 : i32
    return %c0_i32, %c0_i32_0 : i32, i32
  }
  func.func @transform_5(%arg0: i32) -> (i32, i32) {
    %c0_i32 = arith.constant 0 : i32
    %c0_i32_0 = arith.constant 0 : i32
    %c0_i32_1 = arith.constant 0 : i32
    return %c0_i32, %c0_i32_0 : i32, i32
  }
  func.func @transform_6(%arg0: i32) -> (i32, i32, i32) {
    %c0_i32 = arith.constant 0 : i32
    %c0_i32_0 = arith.constant 0 : i32
    %c0_i32_1 = arith.constant 0 : i32
    %c0_i32_2 = arith.constant 0 : i32
    return %c0_i32, %c0_i32_0, %c0_i32_1 : i32, i32, i32
  }
  func.func @transform_7(%arg0: i32) -> (i32, i32, i32) {
    %c0_i32 = arith.constant 0 : i32
    %c0_i32_0 = arith.constant 0 : i32
    %c0_i32_1 = arith.constant 0 : i32
    %c0_i32_2 = arith.constant 0 : i32
    return %c0_i32, %c0_i32_0, %c0_i32_1 : i32, i32, i32
  }
  func.func @transform_8(%arg0: i32) -> (i32, i32, i32) {
    %c0_i32 = arith.constant 0 : i32
    %c0_i32_0 = arith.constant 0 : i32
    %c0_i32_1 = arith.constant 0 : i32
    %c0_i32_2 = arith.constant 0 : i32
    return %c0_i32, %c0_i32_0, %c0_i32_1 : i32, i32, i32
  }
  func.func @transform_9(%arg0: i32) -> (i32, i32) {
    %c0_i32 = arith.constant 0 : i32
    %c0_i32_0 = arith.constant 0 : i32
    %c0_i32_1 = arith.constant 0 : i32
    return %c0_i32, %c0_i32_0 : i32, i32
  }
  func.func @transform_10(%arg0: i32) -> (i32, i32, i32) {
    %c0_i32 = arith.constant 0 : i32
    %c0_i32_0 = arith.constant 0 : i32
    %c0_i32_1 = arith.constant 0 : i32
    %c0_i32_2 = arith.constant 0 : i32
    return %c0_i32, %c0_i32_0, %c0_i32_1 : i32, i32, i32
  }
  func.func @transform_11(%arg0: i32) -> (i32, i32) {
    %c0_i32 = arith.constant 0 : i32
    %c0_i32_0 = arith.constant 0 : i32
    %c0_i32_1 = arith.constant 0 : i32
    return %c0_i32, %c0_i32_0 : i32, i32
  }
  func.func @transform_12(%arg0: i32) -> (i32, i32, i32) {
    %c0_i32 = arith.constant 0 : i32
    %c0_i32_0 = arith.constant 0 : i32
    %c0_i32_1 = arith.constant 0 : i32
    %c0_i32_2 = arith.constant 0 : i32
    return %c0_i32, %c0_i32_0, %c0_i32_1 : i32, i32, i32
  }
  func.func @transform_13(%arg0: i32) -> (i32, i32) {
    %c0_i32 = arith.constant 0 : i32
    %c0_i32_0 = arith.constant 0 : i32
    %c0_i32_1 = arith.constant 0 : i32
    return %c0_i32, %c0_i32_0 : i32, i32
  }
  func.func @transform_14(%arg0: i32) -> (i32, i32) {
    %c0_i32 = arith.constant 0 : i32
    %c0_i32_0 = arith.constant 0 : i32
    %c0_i32_1 = arith.constant 0 : i32
    return %c0_i32, %c0_i32_0 : i32, i32
  }
  func.func @transform_15(%arg0: i32) -> (i32, i32) {
    %c0_i32 = arith.constant 0 : i32
    %c0_i32_0 = arith.constant 0 : i32
    %c0_i32_1 = arith.constant 0 : i32
    return %c0_i32, %c0_i32_0 : i32, i32
  }
  func.func @transform_16(%arg0: i32) -> (i32, i32) {
    %c0_i32 = arith.constant 0 : i32
    %c0_i32_0 = arith.constant 0 : i32
    %c0_i32_1 = arith.constant 0 : i32
    return %c0_i32, %c0_i32_0 : i32, i32
  }
  func.func @transform_17(%arg0: i32) -> (i32, i32, i32) {
    %c0_i32 = arith.constant 0 : i32
    %c0_i32_0 = arith.constant 0 : i32
    %c0_i32_1 = arith.constant 0 : i32
    return %arg0, %c0_i32, %c0_i32_0 : i32, i32, i32
  }
}

</mosaic_0001>

<llo_original>
// kernel: esa_forward.1
$region0: #{esa_forward.1}
  #allocation0 [shape = 'u32[]', space=smem, size = 0x4, offset = 0x4, fixed_abs, tag = 'smem constant byte address 0x4 - core index']
  #allocation1 [shape = 'u32[144,128]{1,0:T(1,128)}', space=vmem, size = 0x12000, scoped, tag = 'internal scratch']
  %s0 = inlined_call_operand.vmem [shape: f32[2,16,576], index: 0, kind: input, shape index: {}]
  %s1 = inlined_call_operand.vmem [shape: f32[2,144,121], index: 1, kind: input, shape index: {}]
  %s2 = inlined_call_operand.vmem [shape: f32[4,16], index: 2, kind: input, shape index: {}]
  %s3 = inlined_call_operand.vmem [shape: f32[4,1], index: 3, kind: input, shape index: {}]
  %s4 = inlined_call_operand.vmem [shape: f32[4,144], index: 4, kind: input, shape index: {}]
  %s5 = inlined_call_operand.vmem [shape: f32[4,1], index: 5, kind: input, shape index: {}]
  %s6 = inlined_call_operand.vmem [shape: f32[49,121,4], index: 6, kind: input, shape index: {}]
  %s7 = inlined_call_operand.vmem [shape: f32[9,4,4], index: 7, kind: input, shape index: {}]
  %s8 = inlined_call_operand.vmem [shape: f32[9,4,4], index: 8, kind: input, shape index: {}]
  %s9 = inlined_call_operand.vmem [shape: f32[4,1], index: 9, kind: input, shape index: {}]
  %s10 = inlined_call_operand.vmem [shape: f32[9,4,4], index: 10, kind: input, shape index: {}]
  %s11 = inlined_call_operand.vmem [shape: f32[4,1], index: 11, kind: input, shape index: {}]
  %s12 = inlined_call_operand.vmem [shape: f32[9,4,4], index: 12, kind: input, shape index: {}]
  %s13 = inlined_call_operand.vmem [shape: f32[4,1], index: 13, kind: input, shape index: {}]
  %s14 = inlined_call_operand.vmem [shape: f32[16,4], index: 14, kind: input, shape index: {}]
  %s15 = inlined_call_operand.vmem [shape: f32[16,1], index: 15, kind: input, shape index: {}]
  %s16 = inlined_call_operand.vmem [shape: f32[4,576], index: 16, kind: input, shape index: {}]
  %s17 = inlined_call_operand.vmem [shape: f32[2,16,576], index: 17, kind: output, shape index: {}]
  %s18 = sld [smem:[#allocation0]]
  $region101: #{esa_forward.1} parent=0
    _
  %s20 = ssub.s32 1, %s18
  %s21 = scalar_select 0, %s20, %s18
  loop: start=0, step=1, limit=4
  $region2: #{esa_forward.1} parent=0 // loop_pre_header
    _
  $region3: #{esa_forward.1} parent=0 // loop_header
    %s23 = sphi 0, %s27
    %p24 = scmp.ge.s32.totalorder %s23, 4
    %s33 = sphi 0, %s35
    %s36 = sphi 0, %s33
    %s37 = sphi 0, %s36
    %s53 = sphi 0, %s37
    %s59 = sphi 0, %s61
    %s62 = sphi 0, %s59
    %s63 = sphi 0, %s62
    %s79 = sphi 0, %s63
    %s83 = sphi 0, %s83
    %s85 = sphi 0, %s83
    %s86 = sphi 0, %s85
    %s100 = sphi 0, %s86
    %s104 = sphi 0, %s104
    %s106 = sphi 0, %s104
    %s107 = sphi 0, %s106
    %s121 = sphi 0, %s107
    %s125 = sphi 0, %s125
    %s127 = sphi 0, %s125
    %s128 = sphi 0, %s127
    %s142 = sphi 0, %s128
    %s146 = sphi 0, %s146
    %s148 = sphi 0, %s146
    %s149 = sphi 0, %s148
    %s163 = sphi 0, %s149
    %s167 = sphi 0, %s167
    %s169 = sphi 0, %s167
    %s170 = sphi 0, %s169
    %s184 = sphi 0, %s170
    %s188 = sphi 0, %s188
    %s190 = sphi 0, %s188
    %s191 = sphi 0, %s190
    %s205 = sphi 0, %s191
    %s209 = sphi 0, %s209
    %s211 = sphi 0, %s209
    %s212 = sphi 0, %s211
    %s226 = sphi 0, %s212
    %s230 = sphi 0, %s230
    %s232 = sphi 0, %s230
    %s233 = sphi 0, %s232
    %s247 = sphi 0, %s233
    %s251 = sphi 0, %s251
    %s253 = sphi 0, %s251
    %s254 = sphi 0, %s253
    %s268 = sphi 0, %s254
    %s272 = sphi 0, %s272
    %s274 = sphi 0, %s272
    %s275 = sphi 0, %s274
    %s289 = sphi 0, %s275
    %s293 = sphi 0, %s293
    %s295 = sphi 0, %s293
    %s296 = sphi 0, %s295
    %s310 = sphi 0, %s296
    %s314 = sphi 0, %s314
    %s316 = sphi 0, %s314
    %s317 = sphi 0, %s316
    %s331 = sphi 0, %s317
    %s335 = sphi 0, %s335
    %s337 = sphi 0, %s335
    %s338 = sphi 0, %s337
    %s352 = sphi 0, %s338
    %s356 = sphi 0, %s356
    %s358 = sphi 0, %s356
    %s359 = sphi 0, %s358
    %s373 = sphi 0, %s359
    %s377 = sphi 0, %s377
    %s379 = sphi 0, %s377
    %s380 = sphi 0, %s379
    %s394 = sphi 0, %s380
    %s400 = sphi 0, %s402
    %s403 = sphi 0, %s400
    %s404 = sphi 0, %s403
    %s420 = sphi 0, %s404
  $region4: #{esa_forward.1} parent=0 // loop_header_branch
    %26 = sbr.rel (%p24) target = $region8
  $region5: #{esa_forward.1} parent=0 // loop_body
    %s28 = ssub.s32 %s23, 1
    %s29 = ssub.s32 %s23, 2
    %s30 = sadd.s32 %s23, 1
    %s31 = ssub.s32 %s23, %s30
    %p32 = scmp.eq.s32.totalorder %s31, 0
    %s34 = sadd.s32 %s33, 1
    %s35 = scalar_select %p32, %s33, %s34
    %p38 = pneg %p32
    %p39 = scmp.eq.s32.totalorder %s23, 1
    %p40 = por %p38, %p39
    %p41 = scmp.ne.s32.totalorder %s33, %s36
    %p42 = scmp.eq.s32.totalorder %s23, 0
    %p43 = por %p41, %p42
    %p44 = scmp.ne.s32.totalorder %s33, %s36
    %p45 = scmp.eq.s32.totalorder %s28, 1
    %p46 = por %p44, %p45
    %p47 = scmp.ne.s32.totalorder %s36, %s37
    %p48 = scmp.eq.s32.totalorder %s28, 0
    %p49 = por %p47, %p48
    %p50 = scmp.ne.s32.totalorder %s36, %s37
    %p51 = scmp.eq.s32.totalorder %s29, 1
    %p52 = por %p50, %p51
    %p54 = scmp.ne.s32.totalorder %s37, %s53
    %p55 = scmp.eq.s32.totalorder %s29, 0
    %p56 = por %p54, %p55
    %s57 = ssub.s32 %s23, %s30
    %p58 = scmp.eq.s32.totalorder %s57, 0
    %s60 = sadd.s32 %s59, 1
    %s61 = scalar_select %p58, %s59, %s60
    %p64 = pneg %p58
    %p65 = scmp.eq.s32.totalorder %s23, 1
    %p66 = por %p64, %p65
    %p67 = scmp.ne.s32.totalorder %s59, %s62
    %p68 = scmp.eq.s32.totalorder %s23, 0
    %p69 = por %p67, %p68
    %p70 = scmp.ne.s32.totalorder %s59, %s62
    %p71 = scmp.eq.s32.totalorder %s28, 1
    %p72 = por %p70, %p71
    %p73 = scmp.ne.s32.totalorder %s62, %s63
    %p74 = scmp.eq.s32.totalorder %s28, 0
    %p75 = por %p73, %p74
    %p76 = scmp.ne.s32.totalorder %s62, %s63
    %p77 = scmp.eq.s32.totalorder %s29, 1
    %p78 = por %p76, %p77
    %p80 = scmp.ne.s32.totalorder %s63, %s79
    %p81 = scmp.eq.s32.totalorder %s29, 0
    %p82 = por %p80, %p81
    %s84 = sadd.s32 %s83, 1
    %p87 = scmp.eq.s32.totalorder %s23, 1
    %p88 = scmp.ne.s32.totalorder %s83, %s85
    %p89 = scmp.eq.s32.totalorder %s23, 0
    %p90 = por %p88, %p89
    %p91 = scmp.ne.s32.totalorder %s83, %s85
    %p92 = scmp.eq.s32.totalorder %s28, 1
    %p93 = por %p91, %p92
    %p94 = scmp.ne.s32.totalorder %s85, %s86
    %p95 = scmp.eq.s32.totalorder %s28, 0
    %p96 = por %p94, %p95
    %p97 = scmp.ne.s32.totalorder %s85, %s86
    %p98 = scmp.eq.s32.totalorder %s29, 1
    %p99 = por %p97, %p98
    %p101 = scmp.ne.s32.totalorder %s86, %s100
    %p102 = scmp.eq.s32.totalorder %s29, 0
    %p103 = por %p101, %p102
    %s105 = sadd.s32 %s104, 1
    %p108 = scmp.eq.s32.totalorder %s23, 1
    %p109 = scmp.ne.s32.totalorder %s104, %s106
    %p110 = scmp.eq.s32.totalorder %s23, 0
    %p111 = por %p109, %p110
    %p112 = scmp.ne.s32.totalorder %s104, %s106
    %p113 = scmp.eq.s32.totalorder %s28, 1
    %p114 = por %p112, %p113
    %p115 = scmp.ne.s32.totalorder %s106, %s107
    %p116 = scmp.eq.s32.totalorder %s28, 0
    %p117 = por %p115, %p116
    %p118 = scmp.ne.s32.totalorder %s106, %s107
    %p119 = scmp.eq.s32.totalorder %s29, 1
    %p120 = por %p118, %p119
    %p122 = scmp.ne.s32.totalorder %s107, %s121
    %p123 = scmp.eq.s32.totalorder %s29, 0
    %p124 = por %p122, %p123
    %s126 = sadd.s32 %s125, 1
    %p129 = scmp.eq.s32.totalorder %s23, 1
    %p130 = scmp.ne.s32.totalorder %s125, %s127
    %p131 = scmp.eq.s32.totalorder %s23, 0
    %p132 = por %p130, %p131
    %p133 = scmp.ne.s32.totalorder %s125, %s127
    %p134 = scmp.eq.s32.totalorder %s28, 1
    %p135 = por %p133, %p134
    %p136 = scmp.ne.s32.totalorder %s127, %s128
    %p137 = scmp.eq.s32.totalorder %s28, 0
    %p138 = por %p136, %p137
    %p139 = scmp.ne.s32.totalorder %s127, %s128
    %p140 = scmp.eq.s32.totalorder %s29, 1
    %p141 = por %p139, %p140
    %p143 = scmp.ne.s32.totalorder %s128, %s142
    %p144 = scmp.eq.s32.totalorder %s29, 0
    %p145 = por %p143, %p144
    %s147 = sadd.s32 %s146, 1
    %p150 = scmp.eq.s32.totalorder %s23, 1
    %p151 = scmp.ne.s32.totalorder %s146, %s148
    %p152 = scmp.eq.s32.totalorder %s23, 0
    %p153 = por %p151, %p152
    %p154 = scmp.ne.s32.totalorder %s146, %s148
    %p155 = scmp.eq.s32.totalorder %s28, 1
    %p156 = por %p154, %p155
    %p157 = scmp.ne.s32.totalorder %s148, %s149
    %p158 = scmp.eq.s32.totalorder %s28, 0
    %p159 = por %p157, %p158
    %p160 = scmp.ne.s32.totalorder %s148, %s149
    %p161 = scmp.eq.s32.totalorder %s29, 1
    %p162 = por %p160, %p161
    %p164 = scmp.ne.s32.totalorder %s149, %s163
    %p165 = scmp.eq.s32.totalorder %s29, 0
    %p166 = por %p164, %p165
    %s168 = sadd.s32 %s167, 1
    %p171 = scmp.eq.s32.totalorder %s23, 1
    %p172 = scmp.ne.s32.totalorder %s167, %s169
    %p173 = scmp.eq.s32.totalorder %s23, 0
    %p174 = por %p172, %p173
    %p175 = scmp.ne.s32.totalorder %s167, %s169
    %p176 = scmp.eq.s32.totalorder %s28, 1
    %p177 = por %p175, %p176
    %p178 = scmp.ne.s32.totalorder %s169, %s170
    %p179 = scmp.eq.s32.totalorder %s28, 0
    %p180 = por %p178, %p179
    %p181 = scmp.ne.s32.totalorder %s169, %s170
    %p182 = scmp.eq.s32.totalorder %s29, 1
    %p183 = por %p181, %p182
    %p185 = scmp.ne.s32.totalorder %s170, %s184
    %p186 = scmp.eq.s32.totalorder %s29, 0
    %p187 = por %p185, %p186
    %s189 = sadd.s32 %s188, 1
    %p192 = scmp.eq.s32.totalorder %s23, 1
    %p193 = scmp.ne.s32.totalorder %s188, %s190
    %p194 = scmp.eq.s32.totalorder %s23, 0
    %p195 = por %p193, %p194
    %p196 = scmp.ne.s32.totalorder %s188, %s190
    %p197 = scmp.eq.s32.totalorder %s28, 1
    %p198 = por %p196, %p197
    %p199 = scmp.ne.s32.totalorder %s190, %s191
    %p200 = scmp.eq.s32.totalorder %s28, 0
    %p201 = por %p199, %p200
    %p202 = scmp.ne.s32.totalorder %s190, %s191
    %p203 = scmp.eq.s32.totalorder %s29, 1
    %p204 = por %p202, %p203
    %p206 = scmp.ne.s32.totalorder %s191, %s205
    %p207 = scmp.eq.s32.totalorder %s29, 0
    %p208 = por %p206, %p207
    %s210 = sadd.s32 %s209, 1
    %p213 = scmp.eq.s32.totalorder %s23, 1
    %p214 = scmp.ne.s32.totalorder %s209, %s211
    %p215 = scmp.eq.s32.totalorder %s23, 0
    %p216 = por %p214, %p215
    %p217 = scmp.ne.s32.totalorder %s209, %s211
    %p218 = scmp.eq.s32.totalorder %s28, 1
    %p219 = por %p217, %p218
    %p220 = scmp.ne.s32.totalorder %s211, %s212
    %p221 = scmp.eq.s32.totalorder %s28, 0
    %p222 = por %p220, %p221
    %p223 = scmp.ne.s32.totalorder %s211, %s212
    %p224 = scmp.eq.s32.totalorder %s29, 1
    %p225 = por %p223, %p224
    %p227 = scmp.ne.s32.totalorder %s212, %s226
    %p228 = scmp.eq.s32.totalorder %s29, 0
    %p229 = por %p227, %p228
    %s231 = sadd.s32 %s230, 1
    %p234 = scmp.eq.s32.totalorder %s23, 1
    %p235 = scmp.ne.s32.totalorder %s230, %s232
    %p236 = scmp.eq.s32.totalorder %s23, 0
    %p237 = por %p235, %p236
    %p238 = scmp.ne.s32.totalorder %s230, %s232
    %p239 = scmp.eq.s32.totalorder %s28, 1
    %p240 = por %p238, %p239
    %p241 = scmp.ne.s32.totalorder %s232, %s233
    %p242 = scmp.eq.s32.totalorder %s28, 0
    %p243 = por %p241, %p242
    %p244 = scmp.ne.s32.totalorder %s232, %s233
    %p245 = scmp.eq.s32.totalorder %s29, 1
    %p246 = por %p244, %p245
    %p248 = scmp.ne.s32.totalorder %s233, %s247
    %p249 = scmp.eq.s32.totalorder %s29, 0
    %p250 = por %p248, %p249
    %s252 = sadd.s32 %s251, 1
    %p255 = scmp.eq.s32.totalorder %s23, 1
    %p256 = scmp.ne.s32.totalorder %s251, %s253
    %p257 = scmp.eq.s32.totalorder %s23, 0
    %p258 = por %p256, %p257
    %p259 = scmp.ne.s32.totalorder %s251, %s253
    %p260 = scmp.eq.s32.totalorder %s28, 1
    %p261 = por %p259, %p260
    %p262 = scmp.ne.s32.totalorder %s253, %s254
    %p263 = scmp.eq.s32.totalorder %s28, 0
    %p264 = por %p262, %p263
    %p265 = scmp.ne.s32.totalorder %s253, %s254
    %p266 = scmp.eq.s32.totalorder %s29, 1
    %p267 = por %p265, %p266
    %p269 = scmp.ne.s32.totalorder %s254, %s268
    %p270 = scmp.eq.s32.totalorder %s29, 0
    %p271 = por %p269, %p270
    %s273 = sadd.s32 %s272, 1
    %p276 = scmp.eq.s32.totalorder %s23, 1
    %p277 = scmp.ne.s32.totalorder %s272, %s274
    %p278 = scmp.eq.s32.totalorder %s23, 0
    %p279 = por %p277, %p278
    %p280 = scmp.ne.s32.totalorder %s272, %s274
    %p281 = scmp.eq.s32.totalorder %s28, 1
    %p282 = por %p280, %p281
    %p283 = scmp.ne.s32.totalorder %s274, %s275
    %p284 = scmp.eq.s32.totalorder %s28, 0
    %p285 = por %p283, %p284
    %p286 = scmp.ne.s32.totalorder %s274, %s275
    %p287 = scmp.eq.s32.totalorder %s29, 1
    %p288 = por %p286, %p287
    %p290 = scmp.ne.s32.totalorder %s275, %s289
    %p291 = scmp.eq.s32.totalorder %s29, 0
    %p292 = por %p290, %p291
    %s294 = sadd.s32 %s293, 1
    %p297 = scmp.eq.s32.totalorder %s23, 1
    %p298 = scmp.ne.s32.totalorder %s293, %s295
    %p299 = scmp.eq.s32.totalorder %s23, 0
    %p300 = por %p298, %p299
    %p301 = scmp.ne.s32.totalorder %s293, %s295
    %p302 = scmp.eq.s32.totalorder %s28, 1
    %p303 = por %p301, %p302
    %p304 = scmp.ne.s32.totalorder %s295, %s296
    %p305 = scmp.eq.s32.totalorder %s28, 0
    %p306 = por %p304, %p305
    %p307 = scmp.ne.s32.totalorder %s295, %s296
    %p308 = scmp.eq.s32.totalorder %s29, 1
    %p309 = por %p307, %p308
    %p311 = scmp.ne.s32.totalorder %s296, %s310
    %p312 = scmp.eq.s32.totalorder %s29, 0
    %p313 = por %p311, %p312
    %s315 = sadd.s32 %s314, 1
    %p318 = scmp.eq.s32.totalorder %s23, 1
    %p319 = scmp.ne.s32.totalorder %s314, %s316
    %p320 = scmp.eq.s32.totalorder %s23, 0
    %p321 = por %p319, %p320
    %p322 = scmp.ne.s32.totalorder %s314, %s316
    %p323 = scmp.eq.s32.totalorder %s28, 1
    %p324 = por %p322, %p323
    %p325 = scmp.ne.s32.totalorder %s316, %s317
    %p326 = scmp.eq.s32.totalorder %s28, 0
    %p327 = por %p325, %p326
    %p328 = scmp.ne.s32.totalorder %s316, %s317
    %p329 = scmp.eq.s32.totalorder %s29, 1
    %p330 = por %p328, %p329
    %p332 = scmp.ne.s32.totalorder %s317, %s331
    %p333 = scmp.eq.s32.totalorder %s29, 0
    %p334 = por %p332, %p333
    %s336 = sadd.s32 %s335, 1
    %p339 = scmp.eq.s32.totalorder %s23, 1
    %p340 = scmp.ne.s32.totalorder %s335, %s337
    %p341 = scmp.eq.s32.totalorder %s23, 0
    %p342 = por %p340, %p341
    %p343 = scmp.ne.s32.totalorder %s335, %s337
    %p344 = scmp.eq.s32.totalorder %s28, 1
    %p345 = por %p343, %p344
    %p346 = scmp.ne.s32.totalorder %s337, %s338
    %p347 = scmp.eq.s32.totalorder %s28, 0
    %p348 = por %p346, %p347
    %p349 = scmp.ne.s32.totalorder %s337, %s338
    %p350 = scmp.eq.s32.totalorder %s29, 1
    %p351 = por %p349, %p350
    %p353 = scmp.ne.s32.totalorder %s338, %s352
    %p354 = scmp.eq.s32.totalorder %s29, 0
    %p355 = por %p353, %p354
    %s357 = sadd.s32 %s356, 1
    %p360 = scmp.eq.s32.totalorder %s23, 1
    %p361 = scmp.ne.s32.totalorder %s356, %s358
    %p362 = scmp.eq.s32.totalorder %s23, 0
    %p363 = por %p361, %p362
    %p364 = scmp.ne.s32.totalorder %s356, %s358
    %p365 = scmp.eq.s32.totalorder %s28, 1
    %p366 = por %p364, %p365
    %p367 = scmp.ne.s32.totalorder %s358, %s359
    %p368 = scmp.eq.s32.totalorder %s28, 0
    %p369 = por %p367, %p368
    %p370 = scmp.ne.s32.totalorder %s358, %s359
    %p371 = scmp.eq.s32.totalorder %s29, 1
    %p372 = por %p370, %p371
    %p374 = scmp.ne.s32.totalorder %s359, %s373
    %p375 = scmp.eq.s32.totalorder %s29, 0
    %p376 = por %p374, %p375
    %s378 = sadd.s32 %s377, 1
    %p381 = scmp.eq.s32.totalorder %s23, 1
    %p382 = scmp.ne.s32.totalorder %s377, %s379
    %p383 = scmp.eq.s32.totalorder %s23, 0
    %p384 = por %p382, %p383
    %p385 = scmp.ne.s32.totalorder %s377, %s379
    %p386 = scmp.eq.s32.totalorder %s28, 1
    %p387 = por %p385, %p386
    %p388 = scmp.ne.s32.totalorder %s379, %s380
    %p389 = scmp.eq.s32.totalorder %s28, 0
    %p390 = por %p388, %p389
    %p391 = scmp.ne.s32.totalorder %s379, %s380
    %p392 = scmp.eq.s32.totalorder %s29, 1
    %p393 = por %p391, %p392
    %p395 = scmp.ne.s32.totalorder %s380, %s394
    %p396 = scmp.eq.s32.totalorder %s29, 0
    %p397 = por %p395, %p396
    %s398 = ssub.s32 %s23, %s30
    %p399 = scmp.eq.s32.totalorder %s398, 0
    %s401 = sadd.s32 %s400, 1
    %s402 = scalar_select %p399, %s400, %s401
    %p405 = pneg %p399
    %p406 = scmp.eq.s32.totalorder %s23, 1
    %p407 = por %p405, %p406
    %p408 = scmp.ne.s32.totalorder %s400, %s403
    %p409 = scmp.eq.s32.totalorder %s23, 0
    %p410 = por %p408, %p409
    %p411 = scmp.ne.s32.totalorder %s400, %s403
    %p412 = scmp.eq.s32.totalorder %s28, 1
    %p413 = por %p411, %p412
    %p414 = scmp.ne.s32.totalorder %s403, %s404
    %p415 = scmp.eq.s32.totalorder %s28, 0
    %p416 = por %p414, %p415
    %p417 = scmp.ne.s32.totalorder %s403, %s404
    %p418 = scmp.eq.s32.totalorder %s29, 1
    %p419 = por %p417, %p418
    %p421 = scmp.ne.s32.totalorder %s404, %s420
    %p422 = scmp.eq.s32.totalorder %s29, 0
    %p423 = por %p421, %p422
    %p424 = scmp.le.s32.totalorder 1, %s23
    %p425 = scmp.lt.s32.totalorder %s23, 3
    %p426 = pnand %p424, %p425
    %p427 = pneg %p426
    // Predicated region
    $region9: #{esa_forward.1} parent=5 // pred_check
      _
    $region10: #{esa_forward.1} parent=5 // pred_check_branch
      %429 = sbr.rel (%p426) target = $region12
    $region11: #{esa_forward.1} parent=5 // pred_region
      %s430 = ssub.s32 %s23, 1
      // Predicated region
      $region13: #{esa_forward.1} parent=11 // pred_check
        %p431 = pneg %p96
      $region14: #{esa_forward.1} parent=11 // pred_check_branch
        %433 = sbr.rel (%p431) target = $region16
      $region15: #{esa_forward.1} parent=11 // pred_region
        _
      $region16: #{esa_forward.1} parent=11 // pred_fallthru
        _
      // Predicated region
      $region17: #{esa_forward.1} parent=11 // pred_check
        %p434 = pneg %p117
      $region18: #{esa_forward.1} parent=11 // pred_check_branch
        %436 = sbr.rel (%p434) target = $region20
      $region19: #{esa_forward.1} parent=11 // pred_region
        _
      $region20: #{esa_forward.1} parent=11 // pred_fallthru
        _
      // Predicated region
      $region21: #{esa_forward.1} parent=11 // pred_check
        %p437 = pneg %p138
      $region22: #{esa_forward.1} parent=11 // pred_check_branch
        %439 = sbr.rel (%p437) target = $region24
      $region23: #{esa_forward.1} parent=11 // pred_region
        _
      $region24: #{esa_forward.1} parent=11 // pred_fallthru
        _
      // Predicated region
      $region25: #{esa_forward.1} parent=11 // pred_check
        %p440 = pneg %p159
      $region26: #{esa_forward.1} parent=11 // pred_check_branch
        %442 = sbr.rel (%p440) target = $region28
      $region27: #{esa_forward.1} parent=11 // pred_region
        _
      $region28: #{esa_forward.1} parent=11 // pred_fallthru
        _
      // Predicated region
      $region29: #{esa_forward.1} parent=11 // pred_check
        %p443 = pneg %p180
      $region30: #{esa_forward.1} parent=11 // pred_check_branch
        %445 = sbr.rel (%p443) target = $region32
      $region31: #{esa_forward.1} parent=11 // pred_region
        _
      $region32: #{esa_forward.1} parent=11 // pred_fallthru
        _
      // Predicated region
      $region33: #{esa_forward.1} parent=11 // pred_check
        %p446 = pneg %p201
      $region34: #{esa_forward.1} parent=11 // pred_check_branch
        %448 = sbr.rel (%p446) target = $region36
      $region35: #{esa_forward.1} parent=11 // pred_region
        _
      $region36: #{esa_forward.1} parent=11 // pred_fallthru
        _
      // Predicated region
      $region37: #{esa_forward.1} parent=11 // pred_check
        %p449 = pneg %p222
      $region38: #{esa_forward.1} parent=11 // pred_check_branch
        %451 = sbr.rel (%p449) target = $region40
      $region39: #{esa_forward.1} parent=11 // pred_region
        _
      $region40: #{esa_forward.1} parent=11 // pred_fallthru
        _
      // Predicated region
      $region41: #{esa_forward.1} parent=11 // pred_check
        %p452 = pneg %p243
      $region42: #{esa_forward.1} parent=11 // pred_check_branch
        %454 = sbr.rel (%p452) target = $region44
      $region43: #{esa_forward.1} parent=11 // pred_region
        _
      $region44: #{esa_forward.1} parent=11 // pred_fallthru
        _
      // Predicated region
      $region45: #{esa_forward.1} parent=11 // pred_check
        %p455 = pneg %p264
      $region46: #{esa_forward.1} parent=11 // pred_check_branch
        %457 = sbr.rel (%p455) target = $region48
      $region47: #{esa_forward.1} parent=11 // pred_region
        _
      $region48: #{esa_forward.1} parent=11 // pred_fallthru
        _
      // Predicated region
      $region49: #{esa_forward.1} parent=11 // pred_check
        %p458 = pneg %p285
      $region50: #{esa_forward.1} parent=11 // pred_check_branch
        %460 = sbr.rel (%p458) target = $region52
      $region51: #{esa_forward.1} parent=11 // pred_region
        _
      $region52: #{esa_forward.1} parent=11 // pred_fallthru
        _
      // Predicated region
      $region53: #{esa_forward.1} parent=11 // pred_check
        %p461 = pneg %p306
      $region54: #{esa_forward.1} parent=11 // pred_check_branch
        %463 = sbr.rel (%p461) target = $region56
      $region55: #{esa_forward.1} parent=11 // pred_region
        _
      $region56: #{esa_forward.1} parent=11 // pred_fallthru
        _
      // Predicated region
      $region57: #{esa_forward.1} parent=11 // pred_check
        %p464 = pneg %p327
      $region58: #{esa_forward.1} parent=11 // pred_check_branch
        %466 = sbr.rel (%p464) target = $region60
      $region59: #{esa_forward.1} parent=11 // pred_region
        _
      $region60: #{esa_forward.1} parent=11 // pred_fallthru
        _
      // Predicated region
      $region61: #{esa_forward.1} parent=11 // pred_check
        %p467 = pneg %p348
      $region62: #{esa_forward.1} parent=11 // pred_check_branch
        %469 = sbr.rel (%p467) target = $region64
      $region63: #{esa_forward.1} parent=11 // pred_region
        _
      $region64: #{esa_forward.1} parent=11 // pred_fallthru
        _
      // Predicated region
      $region65: #{esa_forward.1} parent=11 // pred_check
        %p470 = pneg %p369
      $region66: #{esa_forward.1} parent=11 // pred_check_branch
        %472 = sbr.rel (%p470) target = $region68
      $region67: #{esa_forward.1} parent=11 // pred_region
        _
      $region68: #{esa_forward.1} parent=11 // pred_fallthru
        _
      // Predicated region
      $region69: #{esa_forward.1} parent=11 // pred_check
        %p473 = pneg %p390
      $region70: #{esa_forward.1} parent=11 // pred_check_branch
        %475 = sbr.rel (%p473) target = $region72
      $region71: #{esa_forward.1} parent=11 // pred_region
        _
      $region72: #{esa_forward.1} parent=11 // pred_fallthru
        _
    $region12: #{esa_forward.1} parent=5 // pred_fallthru
      _
    %p476 = scmp.lt.s32.totalorder %s23, 2
    // Predicated region
    $region73: #{esa_forward.1} parent=5 // pred_check
      %p477 = pneg %p476
    $region74: #{esa_forward.1} parent=5 // pred_check_branch
      %479 = sbr.rel (%p477) target = $region76
    $region75: #{esa_forward.1} parent=5 // pred_region
      // Predicated region
      $region77: #{esa_forward.1} parent=75 // pred_check
        %p480 = pneg %p43
      $region78: #{esa_forward.1} parent=75 // pred_check_branch
        %482 = sbr.rel (%p480) target = $region80
      $region79: #{esa_forward.1} parent=75 // pred_region
        %p483 = scmp.lt.s32.totalorder %s23, 1
        %s484 = scalar_select %p483, %s23, 1
        %s485 = smul.addr %s484, 10
        %s486 = smul.addr %s485, 8
        %s487 = scalar_lea.vmem %s0, %s486
      $region80: #{esa_forward.1} parent=75 // pred_fallthru
        _
      // Predicated region
      $region81: #{esa_forward.1} parent=75 // pred_check
        %p488 = pneg %p69
      $region82: #{esa_forward.1} parent=75 // pred_check_branch
        %490 = sbr.rel (%p488) target = $region84
      $region83: #{esa_forward.1} parent=75 // pred_region
        %p491 = scmp.lt.s32.totalorder %s23, 1
        %s492 = scalar_select %p491, %s23, 1
        %s493 = smul.addr %s492, 18
        %s494 = smul.addr %s493, 8
        %s495 = scalar_lea.vmem %s1, %s494
      $region84: #{esa_forward.1} parent=75 // pred_fallthru
        _
    $region76: #{esa_forward.1} parent=5 // pred_fallthru
      _
    %p496 = scmp.le.s32.totalorder 1, %s23
    %p497 = scmp.lt.s32.totalorder %s23, 3
    %p498 = pnand %p496, %p497
    %p499 = pneg %p498
    // Predicated region
    $region85: #{esa_forward.1} parent=5 // pred_check
      _
    $region86: #{esa_forward.1} parent=5 // pred_check_branch
      %501 = sbr.rel (%p498) target = $region88
    $region87: #{esa_forward.1} parent=5 // pred_region
      %s502 = ssub.s32 %s23, 1
      %p503 = scmp.lt.s32.totalorder %s28, 1
      %s504 = scalar_select %p503, %s28, 1
      %s505 = smul.addr %s504, 10
      %s506 = smul.addr %s505, 8
      %s507 = scalar_lea.vmem %s0, %s506
      %p508 = pneg %p49
      %p509 = pneg %p46
      %p510 = scmp.lt.s32.totalorder %s28, 1
      %s511 = scalar_select %p510, %s28, 1
      %s512 = smul.addr %s511, 18
      %s513 = smul.addr %s512, 8
      %s514 = scalar_lea.vmem %s1, %s513
      %p515 = pneg %p75
      %p516 = pneg %p72
      %p517 = pneg %p96
      %p518 = pneg %p93
      %p519 = pneg %p117
      %p520 = pneg %p114
      %p521 = pneg %p138
      %p522 = pneg %p135
      %p523 = pneg %p159
      %p524 = pneg %p156
      %p525 = pneg %p180
      %p526 = pneg %p177
      %p527 = pneg %p201
      %p528 = pneg %p198
      %p529 = pneg %p222
      %p530 = pneg %p219
      %p531 = pneg %p243
      %p532 = pneg %p240
      %p533 = pneg %p264
      %p534 = pneg %p261
      %p535 = pneg %p285
      %p536 = pneg %p282
      %p537 = pneg %p306
      %p538 = pneg %p303
      %p539 = pneg %p327
      %p540 = pneg %p324
      %p541 = pneg %p348
      %p542 = pneg %p345
      %p543 = pneg %p369
      %p544 = pneg %p366
      %p545 = pneg %p390
      %p546 = pneg %p387
      %p547 = pneg %p416
      %p548 = pneg %p413
      %p549 = scmp.lt.s32.totalorder %s28, 1
      %s550 = scalar_select %p549, %s28, 1
      %s551 = smul.addr %s550, 10
      %s552 = smul.addr %s551, 8
      %s553 = scalar_lea.vmem %s17, %s552
      %p554 = scmp.lt.s32.totalorder %s28, 1
      %s555 = scalar_select %p554, %s28, 1
      %s556 = smul.addr %s555, 10
      %s557 = smul.addr %s556, 8
      %s558 = scalar_lea.vmem %s0, %s557
      %p559 = scmp.lt.s32.totalorder %s28, 1
      %s560 = scalar_select %p559, %s28, 1
      %s561 = smul.addr %s560, 18
      %s562 = smul.addr %s561, 8
      %s563 = scalar_lea.vmem %s1, %s562
      %p564 = scmp.lt.s32.totalorder %s28, 1
      %s565 = scalar_select %p564, %s28, 1
      %s566 = smul.addr %s565, 10
      %s567 = smul.addr %s566, 8
      %s568 = scalar_lea.vmem %s17, %s567
      %v569 = vld [vmem:[%s558] sm:$0xff]
      %v570 = vld [vmem:[%s558 + $0x8] sm:$0xff]
      %v571 = vld [vmem:[%s558 + $0x10] sm:$0xff]
      %v572 = vld [vmem:[%s558 + $0x18] sm:$0xff]
      %v573 = vld [vmem:[%s558 + $0x20] sm:$0xff]
      %v574 = vld [vmem:[%s558 + $0x28] sm:$0xff]
      %v575 = vld [vmem:[%s558 + $0x30] sm:$0xff]
      %v576 = vld [vmem:[%s558 + $0x38] sm:$0xff]
      %v577 = vld [vmem:[%s558 + $0x40] sm:$0xff]
      %v578 = vld [vmem:[%s558 + $0x48] sm:$0xff]
      %v579 = vld [vmem:[%s563] sm:$0xff]
      %v580 = vld [vmem:[%s563 + $0x8] sm:$0xff]
      %v581 = vld [vmem:[%s563 + $0x10] sm:$0xff]
      %v582 = vld [vmem:[%s563 + $0x18] sm:$0xff]
      %v583 = vld [vmem:[%s563 + $0x20] sm:$0xff]
      %v584 = vld [vmem:[%s563 + $0x28] sm:$0xff]
      %v585 = vld [vmem:[%s563 + $0x30] sm:$0xff]
      %v586 = vld [vmem:[%s563 + $0x38] sm:$0xff]
      %v587 = vld [vmem:[%s563 + $0x40] sm:$0xff]
      %v588 = vld [vmem:[%s563 + $0x48] sm:$0xff]
      %v589 = vld [vmem:[%s563 + $0x50] sm:$0xff]
      %v590 = vld [vmem:[%s563 + $0x58] sm:$0xff]
      %v591 = vld [vmem:[%s563 + $0x60] sm:$0xff]
      %v592 = vld [vmem:[%s563 + $0x68] sm:$0xff]
      %v593 = vld [vmem:[%s563 + $0x70] sm:$0xff]
      %v594 = vld [vmem:[%s563 + $0x78] sm:$0xff]
      %v595 = vld [vmem:[%s563 + $0x80] sm:$0xff]
      %v596 = vld [vmem:[%s563 + $0x88] sm:$0xff]
      %v597 = vld [vmem:[%s4] sm:$0xff]
      %v598 = vld [vmem:[%s5] sm:$0xf]
      %600 = vset.pattern.permute.xlu0 0
      %601 = vperm.xlu0 %600, %v598
      %v602 = vpop.permute.xlu0 %601
      %v605 = vcombine.high %v597, %v597
      %vm606 = vcmask 130048
      %v607 = vsel %vm606, %v605, 0
      %609 = vmatprep.subr.mxu0 0.0
      %610 = vmatpush1.msra.mxu0 %v579
      %611 = vmatprep.subr.mxu0 0.0
      %612 = vmatpush1.msra.mxu0 %v580
      %613 = vmatprep.subr.mxu0 0.0
      %614 = vmatpush1.msra.mxu0 %v581
      %615 = vmatprep.subr.mxu0 0.0
      %616 = vmatpush1.msra.mxu0 %v582
      %617 = vmatprep.subr.mxu0 0.0
      %618 = vmatpush1.msra.mxu0 %v583
      %619 = vmatprep.subr.mxu0 0.0
      %620 = vmatpush1.msra.mxu0 %v584
      %621 = vmatprep.subr.mxu0 0.0
      %622 = vmatpush1.msra.mxu0 %v585
      %623 = vmatprep.subr.mxu0 0.0
      %624 = vmatpush1.msra.mxu0 %v586
      %625 = vmatprep.subr.mxu0 0.0
      %626 = vmatpush1.msra.mxu0 %v587
      %627 = vmatprep.subr.mxu0 0.0
      %628 = vmatpush1.msra.mxu0 %v588
      %629 = vmatprep.subr.mxu0 0.0
      %630 = vmatpush1.msra.mxu0 %v589
      %631 = vmatprep.subr.mxu0 0.0
      %632 = vmatpush1.msra.mxu0 %v590
      %633 = vmatprep.subr.mxu0 0.0
      %634 = vmatpush1.msra.mxu0 %v591
      %635 = vmatprep.subr.mxu0 0.0
      %636 = vmatpush1.msra.mxu0 %v592
      %637 = vmatprep.subr.mxu0 0.0
      %638 = vmatpush1.msra.mxu0 %v593
      %639 = vmatprep.subr.mxu0 0.0
      %640 = vmatpush1.msra.mxu0 %v594
      %641 = vmatprep.subr.mxu0 0.0
      %642 = vmatpush1.msra.mxu0 %v595
      %643 = vmatprep.subr.mxu0 0.0
      %644 = vmatpush1.msra.mxu0 %v596
      %645 = vmatprep.subr.mxu0 0.0
      %646 = vmatpush1.msra.mxu0 0.0
      %647 = vmatprep.subr.mxu0 0.0
      %648 = vmatpush1.msra.mxu0 0.0
      %649 = vmatprep.subr.mxu0 0.0
      %650 = vmatpush1.msra.mxu0 0.0
      %651 = vmatprep.subr.mxu0 0.0
      %652 = vmatpush1.msra.mxu0 0.0
      %653 = vmatprep.subr.mxu0 0.0
      %654 = vmatpush1.msra.mxu0 0.0
      %655 = vmatprep.subr.mxu0 0.0
      %656 = vmatpush1.msra.mxu0 0.0
      %657 = vmatprep.subr.mxu0 0.0
      %658 = vmatpush1.msra.mxu0 0.0
      %659 = vmatprep.subr.mxu0 0.0
      %660 = vmatpush1.msra.mxu0 0.0
      %661 = vmatprep.subr.mxu0 0.0
      %662 = vmatpush1.msra.mxu0 0.0
      %663 = vmatprep.subr.mxu0 0.0
      %664 = vmatpush1.msra.mxu0 0.0
      %665 = vmatprep.subr.mxu0 0.0
      %666 = vmatpush1.msra.mxu0 0.0
      %667 = vmatprep.subr.mxu0 0.0
      %668 = vmatpush1.msra.mxu0 0.0
      %669 = vmatprep.subr.mxu0 0.0
      %670 = vmatpush1.msra.mxu0 0.0
      %671 = vmatprep.subr.mxu0 0.0
      %672 = vmatpush1.msra.mxu0 0.0
      %673 = vmatprep.mubr.f32.mxu0 %v607
      %674 = vmatmul.mubr.f32.gmra.mrb[0].mxu0 %v597
      %v675 = vpop.f32.mrb[0].mxu0
      %v676 = vadd.f32 %v602, %v675
      %v677 = vpop.f32.mrb[0].mxu0
      %678 = vdwg.mxu0
      %v679 = vld [vmem:[%s6] sm:$0xff]
      %v680 = vld [vmem:[%s6 + $0x8] sm:$0xff]
      %v681 = vld [vmem:[%s6 + $0x10] sm:$0xff]
      %v682 = vld [vmem:[%s6 + $0x18] sm:$0xff]
      %v683 = vld [vmem:[%s6 + $0x20] sm:$0xff]
      %v684 = vld [vmem:[%s6 + $0x28] sm:$0xff]
      %v685 = vld [vmem:[%s6 + $0x30] sm:$0xff]
      %v686 = vld [vmem:[%s6 + $0x38] sm:$0xff]
      %v687 = vld [vmem:[%s6 + $0x40] sm:$0xff]
      %v688 = vld [vmem:[%s6 + $0x48] sm:$0xff]
      %v689 = vld [vmem:[%s6 + $0x50] sm:$0xff]
      %v690 = vld [vmem:[%s6 + $0x58] sm:$0xff]
      %v691 = vld [vmem:[%s6 + $0x60] sm:$0xff]
      %v692 = vld [vmem:[%s6 + $0x68] sm:$0xff]
      %v693 = vld [vmem:[%s6 + $0x70] sm:$0xff]
      %v694 = vld [vmem:[%s6 + $0x78] sm:$0x1]
      %vm695 = vcmask 990208
      %v697 = vsel %vm695, %v676, 0
      %vm699 = vcmask 1040384
      %v701 = vsel %vm699, %v694, 0
      %703 = vmatprep.subr.mxu0 0.0
      %704 = vmatpush1.msra.mxu0 %v679
      %705 = vmatprep.subr.mxu0 0.0
      %706 = vmatpush1.msra.mxu0 %v680
      %707 = vmatprep.subr.mxu0 0.0
      %708 = vmatpush1.msra.mxu0 %v681
      %709 = vmatprep.subr.mxu0 0.0
      %710 = vmatpush1.msra.mxu0 %v682
      %711 = vmatprep.subr.mxu0 0.0
      %712 = vmatpush1.msra.mxu0 %v683
      %713 = vmatprep.subr.mxu0 0.0
      %714 = vmatpush1.msra.mxu0 %v684
      %715 = vmatprep.subr.mxu0 0.0
      %716 = vmatpush1.msra.mxu0 %v685
      %717 = vmatprep.subr.mxu0 0.0
      %718 = vmatpush1.msra.mxu0 %v686
      %719 = vmatprep.subr.mxu0 0.0
      %720 = vmatpush1.msra.mxu0 %v687
      %721 = vmatprep.subr.mxu0 0.0
      %722 = vmatpush1.msra.mxu0 %v688
      %723 = vmatprep.subr.mxu0 0.0
      %724 = vmatpush1.msra.mxu0 %v689
      %725 = vmatprep.subr.mxu0 0.0
      %726 = vmatpush1.msra.mxu0 %v690
      %727 = vmatprep.subr.mxu0 0.0
      %728 = vmatpush1.msra.mxu0 %v691
      %729 = vmatprep.subr.mxu0 0.0
      %730 = vmatpush1.msra.mxu0 %v692
      %731 = vmatprep.subr.mxu0 0.0
      %732 = vmatpush1.msra.mxu0 %v693
      %733 = vmatprep.subr.mxu0 0.0
      %734 = vmatpush1.msra.mxu0 %v701
      %735 = vmatprep.subr.mxu0 0.0
      %736 = vmatpush1.msra.mxu0 0.0
      %737 = vmatprep.subr.mxu0 0.0
      %738 = vmatpush1.msra.mxu0 0.0
      %739 = vmatprep.subr.mxu0 0.0
      %740 = vmatpush1.msra.mxu0 0.0
      %741 = vmatprep.subr.mxu0 0.0
      %742 = vmatpush1.msra.mxu0 0.0
      %743 = vmatprep.subr.mxu0 0.0
      %744 = vmatpush1.msra.mxu0 0.0
      %745 = vmatprep.subr.mxu0 0.0
      %746 = vmatpush1.msra.mxu0 0.0
      %747 = vmatprep.subr.mxu0 0.0
      %748 = vmatpush1.msra.mxu0 0.0
      %749 = vmatprep.subr.mxu0 0.0
      %750 = vmatpush1.msra.mxu0 0.0
      %751 = vmatprep.subr.mxu0 0.0
      %752 = vmatpush1.msra.mxu0 0.0
      %753 = vmatprep.subr.mxu0 0.0
      %754 = vmatpush1.msra.mxu0 0.0
      %755 = vmatprep.subr.mxu0 0.0
      %756 = vmatpush1.msra.mxu0 0.0
      %757 = vmatprep.subr.mxu0 0.0
      %758 = vmatpush1.msra.mxu0 0.0
      %759 = vmatprep.subr.mxu0 0.0
      %760 = vmatpush1.msra.mxu0 0.0
      %761 = vmatprep.subr.mxu0 0.0
      %762 = vmatpush1.msra.mxu0 0.0
      %763 = vmatprep.subr.mxu0 0.0
      %764 = vmatpush1.msra.mxu0 0.0
      %765 = vmatprep.subr.mxu0 0.0
      %766 = vmatpush1.msra.mxu0 0.0
      %767 = vmatprep.mubr.f32.mxu0 0.0
      %768 = vmatmul.mubr.f32.gmra.mrb[0].mxu0 %v697
      %v769 = vpop.f32.mrb[0].mxu0
      %v770 = vadd.f32 0.0, %v769
      %v771 = vpop.f32.mrb[0].mxu0
      %772 = vdwg.mxu0
      %s773 = scalar_lea.vmem %s6, 128
      %v774 = vld [vmem:[%s773] sm:$0xff]
      %v775 = vld [vmem:[%s773 + $0x8] sm:$0xff]
      %v776 = vld [vmem:[%s773 + $0x10] sm:$0xff]
      %v777 = vld [vmem:[%s773 + $0x18] sm:$0xff]
      %v778 = vld [vmem:[%s773 + $0x20] sm:$0xff]
      %v779 = vld [vmem:[%s773 + $0x28] sm:$0xff]
      %v780 = vld [vmem:[%s773 + $0x30] sm:$0xff]
      %v781 = vld [vmem:[%s773 + $0x38] sm:$0xff]
      %v782 = vld [vmem:[%s773 + $0x40] sm:$0xff]
      %v783 = vld [vmem:[%s773 + $0x48] sm:$0xff]
      %v784 = vld [vmem:[%s773 + $0x50] sm:$0xff]
      %v785 = vld [vmem:[%s773 + $0x58] sm:$0xff]
      %v786 = vld [vmem:[%s773 + $0x60] sm:$0xff]
      %v787 = vld [vmem:[%s773 + $0x68] sm:$0xff]
      %v788 = vld [vmem:[%s773 + $0x70] sm:$0xff]
      %v789 = vld [vmem:[%s773 + $0x78] sm:$0x1]
      %v791 = vsel %vm699, %v789, 0
      %793 = vmatprep.subr.mxu0 0.0
      %794 = vmatpush1.msra.mxu0 %v774
      %795 = vmatprep.subr.mxu0 0.0
      %796 = vmatpush1.msra.mxu0 %v775
      %797 = vmatprep.subr.mxu0 0.0
      %798 = vmatpush1.msra.mxu0 %v776
      %799 = vmatprep.subr.mxu0 0.0
      %800 = vmatpush1.msra.mxu0 %v777
      %801 = vmatprep.subr.mxu0 0.0
      %802 = vmatpush1.msra.mxu0 %v778
      %803 = vmatprep.subr.mxu0 0.0
      %804 = vmatpush1.msra.mxu0 %v779
      %805 = vmatprep.subr.mxu0 0.0
      %806 = vmatpush1.msra.mxu0 %v780
      %807 = vmatprep.subr.mxu0 0.0
      %808 = vmatpush1.msra.mxu0 %v781
      %809 = vmatprep.subr.mxu0 0.0
      %810 = vmatpush1.msra.mxu0 %v782
      %811 = vmatprep.subr.mxu0 0.0
      %812 = vmatpush1.msra.mxu0 %v783
      %813 = vmatprep.subr.mxu0 0.0
      %814 = vmatpush1.msra.mxu0 %v784
      %815 = vmatprep.subr.mxu0 0.0
      %816 = vmatpush1.msra.mxu0 %v785
      %817 = vmatprep.subr.mxu0 0.0
      %818 = vmatpush1.msra.mxu0 %v786
      %819 = vmatprep.subr.mxu0 0.0
      %820 = vmatpush1.msra.mxu0 %v787
      %821 = vmatprep.subr.mxu0 0.0
      %822 = vmatpush1.msra.mxu0 %v788
      %823 = vmatprep.subr.mxu0 0.0
      %824 = vmatpush1.msra.mxu0 %v791
      %825 = vmatprep.subr.mxu0 0.0
      %826 = vmatpush1.msra.mxu0 0.0
      %827 = vmatprep.subr.mxu0 0.0
      %828 = vmatpush1.msra.mxu0 0.0
      %829 = vmatprep.subr.mxu0 0.0
      %830 = vmatpush1.msra.mxu0 0.0
      %831 = vmatprep.subr.mxu0 0.0
      %832 = vmatpush1.msra.mxu0 0.0
      %833 = vmatprep.subr.mxu0 0.0
      %834 = vmatpush1.msra.mxu0 0.0
      %835 = vmatprep.subr.mxu0 0.0
      %836 = vmatpush1.msra.mxu0 0.0
      %837 = vmatprep.subr.mxu0 0.0
      %838 = vmatpush1.msra.mxu0 0.0
      %839 = vmatprep.subr.mxu0 0.0
      %840 = vmatpush1.msra.mxu0 0.0
      %841 = vmatprep.subr.mxu0 0.0
      %842 = vmatpush1.msra.mxu0 0.0
      %843 = vmatprep.subr.mxu0 0.0
      %844 = vmatpush1.msra.mxu0 0.0
      %845 = vmatprep.subr.mxu0 0.0
      %846 = vmatpush1.msra.mxu0 0.0
      %847 = vmatprep.subr.mxu0 0.0
      %848 = vmatpush1.msra.mxu0 0.0
      %849 = vmatprep.subr.mxu0 0.0
      %850 = vmatpush1.msra.mxu0 0.0
      %851 = vmatprep.subr.mxu0 0.0
      %852 = vmatpush1.msra.mxu0 0.0
      %853 = vmatprep.subr.mxu0 0.0
      %854 = vmatpush1.msra.mxu0 0.0
      %855 = vmatprep.subr.mxu0 0.0
      %856 = vmatpush1.msra.mxu0 0.0
      %857 = vmatprep.mubr.f32.mxu0 0.0
      %858 = vmatmul.mubr.f32.gmra.mrb[0].mxu0 %v697
      %v859 = vpop.f32.mrb[0].mxu0
      %v860 = vadd.f32 0.0, %v859
      %v861 = vpop.f32.mrb[0].mxu0
      %862 = vdwg.mxu0
      %v863 = vmax.f32 %v770, %v860
      %s864 = scalar_lea.vmem %s6, 256
      %v865 = vld [vmem:[%s864] sm:$0xff]
      %v866 = vld [vmem:[%s864 + $0x8] sm:$0xff]
      %v867 = vld [vmem:[%s864 + $0x10] sm:$0xff]
      %v868 = vld [vmem:[%s864 + $0x18] sm:$0xff]
      %v869 = vld [vmem:[%s864 + $0x20] sm:$0xff]
      %v870 = vld [vmem:[%s864 + $0x28] sm:$0xff]
      %v871 = vld [vmem:[%s864 + $0x30] sm:$0xff]
      %v872 = vld [vmem:[%s864 + $0x38] sm:$0xff]
      %v873 = vld [vmem:[%s864 + $0x40] sm:$0xff]
      %v874 = vld [vmem:[%s864 + $0x48] sm:$0xff]
      %v875 = vld [vmem:[%s864 + $0x50] sm:$0xff]
      %v876 = vld [vmem:[%s864 + $0x58] sm:$0xff]
      %v877 = vld [vmem:[%s864 + $0x60] sm:$0xff]
      %v878 = vld [vmem:[%s864 + $0x68] sm:$0xff]
      %v879 = vld [vmem:[%s864 + $0x70] sm:$0xff]
      %v880 = vld [vmem:[%s864 + $0x78] sm:$0x1]
      %v882 = vsel %vm699, %v880, 0
      %884 = vmatprep.subr.mxu0 0.0
      %885 = vmatpush1.msra.mxu0 %v865
      %886 = vmatprep.subr.mxu0 0.0
      %887 = vmatpush1.msra.mxu0 %v866
      %888 = vmatprep.subr.mxu0 0.0
      %889 = vmatpush1.msra.mxu0 %v867
      %890 = vmatprep.subr.mxu0 0.0
      %891 = vmatpush1.msra.mxu0 %v868
      %892 = vmatprep.subr.mxu0 0.0
      %893 = vmatpush1.msra.mxu0 %v869
      %894 = vmatprep.subr.mxu0 0.0
      %895 = vmatpush1.msra.mxu0 %v870
      %896 = vmatprep.subr.mxu0 0.0
      %897 = vmatpush1.msra.mxu0 %v871
      %898 = vmatprep.subr.mxu0 0.0
      %899 = vmatpush1.msra.mxu0 %v872
      %900 = vmatprep.subr.mxu0 0.0
      %901 = vmatpush1.msra.mxu0 %v873
      %902 = vmatprep.subr.mxu0 0.0
      %903 = vmatpush1.msra.mxu0 %v874
      %904 = vmatprep.subr.mxu0 0.0
      %905 = vmatpush1.msra.mxu0 %v875
      %906 = vmatprep.subr.mxu0 0.0
      %907 = vmatpush1.msra.mxu0 %v876
      %908 = vmatprep.subr.mxu0 0.0
      %909 = vmatpush1.msra.mxu0 %v877
      %910 = vmatprep.subr.mxu0 0.0
      %911 = vmatpush1.msra.mxu0 %v878
      %912 = vmatprep.subr.mxu0 0.0
      %913 = vmatpush1.msra.mxu0 %v879
      %914 = vmatprep.subr.mxu0 0.0
      %915 = vmatpush1.msra.mxu0 %v882
      %916 = vmatprep.subr.mxu0 0.0
      %917 = vmatpush1.msra.mxu0 0.0
      %918 = vmatprep.subr.mxu0 0.0
      %919 = vmatpush1.msra.mxu0 0.0
      %920 = vmatprep.subr.mxu0 0.0
      %921 = vmatpush1.msra.mxu0 0.0
      %922 = vmatprep.subr.mxu0 0.0
      %923 = vmatpush1.msra.mxu0 0.0
      %924 = vmatprep.subr.mxu0 0.0
      %925 = vmatpush1.msra.mxu0 0.0
      %926 = vmatprep.subr.mxu0 0.0
      %927 = vmatpush1.msra.mxu0 0.0
      %928 = vmatprep.subr.mxu0 0.0
      %929 = vmatpush1.msra.mxu0 0.0
      %930 = vmatprep.subr.mxu0 0.0
      %931 = vmatpush1.msra.mxu0 0.0
      %932 = vmatprep.subr.mxu0 0.0
      %933 = vmatpush1.msra.mxu0 0.0
      %934 = vmatprep.subr.mxu0 0.0
      %935 = vmatpush1.msra.mxu0 0.0
      %936 = vmatprep.subr.mxu0 0.0
      %937 = vmatpush1.msra.mxu0 0.0
      %938 = vmatprep.subr.mxu0 0.0
      %939 = vmatpush1.msra.mxu0 0.0
      %940 = vmatprep.subr.mxu0 0.0
      %941 = vmatpush1.msra.mxu0 0.0
      %942 = vmatprep.subr.mxu0 0.0
      %943 = vmatpush1.msra.mxu0 0.0
      %944 = vmatprep.subr.mxu0 0.0
      %945 = vmatpush1.msra.mxu0 0.0
      %946 = vmatprep.subr.mxu0 0.0
      %947 = vmatpush1.msra.mxu0 0.0
      %948 = vmatprep.mubr.f32.mxu0 0.0
      %949 = vmatmul.mubr.f32.gmra.mrb[0].mxu0 %v697
      %v950 = vpop.f32.mrb[0].mxu0
      %v951 = vadd.f32 0.0, %v950
      %v952 = vpop.f32.mrb[0].mxu0
      %953 = vdwg.mxu0
      %v954 = vmax.f32 %v863, %v951
      %s955 = scalar_lea.vmem %s6, 384
      %v956 = vld [vmem:[%s955] sm:$0xff]
      %v957 = vld [vmem:[%s955 + $0x8] sm:$0xff]
      %v958 = vld [vmem:[%s955 + $0x10] sm:$0xff]
      %v959 = vld [vmem:[%s955 + $0x18] sm:$0xff]
      %v960 = vld [vmem:[%s955 + $0x20] sm:$0xff]
      %v961 = vld [vmem:[%s955 + $0x28] sm:$0xff]
      %v962 = vld [vmem:[%s955 + $0x30] sm:$0xff]
      %v963 = vld [vmem:[%s955 + $0x38] sm:$0xff]
      %v964 = vld [vmem:[%s955 + $0x40] sm:$0xff]
      %v965 = vld [vmem:[%s955 + $0x48] sm:$0xff]
      %v966 = vld [vmem:[%s955 + $0x50] sm:$0xff]
      %v967 = vld [vmem:[%s955 + $0x58] sm:$0xff]
      %v968 = vld [vmem:[%s955 + $0x60] sm:$0xff]
      %v969 = vld [vmem:[%s955 + $0x68] sm:$0xff]
      %v970 = vld [vmem:[%s955 + $0x70] sm:$0xff]
      %v971 = vld [vmem:[%s955 + $0x78] sm:$0x1]
      %v973 = vsel %vm699, %v971, 0
      %975 = vmatprep.subr.mxu0 0.0
      %976 = vmatpush1.msra.mxu0 %v956
      %977 = vmatprep.subr.mxu0 0.0
      %978 = vmatpush1.msra.mxu0 %v957
      %979 = vmatprep.subr.mxu0 0.0
      %980 = vmatpush1.msra.mxu0 %v958
      %981 = vmatprep.subr.mxu0 0.0
      %982 = vmatpush1.msra.mxu0 %v959
      %983 = vmatprep.subr.mxu0 0.0
      %984 = vmatpush1.msra.mxu0 %v960
      %985 = vmatprep.subr.mxu0 0.0
      %986 = vmatpush1.msra.mxu0 %v961
      %987 = vmatprep.subr.mxu0 0.0
      %988 = vmatpush1.msra.mxu0 %v962
      %989 = vmatprep.subr.mxu0 0.0
      %990 = vmatpush1.msra.mxu0 %v963
      %991 = vmatprep.subr.mxu0 0.0
      %992 = vmatpush1.msra.mxu0 %v964
      %993 = vmatprep.subr.mxu0 0.0
      %994 = vmatpush1.msra.mxu0 %v965
      %995 = vmatprep.subr.mxu0 0.0
      %996 = vmatpush1.msra.mxu0 %v966
      %997 = vmatprep.subr.mxu0 0.0
      %998 = vmatpush1.msra.mxu0 %v967
      %999 = vmatprep.subr.mxu0 0.0
      %1000 = vmatpush1.msra.mxu0 %v968
      %1001 = vmatprep.subr.mxu0 0.0
      %1002 = vmatpush1.msra.mxu0 %v969
      %1003 = vmatprep.subr.mxu0 0.0
      %1004 = vmatpush1.msra.mxu0 %v970
      %1005 = vmatprep.subr.mxu0 0.0
      %1006 = vmatpush1.msra.mxu0 %v973
      %1007 = vmatprep.subr.mxu0 0.0
      %1008 = vmatpush1.msra.mxu0 0.0
      %1009 = vmatprep.subr.mxu0 0.0
      %1010 = vmatpush1.msra.mxu0 0.0
      %1011 = vmatprep.subr.mxu0 0.0
      %1012 = vmatpush1.msra.mxu0 0.0
      %1013 = vmatprep.subr.mxu0 0.0
      %1014 = vmatpush1.msra.mxu0 0.0
      %1015 = vmatprep.subr.mxu0 0.0
      %1016 = vmatpush1.msra.mxu0 0.0
      %1017 = vmatprep.subr.mxu0 0.0
      %1018 = vmatpush1.msra.mxu0 0.0
      %1019 = vmatprep.subr.mxu0 0.0
      %1020 = vmatpush1.msra.mxu0 0.0
      %1021 = vmatprep.subr.mxu0 0.0
      %1022 = vmatpush1.msra.mxu0 0.0
      %1023 = vmatprep.subr.mxu0 0.0
      %1024 = vmatpush1.msra.mxu0 0.0
      %1025 = vmatprep.subr.mxu0 0.0
      %1026 = vmatpush1.msra.mxu0 0.0
      %1027 = vmatprep.subr.mxu0 0.0
      %1028 = vmatpush1.msra.mxu0 0.0
      %1029 = vmatprep.subr.mxu0 0.0
      %1030 = vmatpush1.msra.mxu0 0.0
      %1031 = vmatprep.subr.mxu0 0.0
      %1032 = vmatpush1.msra.mxu0 0.0
      %1033 = vmatprep.subr.mxu0 0.0
      %1034 = vmatpush1.msra.mxu0 0.0
      %1035 = vmatprep.subr.mxu0 0.0
      %1036 = vmatpush1.msra.mxu0 0.0
      %1037 = vmatprep.subr.mxu0 0.0
      %1038 = vmatpush1.msra.mxu0 0.0
      %1039 = vmatprep.mubr.f32.mxu0 0.0
      %1040 = vmatmul.mubr.f32.gmra.mrb[0].mxu0 %v697
      %v1041 = vpop.f32.mrb[0].mxu0
      %v1042 = vadd.f32 0.0, %v1041
      %v1043 = vpop.f32.mrb[0].mxu0
      %1044 = vdwg.mxu0
      %v1045 = vmax.f32 %v954, %v1042
      %s1046 = scalar_lea.vmem %s6, 512
      %v1047 = vld [vmem:[%s1046] sm:$0xff]
      %v1048 = vld [vmem:[%s1046 + $0x8] sm:$0xff]
      %v1049 = vld [vmem:[%s1046 + $0x10] sm:$0xff]
      %v1050 = vld [vmem:[%s1046 + $0x18] sm:$0xff]
      %v1051 = vld [vmem:[%s1046 + $0x20] sm:$0xff]
      %v1052 = vld [vmem:[%s1046 + $0x28] sm:$0xff]
      %v1053 = vld [vmem:[%s1046 + $0x30] sm:$0xff]
      %v1054 = vld [vmem:[%s1046 + $0x38] sm:$0xff]
      %v1055 = vld [vmem:[%s1046 + $0x40] sm:$0xff]
      %v1056 = vld [vmem:[%s1046 + $0x48] sm:$0xff]
      %v1057 = vld [vmem:[%s1046 + $0x50] sm:$0xff]
      %v1058 = vld [vmem:[%s1046 + $0x58] sm:$0xff]
      %v1059 = vld [vmem:[%s1046 + $0x60] sm:$0xff]
      %v1060 = vld [vmem:[%s1046 + $0x68] sm:$0xff]
      %v1061 = vld [vmem:[%s1046 + $0x70] sm:$0xff]
      %v1062 = vld [vmem:[%s1046 + $0x78] sm:$0x1]
      %v1064 = vsel %vm699, %v1062, 0
      %1066 = vmatprep.subr.mxu0 0.0
      %1067 = vmatpush1.msra.mxu0 %v1047
      %1068 = vmatprep.subr.mxu0 0.0
      %1069 = vmatpush1.msra.mxu0 %v1048
      %1070 = vmatprep.subr.mxu0 0.0
      %1071 = vmatpush1.msra.mxu0 %v1049
      %1072 = vmatprep.subr.mxu0 0.0
      %1073 = vmatpush1.msra.mxu0 %v1050
      %1074 = vmatprep.subr.mxu0 0.0
      %1075 = vmatpush1.msra.mxu0 %v1051
      %1076 = vmatprep.subr.mxu0 0.0
      %1077 = vmatpush1.msra.mxu0 %v1052
      %1078 = vmatprep.subr.mxu0 0.0
      %1079 = vmatpush1.msra.mxu0 %v1053
      %1080 = vmatprep.subr.mxu0 0.0
      %1081 = vmatpush1.msra.mxu0 %v1054
      %1082 = vmatprep.subr.mxu0 0.0
      %1083 = vmatpush1.msra.mxu0 %v1055
      %1084 = vmatprep.subr.mxu0 0.0
      %1085 = vmatpush1.msra.mxu0 %v1056
      %1086 = vmatprep.subr.mxu0 0.0
      %1087 = vmatpush1.msra.mxu0 %v1057
      %1088 = vmatprep.subr.mxu0 0.0
      %1089 = vmatpush1.msra.mxu0 %v1058
      %1090 = vmatprep.subr.mxu0 0.0
      %1091 = vmatpush1.msra.mxu0 %v1059
      %1092 = vmatprep.subr.mxu0 0.0
      %1093 = vmatpush1.msra.mxu0 %v1060
      %1094 = vmatprep.subr.mxu0 0.0
      %1095 = vmatpush1.msra.mxu0 %v1061
      %1096 = vmatprep.subr.mxu0 0.0
      %1097 = vmatpush1.msra.mxu0 %v1064
      %1098 = vmatprep.subr.mxu0 0.0
      %1099 = vmatpush1.msra.mxu0 0.0
      %1100 = vmatprep.subr.mxu0 0.0
      %1101 = vmatpush1.msra.mxu0 0.0
      %1102 = vmatprep.subr.mxu0 0.0
      %1103 = vmatpush1.msra.mxu0 0.0
      %1104 = vmatprep.subr.mxu0 0.0
      %1105 = vmatpush1.msra.mxu0 0.0
      %1106 = vmatprep.subr.mxu0 0.0
      %1107 = vmatpush1.msra.mxu0 0.0
      %1108 = vmatprep.subr.mxu0 0.0
      %1109 = vmatpush1.msra.mxu0 0.0
      %1110 = vmatprep.subr.mxu0 0.0
      %1111 = vmatpush1.msra.mxu0 0.0
      %1112 = vmatprep.subr.mxu0 0.0
      %1113 = vmatpush1.msra.mxu0 0.0
      %1114 = vmatprep.subr.mxu0 0.0
      %1115 = vmatpush1.msra.mxu0 0.0
      %1116 = vmatprep.subr.mxu0 0.0
      %1117 = vmatpush1.msra.mxu0 0.0
      %1118 = vmatprep.subr.mxu0 0.0
      %1119 = vmatpush1.msra.mxu0 0.0
      %1120 = vmatprep.subr.mxu0 0.0
      %1121 = vmatpush1.msra.mxu0 0.0
      %1122 = vmatprep.subr.mxu0 0.0
      %1123 = vmatpush1.msra.mxu0 0.0
      %1124 = vmatprep.subr.mxu0 0.0
      %1125 = vmatpush1.msra.mxu0 0.0
      %1126 = vmatprep.subr.mxu0 0.0
      %1127 = vmatpush1.msra.mxu0 0.0
      %1128 = vmatprep.subr.mxu0 0.0
      %1129 = vmatpush1.msra.mxu0 0.0
      %1130 = vmatprep.mubr.f32.mxu0 0.0
      %1131 = vmatmul.mubr.f32.gmra.mrb[0].mxu0 %v697
      %v1132 = vpop.f32.mrb[0].mxu0
      %v1133 = vadd.f32 0.0, %v1132
      %v1134 = vpop.f32.mrb[0].mxu0
      %1135 = vdwg.mxu0
      %v1136 = vmax.f32 %v1045, %v1133
      %s1137 = scalar_lea.vmem %s6, 640
      %v1138 = vld [vmem:[%s1137] sm:$0xff]
      %v1139 = vld [vmem:[%s1137 + $0x8] sm:$0xff]
      %v1140 = vld [vmem:[%s1137 + $0x10] sm:$0xff]
      %v1141 = vld [vmem:[%s1137 + $0x18] sm:$0xff]
      %v1142 = vld [vmem:[%s1137 + $0x20] sm:$0xff]
      %v1143 = vld [vmem:[%s1137 + $0x28] sm:$0xff]
      %v1144 = vld [vmem:[%s1137 + $0x30] sm:$0xff]
      %v1145 = vld [vmem:[%s1137 + $0x38] sm:$0xff]
      %v1146 = vld [vmem:[%s1137 + $0x40] sm:$0xff]
      %v1147 = vld [vmem:[%s1137 + $0x48] sm:$0xff]
      %v1148 = vld [vmem:[%s1137 + $0x50] sm:$0xff]
      %v1149 = vld [vmem:[%s1137 + $0x58] sm:$0xff]
      %v1150 = vld [vmem:[%s1137 + $0x60] sm:$0xff]
      %v1151 = vld [vmem:[%s1137 + $0x68] sm:$0xff]
      %v1152 = vld [vmem:[%s1137 + $0x70] sm:$0xff]
      %v1153 = vld [vmem:[%s1137 + $0x78] sm:$0x1]
      %v1155 = vsel %vm699, %v1153, 0
      %1157 = vmatprep.subr.mxu0 0.0
      %1158 = vmatpush1.msra.mxu0 %v1138
      %1159 = vmatprep.subr.mxu0 0.0
      %1160 = vmatpush1.msra.mxu0 %v1139
      %1161 = vmatprep.subr.mxu0 0.0
      %1162 = vmatpush1.msra.mxu0 %v1140
      %1163 = vmatprep.subr.mxu0 0.0
      %1164 = vmatpush1.msra.mxu0 %v1141
      %1165 = vmatprep.subr.mxu0 0.0
      %1166 = vmatpush1.msra.mxu0 %v1142
      %1167 = vmatprep.subr.mxu0 0.0
      %1168 = vmatpush1.msra.mxu0 %v1143
      %1169 = vmatprep.subr.mxu0 0.0
      %1170 = vmatpush1.msra.mxu0 %v1144
      %1171 = vmatprep.subr.mxu0 0.0
      %1172 = vmatpush1.msra.mxu0 %v1145
      %1173 = vmatprep.subr.mxu0 0.0
      %1174 = vmatpush1.msra.mxu0 %v1146
      %1175 = vmatprep.subr.mxu0 0.0
      %1176 = vmatpush1.msra.mxu0 %v1147
      %1177 = vmatprep.subr.mxu0 0.0
      %1178 = vmatpush1.msra.mxu0 %v1148
      %1179 = vmatprep.subr.mxu0 0.0
      %1180 = vmatpush1.msra.mxu0 %v1149
      %1181 = vmatprep.subr.mxu0 0.0
      %1182 = vmatpush1.msra.mxu0 %v1150
      %1183 = vmatprep.subr.mxu0 0.0
      %1184 = vmatpush1.msra.mxu0 %v1151
      %1185 = vmatprep.subr.mxu0 0.0
      %1186 = vmatpush1.msra.mxu0 %v1152
      %1187 = vmatprep.subr.mxu0 0.0
      %1188 = vmatpush1.msra.mxu0 %v1155
      %1189 = vmatprep.subr.mxu0 0.0
      %1190 = vmatpush1.msra.mxu0 0.0
      %1191 = vmatprep.subr.mxu0 0.0
      %1192 = vmatpush1.msra.mxu0 0.0
      %1193 = vmatprep.subr.mxu0 0.0
      %1194 = vmatpush1.msra.mxu0 0.0
      %1195 = vmatprep.subr.mxu0 0.0
      %1196 = vmatpush1.msra.mxu0 0.0
      %1197 = vmatprep.subr.mxu0 0.0
      %1198 = vmatpush1.msra.mxu0 0.0
      %1199 = vmatprep.subr.mxu0 0.0
      %1200 = vmatpush1.msra.mxu0 0.0
      %1201 = vmatprep.subr.mxu0 0.0
      %1202 = vmatpush1.msra.mxu0 0.0
      %1203 = vmatprep.subr.mxu0 0.0
      %1204 = vmatpush1.msra.mxu0 0.0
      %1205 = vmatprep.subr.mxu0 0.0
      %1206 = vmatpush1.msra.mxu0 0.0
      %1207 = vmatprep.subr.mxu0 0.0
      %1208 = vmatpush1.msra.mxu0 0.0
      %1209 = vmatprep.subr.mxu0 0.0
      %1210 = vmatpush1.msra.mxu0 0.0
      %1211 = vmatprep.subr.mxu0 0.0
      %1212 = vmatpush1.msra.mxu0 0.0
      %1213 = vmatprep.subr.mxu0 0.0
      %1214 = vmatpush1.msra.mxu0 0.0
      %1215 = vmatprep.subr.mxu0 0.0
      %1216 = vmatpush1.msra.mxu0 0.0
      %1217 = vmatprep.subr.mxu0 0.0
      %1218 = vmatpush1.msra.mxu0 0.0
      %1219 = vmatprep.subr.mxu0 0.0
      %1220 = vmatpush1.msra.mxu0 0.0
      %1221 = vmatprep.mubr.f32.mxu0 0.0
      %1222 = vmatmul.mubr.f32.gmra.mrb[0].mxu0 %v697
      %v1223 = vpop.f32.mrb[0].mxu0
      %v1224 = vadd.f32 0.0, %v1223
      %v1225 = vpop.f32.mrb[0].mxu0
      %1226 = vdwg.mxu0
      %v1227 = vmax.f32 %v1136, %v1224
      %s1228 = scalar_lea.vmem %s6, 768
      %v1229 = vld [vmem:[%s1228] sm:$0xff]
      %v1230 = vld [vmem:[%s1228 + $0x8] sm:$0xff]
      %v1231 = vld [vmem:[%s1228 + $0x10] sm:$0xff]
      %v1232 = vld [vmem:[%s1228 + $0x18] sm:$0xff]
      %v1233 = vld [vmem:[%s1228 + $0x20] sm:$0xff]
      %v1234 = vld [vmem:[%s1228 + $0x28] sm:$0xff]
      %v1235 = vld [vmem:[%s1228 + $0x30] sm:$0xff]
      %v1236 = vld [vmem:[%s1228 + $0x38] sm:$0xff]
      %v1237 = vld [vmem:[%s1228 + $0x40] sm:$0xff]
      %v1238 = vld [vmem:[%s1228 + $0x48] sm:$0xff]
      %v1239 = vld [vmem:[%s1228 + $0x50] sm:$0xff]
      %v1240 = vld [vmem:[%s1228 + $0x58] sm:$0xff]
      %v1241 = vld [vmem:[%s1228 + $0x60] sm:$0xff]
      %v1242 = vld [vmem:[%s1228 + $0x68] sm:$0xff]
      %v1243 = vld [vmem:[%s1228 + $0x70] sm:$0xff]
      %v1244 = vld [vmem:[%s1228 + $0x78] sm:$0x1]
      %v1246 = vsel %vm699, %v1244, 0
      %1248 = vmatprep.subr.mxu0 0.0
      %1249 = vmatpush1.msra.mxu0 %v1229
      %1250 = vmatprep.subr.mxu0 0.0
      %1251 = vmatpush1.msra.mxu0 %v1230
      %1252 = vmatprep.subr.mxu0 0.0
      %1253 = vmatpush1.msra.mxu0 %v1231
      %1254 = vmatprep.subr.mxu0 0.0
      %1255 = vmatpush1.msra.mxu0 %v1232
      %1256 = vmatprep.subr.mxu0 0.0
      %1257 = vmatpush1.msra.mxu0 %v1233
      %1258 = vmatprep.subr.mxu0 0.0
      %1259 = vmatpush1.msra.mxu0 %v1234
      %1260 = vmatprep.subr.mxu0 0.0
      %1261 = vmatpush1.msra.mxu0 %v1235
      %1262 = vmatprep.subr.mxu0 0.0
      %1263 = vmatpush1.msra.mxu0 %v1236
      %1264 = vmatprep.subr.mxu0 0.0
      %1265 = vmatpush1.msra.mxu0 %v1237
      %1266 = vmatprep.subr.mxu0 0.0
      %1267 = vmatpush1.msra.mxu0 %v1238
      %1268 = vmatprep.subr.mxu0 0.0
      %1269 = vmatpush1.msra.mxu0 %v1239
      %1270 = vmatprep.subr.mxu0 0.0
      %1271 = vmatpush1.msra.mxu0 %v1240
      %1272 = vmatprep.subr.mxu0 0.0
      %1273 = vmatpush1.msra.mxu0 %v1241
      %1274 = vmatprep.subr.mxu0 0.0
      %1275 = vmatpush1.msra.mxu0 %v1242
      %1276 = vmatprep.subr.mxu0 0.0
      %1277 = vmatpush1.msra.mxu0 %v1243
      %1278 = vmatprep.subr.mxu0 0.0
      %1279 = vmatpush1.msra.mxu0 %v1246
      %1280 = vmatprep.subr.mxu0 0.0
      %1281 = vmatpush1.msra.mxu0 0.0
      %1282 = vmatprep.subr.mxu0 0.0
      %1283 = vmatpush1.msra.mxu0 0.0
      %1284 = vmatprep.subr.mxu0 0.0
      %1285 = vmatpush1.msra.mxu0 0.0
      %1286 = vmatprep.subr.mxu0 0.0
      %1287 = vmatpush1.msra.mxu0 0.0
      %1288 = vmatprep.subr.mxu0 0.0
      %1289 = vmatpush1.msra.mxu0 0.0
      %1290 = vmatprep.subr.mxu0 0.0
      %1291 = vmatpush1.msra.mxu0 0.0
      %1292 = vmatprep.subr.mxu0 0.0
      %1293 = vmatpush1.msra.mxu0 0.0
      %1294 = vmatprep.subr.mxu0 0.0
      %1295 = vmatpush1.msra.mxu0 0.0
      %1296 = vmatprep.subr.mxu0 0.0
      %1297 = vmatpush1.msra.mxu0 0.0
      %1298 = vmatprep.subr.mxu0 0.0
      %1299 = vmatpush1.msra.mxu0 0.0
      %1300 = vmatprep.subr.mxu0 0.0
      %1301 = vmatpush1.msra.mxu0 0.0
      %1302 = vmatprep.subr.mxu0 0.0
      %1303 = vmatpush1.msra.mxu0 0.0
      %1304 = vmatprep.subr.mxu0 0.0
      %1305 = vmatpush1.msra.mxu0 0.0
      %1306 = vmatprep.subr.mxu0 0.0
      %1307 = vmatpush1.msra.mxu0 0.0
      %1308 = vmatprep.subr.mxu0 0.0
      %1309 = vmatpush1.msra.mxu0 0.0
      %1310 = vmatprep.subr.mxu0 0.0
      %1311 = vmatpush1.msra.mxu0 0.0
      %1312 = vmatprep.mubr.f32.mxu0 0.0
      %1313 = vmatmul.mubr.f32.gmra.mrb[0].mxu0 %v697
      %v1314 = vpop.f32.mrb[0].mxu0
      %v1315 = vadd.f32 0.0, %v1314
      %v1316 = vpop.f32.mrb[0].mxu0
      %1317 = vdwg.mxu0
      %v1318 = vmax.f32 %v1227, %v1315
      %s1319 = scalar_lea.vmem %s6, 896
      %v1320 = vld [vmem:[%s1319] sm:$0xff]
      %v1321 = vld [vmem:[%s1319 + $0x8] sm:$0xff]
      %v1322 = vld [vmem:[%s1319 + $0x10] sm:$0xff]
      %v1323 = vld [vmem:[%s1319 + $0x18] sm:$0xff]
      %v1324 = vld [vmem:[%s1319 + $0x20] sm:$0xff]
      %v1325 = vld [vmem:[%s1319 + $0x28] sm:$0xff]
      %v1326 = vld [vmem:[%s1319 + $0x30] sm:$0xff]
      %v1327 = vld [vmem:[%s1319 + $0x38] sm:$0xff]
      %v1328 = vld [vmem:[%s1319 + $0x40] sm:$0xff]
      %v1329 = vld [vmem:[%s1319 + $0x48] sm:$0xff]
      %v1330 = vld [vmem:[%s1319 + $0x50] sm:$0xff]
      %v1331 = vld [vmem:[%s1319 + $0x58] sm:$0xff]
      %v1332 = vld [vmem:[%s1319 + $0x60] sm:$0xff]
      %v1333 = vld [vmem:[%s1319 + $0x68] sm:$0xff]
      %v1334 = vld [vmem:[%s1319 + $0x70] sm:$0xff]
      %v1335 = vld [vmem:[%s1319 + $0x78] sm:$0x1]
      %v1337 = vsel %vm699, %v1335, 0
      %1339 = vmatprep.subr.mxu0 0.0
      %1340 = vmatpush1.msra.mxu0 %v1320
      %1341 = vmatprep.subr.mxu0 0.0
      %1342 = vmatpush1.msra.mxu0 %v1321
      %1343 = vmatprep.subr.mxu0 0.0
      %1344 = vmatpush1.msra.mxu0 %v1322
      %1345 = vmatprep.subr.mxu0 0.0
      %1346 = vmatpush1.msra.mxu0 %v1323
      %1347 = vmatprep.subr.mxu0 0.0
      %1348 = vmatpush1.msra.mxu0 %v1324
      %1349 = vmatprep.subr.mxu0 0.0
      %1350 = vmatpush1.msra.mxu0 %v1325
      %1351 = vmatprep.subr.mxu0 0.0
      %1352 = vmatpush1.msra.mxu0 %v1326
      %1353 = vmatprep.subr.mxu0 0.0
      %1354 = vmatpush1.msra.mxu0 %v1327
      %1355 = vmatprep.subr.mxu0 0.0
      %1356 = vmatpush1.msra.mxu0 %v1328
      %1357 = vmatprep.subr.mxu0 0.0
      %1358 = vmatpush1.msra.mxu0 %v1329
      %1359 = vmatprep.subr.mxu0 0.0
      %1360 = vmatpush1.msra.mxu0 %v1330
      %1361 = vmatprep.subr.mxu0 0.0
      %1362 = vmatpush1.msra.mxu0 %v1331
      %1363 = vmatprep.subr.mxu0 0.0
      %1364 = vmatpush1.msra.mxu0 %v1332
      %1365 = vmatprep.subr.mxu0 0.0
      %1366 = vmatpush1.msra.mxu0 %v1333
      %1367 = vmatprep.subr.mxu0 0.0
      %1368 = vmatpush1.msra.mxu0 %v1334
      %1369 = vmatprep.subr.mxu0 0.0
      %1370 = vmatpush1.msra.mxu0 %v1337
      %1371 = vmatprep.subr.mxu0 0.0
      %1372 = vmatpush1.msra.mxu0 0.0
      %1373 = vmatprep.subr.mxu0 0.0
      %1374 = vmatpush1.msra.mxu0 0.0
      %1375 = vmatprep.subr.mxu0 0.0
      %1376 = vmatpush1.msra.mxu0 0.0
      %1377 = vmatprep.subr.mxu0 0.0
      %1378 = vmatpush1.msra.mxu0 0.0
      %1379 = vmatprep.subr.mxu0 0.0
      %1380 = vmatpush1.msra.mxu0 0.0
      %1381 = vmatprep.subr.mxu0 0.0
      %1382 = vmatpush1.msra.mxu0 0.0
      %1383 = vmatprep.subr.mxu0 0.0
      %1384 = vmatpush1.msra.mxu0 0.0
      %1385 = vmatprep.subr.mxu0 0.0
      %1386 = vmatpush1.msra.mxu0 0.0
      %1387 = vmatprep.subr.mxu0 0.0
      %1388 = vmatpush1.msra.mxu0 0.0
      %1389 = vmatprep.subr.mxu0 0.0
      %1390 = vmatpush1.msra.mxu0 0.0
      %1391 = vmatprep.subr.mxu0 0.0
      %1392 = vmatpush1.msra.mxu0 0.0
      %1393 = vmatprep.subr.mxu0 0.0
      %1394 = vmatpush1.msra.mxu0 0.0
      %1395 = vmatprep.subr.mxu0 0.0
      %1396 = vmatpush1.msra.mxu0 0.0
      %1397 = vmatprep.subr.mxu0 0.0
      %1398 = vmatpush1.msra.mxu0 0.0
      %1399 = vmatprep.subr.mxu0 0.0
      %1400 = vmatpush1.msra.mxu0 0.0
      %1401 = vmatprep.subr.mxu0 0.0
      %1402 = vmatpush1.msra.mxu0 0.0
      %1403 = vmatprep.mubr.f32.mxu0 0.0
      %1404 = vmatmul.mubr.f32.gmra.mrb[0].mxu0 %v697
      %v1405 = vpop.f32.mrb[0].mxu0
      %v1406 = vadd.f32 0.0, %v1405
      %v1407 = vpop.f32.mrb[0].mxu0
      %1408 = vdwg.mxu0
      %v1409 = vmax.f32 %v1318, %v1406
      %s1410 = scalar_lea.vmem %s6, 1024
      %v1411 = vld [vmem:[%s1410] sm:$0xff]
      %v1412 = vld [vmem:[%s1410 + $0x8] sm:$0xff]
      %v1413 = vld [vmem:[%s1410 + $0x10] sm:$0xff]
      %v1414 = vld [vmem:[%s1410 + $0x18] sm:$0xff]
      %v1415 = vld [vmem:[%s1410 + $0x20] sm:$0xff]
      %v1416 = vld [vmem:[%s1410 + $0x28] sm:$0xff]
      %v1417 = vld [vmem:[%s1410 + $0x30] sm:$0xff]
      %v1418 = vld [vmem:[%s1410 + $0x38] sm:$0xff]
      %v1419 = vld [vmem:[%s1410 + $0x40] sm:$0xff]
      %v1420 = vld [vmem:[%s1410 + $0x48] sm:$0xff]
      %v1421 = vld [vmem:[%s1410 + $0x50] sm:$0xff]
      %v1422 = vld [vmem:[%s1410 + $0x58] sm:$0xff]
      %v1423 = vld [vmem:[%s1410 + $0x60] sm:$0xff]
      %v1424 = vld [vmem:[%s1410 + $0x68] sm:$0xff]
      %v1425 = vld [vmem:[%s1410 + $0x70] sm:$0xff]
      %v1426 = vld [vmem:[%s1410 + $0x78] sm:$0x1]
      %v1428 = vsel %vm699, %v1426, 0
      %1430 = vmatprep.subr.mxu0 0.0
      %1431 = vmatpush1.msra.mxu0 %v1411
      %1432 = vmatprep.subr.mxu0 0.0
      %1433 = vmatpush1.msra.mxu0 %v1412
      %1434 = vmatprep.subr.mxu0 0.0
      %1435 = vmatpush1.msra.mxu0 %v1413
      %1436 = vmatprep.subr.mxu0 0.0
      %1437 = vmatpush1.msra.mxu0 %v1414
      %1438 = vmatprep.subr.mxu0 0.0
      %1439 = vmatpush1.msra.mxu0 %v1415
      %1440 = vmatprep.subr.mxu0 0.0
      %1441 = vmatpush1.msra.mxu0 %v1416
      %1442 = vmatprep.subr.mxu0 0.0
      %1443 = vmatpush1.msra.mxu0 %v1417
      %1444 = vmatprep.subr.mxu0 0.0
      %1445 = vmatpush1.msra.mxu0 %v1418
      %1446 = vmatprep.subr.mxu0 0.0
      %1447 = vmatpush1.msra.mxu0 %v1419
      %1448 = vmatprep.subr.mxu0 0.0
      %1449 = vmatpush1.msra.mxu0 %v1420
      %1450 = vmatprep.subr.mxu0 0.0
      %1451 = vmatpush1.msra.mxu0 %v1421
      %1452 = vmatprep.subr.mxu0 0.0
      %1453 = vmatpush1.msra.mxu0 %v1422
      %1454 = vmatprep.subr.mxu0 0.0
      %1455 = vmatpush1.msra.mxu0 %v1423
      %1456 = vmatprep.subr.mxu0 0.0
      %1457 = vmatpush1.msra.mxu0 %v1424
      %1458 = vmatprep.subr.mxu0 0.0
      %1459 = vmatpush1.msra.mxu0 %v1425
      %1460 = vmatprep.subr.mxu0 0.0
      %1461 = vmatpush1.msra.mxu0 %v1428
      %1462 = vmatprep.subr.mxu0 0.0
      %1463 = vmatpush1.msra.mxu0 0.0
      %1464 = vmatprep.subr.mxu0 0.0
      %1465 = vmatpush1.msra.mxu0 0.0
      %1466 = vmatprep.subr.mxu0 0.0
      %1467 = vmatpush1.msra.mxu0 0.0
      %1468 = vmatprep.subr.mxu0 0.0
      %1469 = vmatpush1.msra.mxu0 0.0
      %1470 = vmatprep.subr.mxu0 0.0
      %1471 = vmatpush1.msra.mxu0 0.0
      %1472 = vmatprep.subr.mxu0 0.0
      %1473 = vmatpush1.msra.mxu0 0.0
      %1474 = vmatprep.subr.mxu0 0.0
      %1475 = vmatpush1.msra.mxu0 0.0
      %1476 = vmatprep.subr.mxu0 0.0
      %1477 = vmatpush1.msra.mxu0 0.0
      %1478 = vmatprep.subr.mxu0 0.0
      %1479 = vmatpush1.msra.mxu0 0.0
      %1480 = vmatprep.subr.mxu0 0.0
      %1481 = vmatpush1.msra.mxu0 0.0
      %1482 = vmatprep.subr.mxu0 0.0
      %1483 = vmatpush1.msra.mxu0 0.0
      %1484 = vmatprep.subr.mxu0 0.0
      %1485 = vmatpush1.msra.mxu0 0.0
      %1486 = vmatprep.subr.mxu0 0.0
      %1487 = vmatpush1.msra.mxu0 0.0
      %1488 = vmatprep.subr.mxu0 0.0
      %1489 = vmatpush1.msra.mxu0 0.0
      %1490 = vmatprep.subr.mxu0 0.0
      %1491 = vmatpush1.msra.mxu0 0.0
      %1492 = vmatprep.subr.mxu0 0.0
      %1493 = vmatpush1.msra.mxu0 0.0
      %1494 = vmatprep.mubr.f32.mxu0 0.0
      %1495 = vmatmul.mubr.f32.gmra.mrb[0].mxu0 %v697
      %v1496 = vpop.f32.mrb[0].mxu0
      %v1497 = vadd.f32 0.0, %v1496
      %v1498 = vpop.f32.mrb[0].mxu0
      %1499 = vdwg.mxu0
      %v1500 = vmax.f32 %v1409, %v1497
      %s1501 = scalar_lea.vmem %s6, 1152
      %v1502 = vld [vmem:[%s1501] sm:$0xff]
      %v1503 = vld [vmem:[%s1501 + $0x8] sm:$0xff]
      %v1504 = vld [vmem:[%s1501 + $0x10] sm:$0xff]
      %v1505 = vld [vmem:[%s1501 + $0x18] sm:$0xff]
      %v1506 = vld [vmem:[%s1501 + $0x20] sm:$0xff]
      %v1507 = vld [vmem:[%s1501 + $0x28] sm:$0xff]
      %v1508 = vld [vmem:[%s1501 + $0x30] sm:$0xff]
      %v1509 = vld [vmem:[%s1501 + $0x38] sm:$0xff]
      %v1510 = vld [vmem:[%s1501 + $0x40] sm:$0xff]
      %v1511 = vld [vmem:[%s1501 + $0x48] sm:$0xff]
      %v1512 = vld [vmem:[%s1501 + $0x50] sm:$0xff]
      %v1513 = vld [vmem:[%s1501 + $0x58] sm:$0xff]
      %v1514 = vld [vmem:[%s1501 + $0x60] sm:$0xff]
      %v1515 = vld [vmem:[%s1501 + $0x68] sm:$0xff]
      %v1516 = vld [vmem:[%s1501 + $0x70] sm:$0xff]
      %v1517 = vld [vmem:[%s1501 + $0x78] sm:$0x1]
      %v1519 = vsel %vm699, %v1517, 0
      %1521 = vmatprep.subr.mxu0 0.0
      %1522 = vmatpush1.msra.mxu0 %v1502
      %1523 = vmatprep.subr.mxu0 0.0
      %1524 = vmatpush1.msra.mxu0 %v1503
      %1525 = vmatprep.subr.mxu0 0.0
      %1526 = vmatpush1.msra.mxu0 %v1504
      %1527 = vmatprep.subr.mxu0 0.0
      %1528 = vmatpush1.msra.mxu0 %v1505
      %1529 = vmatprep.subr.mxu0 0.0
      %1530 = vmatpush1.msra.mxu0 %v1506
      %1531 = vmatprep.subr.mxu0 0.0
      %1532 = vmatpush1.msra.mxu0 %v1507
      %1533 = vmatprep.subr.mxu0 0.0
      %1534 = vmatpush1.msra.mxu0 %v1508
      %1535 = vmatprep.subr.mxu0 0.0
      %1536 = vmatpush1.msra.mxu0 %v1509
      %1537 = vmatprep.subr.mxu0 0.0
      %1538 = vmatpush1.msra.mxu0 %v1510
      %1539 = vmatprep.subr.mxu0 0.0
      %1540 = vmatpush1.msra.mxu0 %v1511
      %1541 = vmatprep.subr.mxu0 0.0
      %1542 = vmatpush1.msra.mxu0 %v1512
      %1543 = vmatprep.subr.mxu0 0.0
      %1544 = vmatpush1.msra.mxu0 %v1513
      %1545 = vmatprep.subr.mxu0 0.0
      %1546 = vmatpush1.msra.mxu0 %v1514
      %1547 = vmatprep.subr.mxu0 0.0
      %1548 = vmatpush1.msra.mxu0 %v1515
      %1549 = vmatprep.subr.mxu0 0.0
      %1550 = vmatpush1.msra.mxu0 %v1516
      %1551 = vmatprep.subr.mxu0 0.0
      %1552 = vmatpush1.msra.mxu0 %v1519
      %1553 = vmatprep.subr.mxu0 0.0
      %1554 = vmatpush1.msra.mxu0 0.0
      %1555 = vmatprep.subr.mxu0 0.0
      %1556 = vmatpush1.msra.mxu0 0.0
      %1557 = vmatprep.subr.mxu0 0.0
      %1558 = vmatpush1.msra.mxu0 0.0
      %1559 = vmatprep.subr.mxu0 0.0
      %1560 = vmatpush1.msra.mxu0 0.0
      %1561 = vmatprep.subr.mxu0 0.0
      %1562 = vmatpush1.msra.mxu0 0.0
      %1563 = vmatprep.subr.mxu0 0.0
      %1564 = vmatpush1.msra.mxu0 0.0
      %1565 = vmatprep.subr.mxu0 0.0
      %1566 = vmatpush1.msra.mxu0 0.0
      %1567 = vmatprep.subr.mxu0 0.0
      %1568 = vmatpush1.msra.mxu0 0.0
      %1569 = vmatprep.subr.mxu0 0.0
      %1570 = vmatpush1.msra.mxu0 0.0
      %1571 = vmatprep.subr.mxu0 0.0
      %1572 = vmatpush1.msra.mxu0 0.0
      %1573 = vmatprep.subr.mxu0 0.0
      %1574 = vmatpush1.msra.mxu0 0.0
      %1575 = vmatprep.subr.mxu0 0.0
      %1576 = vmatpush1.msra.mxu0 0.0
      %1577 = vmatprep.subr.mxu0 0.0
      %1578 = vmatpush1.msra.mxu0 0.0
      %1579 = vmatprep.subr.mxu0 0.0
      %1580 = vmatpush1.msra.mxu0 0.0
      %1581 = vmatprep.subr.mxu0 0.0
      %1582 = vmatpush1.msra.mxu0 0.0
      %1583 = vmatprep.subr.mxu0 0.0
      %1584 = vmatpush1.msra.mxu0 0.0
      %1585 = vmatprep.mubr.f32.mxu0 0.0
      %1586 = vmatmul.mubr.f32.gmra.mrb[0].mxu0 %v697
      %v1587 = vpop.f32.mrb[0].mxu0
      %v1588 = vadd.f32 0.0, %v1587
      %v1589 = vpop.f32.mrb[0].mxu0
      %1590 = vdwg.mxu0
      %v1591 = vmax.f32 %v1500, %v1588
      %s1592 = scalar_lea.vmem %s6, 1280
      %v1593 = vld [vmem:[%s1592] sm:$0xff]
      %v1594 = vld [vmem:[%s1592 + $0x8] sm:$0xff]
      %v1595 = vld [vmem:[%s1592 + $0x10] sm:$0xff]
      %v1596 = vld [vmem:[%s1592 + $0x18] sm:$0xff]
      %v1597 = vld [vmem:[%s1592 + $0x20] sm:$0xff]
      %v1598 = vld [vmem:[%s1592 + $0x28] sm:$0xff]
      %v1599 = vld [vmem:[%s1592 + $0x30] sm:$0xff]
      %v1600 = vld [vmem:[%s1592 + $0x38] sm:$0xff]
      %v1601 = vld [vmem:[%s1592 + $0x40] sm:$0xff]
      %v1602 = vld [vmem:[%s1592 + $0x48] sm:$0xff]
      %v1603 = vld [vmem:[%s1592 + $0x50] sm:$0xff]
      %v1604 = vld [vmem:[%s1592 + $0x58] sm:$0xff]
      %v1605 = vld [vmem:[%s1592 + $0x60] sm:$0xff]
      %v1606 = vld [vmem:[%s1592 + $0x68] sm:$0xff]
      %v1607 = vld [vmem:[%s1592 + $0x70] sm:$0xff]
      %v1608 = vld [vmem:[%s1592 + $0x78] sm:$0x1]
      %v1610 = vsel %vm699, %v1608, 0
      %1612 = vmatprep.subr.mxu0 0.0
      %1613 = vmatpush1.msra.mxu0 %v1593
      %1614 = vmatprep.subr.mxu0 0.0
      %1615 = vmatpush1.msra.mxu0 %v1594
      %1616 = vmatprep.subr.mxu0 0.0
      %1617 = vmatpush1.msra.mxu0 %v1595
      %1618 = vmatprep.subr.mxu0 0.0
      %1619 = vmatpush1.msra.mxu0 %v1596
      %1620 = vmatprep.subr.mxu0 0.0
      %1621 = vmatpush1.msra.mxu0 %v1597
      %1622 = vmatprep.subr.mxu0 0.0
      %1623 = vmatpush1.msra.mxu0 %v1598
      %1624 = vmatprep.subr.mxu0 0.0
      %1625 = vmatpush1.msra.mxu0 %v1599
      %1626 = vmatprep.subr.mxu0 0.0
      %1627 = vmatpush1.msra.mxu0 %v1600
      %1628 = vmatprep.subr.mxu0 0.0
      %1629 = vmatpush1.msra.mxu0 %v1601
      %1630 = vmatprep.subr.mxu0 0.0
      %1631 = vmatpush1.msra.mxu0 %v1602
      %1632 = vmatprep.subr.mxu0 0.0
      %1633 = vmatpush1.msra.mxu0 %v1603
      %1634 = vmatprep.subr.mxu0 0.0
      %1635 = vmatpush1.msra.mxu0 %v1604
      %1636 = vmatprep.subr.mxu0 0.0
      %1637 = vmatpush1.msra.mxu0 %v1605
      %1638 = vmatprep.subr.mxu0 0.0
      %1639 = vmatpush1.msra.mxu0 %v1606
      %1640 = vmatprep.subr.mxu0 0.0
      %1641 = vmatpush1.msra.mxu0 %v1607
      %1642 = vmatprep.subr.mxu0 0.0
      %1643 = vmatpush1.msra.mxu0 %v1610
      %1644 = vmatprep.subr.mxu0 0.0
      %1645 = vmatpush1.msra.mxu0 0.0
      %1646 = vmatprep.subr.mxu0 0.0
      %1647 = vmatpush1.msra.mxu0 0.0
      %1648 = vmatprep.subr.mxu0 0.0
      %1649 = vmatpush1.msra.mxu0 0.0
      %1650 = vmatprep.subr.mxu0 0.0
      %1651 = vmatpush1.msra.mxu0 0.0
      %1652 = vmatprep.subr.mxu0 0.0
      %1653 = vmatpush1.msra.mxu0 0.0
      %1654 = vmatprep.subr.mxu0 0.0
      %1655 = vmatpush1.msra.mxu0 0.0
      %1656 = vmatprep.subr.mxu0 0.0
      %1657 = vmatpush1.msra.mxu0 0.0
      %1658 = vmatprep.subr.mxu0 0.0
      %1659 = vmatpush1.msra.mxu0 0.0
      %1660 = vmatprep.subr.mxu0 0.0
      %1661 = vmatpush1.msra.mxu0 0.0
      %1662 = vmatprep.subr.mxu0 0.0
      %1663 = vmatpush1.msra.mxu0 0.0
      %1664 = vmatprep.subr.mxu0 0.0
      %1665 = vmatpush1.msra.mxu0 0.0
      %1666 = vmatprep.subr.mxu0 0.0
      %1667 = vmatpush1.msra.mxu0 0.0
      %1668 = vmatprep.subr.mxu0 0.0
      %1669 = vmatpush1.msra.mxu0 0.0
      %1670 = vmatprep.subr.mxu0 0.0
      %1671 = vmatpush1.msra.mxu0 0.0
      %1672 = vmatprep.subr.mxu0 0.0
      %1673 = vmatpush1.msra.mxu0 0.0
      %1674 = vmatprep.subr.mxu0 0.0
      %1675 = vmatpush1.msra.mxu0 0.0
      %1676 = vmatprep.mubr.f32.mxu0 0.0
      %1677 = vmatmul.mubr.f32.gmra.mrb[0].mxu0 %v697
      %v1678 = vpop.f32.mrb[0].mxu0
      %v1679 = vadd.f32 0.0, %v1678
      %v1680 = vpop.f32.mrb[0].mxu0
      %1681 = vdwg.mxu0
      %v1682 = vmax.f32 %v1591, %v1679
      %s1683 = scalar_lea.vmem %s6, 1408
      %v1684 = vld [vmem:[%s1683] sm:$0xff]
      %v1685 = vld [vmem:[%s1683 + $0x8] sm:$0xff]
      %v1686 = vld [vmem:[%s1683 + $0x10] sm:$0xff]
      %v1687 = vld [vmem:[%s1683 + $0x18] sm:$0xff]
      %v1688 = vld [vmem:[%s1683 + $0x20] sm:$0xff]
      %v1689 = vld [vmem:[%s1683 + $0x28] sm:$0xff]
      %v1690 = vld [vmem:[%s1683 + $0x30] sm:$0xff]
      %v1691 = vld [vmem:[%s1683 + $0x38] sm:$0xff]
      %v1692 = vld [vmem:[%s1683 + $0x40] sm:$0xff]
      %v1693 = vld [vmem:[%s1683 + $0x48] sm:$0xff]
      %v1694 = vld [vmem:[%s1683 + $0x50] sm:$0xff]
      %v1695 = vld [vmem:[%s1683 + $0x58] sm:$0xff]
      %v1696 = vld [vmem:[%s1683 + $0x60] sm:$0xff]
      %v1697 = vld [vmem:[%s1683 + $0x68] sm:$0xff]
      %v1698 = vld [vmem:[%s1683 + $0x70] sm:$0xff]
      %v1699 = vld [vmem:[%s1683 + $0x78] sm:$0x1]
      %v1701 = vsel %vm699, %v1699, 0
      %1703 = vmatprep.subr.mxu0 0.0
      %1704 = vmatpush1.msra.mxu0 %v1684
      %1705 = vmatprep.subr.mxu0 0.0
      %1706 = vmatpush1.msra.mxu0 %v1685
      %1707 = vmatprep.subr.mxu0 0.0
      %1708 = vmatpush1.msra.mxu0 %v1686
      %1709 = vmatprep.subr.mxu0 0.0
      %1710 = vmatpush1.msra.mxu0 %v1687
      %1711 = vmatprep.subr.mxu0 0.0
      %1712 = vmatpush1.msra.mxu0 %v1688
      %1713 = vmatprep.subr.mxu0 0.0
      %1714 = vmatpush1.msra.mxu0 %v1689
      %1715 = vmatprep.subr.mxu0 0.0
      %1716 = vmatpush1.msra.mxu0 %v1690
      %1717 = vmatprep.subr.mxu0 0.0
      %1718 = vmatpush1.msra.mxu0 %v1691
      %1719 = vmatprep.subr.mxu0 0.0
      %1720 = vmatpush1.msra.mxu0 %v1692
      %1721 = vmatprep.subr.mxu0 0.0
      %1722 = vmatpush1.msra.mxu0 %v1693
      %1723 = vmatprep.subr.mxu0 0.0
      %1724 = vmatpush1.msra.mxu0 %v1694
      %1725 = vmatprep.subr.mxu0 0.0
      %1726 = vmatpush1.msra.mxu0 %v1695
      %1727 = vmatprep.subr.mxu0 0.0
      %1728 = vmatpush1.msra.mxu0 %v1696
      %1729 = vmatprep.subr.mxu0 0.0
      %1730 = vmatpush1.msra.mxu0 %v1697
      %1731 = vmatprep.subr.mxu0 0.0
      %1732 = vmatpush1.msra.mxu0 %v1698
      %1733 = vmatprep.subr.mxu0 0.0
      %1734 = vmatpush1.msra.mxu0 %v1701
      %1735 = vmatprep.subr.mxu0 0.0
      %1736 = vmatpush1.msra.mxu0 0.0
      %1737 = vmatprep.subr.mxu0 0.0
      %1738 = vmatpush1.msra.mxu0 0.0
      %1739 = vmatprep.subr.mxu0 0.0
      %1740 = vmatpush1.msra.mxu0 0.0
      %1741 = vmatprep.subr.mxu0 0.0
      %1742 = vmatpush1.msra.mxu0 0.0
      %1743 = vmatprep.subr.mxu0 0.0
      %1744 = vmatpush1.msra.mxu0 0.0
      %1745 = vmatprep.subr.mxu0 0.0
      %1746 = vmatpush1.msra.mxu0 0.0
      %1747 = vmatprep.subr.mxu0 0.0
      %1748 = vmatpush1.msra.mxu0 0.0
      %1749 = vmatprep.subr.mxu0 0.0
      %1750 = vmatpush1.msra.mxu0 0.0
      %1751 = vmatprep.subr.mxu0 0.0
      %1752 = vmatpush1.msra.mxu0 0.0
      %1753 = vmatprep.subr.mxu0 0.0
      %1754 = vmatpush1.msra.mxu0 0.0
      %1755 = vmatprep.subr.mxu0 0.0
      %1756 = vmatpush1.msra.mxu0 0.0
      %1757 = vmatprep.subr.mxu0 0.0
      %1758 = vmatpush1.msra.mxu0 0.0
      %1759 = vmatprep.subr.mxu0 0.0
      %1760 = vmatpush1.msra.mxu0 0.0
      %1761 = vmatprep.subr.mxu0 0.0
      %1762 = vmatpush1.msra.mxu0 0.0
      %1763 = vmatprep.subr.mxu0 0.0
      %1764 = vmatpush1.msra.mxu0 0.0
      %1765 = vmatprep.subr.mxu0 0.0
      %1766 = vmatpush1.msra.mxu0 0.0
      %1767 = vmatprep.mubr.f32.mxu0 0.0
      %1768 = vmatmul.mubr.f32.gmra.mrb[0].mxu0 %v697
      %v1769 = vpop.f32.mrb[0].mxu0
      %v1770 = vadd.f32 0.0, %v1769
      %v1771 = vpop.f32.mrb[0].mxu0
      %1772 = vdwg.mxu0
      %v1773 = vmax.f32 %v1682, %v1770
      %s1774 = scalar_lea.vmem %s6, 1536
      %v1775 = vld [vmem:[%s1774] sm:$0xff]
      %v1776 = vld [vmem:[%s1774 + $0x8] sm:$0xff]
      %v1777 = vld [vmem:[%s1774 + $0x10] sm:$0xff]
      %v1778 = vld [vmem:[%s1774 + $0x18] sm:$0xff]
      %v1779 = vld [vmem:[%s1774 + $0x20] sm:$0xff]
      %v1780 = vld [vmem:[%s1774 + $0x28] sm:$0xff]
      %v1781 = vld [vmem:[%s1774 + $0x30] sm:$0xff]
      %v1782 = vld [vmem:[%s1774 + $0x38] sm:$0xff]
      %v1783 = vld [vmem:[%s1774 + $0x40] sm:$0xff]
      %v1784 = vld [vmem:[%s1774 + $0x48] sm:$0xff]
      %v1785 = vld [vmem:[%s1774 + $0x50] sm:$0xff]
      %v1786 = vld [vmem:[%s1774 + $0x58] sm:$0xff]
      %v1787 = vld [vmem:[%s1774 + $0x60] sm:$0xff]
      %v1788 = vld [vmem:[%s1774 + $0x68] sm:$0xff]
      %v1789 = vld [vmem:[%s1774 + $0x70] sm:$0xff]
      %v1790 = vld [vmem:[%s1774 + $0x78] sm:$0x1]
      %v1792 = vsel %vm699, %v1790, 0
      %1794 = vmatprep.subr.mxu0 0.0
      %1795 = vmatpush1.msra.mxu0 %v1775
      %1796 = vmatprep.subr.mxu0 0.0
      %1797 = vmatpush1.msra.mxu0 %v1776
      %1798 = vmatprep.subr.mxu0 0.0
      %1799 = vmatpush1.msra.mxu0 %v1777
      %1800 = vmatprep.subr.mxu0 0.0
      %1801 = vmatpush1.msra.mxu0 %v1778
      %1802 = vmatprep.subr.mxu0 0.0
      %1803 = vmatpush1.msra.mxu0 %v1779
      %1804 = vmatprep.subr.mxu0 0.0
      %1805 = vmatpush1.msra.mxu0 %v1780
      %1806 = vmatprep.subr.mxu0 0.0
      %1807 = vmatpush1.msra.mxu0 %v1781
      %1808 = vmatprep.subr.mxu0 0.0
      %1809 = vmatpush1.msra.mxu0 %v1782
      %1810 = vmatprep.subr.mxu0 0.0
      %1811 = vmatpush1.msra.mxu0 %v1783
      %1812 = vmatprep.subr.mxu0 0.0
      %1813 = vmatpush1.msra.mxu0 %v1784
      %1814 = vmatprep.subr.mxu0 0.0
      %1815 = vmatpush1.msra.mxu0 %v1785
      %1816 = vmatprep.subr.mxu0 0.0
      %1817 = vmatpush1.msra.mxu0 %v1786
      %1818 = vmatprep.subr.mxu0 0.0
      %1819 = vmatpush1.msra.mxu0 %v1787
      %1820 = vmatprep.subr.mxu0 0.0
      %1821 = vmatpush1.msra.mxu0 %v1788
      %1822 = vmatprep.subr.mxu0 0.0
      %1823 = vmatpush1.msra.mxu0 %v1789
      %1824 = vmatprep.subr.mxu0 0.0
      %1825 = vmatpush1.msra.mxu0 %v1792
      %1826 = vmatprep.subr.mxu0 0.0
      %1827 = vmatpush1.msra.mxu0 0.0
      %1828 = vmatprep.subr.mxu0 0.0
      %1829 = vmatpush1.msra.mxu0 0.0
      %1830 = vmatprep.subr.mxu0 0.0
      %1831 = vmatpush1.msra.mxu0 0.0
      %1832 = vmatprep.subr.mxu0 0.0
      %1833 = vmatpush1.msra.mxu0 0.0
      %1834 = vmatprep.subr.mxu0 0.0
      %1835 = vmatpush1.msra.mxu0 0.0
      %1836 = vmatprep.subr.mxu0 0.0
      %1837 = vmatpush1.msra.mxu0 0.0
      %1838 = vmatprep.subr.mxu0 0.0
      %1839 = vmatpush1.msra.mxu0 0.0
      %1840 = vmatprep.subr.mxu0 0.0
      %1841 = vmatpush1.msra.mxu0 0.0
      %1842 = vmatprep.subr.mxu0 0.0
      %1843 = vmatpush1.msra.mxu0 0.0
      %1844 = vmatprep.subr.mxu0 0.0
      %1845 = vmatpush1.msra.mxu0 0.0
      %1846 = vmatprep.subr.mxu0 0.0
      %1847 = vmatpush1.msra.mxu0 0.0
      %1848 = vmatprep.subr.mxu0 0.0
      %1849 = vmatpush1.msra.mxu0 0.0
      %1850 = vmatprep.subr.mxu0 0.0
      %1851 = vmatpush1.msra.mxu0 0.0
      %1852 = vmatprep.subr.mxu0 0.0
      %1853 = vmatpush1.msra.mxu0 0.0
      %1854 = vmatprep.subr.mxu0 0.0
      %1855 = vmatpush1.msra.mxu0 0.0
      %1856 = vmatprep.subr.mxu0 0.0
      %1857 = vmatpush1.msra.mxu0 0.0
      %1858 = vmatprep.mubr.f32.mxu0 0.0
      %1859 = vmatmul.mubr.f32.gmra.mrb[0].mxu0 %v697
      %v1860 = vpop.f32.mrb[0].mxu0
      %v1861 = vadd.f32 0.0, %v1860
      %v1862 = vpop.f32.mrb[0].mxu0
      %1863 = vdwg.mxu0
      %v1864 = vmax.f32 %v1773, %v1861
      %s1865 = scalar_lea.vmem %s6, 1664
      %v1866 = vld [vmem:[%s1865] sm:$0xff]
      %v1867 = vld [vmem:[%s1865 + $0x8] sm:$0xff]
      %v1868 = vld [vmem:[%s1865 + $0x10] sm:$0xff]
      %v1869 = vld [vmem:[%s1865 + $0x18] sm:$0xff]
      %v1870 = vld [vmem:[%s1865 + $0x20] sm:$0xff]
      %v1871 = vld [vmem:[%s1865 + $0x28] sm:$0xff]
      %v1872 = vld [vmem:[%s1865 + $0x30] sm:$0xff]
      %v1873 = vld [vmem:[%s1865 + $0x38] sm:$0xff]
      %v1874 = vld [vmem:[%s1865 + $0x40] sm:$0xff]
      %v1875 = vld [vmem:[%s1865 + $0x48] sm:$0xff]
      %v1876 = vld [vmem:[%s1865 + $0x50] sm:$0xff]
      %v1877 = vld [vmem:[%s1865 + $0x58] sm:$0xff]
      %v1878 = vld [vmem:[%s1865 + $0x60] sm:$0xff]
      %v1879 = vld [vmem:[%s1865 + $0x68] sm:$0xff]
      %v1880 = vld [vmem:[%s1865 + $0x70] sm:$0xff]
      %v1881 = vld [vmem:[%s1865 + $0x78] sm:$0x1]
      %v1883 = vsel %vm699, %v1881, 0
      %1885 = vmatprep.subr.mxu0 0.0
      %1886 = vmatpush1.msra.mxu0 %v1866
      %1887 = vmatprep.subr.mxu0 0.0
      %1888 = vmatpush1.msra.mxu0 %v1867
      %1889 = vmatprep.subr.mxu0 0.0
      %1890 = vmatpush1.msra.mxu0 %v1868
      %1891 = vmatprep.subr.mxu0 0.0
      %1892 = vmatpush1.msra.mxu0 %v1869
      %1893 = vmatprep.subr.mxu0 0.0
      %1894 = vmatpush1.msra.mxu0 %v1870
      %1895 = vmatprep.subr.mxu0 0.0
      %1896 = vmatpush1.msra.mxu0 %v1871
      %1897 = vmatprep.subr.mxu0 0.0
      %1898 = vmatpush1.msra.mxu0 %v1872
      %1899 = vmatprep.subr.mxu0 0.0
      %1900 = vmatpush1.msra.mxu0 %v1873
      %1901 = vmatprep.subr.mxu0 0.0
      %1902 = vmatpush1.msra.mxu0 %v1874
      %1903 = vmatprep.subr.mxu0 0.0
      %1904 = vmatpush1.msra.mxu0 %v1875
      %1905 = vmatprep.subr.mxu0 0.0
      %1906 = vmatpush1.msra.mxu0 %v1876
      %1907 = vmatprep.subr.mxu0 0.0
      %1908 = vmatpush1.msra.mxu0 %v1877
      %1909 = vmatprep.subr.mxu0 0.0
      %1910 = vmatpush1.msra.mxu0 %v1878
      %1911 = vmatprep.subr.mxu0 0.0
      %1912 = vmatpush1.msra.mxu0 %v1879
      %1913 = vmatprep.subr.mxu0 0.0
      %1914 = vmatpush1.msra.mxu0 %v1880
      %1915 = vmatprep.subr.mxu0 0.0
      %1916 = vmatpush1.msra.mxu0 %v1883
      %1917 = vmatprep.subr.mxu0 0.0
      %1918 = vmatpush1.msra.mxu0 0.0
      %1919 = vmatprep.subr.mxu0 0.0
      %1920 = vmatpush1.msra.mxu0 0.0
      %1921 = vmatprep.subr.mxu0 0.0
      %1922 = vmatpush1.msra.mxu0 0.0
      %1923 = vmatprep.subr.mxu0 0.0
      %1924 = vmatpush1.msra.mxu0 0.0
      %1925 = vmatprep.subr.mxu0 0.0
      %1926 = vmatpush1.msra.mxu0 0.0
      %1927 = vmatprep.subr.mxu0 0.0
      %1928 = vmatpush1.msra.mxu0 0.0
      %1929 = vmatprep.subr.mxu0 0.0
      %1930 = vmatpush1.msra.mxu0 0.0
      %1931 = vmatprep.subr.mxu0 0.0
      %1932 = vmatpush1.msra.mxu0 0.0
      %1933 = vmatprep.subr.mxu0 0.0
      %1934 = vmatpush1.msra.mxu0 0.0
      %1935 = vmatprep.subr.mxu0 0.0
      %1936 = vmatpush1.msra.mxu0 0.0
      %1937 = vmatprep.subr.mxu0 0.0
      %1938 = vmatpush1.msra.mxu0 0.0
      %1939 = vmatprep.subr.mxu0 0.0
      %1940 = vmatpush1.msra.mxu0 0.0
      %1941 = vmatprep.subr.mxu0 0.0
      %1942 = vmatpush1.msra.mxu0 0.0
      %1943 = vmatprep.subr.mxu0 0.0
      %1944 = vmatpush1.msra.mxu0 0.0
      %1945 = vmatprep.subr.mxu0 0.0
      %1946 = vmatpush1.msra.mxu0 0.0
      %1947 = vmatprep.subr.mxu0 0.0
      %1948 = vmatpush1.msra.mxu0 0.0
      %1949 = vmatprep.mubr.f32.mxu0 0.0
      %1950 = vmatmul.mubr.f32.gmra.mrb[0].mxu0 %v697
      %v1951 = vpop.f32.mrb[0].mxu0
      %v1952 = vadd.f32 0.0, %v1951
      %v1953 = vpop.f32.mrb[0].mxu0
      %1954 = vdwg.mxu0
      %v1955 = vmax.f32 %v1864, %v1952
      %s1956 = scalar_lea.vmem %s6, 1792
      %v1957 = vld [vmem:[%s1956] sm:$0xff]
      %v1958 = vld [vmem:[%s1956 + $0x8] sm:$0xff]
      %v1959 = vld [vmem:[%s1956 + $0x10] sm:$0xff]
      %v1960 = vld [vmem:[%s1956 + $0x18] sm:$0xff]
      %v1961 = vld [vmem:[%s1956 + $0x20] sm:$0xff]
      %v1962 = vld [vmem:[%s1956 + $0x28] sm:$0xff]
      %v1963 = vld [vmem:[%s1956 + $0x30] sm:$0xff]
      %v1964 = vld [vmem:[%s1956 + $0x38] sm:$0xff]
      %v1965 = vld [vmem:[%s1956 + $0x40] sm:$0xff]
      %v1966 = vld [vmem:[%s1956 + $0x48] sm:$0xff]
      %v1967 = vld [vmem:[%s1956 + $0x50] sm:$0xff]
      %v1968 = vld [vmem:[%s1956 + $0x58] sm:$0xff]
      %v1969 = vld [vmem:[%s1956 + $0x60] sm:$0xff]
      %v1970 = vld [vmem:[%s1956 + $0x68] sm:$0xff]
      %v1971 = vld [vmem:[%s1956 + $0x70] sm:$0xff]
      %v1972 = vld [vmem:[%s1956 + $0x78] sm:$0x1]
      %v1974 = vsel %vm699, %v1972, 0
      %1976 = vmatprep.subr.mxu0 0.0
      %1977 = vmatpush1.msra.mxu0 %v1957
      %1978 = vmatprep.subr.mxu0 0.0
      %1979 = vmatpush1.msra.mxu0 %v1958
      %1980 = vmatprep.subr.mxu0 0.0
      %1981 = vmatpush1.msra.mxu0 %v1959
      %1982 = vmatprep.subr.mxu0 0.0
      %1983 = vmatpush1.msra.mxu0 %v1960
      %1984 = vmatprep.subr.mxu0 0.0
      %1985 = vmatpush1.msra.mxu0 %v1961
      %1986 = vmatprep.subr.mxu0 0.0
      %1987 = vmatpush1.msra.mxu0 %v1962
      %1988 = vmatprep.subr.mxu0 0.0
      %1989 = vmatpush1.msra.mxu0 %v1963
      %1990 = vmatprep.subr.mxu0 0.0
      %1991 = vmatpush1.msra.mxu0 %v1964
      %1992 = vmatprep.subr.mxu0 0.0
      %1993 = vmatpush1.msra.mxu0 %v1965
      %1994 = vmatprep.subr.mxu0 0.0
      %1995 = vmatpush1.msra.mxu0 %v1966
      %1996 = vmatprep.subr.mxu0 0.0
      %1997 = vmatpush1.msra.mxu0 %v1967
      %1998 = vmatprep.subr.mxu0 0.0
      %1999 = vmatpush1.msra.mxu0 %v1968
      %2000 = vmatprep.subr.mxu0 0.0
      %2001 = vmatpush1.msra.mxu0 %v1969
      %2002 = vmatprep.subr.mxu0 0.0
      %2003 = vmatpush1.msra.mxu0 %v1970
      %2004 = vmatprep.subr.mxu0 0.0
      %2005 = vmatpush1.msra.mxu0 %v1971
      %2006 = vmatprep.subr.mxu0 0.0
      %2007 = vmatpush1.msra.mxu0 %v1974
      %2008 = vmatprep.subr.mxu0 0.0
      %2009 = vmatpush1.msra.mxu0 0.0
      %2010 = vmatprep.subr.mxu0 0.0
      %2011 = vmatpush1.msra.mxu0 0.0
      %2012 = vmatprep.subr.mxu0 0.0
      %2013 = vmatpush1.msra.mxu0 0.0
      %2014 = vmatprep.subr.mxu0 0.0
      %2015 = vmatpush1.msra.mxu0 0.0
      %2016 = vmatprep.subr.mxu0 0.0
      %2017 = vmatpush1.msra.mxu0 0.0
      %2018 = vmatprep.subr.mxu0 0.0
      %2019 = vmatpush1.msra.mxu0 0.0
      %2020 = vmatprep.subr.mxu0 0.0
      %2021 = vmatpush1.msra.mxu0 0.0
      %2022 = vmatprep.subr.mxu0 0.0
      %2023 = vmatpush1.msra.mxu0 0.0
      %2024 = vmatprep.subr.mxu0 0.0
      %2025 = vmatpush1.msra.mxu0 0.0
      %2026 = vmatprep.subr.mxu0 0.0
      %2027 = vmatpush1.msra.mxu0 0.0
      %2028 = vmatprep.subr.mxu0 0.0
      %2029 = vmatpush1.msra.mxu0 0.0
      %2030 = vmatprep.subr.mxu0 0.0
      %2031 = vmatpush1.msra.mxu0 0.0
      %2032 = vmatprep.subr.mxu0 0.0
      %2033 = vmatpush1.msra.mxu0 0.0
      %2034 = vmatprep.subr.mxu0 0.0
      %2035 = vmatpush1.msra.mxu0 0.0
      %2036 = vmatprep.subr.mxu0 0.0
      %2037 = vmatpush1.msra.mxu0 0.0
      %2038 = vmatprep.subr.mxu0 0.0
      %2039 = vmatpush1.msra.mxu0 0.0
      %2040 = vmatprep.mubr.f32.mxu0 0.0
      %2041 = vmatmul.mubr.f32.gmra.mrb[0].mxu0 %v697
      %v2042 = vpop.f32.mrb[0].mxu0
      %v2043 = vadd.f32 0.0, %v2042
      %v2044 = vpop.f32.mrb[0].mxu0
      %2045 = vdwg.mxu0
      %v2046 = vmax.f32 %v1955, %v2043
      %s2047 = scalar_lea.vmem %s6, 1920
      %v2048 = vld [vmem:[%s2047] sm:$0xff]
      %v2049 = vld [vmem:[%s2047 + $0x8] sm:$0xff]
      %v2050 = vld [vmem:[%s2047 + $0x10] sm:$0xff]
      %v2051 = vld [vmem:[%s2047 + $0x18] sm:$0xff]
      %v2052 = vld [vmem:[%s2047 + $0x20] sm:$0xff]
      %v2053 = vld [vmem:[%s2047 + $0x28] sm:$0xff]
      %v2054 = vld [vmem:[%s2047 + $0x30] sm:$0xff]
      %v2055 = vld [vmem:[%s2047 + $0x38] sm:$0xff]
      %v2056 = vld [vmem:[%s2047 + $0x40] sm:$0xff]
      %v2057 = vld [vmem:[%s2047 + $0x48] sm:$0xff]
      %v2058 = vld [vmem:[%s2047 + $0x50] sm:$0xff]
      %v2059 = vld [vmem:[%s2047 + $0x58] sm:$0xff]
      %v2060 = vld [vmem:[%s2047 + $0x60] sm:$0xff]
      %v2061 = vld [vmem:[%s2047 + $0x68] sm:$0xff]
      %v2062 = vld [vmem:[%s2047 + $0x70] sm:$0xff]
      %v2063 = vld [vmem:[%s2047 + $0x78] sm:$0x1]
      %v2065 = vsel %vm699, %v2063, 0
      %2067 = vmatprep.subr.mxu0 0.0
      %2068 = vmatpush1.msra.mxu0 %v2048
      %2069 = vmatprep.subr.mxu0 0.0
      %2070 = vmatpush1.msra.mxu0 %v2049
      %2071 = vmatprep.subr.mxu0 0.0
      %2072 = vmatpush1.msra.mxu0 %v2050
      %2073 = vmatprep.subr.mxu0 0.0
      %2074 = vmatpush1.msra.mxu0 %v2051
      %2075 = vmatprep.subr.mxu0 0.0
      %2076 = vmatpush1.msra.mxu0 %v2052
      %2077 = vmatprep.subr.mxu0 0.0
      %2078 = vmatpush1.msra.mxu0 %v2053
      %2079 = vmatprep.subr.mxu0 0.0
      %2080 = vmatpush1.msra.mxu0 %v2054
      %2081 = vmatprep.subr.mxu0 0.0
      %2082 = vmatpush1.msra.mxu0 %v2055
      %2083 = vmatprep.subr.mxu0 0.0
      %2084 = vmatpush1.msra.mxu0 %v2056
      %2085 = vmatprep.subr.mxu0 0.0
      %2086 = vmatpush1.msra.mxu0 %v2057
      %2087 = vmatprep.subr.mxu0 0.0
      %2088 = vmatpush1.msra.mxu0 %v2058
      %2089 = vmatprep.subr.mxu0 0.0
      %2090 = vmatpush1.msra.mxu0 %v2059
      %2091 = vmatprep.subr.mxu0 0.0
      %2092 = vmatpush1.msra.mxu0 %v2060
      %2093 = vmatprep.subr.mxu0 0.0
      %2094 = vmatpush1.msra.mxu0 %v2061
      %2095 = vmatprep.subr.mxu0 0.0
      %2096 = vmatpush1.msra.mxu0 %v2062
      %2097 = vmatprep.subr.mxu0 0.0
      %2098 = vmatpush1.msra.mxu0 %v2065
      %2099 = vmatprep.subr.mxu0 0.0
      %2100 = vmatpush1.msra.mxu0 0.0
      %2101 = vmatprep.subr.mxu0 0.0
      %2102 = vmatpush1.msra.mxu0 0.0
      %2103 = vmatprep.subr.mxu0 0.0
      %2104 = vmatpush1.msra.mxu0 0.0
      %2105 = vmatprep.subr.mxu0 0.0
      %2106 = vmatpush1.msra.mxu0 0.0
      %2107 = vmatprep.subr.mxu0 0.0
      %2108 = vmatpush1.msra.mxu0 0.0
      %2109 = vmatprep.subr.mxu0 0.0
      %2110 = vmatpush1.msra.mxu0 0.0
      %2111 = vmatprep.subr.mxu0 0.0
      %2112 = vmatpush1.msra.mxu0 0.0
      %2113 = vmatprep.subr.mxu0 0.0
      %2114 = vmatpush1.msra.mxu0 0.0
      %2115 = vmatprep.subr.mxu0 0.0
      %2116 = vmatpush1.msra.mxu0 0.0
      %2117 = vmatprep.subr.mxu0 0.0
      %2118 = vmatpush1.msra.mxu0 0.0
      %2119 = vmatprep.subr.mxu0 0.0
      %2120 = vmatpush1.msra.mxu0 0.0
      %2121 = vmatprep.subr.mxu0 0.0
      %2122 = vmatpush1.msra.mxu0 0.0
      %2123 = vmatprep.subr.mxu0 0.0
      %2124 = vmatpush1.msra.mxu0 0.0
      %2125 = vmatprep.subr.mxu0 0.0
      %2126 = vmatpush1.msra.mxu0 0.0
      %2127 = vmatprep.subr.mxu0 0.0
      %2128 = vmatpush1.msra.mxu0 0.0
      %2129 = vmatprep.subr.mxu0 0.0
      %2130 = vmatpush1.msra.mxu0 0.0
      %2131 = vmatprep.mubr.f32.mxu0 0.0
      %2132 = vmatmul.mubr.f32.gmra.mrb[0].mxu0 %v697
      %v2133 = vpop.f32.mrb[0].mxu0
      %v2134 = vadd.f32 0.0, %v2133
      %v2135 = vpop.f32.mrb[0].mxu0
      %2136 = vdwg.mxu0
      %v2137 = vmax.f32 %v2046, %v2134
      %s2138 = scalar_lea.vmem %s6, 2048
      %v2139 = vld [vmem:[%s2138] sm:$0xff]
      %v2140 = vld [vmem:[%s2138 + $0x8] sm:$0xff]
      %v2141 = vld [vmem:[%s2138 + $0x10] sm:$0xff]
      %v2142 = vld [vmem:[%s2138 + $0x18] sm:$0xff]
      %v2143 = vld [vmem:[%s2138 + $0x20] sm:$0xff]
      %v2144 = vld [vmem:[%s2138 + $0x28] sm:$0xff]
      %v2145 = vld [vmem:[%s2138 + $0x30] sm:$0xff]
      %v2146 = vld [vmem:[%s2138 + $0x38] sm:$0xff]
      %v2147 = vld [vmem:[%s2138 + $0x40] sm:$0xff]
      %v2148 = vld [vmem:[%s2138 + $0x48] sm:$0xff]
      %v2149 = vld [vmem:[%s2138 + $0x50] sm:$0xff]
      %v2150 = vld [vmem:[%s2138 + $0x58] sm:$0xff]
      %v2151 = vld [vmem:[%s2138 + $0x60] sm:$0xff]
      %v2152 = vld [vmem:[%s2138 + $0x68] sm:$0xff]
      %v2153 = vld [vmem:[%s2138 + $0x70] sm:$0xff]
      %v2154 = vld [vmem:[%s2138 + $0x78] sm:$0x1]
      %v2156 = vsel %vm699, %v2154, 0
      %2158 = vmatprep.subr.mxu0 0.0
      %2159 = vmatpush1.msra.mxu0 %v2139
      %2160 = vmatprep.subr.mxu0 0.0
      %2161 = vmatpush1.msra.mxu0 %v2140
      %2162 = vmatprep.subr.mxu0 0.0
      %2163 = vmatpush1.msra.mxu0 %v2141
      %2164 = vmatprep.subr.mxu0 0.0
      %2165 = vmatpush1.msra.mxu0 %v2142
      %2166 = vmatprep.subr.mxu0 0.0
      %2167 = vmatpush1.msra.mxu0 %v2143
      %2168 = vmatprep.subr.mxu0 0.0
      %2169 = vmatpush1.msra.mxu0 %v2144
      %2170 = vmatprep.subr.mxu0 0.0
      %2171 = vmatpush1.msra.mxu0 %v2145
      %2172 = vmatprep.subr.mxu0 0.0
      %2173 = vmatpush1.msra.mxu0 %v2146
      %2174 = vmatprep.subr.mxu0 0.0
      %2175 = vmatpush1.msra.mxu0 %v2147
      %2176 = vmatprep.subr.mxu0 0.0
      %2177 = vmatpush1.msra.mxu0 %v2148
      %2178 = vmatprep.subr.mxu0 0.0
      %2179 = vmatpush1.msra.mxu0 %v2149
      %2180 = vmatprep.subr.mxu0 0.0
      %2181 = vmatpush1.msra.mxu0 %v2150
      %2182 = vmatprep.subr.mxu0 0.0
      %2183 = vmatpush1.msra.mxu0 %v2151
      %2184 = vmatprep.subr.mxu0 0.0
      %2185 = vmatpush1.msra.mxu0 %v2152
      %2186 = vmatprep.subr.mxu0 0.0
      %2187 = vmatpush1.msra.mxu0 %v2153
      %2188 = vmatprep.subr.mxu0 0.0
      %2189 = vmatpush1.msra.mxu0 %v2156
      %2190 = vmatprep.subr.mxu0 0.0
      %2191 = vmatpush1.msra.mxu0 0.0
      %2192 = vmatprep.subr.mxu0 0.0
      %2193 = vmatpush1.msra.mxu0 0.0
      %2194 = vmatprep.subr.mxu0 0.0
      %2195 = vmatpush1.msra.mxu0 0.0
      %2196 = vmatprep.subr.mxu0 0.0
      %2197 = vmatpush1.msra.mxu0 0.0
      %2198 = vmatprep.subr.mxu0 0.0
      %2199 = vmatpush1.msra.mxu0 0.0
      %2200 = vmatprep.subr.mxu0 0.0
      %2201 = vmatpush1.msra.mxu0 0.0
      %2202 = vmatprep.subr.mxu0 0.0
      %2203 = vmatpush1.msra.mxu0 0.0
      %2204 = vmatprep.subr.mxu0 0.0
      %2205 = vmatpush1.msra.mxu0 0.0
      %2206 = vmatprep.subr.mxu0 0.0
      %2207 = vmatpush1.msra.mxu0 0.0
      %2208 = vmatprep.subr.mxu0 0.0
      %2209 = vmatpush1.msra.mxu0 0.0
      %2210 = vmatprep.subr.mxu0 0.0
      %2211 = vmatpush1.msra.mxu0 0.0
      %2212 = vmatprep.subr.mxu0 0.0
      %2213 = vmatpush1.msra.mxu0 0.0
      %2214 = vmatprep.subr.mxu0 0.0
      %2215 = vmatpush1.msra.mxu0 0.0
      %2216 = vmatprep.subr.mxu0 0.0
      %2217 = vmatpush1.msra.mxu0 0.0
      %2218 = vmatprep.subr.mxu0 0.0
      %2219 = vmatpush1.msra.mxu0 0.0
      %2220 = vmatprep.subr.mxu0 0.0
      %2221 = vmatpush1.msra.mxu0 0.0
      %2222 = vmatprep.mubr.f32.mxu0 0.0
      %2223 = vmatmul.mubr.f32.gmra.mrb[0].mxu0 %v697
      %v2224 = vpop.f32.mrb[0].mxu0
      %v2225 = vadd.f32 0.0, %v2224
      %v2226 = vpop.f32.mrb[0].mxu0
      %2227 = vdwg.mxu0
      %v2228 = vmax.f32 %v2137, %v2225
      %s2229 = scalar_lea.vmem %s6, 2176
      %v2230 = vld [vmem:[%s2229] sm:$0xff]
      %v2231 = vld [vmem:[%s2229 + $0x8] sm:$0xff]
      %v2232 = vld [vmem:[%s2229 + $0x10] sm:$0xff]
      %v2233 = vld [vmem:[%s2229 + $0x18] sm:$0xff]
      %v2234 = vld [vmem:[%s2229 + $0x20] sm:$0xff]
      %v2235 = vld [vmem:[%s2229 + $0x28] sm:$0xff]
      %v2236 = vld [vmem:[%s2229 + $0x30] sm:$0xff]
      %v2237 = vld [vmem:[%s2229 + $0x38] sm:$0xff]
      %v2238 = vld [vmem:[%s2229 + $0x40] sm:$0xff]
      %v2239 = vld [vmem:[%s2229 + $0x48] sm:$0xff]
      %v2240 = vld [vmem:[%s2229 + $0x50] sm:$0xff]
      %v2241 = vld [vmem:[%s2229 + $0x58] sm:$0xff]
      %v2242 = vld [vmem:[%s2229 + $0x60] sm:$0xff]
      %v2243 = vld [vmem:[%s2229 + $0x68] sm:$0xff]
      %v2244 = vld [vmem:[%s2229 + $0x70] sm:$0xff]
      %v2245 = vld [vmem:[%s2229 + $0x78] sm:$0x1]
      %v2247 = vsel %vm699, %v2245, 0
      %2249 = vmatprep.subr.mxu0 0.0
      %2250 = vmatpush1.msra.mxu0 %v2230
      %2251 = vmatprep.subr.mxu0 0.0
      %2252 = vmatpush1.msra.mxu0 %v2231
      %2253 = vmatprep.subr.mxu0 0.0
      %2254 = vmatpush1.msra.mxu0 %v2232
      %2255 = vmatprep.subr.mxu0 0.0
      %2256 = vmatpush1.msra.mxu0 %v2233
      %2257 = vmatprep.subr.mxu0 0.0
      %2258 = vmatpush1.msra.mxu0 %v2234
      %2259 = vmatprep.subr.mxu0 0.0
      %2260 = vmatpush1.msra.mxu0 %v2235
      %2261 = vmatprep.subr.mxu0 0.0
      %2262 = vmatpush1.msra.mxu0 %v2236
      %2263 = vmatprep.subr.mxu0 0.0
      %2264 = vmatpush1.msra.mxu0 %v2237
      %2265 = vmatprep.subr.mxu0 0.0
      %2266 = vmatpush1.msra.mxu0 %v2238
      %2267 = vmatprep.subr.mxu0 0.0
      %2268 = vmatpush1.msra.mxu0 %v2239
      %2269 = vmatprep.subr.mxu0 0.0
      %2270 = vmatpush1.msra.mxu0 %v2240
      %2271 = vmatprep.subr.mxu0 0.0
      %2272 = vmatpush1.msra.mxu0 %v2241
      %2273 = vmatprep.subr.mxu0 0.0
      %2274 = vmatpush1.msra.mxu0 %v2242
      %2275 = vmatprep.subr.mxu0 0.0
      %2276 = vmatpush1.msra.mxu0 %v2243
      %2277 = vmatprep.subr.mxu0 0.0
      %2278 = vmatpush1.msra.mxu0 %v2244
      %2279 = vmatprep.subr.mxu0 0.0
      %2280 = vmatpush1.msra.mxu0 %v2247
      %2281 = vmatprep.subr.mxu0 0.0
      %2282 = vmatpush1.msra.mxu0 0.0
      %2283 = vmatprep.subr.mxu0 0.0
      %2284 = vmatpush1.msra.mxu0 0.0
      %2285 = vmatprep.subr.mxu0 0.0
      %2286 = vmatpush1.msra.mxu0 0.0
      %2287 = vmatprep.subr.mxu0 0.0
      %2288 = vmatpush1.msra.mxu0 0.0
      %2289 = vmatprep.subr.mxu0 0.0
      %2290 = vmatpush1.msra.mxu0 0.0
      %2291 = vmatprep.subr.mxu0 0.0
      %2292 = vmatpush1.msra.mxu0 0.0
      %2293 = vmatprep.subr.mxu0 0.0
      %2294 = vmatpush1.msra.mxu0 0.0
      %2295 = vmatprep.subr.mxu0 0.0
      %2296 = vmatpush1.msra.mxu0 0.0
      %2297 = vmatprep.subr.mxu0 0.0
      %2298 = vmatpush1.msra.mxu0 0.0
      %2299 = vmatprep.subr.mxu0 0.0
      %2300 = vmatpush1.msra.mxu0 0.0
      %2301 = vmatprep.subr.mxu0 0.0
      %2302 = vmatpush1.msra.mxu0 0.0
      %2303 = vmatprep.subr.mxu0 0.0
      %2304 = vmatpush1.msra.mxu0 0.0
      %2305 = vmatprep.subr.mxu0 0.0
      %2306 = vmatpush1.msra.mxu0 0.0
      %2307 = vmatprep.subr.mxu0 0.0
      %2308 = vmatpush1.msra.mxu0 0.0
      %2309 = vmatprep.subr.mxu0 0.0
      %2310 = vmatpush1.msra.mxu0 0.0
      %2311 = vmatprep.subr.mxu0 0.0
      %2312 = vmatpush1.msra.mxu0 0.0
      %2313 = vmatprep.mubr.f32.mxu0 0.0
      %2314 = vmatmul.mubr.f32.gmra.mrb[0].mxu0 %v697
      %v2315 = vpop.f32.mrb[0].mxu0
      %v2316 = vadd.f32 0.0, %v2315
      %v2317 = vpop.f32.mrb[0].mxu0
      %2318 = vdwg.mxu0
      %v2319 = vmax.f32 %v2228, %v2316
      %s2320 = scalar_lea.vmem %s6, 2304
      %v2321 = vld [vmem:[%s2320] sm:$0xff]
      %v2322 = vld [vmem:[%s2320 + $0x8] sm:$0xff]
      %v2323 = vld [vmem:[%s2320 + $0x10] sm:$0xff]
      %v2324 = vld [vmem:[%s2320 + $0x18] sm:$0xff]
      %v2325 = vld [vmem:[%s2320 + $0x20] sm:$0xff]
      %v2326 = vld [vmem:[%s2320 + $0x28] sm:$0xff]
      %v2327 = vld [vmem:[%s2320 + $0x30] sm:$0xff]
      %v2328 = vld [vmem:[%s2320 + $0x38] sm:$0xff]
      %v2329 = vld [vmem:[%s2320 + $0x40] sm:$0xff]
      %v2330 = vld [vmem:[%s2320 + $0x48] sm:$0xff]
      %v2331 = vld [vmem:[%s2320 + $0x50] sm:$0xff]
      %v2332 = vld [vmem:[%s2320 + $0x58] sm:$0xff]
      %v2333 = vld [vmem:[%s2320 + $0x60] sm:$0xff]
      %v2334 = vld [vmem:[%s2320 + $0x68] sm:$0xff]
      %v2335 = vld [vmem:[%s2320 + $0x70] sm:$0xff]
      %v2336 = vld [vmem:[%s2320 + $0x78] sm:$0x1]
      %v2338 = vsel %vm699, %v2336, 0
      %2340 = vmatprep.subr.mxu0 0.0
      %2341 = vmatpush1.msra.mxu0 %v2321
      %2342 = vmatprep.subr.mxu0 0.0
      %2343 = vmatpush1.msra.mxu0 %v2322
      %2344 = vmatprep.subr.mxu0 0.0
      %2345 = vmatpush1.msra.mxu0 %v2323
      %2346 = vmatprep.subr.mxu0 0.0
      %2347 = vmatpush1.msra.mxu0 %v2324
      %2348 = vmatprep.subr.mxu0 0.0
      %2349 = vmatpush1.msra.mxu0 %v2325
      %2350 = vmatprep.subr.mxu0 0.0
      %2351 = vmatpush1.msra.mxu0 %v2326
      %2352 = vmatprep.subr.mxu0 0.0
      %2353 = vmatpush1.msra.mxu0 %v2327
      %2354 = vmatprep.subr.mxu0 0.0
      %2355 = vmatpush1.msra.mxu0 %v2328
      %2356 = vmatprep.subr.mxu0 0.0
      %2357 = vmatpush1.msra.mxu0 %v2329
      %2358 = vmatprep.subr.mxu0 0.0
      %2359 = vmatpush1.msra.mxu0 %v2330
      %2360 = vmatprep.subr.mxu0 0.0
      %2361 = vmatpush1.msra.mxu0 %v2331
      %2362 = vmatprep.subr.mxu0 0.0
      %2363 = vmatpush1.msra.mxu0 %v2332
      %2364 = vmatprep.subr.mxu0 0.0
      %2365 = vmatpush1.msra.mxu0 %v2333
      %2366 = vmatprep.subr.mxu0 0.0
      %2367 = vmatpush1.msra.mxu0 %v2334
      %2368 = vmatprep.subr.mxu0 0.0
      %2369 = vmatpush1.msra.mxu0 %v2335
      %2370 = vmatprep.subr.mxu0 0.0
      %2371 = vmatpush1.msra.mxu0 %v2338
      %2372 = vmatprep.subr.mxu0 0.0
      %2373 = vmatpush1.msra.mxu0 0.0
      %2374 = vmatprep.subr.mxu0 0.0
      %2375 = vmatpush1.msra.mxu0 0.0
      %2376 = vmatprep.subr.mxu0 0.0
      %2377 = vmatpush1.msra.mxu0 0.0
      %2378 = vmatprep.subr.mxu0 0.0
      %2379 = vmatpush1.msra.mxu0 0.0
      %2380 = vmatprep.subr.mxu0 0.0
      %2381 = vmatpush1.msra.mxu0 0.0
      %2382 = vmatprep.subr.mxu0 0.0
      %2383 = vmatpush1.msra.mxu0 0.0
      %2384 = vmatprep.subr.mxu0 0.0
      %2385 = vmatpush1.msra.mxu0 0.0
      %2386 = vmatprep.subr.mxu0 0.0
      %2387 = vmatpush1.msra.mxu0 0.0
      %2388 = vmatprep.subr.mxu0 0.0
      %2389 = vmatpush1.msra.mxu0 0.0
      %2390 = vmatprep.subr.mxu0 0.0
      %2391 = vmatpush1.msra.mxu0 0.0
      %2392 = vmatprep.subr.mxu0 0.0
      %2393 = vmatpush1.msra.mxu0 0.0
      %2394 = vmatprep.subr.mxu0 0.0
      %2395 = vmatpush1.msra.mxu0 0.0
      %2396 = vmatprep.subr.mxu0 0.0
      %2397 = vmatpush1.msra.mxu0 0.0
      %2398 = vmatprep.subr.mxu0 0.0
      %2399 = vmatpush1.msra.mxu0 0.0
      %2400 = vmatprep.subr.mxu0 0.0
      %2401 = vmatpush1.msra.mxu0 0.0
      %2402 = vmatprep.subr.mxu0 0.0
      %2403 = vmatpush1.msra.mxu0 0.0
      %2404 = vmatprep.mubr.f32.mxu0 0.0
      %2405 = vmatmul.mubr.f32.gmra.mrb[0].mxu0 %v697
      %v2406 = vpop.f32.mrb[0].mxu0
      %v2407 = vadd.f32 0.0, %v2406
      %v2408 = vpop.f32.mrb[0].mxu0
      %2409 = vdwg.mxu0
      %v2410 = vmax.f32 %v2319, %v2407
      %s2411 = scalar_lea.vmem %s6, 2432
      %v2412 = vld [vmem:[%s2411] sm:$0xff]
      %v2413 = vld [vmem:[%s2411 + $0x8] sm:$0xff]
      %v2414 = vld [vmem:[%s2411 + $0x10] sm:$0xff]
      %v2415 = vld [vmem:[%s2411 + $0x18] sm:$0xff]
      %v2416 = vld [vmem:[%s2411 + $0x20] sm:$0xff]
      %v2417 = vld [vmem:[%s2411 + $0x28] sm:$0xff]
      %v2418 = vld [vmem:[%s2411 + $0x30] sm:$0xff]
      %v2419 = vld [vmem:[%s2411 + $0x38] sm:$0xff]
      %v2420 = vld [vmem:[%s2411 + $0x40] sm:$0xff]
      %v2421 = vld [vmem:[%s2411 + $0x48] sm:$0xff]
      %v2422 = vld [vmem:[%s2411 + $0x50] sm:$0xff]
      %v2423 = vld [vmem:[%s2411 + $0x58] sm:$0xff]
      %v2424 = vld [vmem:[%s2411 + $0x60] sm:$0xff]
      %v2425 = vld [vmem:[%s2411 + $0x68] sm:$0xff]
      %v2426 = vld [vmem:[%s2411 + $0x70] sm:$0xff]
      %v2427 = vld [vmem:[%s2411 + $0x78] sm:$0x1]
      %v2429 = vsel %vm699, %v2427, 0
      %2431 = vmatprep.subr.mxu0 0.0
      %2432 = vmatpush1.msra.mxu0 %v2412
      %2433 = vmatprep.subr.mxu0 0.0
      %2434 = vmatpush1.msra.mxu0 %v2413
      %2435 = vmatprep.subr.mxu0 0.0
      %2436 = vmatpush1.msra.mxu0 %v2414
      %2437 = vmatprep.subr.mxu0 0.0
      %2438 = vmatpush1.msra.mxu0 %v2415
      %2439 = vmatprep.subr.mxu0 0.0
      %2440 = vmatpush1.msra.mxu0 %v2416
      %2441 = vmatprep.subr.mxu0 0.0
      %2442 = vmatpush1.msra.mxu0 %v2417
      %2443 = vmatprep.subr.mxu0 0.0
      %2444 = vmatpush1.msra.mxu0 %v2418
      %2445 = vmatprep.subr.mxu0 0.0
      %2446 = vmatpush1.msra.mxu0 %v2419
      %2447 = vmatprep.subr.mxu0 0.0
      %2448 = vmatpush1.msra.mxu0 %v2420
      %2449 = vmatprep.subr.mxu0 0.0
      %2450 = vmatpush1.msra.mxu0 %v2421
      %2451 = vmatprep.subr.mxu0 0.0
      %2452 = vmatpush1.msra.mxu0 %v2422
      %2453 = vmatprep.subr.mxu0 0.0
      %2454 = vmatpush1.msra.mxu0 %v2423
      %2455 = vmatprep.subr.mxu0 0.0
      %2456 = vmatpush1.msra.mxu0 %v2424
      %2457 = vmatprep.subr.mxu0 0.0
      %2458 = vmatpush1.msra.mxu0 %v2425
      %2459 = vmatprep.subr.mxu0 0.0
      %2460 = vmatpush1.msra.mxu0 %v2426
      %2461 = vmatprep.subr.mxu0 0.0
      %2462 = vmatpush1.msra.mxu0 %v2429
      %2463 = vmatprep.subr.mxu0 0.0
      %2464 = vmatpush1.msra.mxu0 0.0
      %2465 = vmatprep.subr.mxu0 0.0
      %2466 = vmatpush1.msra.mxu0 0.0
      %2467 = vmatprep.subr.mxu0 0.0
      %2468 = vmatpush1.msra.mxu0 0.0
      %2469 = vmatprep.subr.mxu0 0.0
      %2470 = vmatpush1.msra.mxu0 0.0
      %2471 = vmatprep.subr.mxu0 0.0
      %2472 = vmatpush1.msra.mxu0 0.0
      %2473 = vmatprep.subr.mxu0 0.0
      %2474 = vmatpush1.msra.mxu0 0.0
      %2475 = vmatprep.subr.mxu0 0.0
      %2476 = vmatpush1.msra.mxu0 0.0
      %2477 = vmatprep.subr.mxu0 0.0
      %2478 = vmatpush1.msra.mxu0 0.0
      %2479 = vmatprep.subr.mxu0 0.0
      %2480 = vmatpush1.msra.mxu0 0.0
      %2481 = vmatprep.subr.mxu0 0.0
      %2482 = vmatpush1.msra.mxu0 0.0
      %2483 = vmatprep.subr.mxu0 0.0
      %2484 = vmatpush1.msra.mxu0 0.0
      %2485 = vmatprep.subr.mxu0 0.0
      %2486 = vmatpush1.msra.mxu0 0.0
      %2487 = vmatprep.subr.mxu0 0.0
      %2488 = vmatpush1.msra.mxu0 0.0
      %2489 = vmatprep.subr.mxu0 0.0
      %2490 = vmatpush1.msra.mxu0 0.0
      %2491 = vmatprep.subr.mxu0 0.0
      %2492 = vmatpush1.msra.mxu0 0.0
      %2493 = vmatprep.subr.mxu0 0.0
      %2494 = vmatpush1.msra.mxu0 0.0
      %2495 = vmatprep.mubr.f32.mxu0 0.0
      %2496 = vmatmul.mubr.f32.gmra.mrb[0].mxu0 %v697
      %v2497 = vpop.f32.mrb[0].mxu0
      %v2498 = vadd.f32 0.0, %v2497
      %v2499 = vpop.f32.mrb[0].mxu0
      %2500 = vdwg.mxu0
      %v2501 = vmax.f32 %v2410, %v2498
      %s2502 = scalar_lea.vmem %s6, 2560
      %v2503 = vld [vmem:[%s2502] sm:$0xff]
      %v2504 = vld [vmem:[%s2502 + $0x8] sm:$0xff]
      %v2505 = vld [vmem:[%s2502 + $0x10] sm:$0xff]
      %v2506 = vld [vmem:[%s2502 + $0x18] sm:$0xff]
      %v2507 = vld [vmem:[%s2502 + $0x20] sm:$0xff]
      %v2508 = vld [vmem:[%s2502 + $0x28] sm:$0xff]
      %v2509 = vld [vmem:[%s2502 + $0x30] sm:$0xff]
      %v2510 = vld [vmem:[%s2502 + $0x38] sm:$0xff]
      %v2511 = vld [vmem:[%s2502 + $0x40] sm:$0xff]
      %v2512 = vld [vmem:[%s2502 + $0x48] sm:$0xff]
      %v2513 = vld [vmem:[%s2502 + $0x50] sm:$0xff]
      %v2514 = vld [vmem:[%s2502 + $0x58] sm:$0xff]
      %v2515 = vld [vmem:[%s2502 + $0x60] sm:$0xff]
      %v2516 = vld [vmem:[%s2502 + $0x68] sm:$0xff]
      %v2517 = vld [vmem:[%s2502 + $0x70] sm:$0xff]
      %v2518 = vld [vmem:[%s2502 + $0x78] sm:$0x1]
      %v2520 = vsel %vm699, %v2518, 0
      %2522 = vmatprep.subr.mxu0 0.0
      %2523 = vmatpush1.msra.mxu0 %v2503
      %2524 = vmatprep.subr.mxu0 0.0
      %2525 = vmatpush1.msra.mxu0 %v2504
      %2526 = vmatprep.subr.mxu0 0.0
      %2527 = vmatpush1.msra.mxu0 %v2505
      %2528 = vmatprep.subr.mxu0 0.0
      %2529 = vmatpush1.msra.mxu0 %v2506
      %2530 = vmatprep.subr.mxu0 0.0
      %2531 = vmatpush1.msra.mxu0 %v2507
      %2532 = vmatprep.subr.mxu0 0.0
      %2533 = vmatpush1.msra.mxu0 %v2508
      %2534 = vmatprep.subr.mxu0 0.0
      %2535 = vmatpush1.msra.mxu0 %v2509
      %2536 = vmatprep.subr.mxu0 0.0
      %2537 = vmatpush1.msra.mxu0 %v2510
      %2538 = vmatprep.subr.mxu0 0.0
      %2539 = vmatpush1.msra.mxu0 %v2511
      %2540 = vmatprep.subr.mxu0 0.0
      %2541 = vmatpush1.msra.mxu0 %v2512
      %2542 = vmatprep.subr.mxu0 0.0
      %2543 = vmatpush1.msra.mxu0 %v2513
      %2544 = vmatprep.subr.mxu0 0.0
      %2545 = vmatpush1.msra.mxu0 %v2514
      %2546 = vmatprep.subr.mxu0 0.0
      %2547 = vmatpush1.msra.mxu0 %v2515
      %2548 = vmatprep.subr.mxu0 0.0
      %2549 = vmatpush1.msra.mxu0 %v2516
      %2550 = vmatprep.subr.mxu0 0.0
      %2551 = vmatpush1.msra.mxu0 %v2517
      %2552 = vmatprep.subr.mxu0 0.0
      %2553 = vmatpush1.msra.mxu0 %v2520
      %2554 = vmatprep.subr.mxu0 0.0
      %2555 = vmatpush1.msra.mxu0 0.0
      %2556 = vmatprep.subr.mxu0 0.0
      %2557 = vmatpush1.msra.mxu0 0.0
      %2558 = vmatprep.subr.mxu0 0.0
      %2559 = vmatpush1.msra.mxu0 0.0
      %2560 = vmatprep.subr.mxu0 0.0
      %2561 = vmatpush1.msra.mxu0 0.0
      %2562 = vmatprep.subr.mxu0 0.0
      %2563 = vmatpush1.msra.mxu0 0.0
      %2564 = vmatprep.subr.mxu0 0.0
      %2565 = vmatpush1.msra.mxu0 0.0
      %2566 = vmatprep.subr.mxu0 0.0
      %2567 = vmatpush1.msra.mxu0 0.0
      %2568 = vmatprep.subr.mxu0 0.0
      %2569 = vmatpush1.msra.mxu0 0.0
      %2570 = vmatprep.subr.mxu0 0.0
      %2571 = vmatpush1.msra.mxu0 0.0
      %2572 = vmatprep.subr.mxu0 0.0
      %2573 = vmatpush1.msra.mxu0 0.0
      %2574 = vmatprep.subr.mxu0 0.0
      %2575 = vmatpush1.msra.mxu0 0.0
      %2576 = vmatprep.subr.mxu0 0.0
      %2577 = vmatpush1.msra.mxu0 0.0
      %2578 = vmatprep.subr.mxu0 0.0
      %2579 = vmatpush1.msra.mxu0 0.0
      %2580 = vmatprep.subr.mxu0 0.0
      %2581 = vmatpush1.msra.mxu0 0.0
      %2582 = vmatprep.subr.mxu0 0.0
      %2583 = vmatpush1.msra.mxu0 0.0
      %2584 = vmatprep.subr.mxu0 0.0
      %2585 = vmatpush1.msra.mxu0 0.0
      %2586 = vmatprep.mubr.f32.mxu0 0.0
      %2587 = vmatmul.mubr.f32.gmra.mrb[0].mxu0 %v697
      %v2588 = vpop.f32.mrb[0].mxu0
      %v2589 = vadd.f32 0.0, %v2588
      %v2590 = vpop.f32.mrb[0].mxu0
      %2591 = vdwg.mxu0
      %v2592 = vmax.f32 %v2501, %v2589
      %s2593 = scalar_lea.vmem %s6, 2688
      %v2594 = vld [vmem:[%s2593] sm:$0xff]
      %v2595 = vld [vmem:[%s2593 + $0x8] sm:$0xff]
      %v2596 = vld [vmem:[%s2593 + $0x10] sm:$0xff]
      %v2597 = vld [vmem:[%s2593 + $0x18] sm:$0xff]
      %v2598 = vld [vmem:[%s2593 + $0x20] sm:$0xff]
      %v2599 = vld [vmem:[%s2593 + $0x28] sm:$0xff]
      %v2600 = vld [vmem:[%s2593 + $0x30] sm:$0xff]
      %v2601 = vld [vmem:[%s2593 + $0x38] sm:$0xff]
      %v2602 = vld [vmem:[%s2593 + $0x40] sm:$0xff]
      %v2603 = vld [vmem:[%s2593 + $0x48] sm:$0xff]
      %v2604 = vld [vmem:[%s2593 + $0x50] sm:$0xff]
      %v2605 = vld [vmem:[%s2593 + $0x58] sm:$0xff]
      %v2606 = vld [vmem:[%s2593 + $0x60] sm:$0xff]
      %v2607 = vld [vmem:[%s2593 + $0x68] sm:$0xff]
      %v2608 = vld [vmem:[%s2593 + $0x70] sm:$0xff]
      %v2609 = vld [vmem:[%s2593 + $0x78] sm:$0x1]
      %v2611 = vsel %vm699, %v2609, 0
      %2613 = vmatprep.subr.mxu0 0.0
      %2614 = vmatpush1.msra.mxu0 %v2594
      %2615 = vmatprep.subr.mxu0 0.0
      %2616 = vmatpush1.msra.mxu0 %v2595
      %2617 = vmatprep.subr.mxu0 0.0
      %2618 = vmatpush1.msra.mxu0 %v2596
      %2619 = vmatprep.subr.mxu0 0.0
      %2620 = vmatpush1.msra.mxu0 %v2597
      %2621 = vmatprep.subr.mxu0 0.0
      %2622 = vmatpush1.msra.mxu0 %v2598
      %2623 = vmatprep.subr.mxu0 0.0
      %2624 = vmatpush1.msra.mxu0 %v2599
      %2625 = vmatprep.subr.mxu0 0.0
      %2626 = vmatpush1.msra.mxu0 %v2600
      %2627 = vmatprep.subr.mxu0 0.0
      %2628 = vmatpush1.msra.mxu0 %v2601
      %2629 = vmatprep.subr.mxu0 0.0
      %2630 = vmatpush1.msra.mxu0 %v2602
      %2631 = vmatprep.subr.mxu0 0.0
      %2632 = vmatpush1.msra.mxu0 %v2603
      %2633 = vmatprep.subr.mxu0 0.0
      %2634 = vmatpush1.msra.mxu0 %v2604
      %2635 = vmatprep.subr.mxu0 0.0
      %2636 = vmatpush1.msra.mxu0 %v2605
      %2637 = vmatprep.subr.mxu0 0.0
      %2638 = vmatpush1.msra.mxu0 %v2606
      %2639 = vmatprep.subr.mxu0 0.0
      %2640 = vmatpush1.msra.mxu0 %v2607
      %2641 = vmatprep.subr.mxu0 0.0
      %2642 = vmatpush1.msra.mxu0 %v2608
      %2643 = vmatprep.subr.mxu0 0.0
      %2644 = vmatpush1.msra.mxu0 %v2611
      %2645 = vmatprep.subr.mxu0 0.0
      %2646 = vmatpush1.msra.mxu0 0.0
      %2647 = vmatprep.subr.mxu0 0.0
      %2648 = vmatpush1.msra.mxu0 0.0
      %2649 = vmatprep.subr.mxu0 0.0
      %2650 = vmatpush1.msra.mxu0 0.0
      %2651 = vmatprep.subr.mxu0 0.0
      %2652 = vmatpush1.msra.mxu0 0.0
      %2653 = vmatprep.subr.mxu0 0.0
      %2654 = vmatpush1.msra.mxu0 0.0
      %2655 = vmatprep.subr.mxu0 0.0
      %2656 = vmatpush1.msra.mxu0 0.0
      %2657 = vmatprep.subr.mxu0 0.0
      %2658 = vmatpush1.msra.mxu0 0.0
      %2659 = vmatprep.subr.mxu0 0.0
      %2660 = vmatpush1.msra.mxu0 0.0
      %2661 = vmatprep.subr.mxu0 0.0
      %2662 = vmatpush1.msra.mxu0 0.0
      %2663 = vmatprep.subr.mxu0 0.0
      %2664 = vmatpush1.msra.mxu0 0.0
      %2665 = vmatprep.subr.mxu0 0.0
      %2666 = vmatpush1.msra.mxu0 0.0
      %2667 = vmatprep.subr.mxu0 0.0
      %2668 = vmatpush1.msra.mxu0 0.0
      %2669 = vmatprep.subr.mxu0 0.0
      %2670 = vmatpush1.msra.mxu0 0.0
      %2671 = vmatprep.subr.mxu0 0.0
      %2672 = vmatpush1.msra.mxu0 0.0
      %2673 = vmatprep.subr.mxu0 0.0
      %2674 = vmatpush1.msra.mxu0 0.0
      %2675 = vmatprep.subr.mxu0 0.0
      %2676 = vmatpush1.msra.mxu0 0.0
      %2677 = vmatprep.mubr.f32.mxu0 0.0
      %2678 = vmatmul.mubr.f32.gmra.mrb[0].mxu0 %v697
      %v2679 = vpop.f32.mrb[0].mxu0
      %v2680 = vadd.f32 0.0, %v2679
      %v2681 = vpop.f32.mrb[0].mxu0
      %2682 = vdwg.mxu0
      %v2683 = vmax.f32 %v2592, %v2680
      %s2684 = scalar_lea.vmem %s6, 2816
      %v2685 = vld [vmem:[%s2684] sm:$0xff]
      %v2686 = vld [vmem:[%s2684 + $0x8] sm:$0xff]
      %v2687 = vld [vmem:[%s2684 + $0x10] sm:$0xff]
      %v2688 = vld [vmem:[%s2684 + $0x18] sm:$0xff]
      %v2689 = vld [vmem:[%s2684 + $0x20] sm:$0xff]
      %v2690 = vld [vmem:[%s2684 + $0x28] sm:$0xff]
      %v2691 = vld [vmem:[%s2684 + $0x30] sm:$0xff]
      %v2692 = vld [vmem:[%s2684 + $0x38] sm:$0xff]
      %v2693 = vld [vmem:[%s2684 + $0x40] sm:$0xff]
      %v2694 = vld [vmem:[%s2684 + $0x48] sm:$0xff]
      %v2695 = vld [vmem:[%s2684 + $0x50] sm:$0xff]
      %v2696 = vld [vmem:[%s2684 + $0x58] sm:$0xff]
      %v2697 = vld [vmem:[%s2684 + $0x60] sm:$0xff]
      %v2698 = vld [vmem:[%s2684 + $0x68] sm:$0xff]
      %v2699 = vld [vmem:[%s2684 + $0x70] sm:$0xff]
      %v2700 = vld [vmem:[%s2684 + $0x78] sm:$0x1]
      %v2702 = vsel %vm699, %v2700, 0
      %2704 = vmatprep.subr.mxu0 0.0
      %2705 = vmatpush1.msra.mxu0 %v2685
      %2706 = vmatprep.subr.mxu0 0.0
      %2707 = vmatpush1.msra.mxu0 %v2686
      %2708 = vmatprep.subr.mxu0 0.0
      %2709 = vmatpush1.msra.mxu0 %v2687
      %2710 = vmatprep.subr.mxu0 0.0
      %2711 = vmatpush1.msra.mxu0 %v2688
      %2712 = vmatprep.subr.mxu0 0.0
      %2713 = vmatpush1.msra.mxu0 %v2689
      %2714 = vmatprep.subr.mxu0 0.0
      %2715 = vmatpush1.msra.mxu0 %v2690
      %2716 = vmatprep.subr.mxu0 0.0
      %2717 = vmatpush1.msra.mxu0 %v2691
      %2718 = vmatprep.subr.mxu0 0.0
      %2719 = vmatpush1.msra.mxu0 %v2692
      %2720 = vmatprep.subr.mxu0 0.0
      %2721 = vmatpush1.msra.mxu0 %v2693
      %2722 = vmatprep.subr.mxu0 0.0
      %2723 = vmatpush1.msra.mxu0 %v2694
      %2724 = vmatprep.subr.mxu0 0.0
      %2725 = vmatpush1.msra.mxu0 %v2695
      %2726 = vmatprep.subr.mxu0 0.0
      %2727 = vmatpush1.msra.mxu0 %v2696
      %2728 = vmatprep.subr.mxu0 0.0
      %2729 = vmatpush1.msra.mxu0 %v2697
      %2730 = vmatprep.subr.mxu0 0.0
      %2731 = vmatpush1.msra.mxu0 %v2698
      %2732 = vmatprep.subr.mxu0 0.0
      %2733 = vmatpush1.msra.mxu0 %v2699
      %2734 = vmatprep.subr.mxu0 0.0
      %2735 = vmatpush1.msra.mxu0 %v2702
      %2736 = vmatprep.subr.mxu0 0.0
      %2737 = vmatpush1.msra.mxu0 0.0
      %2738 = vmatprep.subr.mxu0 0.0
      %2739 = vmatpush1.msra.mxu0 0.0
      %2740 = vmatprep.subr.mxu0 0.0
      %2741 = vmatpush1.msra.mxu0 0.0
      %2742 = vmatprep.subr.mxu0 0.0
      %2743 = vmatpush1.msra.mxu0 0.0
      %2744 = vmatprep.subr.mxu0 0.0
      %2745 = vmatpush1.msra.mxu0 0.0
      %2746 = vmatprep.subr.mxu0 0.0
      %2747 = vmatpush1.msra.mxu0 0.0
      %2748 = vmatprep.subr.mxu0 0.0
      %2749 = vmatpush1.msra.mxu0 0.0
      %2750 = vmatprep.subr.mxu0 0.0
      %2751 = vmatpush1.msra.mxu0 0.0
      %2752 = vmatprep.subr.mxu0 0.0
      %2753 = vmatpush1.msra.mxu0 0.0
      %2754 = vmatprep.subr.mxu0 0.0
      %2755 = vmatpush1.msra.mxu0 0.0
      %2756 = vmatprep.subr.mxu0 0.0
      %2757 = vmatpush1.msra.mxu0 0.0
      %2758 = vmatprep.subr.mxu0 0.0
      %2759 = vmatpush1.msra.mxu0 0.0
      %2760 = vmatprep.subr.mxu0 0.0
      %2761 = vmatpush1.msra.mxu0 0.0
      %2762 = vmatprep.subr.mxu0 0.0
      %2763 = vmatpush1.msra.mxu0 0.0
      %2764 = vmatprep.subr.mxu0 0.0
      %2765 = vmatpush1.msra.mxu0 0.0
      %2766 = vmatprep.subr.mxu0 0.0
      %2767 = vmatpush1.msra.mxu0 0.0
      %2768 = vmatprep.mubr.f32.mxu0 0.0
      %2769 = vmatmul.mubr.f32.gmra.mrb[0].mxu0 %v697
      %v2770 = vpop.f32.mrb[0].mxu0
      %v2771 = vadd.f32 0.0, %v2770
      %v2772 = vpop.f32.mrb[0].mxu0
      %2773 = vdwg.mxu0
      %v2774 = vmax.f32 %v2683, %v2771
      %s2775 = scalar_lea.vmem %s6, 2944
      %v2776 = vld [vmem:[%s2775] sm:$0xff]
      %v2777 = vld [vmem:[%s2775 + $0x8] sm:$0xff]
      %v2778 = vld [vmem:[%s2775 + $0x10] sm:$0xff]
      %v2779 = vld [vmem:[%s2775 + $0x18] sm:$0xff]
      %v2780 = vld [vmem:[%s2775 + $0x20] sm:$0xff]
      %v2781 = vld [vmem:[%s2775 + $0x28] sm:$0xff]
      %v2782 = vld [vmem:[%s2775 + $0x30] sm:$0xff]
      %v2783 = vld [vmem:[%s2775 + $0x38] sm:$0xff]
      %v2784 = vld [vmem:[%s2775 + $0x40] sm:$0xff]
      %v2785 = vld [vmem:[%s2775 + $0x48] sm:$0xff]
      %v2786 = vld [vmem:[%s2775 + $0x50] sm:$0xff]
      %v2787 = vld [vmem:[%s2775 + $0x58] sm:$0xff]
      %v2788 = vld [vmem:[%s2775 + $0x60] sm:$0xff]
      %v2789 = vld [vmem:[%s2775 + $0x68] sm:$0xff]
      %v2790 = vld [vmem:[%s2775 + $0x70] sm:$0xff]
      %v2791 = vld [vmem:[%s2775 + $0x78] sm:$0x1]
      %v2793 = vsel %vm699, %v2791, 0
      %2795 = vmatprep.subr.mxu0 0.0
      %2796 = vmatpush1.msra.mxu0 %v2776
      %2797 = vmatprep.subr.mxu0 0.0
      %2798 = vmatpush1.msra.mxu0 %v2777
      %2799 = vmatprep.subr.mxu0 0.0
      %2800 = vmatpush1.msra.mxu0 %v2778
      %2801 = vmatprep.subr.mxu0 0.0
      %2802 = vmatpush1.msra.mxu0 %v2779
      %2803 = vmatprep.subr.mxu0 0.0
      %2804 = vmatpush1.msra.mxu0 %v2780
      %2805 = vmatprep.subr.mxu0 0.0
      %2806 = vmatpush1.msra.mxu0 %v2781
      %2807 = vmatprep.subr.mxu0 0.0
      %2808 = vmatpush1.msra.mxu0 %v2782
      %2809 = vmatprep.subr.mxu0 0.0
      %2810 = vmatpush1.msra.mxu0 %v2783
      %2811 = vmatprep.subr.mxu0 0.0
      %2812 = vmatpush1.msra.mxu0 %v2784
      %2813 = vmatprep.subr.mxu0 0.0
      %2814 = vmatpush1.msra.mxu0 %v2785
      %2815 = vmatprep.subr.mxu0 0.0
      %2816 = vmatpush1.msra.mxu0 %v2786
      %2817 = vmatprep.subr.mxu0 0.0
      %2818 = vmatpush1.msra.mxu0 %v2787
      %2819 = vmatprep.subr.mxu0 0.0
      %2820 = vmatpush1.msra.mxu0 %v2788
      %2821 = vmatprep.subr.mxu0 0.0
      %2822 = vmatpush1.msra.mxu0 %v2789
      %2823 = vmatprep.subr.mxu0 0.0
      %2824 = vmatpush1.msra.mxu0 %v2790
      %2825 = vmatprep.subr.mxu0 0.0
      %2826 = vmatpush1.msra.mxu0 %v2793
      %2827 = vmatprep.subr.mxu0 0.0
      %2828 = vmatpush1.msra.mxu0 0.0
      %2829 = vmatprep.subr.mxu0 0.0
      %2830 = vmatpush1.msra.mxu0 0.0
      %2831 = vmatprep.subr.mxu0 0.0
      %2832 = vmatpush1.msra.mxu0 0.0
      %2833 = vmatprep.subr.mxu0 0.0
      %2834 = vmatpush1.msra.mxu0 0.0
      %2835 = vmatprep.subr.mxu0 0.0
      %2836 = vmatpush1.msra.mxu0 0.0
      %2837 = vmatprep.subr.mxu0 0.0
      %2838 = vmatpush1.msra.mxu0 0.0
      %2839 = vmatprep.subr.mxu0 0.0
      %2840 = vmatpush1.msra.mxu0 0.0
      %2841 = vmatprep.subr.mxu0 0.0
      %2842 = vmatpush1.msra.mxu0 0.0
      %2843 = vmatprep.subr.mxu0 0.0
      %2844 = vmatpush1.msra.mxu0 0.0
      %2845 = vmatprep.subr.mxu0 0.0
      %2846 = vmatpush1.msra.mxu0 0.0
      %2847 = vmatprep.subr.mxu0 0.0
      %2848 = vmatpush1.msra.mxu0 0.0
      %2849 = vmatprep.subr.mxu0 0.0
      %2850 = vmatpush1.msra.mxu0 0.0
      %2851 = vmatprep.subr.mxu0 0.0
      %2852 = vmatpush1.msra.mxu0 0.0
      %2853 = vmatprep.subr.mxu0 0.0
      %2854 = vmatpush1.msra.mxu0 0.0
      %2855 = vmatprep.subr.mxu0 0.0
      %2856 = vmatpush1.msra.mxu0 0.0
      %2857 = vmatprep.subr.mxu0 0.0
      %2858 = vmatpush1.msra.mxu0 0.0
      %2859 = vmatprep.mubr.f32.mxu0 0.0
      %2860 = vmatmul.mubr.f32.gmra.mrb[0].mxu0 %v697
      %v2861 = vpop.f32.mrb[0].mxu0
      %v2862 = vadd.f32 0.0, %v2861
      %v2863 = vpop.f32.mrb[0].mxu0
      %2864 = vdwg.mxu0
      %v2865 = vmax.f32 %v2774, %v2862
      %s2866 = scalar_lea.vmem %s6, 3072
      %v2867 = vld [vmem:[%s2866] sm:$0xff]
      %v2868 = vld [vmem:[%s2866 + $0x8] sm:$0xff]
      %v2869 = vld [vmem:[%s2866 + $0x10] sm:$0xff]
      %v2870 = vld [vmem:[%s2866 + $0x18] sm:$0xff]
      %v2871 = vld [vmem:[%s2866 + $0x20] sm:$0xff]
      %v2872 = vld [vmem:[%s2866 + $0x28] sm:$0xff]
      %v2873 = vld [vmem:[%s2866 + $0x30] sm:$0xff]
      %v2874 = vld [vmem:[%s2866 + $0x38] sm:$0xff]
      %v2875 = vld [vmem:[%s2866 + $0x40] sm:$0xff]
      %v2876 = vld [vmem:[%s2866 + $0x48] sm:$0xff]
      %v2877 = vld [vmem:[%s2866 + $0x50] sm:$0xff]
      %v2878 = vld [vmem:[%s2866 + $0x58] sm:$0xff]
      %v2879 = vld [vmem:[%s2866 + $0x60] sm:$0xff]
      %v2880 = vld [vmem:[%s2866 + $0x68] sm:$0xff]
      %v2881 = vld [vmem:[%s2866 + $0x70] sm:$0xff]
      %v2882 = vld [vmem:[%s2866 + $0x78] sm:$0x1]
      %v2884 = vsel %vm699, %v2882, 0
      %2886 = vmatprep.subr.mxu0 0.0
      %2887 = vmatpush1.msra.mxu0 %v2867
      %2888 = vmatprep.subr.mxu0 0.0
      %2889 = vmatpush1.msra.mxu0 %v2868
      %2890 = vmatprep.subr.mxu0 0.0
      %2891 = vmatpush1.msra.mxu0 %v2869
      %2892 = vmatprep.subr.mxu0 0.0
      %2893 = vmatpush1.msra.mxu0 %v2870
      %2894 = vmatprep.subr.mxu0 0.0
      %2895 = vmatpush1.msra.mxu0 %v2871
      %2896 = vmatprep.subr.mxu0 0.0
      %2897 = vmatpush1.msra.mxu0 %v2872
      %2898 = vmatprep.subr.mxu0 0.0
      %2899 = vmatpush1.msra.mxu0 %v2873
      %2900 = vmatprep.subr.mxu0 0.0
      %2901 = vmatpush1.msra.mxu0 %v2874
      %2902 = vmatprep.subr.mxu0 0.0
      %2903 = vmatpush1.msra.mxu0 %v2875
      %2904 = vmatprep.subr.mxu0 0.0
      %2905 = vmatpush1.msra.mxu0 %v2876
      %2906 = vmatprep.subr.mxu0 0.0
      %2907 = vmatpush1.msra.mxu0 %v2877
      %2908 = vmatprep.subr.mxu0 0.0
      %2909 = vmatpush1.msra.mxu0 %v2878
      %2910 = vmatprep.subr.mxu0 0.0
      %2911 = vmatpush1.msra.mxu0 %v2879
      %2912 = vmatprep.subr.mxu0 0.0
      %2913 = vmatpush1.msra.mxu0 %v2880
      %2914 = vmatprep.subr.mxu0 0.0
      %2915 = vmatpush1.msra.mxu0 %v2881
      %2916 = vmatprep.subr.mxu0 0.0
      %2917 = vmatpush1.msra.mxu0 %v2884
      %2918 = vmatprep.subr.mxu0 0.0
      %2919 = vmatpush1.msra.mxu0 0.0
      %2920 = vmatprep.subr.mxu0 0.0
      %2921 = vmatpush1.msra.mxu0 0.0
      %2922 = vmatprep.subr.mxu0 0.0
      %2923 = vmatpush1.msra.mxu0 0.0
      %2924 = vmatprep.subr.mxu0 0.0
      %2925 = vmatpush1.msra.mxu0 0.0
      %2926 = vmatprep.subr.mxu0 0.0
      %2927 = vmatpush1.msra.mxu0 0.0
      %2928 = vmatprep.subr.mxu0 0.0
      %2929 = vmatpush1.msra.mxu0 0.0
      %2930 = vmatprep.subr.mxu0 0.0
      %2931 = vmatpush1.msra.mxu0 0.0
      %2932 = vmatprep.subr.mxu0 0.0
      %2933 = vmatpush1.msra.mxu0 0.0
      %2934 = vmatprep.subr.mxu0 0.0
      %2935 = vmatpush1.msra.mxu0 0.0
      %2936 = vmatprep.subr.mxu0 0.0
      %2937 = vmatpush1.msra.mxu0 0.0
      %2938 = vmatprep.subr.mxu0 0.0
      %2939 = vmatpush1.msra.mxu0 0.0
      %2940 = vmatprep.subr.mxu0 0.0
      %2941 = vmatpush1.msra.mxu0 0.0
      %2942 = vmatprep.subr.mxu0 0.0
      %2943 = vmatpush1.msra.mxu0 0.0
      %2944 = vmatprep.subr.mxu0 0.0
      %2945 = vmatpush1.msra.mxu0 0.0
      %2946 = vmatprep.subr.mxu0 0.0
      %2947 = vmatpush1.msra.mxu0 0.0
      %2948 = vmatprep.subr.mxu0 0.0
      %2949 = vmatpush1.msra.mxu0 0.0
      %2950 = vmatprep.mubr.f32.mxu0 0.0
      %2951 = vmatmul.mubr.f32.gmra.mrb[0].mxu0 %v697
      %v2952 = vpop.f32.mrb[0].mxu0
      %v2953 = vadd.f32 0.0, %v2952
      %v2954 = vpop.f32.mrb[0].mxu0
      %2955 = vdwg.mxu0
      %v2956 = vmax.f32 %v2865, %v2953
      %s2957 = scalar_lea.vmem %s6, 3200
      %v2958 = vld [vmem:[%s2957] sm:$0xff]
      %v2959 = vld [vmem:[%s2957 + $0x8] sm:$0xff]
      %v2960 = vld [vmem:[%s2957 + $0x10] sm:$0xff]
      %v2961 = vld [vmem:[%s2957 + $0x18] sm:$0xff]
      %v2962 = vld [vmem:[%s2957 + $0x20] sm:$0xff]
      %v2963 = vld [vmem:[%s2957 + $0x28] sm:$0xff]
      %v2964 = vld [vmem:[%s2957 + $0x30] sm:$0xff]
      %v2965 = vld [vmem:[%s2957 + $0x38] sm:$0xff]
      %v2966 = vld [vmem:[%s2957 + $0x40] sm:$0xff]
      %v2967 = vld [vmem:[%s2957 + $0x48] sm:$0xff]
      %v2968 = vld [vmem:[%s2957 + $0x50] sm:$0xff]
      %v2969 = vld [vmem:[%s2957 + $0x58] sm:$0xff]
      %v2970 = vld [vmem:[%s2957 + $0x60] sm:$0xff]
      %v2971 = vld [vmem:[%s2957 + $0x68] sm:$0xff]
      %v2972 = vld [vmem:[%s2957 + $0x70] sm:$0xff]
      %v2973 = vld [vmem:[%s2957 + $0x78] sm:$0x1]
      %v2975 = vsel %vm699, %v2973, 0
      %2977 = vmatprep.subr.mxu0 0.0
      %2978 = vmatpush1.msra.mxu0 %v2958
      %2979 = vmatprep.subr.mxu0 0.0
      %2980 = vmatpush1.msra.mxu0 %v2959
      %2981 = vmatprep.subr.mxu0 0.0
      %2982 = vmatpush1.msra.mxu0 %v2960
      %2983 = vmatprep.subr.mxu0 0.0
      %2984 = vmatpush1.msra.mxu0 %v2961
      %2985 = vmatprep.subr.mxu0 0.0
      %2986 = vmatpush1.msra.mxu0 %v2962
      %2987 = vmatprep.subr.mxu0 0.0
      %2988 = vmatpush1.msra.mxu0 %v2963
      %2989 = vmatprep.subr.mxu0 0.0
      %2990 = vmatpush1.msra.mxu0 %v2964
      %2991 = vmatprep.subr.mxu0 0.0
      %2992 = vmatpush1.msra.mxu0 %v2965
      %2993 = vmatprep.subr.mxu0 0.0
      %2994 = vmatpush1.msra.mxu0 %v2966
      %2995 = vmatprep.subr.mxu0 0.0
      %2996 = vmatpush1.msra.mxu0 %v2967
      %2997 = vmatprep.subr.mxu0 0.0
      %2998 = vmatpush1.msra.mxu0 %v2968
      %2999 = vmatprep.subr.mxu0 0.0
      %3000 = vmatpush1.msra.mxu0 %v2969
      %3001 = vmatprep.subr.mxu0 0.0
      %3002 = vmatpush1.msra.mxu0 %v2970
      %3003 = vmatprep.subr.mxu0 0.0
      %3004 = vmatpush1.msra.mxu0 %v2971
      %3005 = vmatprep.subr.mxu0 0.0
      %3006 = vmatpush1.msra.mxu0 %v2972
      %3007 = vmatprep.subr.mxu0 0.0
      %3008 = vmatpush1.msra.mxu0 %v2975
      %3009 = vmatprep.subr.mxu0 0.0
      %3010 = vmatpush1.msra.mxu0 0.0
      %3011 = vmatprep.subr.mxu0 0.0
      %3012 = vmatpush1.msra.mxu0 0.0
      %3013 = vmatprep.subr.mxu0 0.0
      %3014 = vmatpush1.msra.mxu0 0.0
      %3015 = vmatprep.subr.mxu0 0.0
      %3016 = vmatpush1.msra.mxu0 0.0
      %3017 = vmatprep.subr.mxu0 0.0
      %3018 = vmatpush1.msra.mxu0 0.0
      %3019 = vmatprep.subr.mxu0 0.0
      %3020 = vmatpush1.msra.mxu0 0.0
      %3021 = vmatprep.subr.mxu0 0.0
      %3022 = vmatpush1.msra.mxu0 0.0
      %3023 = vmatprep.subr.mxu0 0.0
      %3024 = vmatpush1.msra.mxu0 0.0
      %3025 = vmatprep.subr.mxu0 0.0
      %3026 = vmatpush1.msra.mxu0 0.0
      %3027 = vmatprep.subr.mxu0 0.0
      %3028 = vmatpush1.msra.mxu0 0.0
      %3029 = vmatprep.subr.mxu0 0.0
      %3030 = vmatpush1.msra.mxu0 0.0
      %3031 = vmatprep.subr.mxu0 0.0
      %3032 = vmatpush1.msra.mxu0 0.0
      %3033 = vmatprep.subr.mxu0 0.0
      %3034 = vmatpush1.msra.mxu0 0.0
      %3035 = vmatprep.subr.mxu0 0.0
      %3036 = vmatpush1.msra.mxu0 0.0
      %3037 = vmatprep.subr.mxu0 0.0
      %3038 = vmatpush1.msra.mxu0 0.0
      %3039 = vmatprep.subr.mxu0 0.0
      %3040 = vmatpush1.msra.mxu0 0.0
      %3041 = vmatprep.mubr.f32.mxu0 0.0
      %3042 = vmatmul.mubr.f32.gmra.mrb[0].mxu0 %v697
      %v3043 = vpop.f32.mrb[0].mxu0
      %v3044 = vadd.f32 0.0, %v3043
      %v3045 = vpop.f32.mrb[0].mxu0
      %3046 = vdwg.mxu0
      %v3047 = vmax.f32 %v2956, %v3044
      %s3048 = scalar_lea.vmem %s6, 3328
      %v3049 = vld [vmem:[%s3048] sm:$0xff]
      %v3050 = vld [vmem:[%s3048 + $0x8] sm:$0xff]
      %v3051 = vld [vmem:[%s3048 + $0x10] sm:$0xff]
      %v3052 = vld [vmem:[%s3048 + $0x18] sm:$0xff]
      %v3053 = vld [vmem:[%s3048 + $0x20] sm:$0xff]
      %v3054 = vld [vmem:[%s3048 + $0x28] sm:$0xff]
      %v3055 = vld [vmem:[%s3048 + $0x30] sm:$0xff]
      %v3056 = vld [vmem:[%s3048 + $0x38] sm:$0xff]
      %v3057 = vld [vmem:[%s3048 + $0x40] sm:$0xff]
      %v3058 = vld [vmem:[%s3048 + $0x48] sm:$0xff]
      %v3059 = vld [vmem:[%s3048 + $0x50] sm:$0xff]
      %v3060 = vld [vmem:[%s3048 + $0x58] sm:$0xff]
      %v3061 = vld [vmem:[%s3048 + $0x60] sm:$0xff]
      %v3062 = vld [vmem:[%s3048 + $0x68] sm:$0xff]
      %v3063 = vld [vmem:[%s3048 + $0x70] sm:$0xff]
      %v3064 = vld [vmem:[%s3048 + $0x78] sm:$0x1]
      %v3066 = vsel %vm699, %v3064, 0
      %3068 = vmatprep.subr.mxu0 0.0
      %3069 = vmatpush1.msra.mxu0 %v3049
      %3070 = vmatprep.subr.mxu0 0.0
      %3071 = vmatpush1.msra.mxu0 %v3050
      %3072 = vmatprep.subr.mxu0 0.0
      %3073 = vmatpush1.msra.mxu0 %v3051
      %3074 = vmatprep.subr.mxu0 0.0
      %3075 = vmatpush1.msra.mxu0 %v3052
      %3076 = vmatprep.subr.mxu0 0.0
      %3077 = vmatpush1.msra.mxu0 %v3053
      %3078 = vmatprep.subr.mxu0 0.0
      %3079 = vmatpush1.msra.mxu0 %v3054
      %3080 = vmatprep.subr.mxu0 0.0
      %3081 = vmatpush1.msra.mxu0 %v3055
      %3082 = vmatprep.subr.mxu0 0.0
      %3083 = vmatpush1.msra.mxu0 %v3056
      %3084 = vmatprep.subr.mxu0 0.0
      %3085 = vmatpush1.msra.mxu0 %v3057
      %3086 = vmatprep.subr.mxu0 0.0
      %3087 = vmatpush1.msra.mxu0 %v3058
      %3088 = vmatprep.subr.mxu0 0.0
      %3089 = vmatpush1.msra.mxu0 %v3059
      %3090 = vmatprep.subr.mxu0 0.0
      %3091 = vmatpush1.msra.mxu0 %v3060
      %3092 = vmatprep.subr.mxu0 0.0
      %3093 = vmatpush1.msra.mxu0 %v3061
      %3094 = vmatprep.subr.mxu0 0.0
      %3095 = vmatpush1.msra.mxu0 %v3062
      %3096 = vmatprep.subr.mxu0 0.0
      %3097 = vmatpush1.msra.mxu0 %v3063
      %3098 = vmatprep.subr.mxu0 0.0
      %3099 = vmatpush1.msra.mxu0 %v3066
      %3100 = vmatprep.subr.mxu0 0.0
      %3101 = vmatpush1.msra.mxu0 0.0
      %3102 = vmatprep.subr.mxu0 0.0
      %3103 = vmatpush1.msra.mxu0 0.0
      %3104 = vmatprep.subr.mxu0 0.0
      %3105 = vmatpush1.msra.mxu0 0.0
      %3106 = vmatprep.subr.mxu0 0.0
      %3107 = vmatpush1.msra.mxu0 0.0
      %3108 = vmatprep.subr.mxu0 0.0
      %3109 = vmatpush1.msra.mxu0 0.0
      %3110 = vmatprep.subr.mxu0 0.0
      %3111 = vmatpush1.msra.mxu0 0.0
      %3112 = vmatprep.subr.mxu0 0.0
      %3113 = vmatpush1.msra.mxu0 0.0
      %3114 = vmatprep.subr.mxu0 0.0
      %3115 = vmatpush1.msra.mxu0 0.0
      %3116 = vmatprep.subr.mxu0 0.0
      %3117 = vmatpush1.msra.mxu0 0.0
      %3118 = vmatprep.subr.mxu0 0.0
      %3119 = vmatpush1.msra.mxu0 0.0
      %3120 = vmatprep.subr.mxu0 0.0
      %3121 = vmatpush1.msra.mxu0 0.0
      %3122 = vmatprep.subr.mxu0 0.0
      %3123 = vmatpush1.msra.mxu0 0.0
      %3124 = vmatprep.subr.mxu0 0.0
      %3125 = vmatpush1.msra.mxu0 0.0
      %3126 = vmatprep.subr.mxu0 0.0
      %3127 = vmatpush1.msra.mxu0 0.0
      %3128 = vmatprep.subr.mxu0 0.0
      %3129 = vmatpush1.msra.mxu0 0.0
      %3130 = vmatprep.subr.mxu0 0.0
      %3131 = vmatpush1.msra.mxu0 0.0
      %3132 = vmatprep.mubr.f32.mxu0 0.0
      %3133 = vmatmul.mubr.f32.gmra.mrb[0].mxu0 %v697
      %v3134 = vpop.f32.mrb[0].mxu0
      %v3135 = vadd.f32 0.0, %v3134
      %v3136 = vpop.f32.mrb[0].mxu0
      %3137 = vdwg.mxu0
      %v3138 = vmax.f32 %v3047, %v3135
      %s3139 = scalar_lea.vmem %s6, 3456
      %v3140 = vld [vmem:[%s3139] sm:$0xff]
      %v3141 = vld [vmem:[%s3139 + $0x8] sm:$0xff]
      %v3142 = vld [vmem:[%s3139 + $0x10] sm:$0xff]
      %v3143 = vld [vmem:[%s3139 + $0x18] sm:$0xff]
      %v3144 = vld [vmem:[%s3139 + $0x20] sm:$0xff]
      %v3145 = vld [vmem:[%s3139 + $0x28] sm:$0xff]
      %v3146 = vld [vmem:[%s3139 + $0x30] sm:$0xff]
      %v3147 = vld [vmem:[%s3139 + $0x38] sm:$0xff]
      %v3148 = vld [vmem:[%s3139 + $0x40] sm:$0xff]
      %v3149 = vld [vmem:[%s3139 + $0x48] sm:$0xff]
      %v3150 = vld [vmem:[%s3139 + $0x50] sm:$0xff]
      %v3151 = vld [vmem:[%s3139 + $0x58] sm:$0xff]
      %v3152 = vld [vmem:[%s3139 + $0x60] sm:$0xff]
      %v3153 = vld [vmem:[%s3139 + $0x68] sm:$0xff]
      %v3154 = vld [vmem:[%s3139 + $0x70] sm:$0xff]
      %v3155 = vld [vmem:[%s3139 + $0x78] sm:$0x1]
      %v3157 = vsel %vm699, %v3155, 0
      %3159 = vmatprep.subr.mxu0 0.0
      %3160 = vmatpush1.msra.mxu0 %v3140
      %3161 = vmatprep.subr.mxu0 0.0
      %3162 = vmatpush1.msra.mxu0 %v3141
      %3163 = vmatprep.subr.mxu0 0.0
      %3164 = vmatpush1.msra.mxu0 %v3142
      %3165 = vmatprep.subr.mxu0 0.0
      %3166 = vmatpush1.msra.mxu0 %v3143
      %3167 = vmatprep.subr.mxu0 0.0
      %3168 = vmatpush1.msra.mxu0 %v3144
      %3169 = vmatprep.subr.mxu0 0.0
      %3170 = vmatpush1.msra.mxu0 %v3145
      %3171 = vmatprep.subr.mxu0 0.0
      %3172 = vmatpush1.msra.mxu0 %v3146
      %3173 = vmatprep.subr.mxu0 0.0
      %3174 = vmatpush1.msra.mxu0 %v3147
      %3175 = vmatprep.subr.mxu0 0.0
      %3176 = vmatpush1.msra.mxu0 %v3148
      %3177 = vmatprep.subr.mxu0 0.0
      %3178 = vmatpush1.msra.mxu0 %v3149
      %3179 = vmatprep.subr.mxu0 0.0
      %3180 = vmatpush1.msra.mxu0 %v3150
      %3181 = vmatprep.subr.mxu0 0.0
      %3182 = vmatpush1.msra.mxu0 %v3151
      %3183 = vmatprep.subr.mxu0 0.0
      %3184 = vmatpush1.msra.mxu0 %v3152
      %3185 = vmatprep.subr.mxu0 0.0
      %3186 = vmatpush1.msra.mxu0 %v3153
      %3187 = vmatprep.subr.mxu0 0.0
      %3188 = vmatpush1.msra.mxu0 %v3154
      %3189 = vmatprep.subr.mxu0 0.0
      %3190 = vmatpush1.msra.mxu0 %v3157
      %3191 = vmatprep.subr.mxu0 0.0
      %3192 = vmatpush1.msra.mxu0 0.0
      %3193 = vmatprep.subr.mxu0 0.0
      %3194 = vmatpush1.msra.mxu0 0.0
      %3195 = vmatprep.subr.mxu0 0.0
      %3196 = vmatpush1.msra.mxu0 0.0
      %3197 = vmatprep.subr.mxu0 0.0
      %3198 = vmatpush1.msra.mxu0 0.0
      %3199 = vmatprep.subr.mxu0 0.0
      %3200 = vmatpush1.msra.mxu0 0.0
      %3201 = vmatprep.subr.mxu0 0.0
      %3202 = vmatpush1.msra.mxu0 0.0
      %3203 = vmatprep.subr.mxu0 0.0
      %3204 = vmatpush1.msra.mxu0 0.0
      %3205 = vmatprep.subr.mxu0 0.0
      %3206 = vmatpush1.msra.mxu0 0.0
      %3207 = vmatprep.subr.mxu0 0.0
      %3208 = vmatpush1.msra.mxu0 0.0
      %3209 = vmatprep.subr.mxu0 0.0
      %3210 = vmatpush1.msra.mxu0 0.0
      %3211 = vmatprep.subr.mxu0 0.0
      %3212 = vmatpush1.msra.mxu0 0.0
      %3213 = vmatprep.subr.mxu0 0.0
      %3214 = vmatpush1.msra.mxu0 0.0
      %3215 = vmatprep.subr.mxu0 0.0
      %3216 = vmatpush1.msra.mxu0 0.0
      %3217 = vmatprep.subr.mxu0 0.0
      %3218 = vmatpush1.msra.mxu0 0.0
      %3219 = vmatprep.subr.mxu0 0.0
      %3220 = vmatpush1.msra.mxu0 0.0
      %3221 = vmatprep.subr.mxu0 0.0
      %3222 = vmatpush1.msra.mxu0 0.0
      %3223 = vmatprep.mubr.f32.mxu0 0.0
      %3224 = vmatmul.mubr.f32.gmra.mrb[0].mxu0 %v697
      %v3225 = vpop.f32.mrb[0].mxu0
      %v3226 = vadd.f32 0.0, %v3225
      %v3227 = vpop.f32.mrb[0].mxu0
      %3228 = vdwg.mxu0
      %v3229 = vmax.f32 %v3138, %v3226
      %s3230 = scalar_lea.vmem %s6, 3584
      %v3231 = vld [vmem:[%s3230] sm:$0xff]
      %v3232 = vld [vmem:[%s3230 + $0x8] sm:$0xff]
      %v3233 = vld [vmem:[%s3230 + $0x10] sm:$0xff]
      %v3234 = vld [vmem:[%s3230 + $0x18] sm:$0xff]
      %v3235 = vld [vmem:[%s3230 + $0x20] sm:$0xff]
      %v3236 = vld [vmem:[%s3230 + $0x28] sm:$0xff]
      %v3237 = vld [vmem:[%s3230 + $0x30] sm:$0xff]
      %v3238 = vld [vmem:[%s3230 + $0x38] sm:$0xff]
      %v3239 = vld [vmem:[%s3230 + $0x40] sm:$0xff]
      %v3240 = vld [vmem:[%s3230 + $0x48] sm:$0xff]
      %v3241 = vld [vmem:[%s3230 + $0x50] sm:$0xff]
      %v3242 = vld [vmem:[%s3230 + $0x58] sm:$0xff]
      %v3243 = vld [vmem:[%s3230 + $0x60] sm:$0xff]
      %v3244 = vld [vmem:[%s3230 + $0x68] sm:$0xff]
      %v3245 = vld [vmem:[%s3230 + $0x70] sm:$0xff]
      %v3246 = vld [vmem:[%s3230 + $0x78] sm:$0x1]
      %v3248 = vsel %vm699, %v3246, 0
      %3250 = vmatprep.subr.mxu0 0.0
      %3251 = vmatpush1.msra.mxu0 %v3231
      %3252 = vmatprep.subr.mxu0 0.0
      %3253 = vmatpush1.msra.mxu0 %v3232
      %3254 = vmatprep.subr.mxu0 0.0
      %3255 = vmatpush1.msra.mxu0 %v3233
      %3256 = vmatprep.subr.mxu0 0.0
      %3257 = vmatpush1.msra.mxu0 %v3234
      %3258 = vmatprep.subr.mxu0 0.0
      %3259 = vmatpush1.msra.mxu0 %v3235
      %3260 = vmatprep.subr.mxu0 0.0
      %3261 = vmatpush1.msra.mxu0 %v3236
      %3262 = vmatprep.subr.mxu0 0.0
      %3263 = vmatpush1.msra.mxu0 %v3237
      %3264 = vmatprep.subr.mxu0 0.0
      %3265 = vmatpush1.msra.mxu0 %v3238
      %3266 = vmatprep.subr.mxu0 0.0
      %3267 = vmatpush1.msra.mxu0 %v3239
      %3268 = vmatprep.subr.mxu0 0.0
      %3269 = vmatpush1.msra.mxu0 %v3240
      %3270 = vmatprep.subr.mxu0 0.0
      %3271 = vmatpush1.msra.mxu0 %v3241
      %3272 = vmatprep.subr.mxu0 0.0
      %3273 = vmatpush1.msra.mxu0 %v3242
      %3274 = vmatprep.subr.mxu0 0.0
      %3275 = vmatpush1.msra.mxu0 %v3243
      %3276 = vmatprep.subr.mxu0 0.0
      %3277 = vmatpush1.msra.mxu0 %v3244
      %3278 = vmatprep.subr.mxu0 0.0
      %3279 = vmatpush1.msra.mxu0 %v3245
      %3280 = vmatprep.subr.mxu0 0.0
      %3281 = vmatpush1.msra.mxu0 %v3248
      %3282 = vmatprep.subr.mxu0 0.0
      %3283 = vmatpush1.msra.mxu0 0.0
      %3284 = vmatprep.subr.mxu0 0.0
      %3285 = vmatpush1.msra.mxu0 0.0
      %3286 = vmatprep.subr.mxu0 0.0
      %3287 = vmatpush1.msra.mxu0 0.0
      %3288 = vmatprep.subr.mxu0 0.0
      %3289 = vmatpush1.msra.mxu0 0.0
      %3290 = vmatprep.subr.mxu0 0.0
      %3291 = vmatpush1.msra.mxu0 0.0
      %3292 = vmatprep.subr.mxu0 0.0
      %3293 = vmatpush1.msra.mxu0 0.0
      %3294 = vmatprep.subr.mxu0 0.0
      %3295 = vmatpush1.msra.mxu0 0.0
      %3296 = vmatprep.subr.mxu0 0.0
      %3297 = vmatpush1.msra.mxu0 0.0
      %3298 = vmatprep.subr.mxu0 0.0
      %3299 = vmatpush1.msra.mxu0 0.0
      %3300 = vmatprep.subr.mxu0 0.0
      %3301 = vmatpush1.msra.mxu0 0.0
      %3302 = vmatprep.subr.mxu0 0.0
      %3303 = vmatpush1.msra.mxu0 0.0
      %3304 = vmatprep.subr.mxu0 0.0
      %3305 = vmatpush1.msra.mxu0 0.0
      %3306 = vmatprep.subr.mxu0 0.0
      %3307 = vmatpush1.msra.mxu0 0.0
      %3308 = vmatprep.subr.mxu0 0.0
      %3309 = vmatpush1.msra.mxu0 0.0
      %3310 = vmatprep.subr.mxu0 0.0
      %3311 = vmatpush1.msra.mxu0 0.0
      %3312 = vmatprep.subr.mxu0 0.0
      %3313 = vmatpush1.msra.mxu0 0.0
      %3314 = vmatprep.mubr.f32.mxu0 0.0
      %3315 = vmatmul.mubr.f32.gmra.mrb[0].mxu0 %v697
      %v3316 = vpop.f32.mrb[0].mxu0
      %v3317 = vadd.f32 0.0, %v3316
      %v3318 = vpop.f32.mrb[0].mxu0
      %3319 = vdwg.mxu0
      %v3320 = vmax.f32 %v3229, %v3317
      %s3321 = scalar_lea.vmem %s6, 3712
      %v3322 = vld [vmem:[%s3321] sm:$0xff]
      %v3323 = vld [vmem:[%s3321 + $0x8] sm:$0xff]
      %v3324 = vld [vmem:[%s3321 + $0x10] sm:$0xff]
      %v3325 = vld [vmem:[%s3321 + $0x18] sm:$0xff]
      %v3326 = vld [vmem:[%s3321 + $0x20] sm:$0xff]
      %v3327 = vld [vmem:[%s3321 + $0x28] sm:$0xff]
      %v3328 = vld [vmem:[%s3321 + $0x30] sm:$0xff]
      %v3329 = vld [vmem:[%s3321 + $0x38] sm:$0xff]
      %v3330 = vld [vmem:[%s3321 + $0x40] sm:$0xff]
      %v3331 = vld [vmem:[%s3321 + $0x48] sm:$0xff]
      %v3332 = vld [vmem:[%s3321 + $0x50] sm:$0xff]
      %v3333 = vld [vmem:[%s3321 + $0x58] sm:$0xff]
      %v3334 = vld [vmem:[%s3321 + $0x60] sm:$0xff]
      %v3335 = vld [vmem:[%s3321 + $0x68] sm:$0xff]
      %v3336 = vld [vmem:[%s3321 + $0x70] sm:$0xff]
      %v3337 = vld [vmem:[%s3321 + $0x78] sm:$0x1]
      %v3339 = vsel %vm699, %v3337, 0
      %3341 = vmatprep.subr.mxu0 0.0
      %3342 = vmatpush1.msra.mxu0 %v3322
      %3343 = vmatprep.subr.mxu0 0.0
      %3344 = vmatpush1.msra.mxu0 %v3323
      %3345 = vmatprep.subr.mxu0 0.0
      %3346 = vmatpush1.msra.mxu0 %v3324
      %3347 = vmatprep.subr.mxu0 0.0
      %3348 = vmatpush1.msra.mxu0 %v3325
      %3349 = vmatprep.subr.mxu0 0.0
      %3350 = vmatpush1.msra.mxu0 %v3326
      %3351 = vmatprep.subr.mxu0 0.0
      %3352 = vmatpush1.msra.mxu0 %v3327
      %3353 = vmatprep.subr.mxu0 0.0
      %3354 = vmatpush1.msra.mxu0 %v3328
      %3355 = vmatprep.subr.mxu0 0.0
      %3356 = vmatpush1.msra.mxu0 %v3329
      %3357 = vmatprep.subr.mxu0 0.0
      %3358 = vmatpush1.msra.mxu0 %v3330
      %3359 = vmatprep.subr.mxu0 0.0
      %3360 = vmatpush1.msra.mxu0 %v3331
      %3361 = vmatprep.subr.mxu0 0.0
      %3362 = vmatpush1.msra.mxu0 %v3332
      %3363 = vmatprep.subr.mxu0 0.0
      %3364 = vmatpush1.msra.mxu0 %v3333
      %3365 = vmatprep.subr.mxu0 0.0
      %3366 = vmatpush1.msra.mxu0 %v3334
      %3367 = vmatprep.subr.mxu0 0.0
      %3368 = vmatpush1.msra.mxu0 %v3335
      %3369 = vmatprep.subr.mxu0 0.0
      %3370 = vmatpush1.msra.mxu0 %v3336
      %3371 = vmatprep.subr.mxu0 0.0
      %3372 = vmatpush1.msra.mxu0 %v3339
      %3373 = vmatprep.subr.mxu0 0.0
      %3374 = vmatpush1.msra.mxu0 0.0
      %3375 = vmatprep.subr.mxu0 0.0
      %3376 = vmatpush1.msra.mxu0 0.0
      %3377 = vmatprep.subr.mxu0 0.0
      %3378 = vmatpush1.msra.mxu0 0.0
      %3379 = vmatprep.subr.mxu0 0.0
      %3380 = vmatpush1.msra.mxu0 0.0
      %3381 = vmatprep.subr.mxu0 0.0
      %3382 = vmatpush1.msra.mxu0 0.0
      %3383 = vmatprep.subr.mxu0 0.0
      %3384 = vmatpush1.msra.mxu0 0.0
      %3385 = vmatprep.subr.mxu0 0.0
      %3386 = vmatpush1.msra.mxu0 0.0
      %3387 = vmatprep.subr.mxu0 0.0
      %3388 = vmatpush1.msra.mxu0 0.0
      %3389 = vmatprep.subr.mxu0 0.0
      %3390 = vmatpush1.msra.mxu0 0.0
      %3391 = vmatprep.subr.mxu0 0.0
      %3392 = vmatpush1.msra.mxu0 0.0
      %3393 = vmatprep.subr.mxu0 0.0
      %3394 = vmatpush1.msra.mxu0 0.0
      %3395 = vmatprep.subr.mxu0 0.0
      %3396 = vmatpush1.msra.mxu0 0.0
      %3397 = vmatprep.subr.mxu0 0.0
      %3398 = vmatpush1.msra.mxu0 0.0
      %3399 = vmatprep.subr.mxu0 0.0
      %3400 = vmatpush1.msra.mxu0 0.0
      %3401 = vmatprep.subr.mxu0 0.0
      %3402 = vmatpush1.msra.mxu0 0.0
      %3403 = vmatprep.subr.mxu0 0.0
      %3404 = vmatpush1.msra.mxu0 0.0
      %3405 = vmatprep.mubr.f32.mxu0 0.0
      %3406 = vmatmul.mubr.f32.gmra.mrb[0].mxu0 %v697
      %v3407 = vpop.f32.mrb[0].mxu0
      %v3408 = vadd.f32 0.0, %v3407
      %v3409 = vpop.f32.mrb[0].mxu0
      %3410 = vdwg.mxu0
      %v3411 = vmax.f32 %v3320, %v3408
      %s3412 = scalar_lea.vmem %s6, 3840
      %v3413 = vld [vmem:[%s3412] sm:$0xff]
      %v3414 = vld [vmem:[%s3412 + $0x8] sm:$0xff]
      %v3415 = vld [vmem:[%s3412 + $0x10] sm:$0xff]
      %v3416 = vld [vmem:[%s3412 + $0x18] sm:$0xff]
      %v3417 = vld [vmem:[%s3412 + $0x20] sm:$0xff]
      %v3418 = vld [vmem:[%s3412 + $0x28] sm:$0xff]
      %v3419 = vld [vmem:[%s3412 + $0x30] sm:$0xff]
      %v3420 = vld [vmem:[%s3412 + $0x38] sm:$0xff]
      %v3421 = vld [vmem:[%s3412 + $0x40] sm:$0xff]
      %v3422 = vld [vmem:[%s3412 + $0x48] sm:$0xff]
      %v3423 = vld [vmem:[%s3412 + $0x50] sm:$0xff]
      %v3424 = vld [vmem:[%s3412 + $0x58] sm:$0xff]
      %v3425 = vld [vmem:[%s3412 + $0x60] sm:$0xff]
      %v3426 = vld [vmem:[%s3412 + $0x68] sm:$0xff]
      %v3427 = vld [vmem:[%s3412 + $0x70] sm:$0xff]
      %v3428 = vld [vmem:[%s3412 + $0x78] sm:$0x1]
      %v3430 = vsel %vm699, %v3428, 0
      %3432 = vmatprep.subr.mxu0 0.0
      %3433 = vmatpush1.msra.mxu0 %v3413
      %3434 = vmatprep.subr.mxu0 0.0
      %3435 = vmatpush1.msra.mxu0 %v3414
      %3436 = vmatprep.subr.mxu0 0.0
      %3437 = vmatpush1.msra.mxu0 %v3415
      %3438 = vmatprep.subr.mxu0 0.0
      %3439 = vmatpush1.msra.mxu0 %v3416
      %3440 = vmatprep.subr.mxu0 0.0
      %3441 = vmatpush1.msra.mxu0 %v3417
      %3442 = vmatprep.subr.mxu0 0.0
      %3443 = vmatpush1.msra.mxu0 %v3418
      %3444 = vmatprep.subr.mxu0 0.0
      %3445 = vmatpush1.msra.mxu0 %v3419
      %3446 = vmatprep.subr.mxu0 0.0
      %3447 = vmatpush1.msra.mxu0 %v3420
      %3448 = vmatprep.subr.mxu0 0.0
      %3449 = vmatpush1.msra.mxu0 %v3421
      %3450 = vmatprep.subr.mxu0 0.0
      %3451 = vmatpush1.msra.mxu0 %v3422
      %3452 = vmatprep.subr.mxu0 0.0
      %3453 = vmatpush1.msra.mxu0 %v3423
      %3454 = vmatprep.subr.mxu0 0.0
      %3455 = vmatpush1.msra.mxu0 %v3424
      %3456 = vmatprep.subr.mxu0 0.0
      %3457 = vmatpush1.msra.mxu0 %v3425
      %3458 = vmatprep.subr.mxu0 0.0
      %3459 = vmatpush1.msra.mxu0 %v3426
      %3460 = vmatprep.subr.mxu0 0.0
      %3461 = vmatpush1.msra.mxu0 %v3427
      %3462 = vmatprep.subr.mxu0 0.0
      %3463 = vmatpush1.msra.mxu0 %v3430
      %3464 = vmatprep.subr.mxu0 0.0
      %3465 = vmatpush1.msra.mxu0 0.0
      %3466 = vmatprep.subr.mxu0 0.0
      %3467 = vmatpush1.msra.mxu0 0.0
      %3468 = vmatprep.subr.mxu0 0.0
      %3469 = vmatpush1.msra.mxu0 0.0
      %3470 = vmatprep.subr.mxu0 0.0
      %3471 = vmatpush1.msra.mxu0 0.0
      %3472 = vmatprep.subr.mxu0 0.0
      %3473 = vmatpush1.msra.mxu0 0.0
      %3474 = vmatprep.subr.mxu0 0.0
      %3475 = vmatpush1.msra.mxu0 0.0
      %3476 = vmatprep.subr.mxu0 0.0
      %3477 = vmatpush1.msra.mxu0 0.0
      %3478 = vmatprep.subr.mxu0 0.0
      %3479 = vmatpush1.msra.mxu0 0.0
      %3480 = vmatprep.subr.mxu0 0.0
      %3481 = vmatpush1.msra.mxu0 0.0
      %3482 = vmatprep.subr.mxu0 0.0
      %3483 = vmatpush1.msra.mxu0 0.0
      %3484 = vmatprep.subr.mxu0 0.0
      %3485 = vmatpush1.msra.mxu0 0.0
      %3486 = vmatprep.subr.mxu0 0.0
      %3487 = vmatpush1.msra.mxu0 0.0
      %3488 = vmatprep.subr.mxu0 0.0
      %3489 = vmatpush1.msra.mxu0 0.0
      %3490 = vmatprep.subr.mxu0 0.0
      %3491 = vmatpush1.msra.mxu0 0.0
      %3492 = vmatprep.subr.mxu0 0.0
      %3493 = vmatpush1.msra.mxu0 0.0
      %3494 = vmatprep.subr.mxu0 0.0
      %3495 = vmatpush1.msra.mxu0 0.0
      %3496 = vmatprep.mubr.f32.mxu0 0.0
      %3497 = vmatmul.mubr.f32.gmra.mrb[0].mxu0 %v697
      %v3498 = vpop.f32.mrb[0].mxu0
      %v3499 = vadd.f32 0.0, %v3498
      %v3500 = vpop.f32.mrb[0].mxu0
      %3501 = vdwg.mxu0
      %v3502 = vmax.f32 %v3411, %v3499
      %s3503 = scalar_lea.vmem %s6, 3968
      %v3504 = vld [vmem:[%s3503] sm:$0xff]
      %v3505 = vld [vmem:[%s3503 + $0x8] sm:$0xff]
      %v3506 = vld [vmem:[%s3503 + $0x10] sm:$0xff]
      %v3507 = vld [vmem:[%s3503 + $0x18] sm:$0xff]
      %v3508 = vld [vmem:[%s3503 + $0x20] sm:$0xff]
      %v3509 = vld [vmem:[%s3503 + $0x28] sm:$0xff]
      %v3510 = vld [vmem:[%s3503 + $0x30] sm:$0xff]
      %v3511 = vld [vmem:[%s3503 + $0x38] sm:$0xff]
      %v3512 = vld [vmem:[%s3503 + $0x40] sm:$0xff]
      %v3513 = vld [vmem:[%s3503 + $0x48] sm:$0xff]
      %v3514 = vld [vmem:[%s3503 + $0x50] sm:$0xff]
      %v3515 = vld [vmem:[%s3503 + $0x58] sm:$0xff]
      %v3516 = vld [vmem:[%s3503 + $0x60] sm:$0xff]
      %v3517 = vld [vmem:[%s3503 + $0x68] sm:$0xff]
      %v3518 = vld [vmem:[%s3503 + $0x70] sm:$0xff]
      %v3519 = vld [vmem:[%s3503 + $0x78] sm:$0x1]
      %v3521 = vsel %vm699, %v3519, 0
      %3523 = vmatprep.subr.mxu0 0.0
      %3524 = vmatpush1.msra.mxu0 %v3504
      %3525 = vmatprep.subr.mxu0 0.0
      %3526 = vmatpush1.msra.mxu0 %v3505
      %3527 = vmatprep.subr.mxu0 0.0
      %3528 = vmatpush1.msra.mxu0 %v3506
      %3529 = vmatprep.subr.mxu0 0.0
      %3530 = vmatpush1.msra.mxu0 %v3507
      %3531 = vmatprep.subr.mxu0 0.0
      %3532 = vmatpush1.msra.mxu0 %v3508
      %3533 = vmatprep.subr.mxu0 0.0
      %3534 = vmatpush1.msra.mxu0 %v3509
      %3535 = vmatprep.subr.mxu0 0.0
      %3536 = vmatpush1.msra.mxu0 %v3510
      %3537 = vmatprep.subr.mxu0 0.0
      %3538 = vmatpush1.msra.mxu0 %v3511
      %3539 = vmatprep.subr.mxu0 0.0
      %3540 = vmatpush1.msra.mxu0 %v3512
      %3541 = vmatprep.subr.mxu0 0.0
      %3542 = vmatpush1.msra.mxu0 %v3513
      %3543 = vmatprep.subr.mxu0 0.0
      %3544 = vmatpush1.msra.mxu0 %v3514
      %3545 = vmatprep.subr.mxu0 0.0
      %3546 = vmatpush1.msra.mxu0 %v3515
      %3547 = vmatprep.subr.mxu0 0.0
      %3548 = vmatpush1.msra.mxu0 %v3516
      %3549 = vmatprep.subr.mxu0 0.0
      %3550 = vmatpush1.msra.mxu0 %v3517
      %3551 = vmatprep.subr.mxu0 0.0
      %3552 = vmatpush1.msra.mxu0 %v3518
      %3553 = vmatprep.subr.mxu0 0.0
      %3554 = vmatpush1.msra.mxu0 %v3521
      %3555 = vmatprep.subr.mxu0 0.0
      %3556 = vmatpush1.msra.mxu0 0.0
      %3557 = vmatprep.subr.mxu0 0.0
      %3558 = vmatpush1.msra.mxu0 0.0
      %3559 = vmatprep.subr.mxu0 0.0
      %3560 = vmatpush1.msra.mxu0 0.0
      %3561 = vmatprep.subr.mxu0 0.0
      %3562 = vmatpush1.msra.mxu0 0.0
      %3563 = vmatprep.subr.mxu0 0.0
      %3564 = vmatpush1.msra.mxu0 0.0
      %3565 = vmatprep.subr.mxu0 0.0
      %3566 = vmatpush1.msra.mxu0 0.0
      %3567 = vmatprep.subr.mxu0 0.0
      %3568 = vmatpush1.msra.mxu0 0.0
      %3569 = vmatprep.subr.mxu0 0.0
      %3570 = vmatpush1.msra.mxu0 0.0
      %3571 = vmatprep.subr.mxu0 0.0
      %3572 = vmatpush1.msra.mxu0 0.0
      %3573 = vmatprep.subr.mxu0 0.0
      %3574 = vmatpush1.msra.mxu0 0.0
      %3575 = vmatprep.subr.mxu0 0.0
      %3576 = vmatpush1.msra.mxu0 0.0
      %3577 = vmatprep.subr.mxu0 0.0
      %3578 = vmatpush1.msra.mxu0 0.0
      %3579 = vmatprep.subr.mxu0 0.0
      %3580 = vmatpush1.msra.mxu0 0.0
      %3581 = vmatprep.subr.mxu0 0.0
      %3582 = vmatpush1.msra.mxu0 0.0
      %3583 = vmatprep.subr.mxu0 0.0
      %3584 = vmatpush1.msra.mxu0 0.0
      %3585 = vmatprep.subr.mxu0 0.0
      %3586 = vmatpush1.msra.mxu0 0.0
      %3587 = vmatprep.mubr.f32.mxu0 0.0
      %3588 = vmatmul.mubr.f32.gmra.mrb[0].mxu0 %v697
      %v3589 = vpop.f32.mrb[0].mxu0
      %v3590 = vadd.f32 0.0, %v3589
      %v3591 = vpop.f32.mrb[0].mxu0
      %3592 = vdwg.mxu0
      %v3593 = vmax.f32 %v3502, %v3590
      %s3594 = scalar_lea.vmem %s6, 4096
      %v3595 = vld [vmem:[%s3594] sm:$0xff]
      %v3596 = vld [vmem:[%s3594 + $0x8] sm:$0xff]
      %v3597 = vld [vmem:[%s3594 + $0x10] sm:$0xff]
      %v3598 = vld [vmem:[%s3594 + $0x18] sm:$0xff]
      %v3599 = vld [vmem:[%s3594 + $0x20] sm:$0xff]
      %v3600 = vld [vmem:[%s3594 + $0x28] sm:$0xff]
      %v3601 = vld [vmem:[%s3594 + $0x30] sm:$0xff]
      %v3602 = vld [vmem:[%s3594 + $0x38] sm:$0xff]
      %v3603 = vld [vmem:[%s3594 + $0x40] sm:$0xff]
      %v3604 = vld [vmem:[%s3594 + $0x48] sm:$0xff]
      %v3605 = vld [vmem:[%s3594 + $0x50] sm:$0xff]
      %v3606 = vld [vmem:[%s3594 + $0x58] sm:$0xff]
      %v3607 = vld [vmem:[%s3594 + $0x60] sm:$0xff]
      %v3608 = vld [vmem:[%s3594 + $0x68] sm:$0xff]
      %v3609 = vld [vmem:[%s3594 + $0x70] sm:$0xff]
      %v3610 = vld [vmem:[%s3594 + $0x78] sm:$0x1]
      %v3612 = vsel %vm699, %v3610, 0
      %3614 = vmatprep.subr.mxu0 0.0
      %3615 = vmatpush1.msra.mxu0 %v3595
      %3616 = vmatprep.subr.mxu0 0.0
      %3617 = vmatpush1.msra.mxu0 %v3596
      %3618 = vmatprep.subr.mxu0 0.0
      %3619 = vmatpush1.msra.mxu0 %v3597
      %3620 = vmatprep.subr.mxu0 0.0
      %3621 = vmatpush1.msra.mxu0 %v3598
      %3622 = vmatprep.subr.mxu0 0.0
      %3623 = vmatpush1.msra.mxu0 %v3599
      %3624 = vmatprep.subr.mxu0 0.0
      %3625 = vmatpush1.msra.mxu0 %v3600
      %3626 = vmatprep.subr.mxu0 0.0
      %3627 = vmatpush1.msra.mxu0 %v3601
      %3628 = vmatprep.subr.mxu0 0.0
      %3629 = vmatpush1.msra.mxu0 %v3602
      %3630 = vmatprep.subr.mxu0 0.0
      %3631 = vmatpush1.msra.mxu0 %v3603
      %3632 = vmatprep.subr.mxu0 0.0
      %3633 = vmatpush1.msra.mxu0 %v3604
      %3634 = vmatprep.subr.mxu0 0.0
      %3635 = vmatpush1.msra.mxu0 %v3605
      %3636 = vmatprep.subr.mxu0 0.0
      %3637 = vmatpush1.msra.mxu0 %v3606
      %3638 = vmatprep.subr.mxu0 0.0
      %3639 = vmatpush1.msra.mxu0 %v3607
      %3640 = vmatprep.subr.mxu0 0.0
      %3641 = vmatpush1.msra.mxu0 %v3608
      %3642 = vmatprep.subr.mxu0 0.0
      %3643 = vmatpush1.msra.mxu0 %v3609
      %3644 = vmatprep.subr.mxu0 0.0
      %3645 = vmatpush1.msra.mxu0 %v3612
      %3646 = vmatprep.subr.mxu0 0.0
      %3647 = vmatpush1.msra.mxu0 0.0
      %3648 = vmatprep.subr.mxu0 0.0
      %3649 = vmatpush1.msra.mxu0 0.0
      %3650 = vmatprep.subr.mxu0 0.0
      %3651 = vmatpush1.msra.mxu0 0.0
      %3652 = vmatprep.subr.mxu0 0.0
      %3653 = vmatpush1.msra.mxu0 0.0
      %3654 = vmatprep.subr.mxu0 0.0
      %3655 = vmatpush1.msra.mxu0 0.0
      %3656 = vmatprep.subr.mxu0 0.0
      %3657 = vmatpush1.msra.mxu0 0.0
      %3658 = vmatprep.subr.mxu0 0.0
      %3659 = vmatpush1.msra.mxu0 0.0
      %3660 = vmatprep.subr.mxu0 0.0
      %3661 = vmatpush1.msra.mxu0 0.0
      %3662 = vmatprep.subr.mxu0 0.0
      %3663 = vmatpush1.msra.mxu0 0.0
      %3664 = vmatprep.subr.mxu0 0.0
      %3665 = vmatpush1.msra.mxu0 0.0
      %3666 = vmatprep.subr.mxu0 0.0
      %3667 = vmatpush1.msra.mxu0 0.0
      %3668 = vmatprep.subr.mxu0 0.0
      %3669 = vmatpush1.msra.mxu0 0.0
      %3670 = vmatprep.subr.mxu0 0.0
      %3671 = vmatpush1.msra.mxu0 0.0
      %3672 = vmatprep.subr.mxu0 0.0
      %3673 = vmatpush1.msra.mxu0 0.0
      %3674 = vmatprep.subr.mxu0 0.0
      %3675 = vmatpush1.msra.mxu0 0.0
      %3676 = vmatprep.subr.mxu0 0.0
      %3677 = vmatpush1.msra.mxu0 0.0
      %3678 = vmatprep.mubr.f32.mxu0 0.0
      %3679 = vmatmul.mubr.f32.gmra.mrb[0].mxu0 %v697
      %v3680 = vpop.f32.mrb[0].mxu0
      %v3681 = vadd.f32 0.0, %v3680
      %v3682 = vpop.f32.mrb[0].mxu0
      %3683 = vdwg.mxu0
      %v3684 = vmax.f32 %v3593, %v3681
      %s3685 = scalar_lea.vmem %s6, 4224
      %v3686 = vld [vmem:[%s3685] sm:$0xff]
      %v3687 = vld [vmem:[%s3685 + $0x8] sm:$0xff]
      %v3688 = vld [vmem:[%s3685 + $0x10] sm:$0xff]
      %v3689 = vld [vmem:[%s3685 + $0x18] sm:$0xff]
      %v3690 = vld [vmem:[%s3685 + $0x20] sm:$0xff]
      %v3691 = vld [vmem:[%s3685 + $0x28] sm:$0xff]
      %v3692 = vld [vmem:[%s3685 + $0x30] sm:$0xff]
      %v3693 = vld [vmem:[%s3685 + $0x38] sm:$0xff]
      %v3694 = vld [vmem:[%s3685 + $0x40] sm:$0xff]
      %v3695 = vld [vmem:[%s3685 + $0x48] sm:$0xff]
      %v3696 = vld [vmem:[%s3685 + $0x50] sm:$0xff]
      %v3697 = vld [vmem:[%s3685 + $0x58] sm:$0xff]
      %v3698 = vld [vmem:[%s3685 + $0x60] sm:$0xff]
      %v3699 = vld [vmem:[%s3685 + $0x68] sm:$0xff]
      %v3700 = vld [vmem:[%s3685 + $0x70] sm:$0xff]
      %v3701 = vld [vmem:[%s3685 + $0x78] sm:$0x1]
      %v3703 = vsel %vm699, %v3701, 0
      %3705 = vmatprep.subr.mxu0 0.0
      %3706 = vmatpush1.msra.mxu0 %v3686
      %3707 = vmatprep.subr.mxu0 0.0
      %3708 = vmatpush1.msra.mxu0 %v3687
      %3709 = vmatprep.subr.mxu0 0.0
      %3710 = vmatpush1.msra.mxu0 %v3688
      %3711 = vmatprep.subr.mxu0 0.0
      %3712 = vmatpush1.msra.mxu0 %v3689
      %3713 = vmatprep.subr.mxu0 0.0
      %3714 = vmatpush1.msra.mxu0 %v3690
      %3715 = vmatprep.subr.mxu0 0.0
      %3716 = vmatpush1.msra.mxu0 %v3691
      %3717 = vmatprep.subr.mxu0 0.0
      %3718 = vmatpush1.msra.mxu0 %v3692
      %3719 = vmatprep.subr.mxu0 0.0
      %3720 = vmatpush1.msra.mxu0 %v3693
      %3721 = vmatprep.subr.mxu0 0.0
      %3722 = vmatpush1.msra.mxu0 %v3694
      %3723 = vmatprep.subr.mxu0 0.0
      %3724 = vmatpush1.msra.mxu0 %v3695
      %3725 = vmatprep.subr.mxu0 0.0
      %3726 = vmatpush1.msra.mxu0 %v3696
      %3727 = vmatprep.subr.mxu0 0.0
      %3728 = vmatpush1.msra.mxu0 %v3697
      %3729 = vmatprep.subr.mxu0 0.0
      %3730 = vmatpush1.msra.mxu0 %v3698
      %3731 = vmatprep.subr.mxu0 0.0
      %3732 = vmatpush1.msra.mxu0 %v3699
      %3733 = vmatprep.subr.mxu0 0.0
      %3734 = vmatpush1.msra.mxu0 %v3700
      %3735 = vmatprep.subr.mxu0 0.0
      %3736 = vmatpush1.msra.mxu0 %v3703
      %3737 = vmatprep.subr.mxu0 0.0
      %3738 = vmatpush1.msra.mxu0 0.0
      %3739 = vmatprep.subr.mxu0 0.0
      %3740 = vmatpush1.msra.mxu0 0.0
      %3741 = vmatprep.subr.mxu0 0.0
      %3742 = vmatpush1.msra.mxu0 0.0
      %3743 = vmatprep.subr.mxu0 0.0
      %3744 = vmatpush1.msra.mxu0 0.0
      %3745 = vmatprep.subr.mxu0 0.0
      %3746 = vmatpush1.msra.mxu0 0.0
      %3747 = vmatprep.subr.mxu0 0.0
      %3748 = vmatpush1.msra.mxu0 0.0
      %3749 = vmatprep.subr.mxu0 0.0
      %3750 = vmatpush1.msra.mxu0 0.0
      %3751 = vmatprep.subr.mxu0 0.0
      %3752 = vmatpush1.msra.mxu0 0.0
      %3753 = vmatprep.subr.mxu0 0.0
      %3754 = vmatpush1.msra.mxu0 0.0
      %3755 = vmatprep.subr.mxu0 0.0
      %3756 = vmatpush1.msra.mxu0 0.0
      %3757 = vmatprep.subr.mxu0 0.0
      %3758 = vmatpush1.msra.mxu0 0.0
      %3759 = vmatprep.subr.mxu0 0.0
      %3760 = vmatpush1.msra.mxu0 0.0
      %3761 = vmatprep.subr.mxu0 0.0
      %3762 = vmatpush1.msra.mxu0 0.0
      %3763 = vmatprep.subr.mxu0 0.0
      %3764 = vmatpush1.msra.mxu0 0.0
      %3765 = vmatprep.subr.mxu0 0.0
      %3766 = vmatpush1.msra.mxu0 0.0
      %3767 = vmatprep.subr.mxu0 0.0
      %3768 = vmatpush1.msra.mxu0 0.0
      %3769 = vmatprep.mubr.f32.mxu0 0.0
      %3770 = vmatmul.mubr.f32.gmra.mrb[0].mxu0 %v697
      %v3771 = vpop.f32.mrb[0].mxu0
      %v3772 = vadd.f32 0.0, %v3771
      %v3773 = vpop.f32.mrb[0].mxu0
      %3774 = vdwg.mxu0
      %v3775 = vmax.f32 %v3684, %v3772
      %s3776 = scalar_lea.vmem %s6, 4352
      %v3777 = vld [vmem:[%s3776] sm:$0xff]
      %v3778 = vld [vmem:[%s3776 + $0x8] sm:$0xff]
      %v3779 = vld [vmem:[%s3776 + $0x10] sm:$0xff]
      %v3780 = vld [vmem:[%s3776 + $0x18] sm:$0xff]
      %v3781 = vld [vmem:[%s3776 + $0x20] sm:$0xff]
      %v3782 = vld [vmem:[%s3776 + $0x28] sm:$0xff]
      %v3783 = vld [vmem:[%s3776 + $0x30] sm:$0xff]
      %v3784 = vld [vmem:[%s3776 + $0x38] sm:$0xff]
      %v3785 = vld [vmem:[%s3776 + $0x40] sm:$0xff]
      %v3786 = vld [vmem:[%s3776 + $0x48] sm:$0xff]
      %v3787 = vld [vmem:[%s3776 + $0x50] sm:$0xff]
      %v3788 = vld [vmem:[%s3776 + $0x58] sm:$0xff]
      %v3789 = vld [vmem:[%s3776 + $0x60] sm:$0xff]
      %v3790 = vld [vmem:[%s3776 + $0x68] sm:$0xff]
      %v3791 = vld [vmem:[%s3776 + $0x70] sm:$0xff]
      %v3792 = vld [vmem:[%s3776 + $0x78] sm:$0x1]
      %v3794 = vsel %vm699, %v3792, 0
      %3796 = vmatprep.subr.mxu0 0.0
      %3797 = vmatpush1.msra.mxu0 %v3777
      %3798 = vmatprep.subr.mxu0 0.0
      %3799 = vmatpush1.msra.mxu0 %v3778
      %3800 = vmatprep.subr.mxu0 0.0
      %3801 = vmatpush1.msra.mxu0 %v3779
      %3802 = vmatprep.subr.mxu0 0.0
      %3803 = vmatpush1.msra.mxu0 %v3780
      %3804 = vmatprep.subr.mxu0 0.0
      %3805 = vmatpush1.msra.mxu0 %v3781
      %3806 = vmatprep.subr.mxu0 0.0
      %3807 = vmatpush1.msra.mxu0 %v3782
      %3808 = vmatprep.subr.mxu0 0.0
      %3809 = vmatpush1.msra.mxu0 %v3783
      %3810 = vmatprep.subr.mxu0 0.0
      %3811 = vmatpush1.msra.mxu0 %v3784
      %3812 = vmatprep.subr.mxu0 0.0
      %3813 = vmatpush1.msra.mxu0 %v3785
      %3814 = vmatprep.subr.mxu0 0.0
      %3815 = vmatpush1.msra.mxu0 %v3786
      %3816 = vmatprep.subr.mxu0 0.0
      %3817 = vmatpush1.msra.mxu0 %v3787
      %3818 = vmatprep.subr.mxu0 0.0
      %3819 = vmatpush1.msra.mxu0 %v3788
      %3820 = vmatprep.subr.mxu0 0.0
      %3821 = vmatpush1.msra.mxu0 %v3789
      %3822 = vmatprep.subr.mxu0 0.0
      %3823 = vmatpush1.msra.mxu0 %v3790
      %3824 = vmatprep.subr.mxu0 0.0
      %3825 = vmatpush1.msra.mxu0 %v3791
      %3826 = vmatprep.subr.mxu0 0.0
      %3827 = vmatpush1.msra.mxu0 %v3794
      %3828 = vmatprep.subr.mxu0 0.0
      %3829 = vmatpush1.msra.mxu0 0.0
      %3830 = vmatprep.subr.mxu0 0.0
      %3831 = vmatpush1.msra.mxu0 0.0
      %3832 = vmatprep.subr.mxu0 0.0
      %3833 = vmatpush1.msra.mxu0 0.0
      %3834 = vmatprep.subr.mxu0 0.0
      %3835 = vmatpush1.msra.mxu0 0.0
      %3836 = vmatprep.subr.mxu0 0.0
      %3837 = vmatpush1.msra.mxu0 0.0
      %3838 = vmatprep.subr.mxu0 0.0
      %3839 = vmatpush1.msra.mxu0 0.0
      %3840 = vmatprep.subr.mxu0 0.0
      %3841 = vmatpush1.msra.mxu0 0.0
      %3842 = vmatprep.subr.mxu0 0.0
      %3843 = vmatpush1.msra.mxu0 0.0
      %3844 = vmatprep.subr.mxu0 0.0
      %3845 = vmatpush1.msra.mxu0 0.0
      %3846 = vmatprep.subr.mxu0 0.0
      %3847 = vmatpush1.msra.mxu0 0.0
      %3848 = vmatprep.subr.mxu0 0.0
      %3849 = vmatpush1.msra.mxu0 0.0
      %3850 = vmatprep.subr.mxu0 0.0
      %3851 = vmatpush1.msra.mxu0 0.0
      %3852 = vmatprep.subr.mxu0 0.0
      %3853 = vmatpush1.msra.mxu0 0.0
      %3854 = vmatprep.subr.mxu0 0.0
      %3855 = vmatpush1.msra.mxu0 0.0
      %3856 = vmatprep.subr.mxu0 0.0
      %3857 = vmatpush1.msra.mxu0 0.0
      %3858 = vmatprep.subr.mxu0 0.0
      %3859 = vmatpush1.msra.mxu0 0.0
      %3860 = vmatprep.mubr.f32.mxu0 0.0
      %3861 = vmatmul.mubr.f32.gmra.mrb[0].mxu0 %v697
      %v3862 = vpop.f32.mrb[0].mxu0
      %v3863 = vadd.f32 0.0, %v3862
      %v3864 = vpop.f32.mrb[0].mxu0
      %3865 = vdwg.mxu0
      %v3866 = vmax.f32 %v3775, %v3863
      %s3867 = scalar_lea.vmem %s6, 4480
      %v3868 = vld [vmem:[%s3867] sm:$0xff]
      %v3869 = vld [vmem:[%s3867 + $0x8] sm:$0xff]
      %v3870 = vld [vmem:[%s3867 + $0x10] sm:$0xff]
      %v3871 = vld [vmem:[%s3867 + $0x18] sm:$0xff]
      %v3872 = vld [vmem:[%s3867 + $0x20] sm:$0xff]
      %v3873 = vld [vmem:[%s3867 + $0x28] sm:$0xff]
      %v3874 = vld [vmem:[%s3867 + $0x30] sm:$0xff]
      %v3875 = vld [vmem:[%s3867 + $0x38] sm:$0xff]
      %v3876 = vld [vmem:[%s3867 + $0x40] sm:$0xff]
      %v3877 = vld [vmem:[%s3867 + $0x48] sm:$0xff]
      %v3878 = vld [vmem:[%s3867 + $0x50] sm:$0xff]
      %v3879 = vld [vmem:[%s3867 + $0x58] sm:$0xff]
      %v3880 = vld [vmem:[%s3867 + $0x60] sm:$0xff]
      %v3881 = vld [vmem:[%s3867 + $0x68] sm:$0xff]
      %v3882 = vld [vmem:[%s3867 + $0x70] sm:$0xff]
      %v3883 = vld [vmem:[%s3867 + $0x78] sm:$0x1]
      %v3885 = vsel %vm699, %v3883, 0
      %3887 = vmatprep.subr.mxu0 0.0
      %3888 = vmatpush1.msra.mxu0 %v3868
      %3889 = vmatprep.subr.mxu0 0.0
      %3890 = vmatpush1.msra.mxu0 %v3869
      %3891 = vmatprep.subr.mxu0 0.0
      %3892 = vmatpush1.msra.mxu0 %v3870
      %3893 = vmatprep.subr.mxu0 0.0
      %3894 = vmatpush1.msra.mxu0 %v3871
      %3895 = vmatprep.subr.mxu0 0.0
      %3896 = vmatpush1.msra.mxu0 %v3872
      %3897 = vmatprep.subr.mxu0 0.0
      %3898 = vmatpush1.msra.mxu0 %v3873
      %3899 = vmatprep.subr.mxu0 0.0
      %3900 = vmatpush1.msra.mxu0 %v3874
      %3901 = vmatprep.subr.mxu0 0.0
      %3902 = vmatpush1.msra.mxu0 %v3875
      %3903 = vmatprep.subr.mxu0 0.0
      %3904 = vmatpush1.msra.mxu0 %v3876
      %3905 = vmatprep.subr.mxu0 0.0
      %3906 = vmatpush1.msra.mxu0 %v3877
      %3907 = vmatprep.subr.mxu0 0.0
      %3908 = vmatpush1.msra.mxu0 %v3878
      %3909 = vmatprep.subr.mxu0 0.0
      %3910 = vmatpush1.msra.mxu0 %v3879
      %3911 = vmatprep.subr.mxu0 0.0
      %3912 = vmatpush1.msra.mxu0 %v3880
      %3913 = vmatprep.subr.mxu0 0.0
      %3914 = vmatpush1.msra.mxu0 %v3881
      %3915 = vmatprep.subr.mxu0 0.0
      %3916 = vmatpush1.msra.mxu0 %v3882
      %3917 = vmatprep.subr.mxu0 0.0
      %3918 = vmatpush1.msra.mxu0 %v3885
      %3919 = vmatprep.subr.mxu0 0.0
      %3920 = vmatpush1.msra.mxu0 0.0
      %3921 = vmatprep.subr.mxu0 0.0
      %3922 = vmatpush1.msra.mxu0 0.0
      %3923 = vmatprep.subr.mxu0 0.0
      %3924 = vmatpush1.msra.mxu0 0.0
      %3925 = vmatprep.subr.mxu0 0.0
      %3926 = vmatpush1.msra.mxu0 0.0
      %3927 = vmatprep.subr.mxu0 0.0
      %3928 = vmatpush1.msra.mxu0 0.0
      %3929 = vmatprep.subr.mxu0 0.0
      %3930 = vmatpush1.msra.mxu0 0.0
      %3931 = vmatprep.subr.mxu0 0.0
      %3932 = vmatpush1.msra.mxu0 0.0
      %3933 = vmatprep.subr.mxu0 0.0
      %3934 = vmatpush1.msra.mxu0 0.0
      %3935 = vmatprep.subr.mxu0 0.0
      %3936 = vmatpush1.msra.mxu0 0.0
      %3937 = vmatprep.subr.mxu0 0.0
      %3938 = vmatpush1.msra.mxu0 0.0
      %3939 = vmatprep.subr.mxu0 0.0
      %3940 = vmatpush1.msra.mxu0 0.0
      %3941 = vmatprep.subr.mxu0 0.0
      %3942 = vmatpush1.msra.mxu0 0.0
      %3943 = vmatprep.subr.mxu0 0.0
      %3944 = vmatpush1.msra.mxu0 0.0
      %3945 = vmatprep.subr.mxu0 0.0
      %3946 = vmatpush1.msra.mxu0 0.0
      %3947 = vmatprep.subr.mxu0 0.0
      %3948 = vmatpush1.msra.mxu0 0.0
      %3949 = vmatprep.subr.mxu0 0.0
      %3950 = vmatpush1.msra.mxu0 0.0
      %3951 = vmatprep.mubr.f32.mxu0 0.0
      %3952 = vmatmul.mubr.f32.gmra.mrb[0].mxu0 %v697
      %v3953 = vpop.f32.mrb[0].mxu0
      %v3954 = vadd.f32 0.0, %v3953
      %v3955 = vpop.f32.mrb[0].mxu0
      %3956 = vdwg.mxu0
      %v3957 = vmax.f32 %v3866, %v3954
      %s3958 = scalar_lea.vmem %s6, 4608
      %v3959 = vld [vmem:[%s3958] sm:$0xff]
      %v3960 = vld [vmem:[%s3958 + $0x8] sm:$0xff]
      %v3961 = vld [vmem:[%s3958 + $0x10] sm:$0xff]
      %v3962 = vld [vmem:[%s3958 + $0x18] sm:$0xff]
      %v3963 = vld [vmem:[%s3958 + $0x20] sm:$0xff]
      %v3964 = vld [vmem:[%s3958 + $0x28] sm:$0xff]
      %v3965 = vld [vmem:[%s3958 + $0x30] sm:$0xff]
      %v3966 = vld [vmem:[%s3958 + $0x38] sm:$0xff]
      %v3967 = vld [vmem:[%s3958 + $0x40] sm:$0xff]
      %v3968 = vld [vmem:[%s3958 + $0x48] sm:$0xff]
      %v3969 = vld [vmem:[%s3958 + $0x50] sm:$0xff]
      %v3970 = vld [vmem:[%s3958 + $0x58] sm:$0xff]
      %v3971 = vld [vmem:[%s3958 + $0x60] sm:$0xff]
      %v3972 = vld [vmem:[%s3958 + $0x68] sm:$0xff]
      %v3973 = vld [vmem:[%s3958 + $0x70] sm:$0xff]
      %v3974 = vld [vmem:[%s3958 + $0x78] sm:$0x1]
      %v3976 = vsel %vm699, %v3974, 0
      %3978 = vmatprep.subr.mxu0 0.0
      %3979 = vmatpush1.msra.mxu0 %v3959
      %3980 = vmatprep.subr.mxu0 0.0
      %3981 = vmatpush1.msra.mxu0 %v3960
      %3982 = vmatprep.subr.mxu0 0.0
      %3983 = vmatpush1.msra.mxu0 %v3961
      %3984 = vmatprep.subr.mxu0 0.0
      %3985 = vmatpush1.msra.mxu0 %v3962
      %3986 = vmatprep.subr.mxu0 0.0
      %3987 = vmatpush1.msra.mxu0 %v3963
      %3988 = vmatprep.subr.mxu0 0.0
      %3989 = vmatpush1.msra.mxu0 %v3964
      %3990 = vmatprep.subr.mxu0 0.0
      %3991 = vmatpush1.msra.mxu0 %v3965
      %3992 = vmatprep.subr.mxu0 0.0
      %3993 = vmatpush1.msra.mxu0 %v3966
      %3994 = vmatprep.subr.mxu0 0.0
      %3995 = vmatpush1.msra.mxu0 %v3967
      %3996 = vmatprep.subr.mxu0 0.0
      %3997 = vmatpush1.msra.mxu0 %v3968
      %3998 = vmatprep.subr.mxu0 0.0
      %3999 = vmatpush1.msra.mxu0 %v3969
      %4000 = vmatprep.subr.mxu0 0.0
      %4001 = vmatpush1.msra.mxu0 %v3970
      %4002 = vmatprep.subr.mxu0 0.0
      %4003 = vmatpush1.msra.mxu0 %v3971
      %4004 = vmatprep.subr.mxu0 0.0
      %4005 = vmatpush1.msra.mxu0 %v3972
      %4006 = vmatprep.subr.mxu0 0.0
      %4007 = vmatpush1.msra.mxu0 %v3973
      %4008 = vmatprep.subr.mxu0 0.0
      %4009 = vmatpush1.msra.mxu0 %v3976
      %4010 = vmatprep.subr.mxu0 0.0
      %4011 = vmatpush1.msra.mxu0 0.0
      %4012 = vmatprep.subr.mxu0 0.0
      %4013 = vmatpush1.msra.mxu0 0.0
      %4014 = vmatprep.subr.mxu0 0.0
      %4015 = vmatpush1.msra.mxu0 0.0
      %4016 = vmatprep.subr.mxu0 0.0
      %4017 = vmatpush1.msra.mxu0 0.0
      %4018 = vmatprep.subr.mxu0 0.0
      %4019 = vmatpush1.msra.mxu0 0.0
      %4020 = vmatprep.subr.mxu0 0.0
      %4021 = vmatpush1.msra.mxu0 0.0
      %4022 = vmatprep.subr.mxu0 0.0
      %4023 = vmatpush1.msra.mxu0 0.0
      %4024 = vmatprep.subr.mxu0 0.0
      %4025 = vmatpush1.msra.mxu0 0.0
      %4026 = vmatprep.subr.mxu0 0.0
      %4027 = vmatpush1.msra.mxu0 0.0
      %4028 = vmatprep.subr.mxu0 0.0
      %4029 = vmatpush1.msra.mxu0 0.0
      %4030 = vmatprep.subr.mxu0 0.0
      %4031 = vmatpush1.msra.mxu0 0.0
      %4032 = vmatprep.subr.mxu0 0.0
      %4033 = vmatpush1.msra.mxu0 0.0
      %4034 = vmatprep.subr.mxu0 0.0
      %4035 = vmatpush1.msra.mxu0 0.0
      %4036 = vmatprep.subr.mxu0 0.0
      %4037 = vmatpush1.msra.mxu0 0.0
      %4038 = vmatprep.subr.mxu0 0.0
      %4039 = vmatpush1.msra.mxu0 0.0
      %4040 = vmatprep.subr.mxu0 0.0
      %4041 = vmatpush1.msra.mxu0 0.0
      %4042 = vmatprep.mubr.f32.mxu0 0.0
      %4043 = vmatmul.mubr.f32.gmra.mrb[0].mxu0 %v697
      %v4044 = vpop.f32.mrb[0].mxu0
      %v4045 = vadd.f32 0.0, %v4044
      %v4046 = vpop.f32.mrb[0].mxu0
      %4047 = vdwg.mxu0
      %v4048 = vmax.f32 %v3957, %v4045
      %s4049 = scalar_lea.vmem %s6, 4736
      %v4050 = vld [vmem:[%s4049] sm:$0xff]
      %v4051 = vld [vmem:[%s4049 + $0x8] sm:$0xff]
      %v4052 = vld [vmem:[%s4049 + $0x10] sm:$0xff]
      %v4053 = vld [vmem:[%s4049 + $0x18] sm:$0xff]
      %v4054 = vld [vmem:[%s4049 + $0x20] sm:$0xff]
      %v4055 = vld [vmem:[%s4049 + $0x28] sm:$0xff]
      %v4056 = vld [vmem:[%s4049 + $0x30] sm:$0xff]
      %v4057 = vld [vmem:[%s4049 + $0x38] sm:$0xff]
      %v4058 = vld [vmem:[%s4049 + $0x40] sm:$0xff]
      %v4059 = vld [vmem:[%s4049 + $0x48] sm:$0xff]
      %v4060 = vld [vmem:[%s4049 + $0x50] sm:$0xff]
      %v4061 = vld [vmem:[%s4049 + $0x58] sm:$0xff]
      %v4062 = vld [vmem:[%s4049 + $0x60] sm:$0xff]
      %v4063 = vld [vmem:[%s4049 + $0x68] sm:$0xff]
      %v4064 = vld [vmem:[%s4049 + $0x70] sm:$0xff]
      %v4065 = vld [vmem:[%s4049 + $0x78] sm:$0x1]
      %v4067 = vsel %vm699, %v4065, 0
      %4069 = vmatprep.subr.mxu0 0.0
      %4070 = vmatpush1.msra.mxu0 %v4050
      %4071 = vmatprep.subr.mxu0 0.0
      %4072 = vmatpush1.msra.mxu0 %v4051
      %4073 = vmatprep.subr.mxu0 0.0
      %4074 = vmatpush1.msra.mxu0 %v4052
      %4075 = vmatprep.subr.mxu0 0.0
      %4076 = vmatpush1.msra.mxu0 %v4053
      %4077 = vmatprep.subr.mxu0 0.0
      %4078 = vmatpush1.msra.mxu0 %v4054
      %4079 = vmatprep.subr.mxu0 0.0
      %4080 = vmatpush1.msra.mxu0 %v4055
      %4081 = vmatprep.subr.mxu0 0.0
      %4082 = vmatpush1.msra.mxu0 %v4056
      %4083 = vmatprep.subr.mxu0 0.0
      %4084 = vmatpush1.msra.mxu0 %v4057
      %4085 = vmatprep.subr.mxu0 0.0
      %4086 = vmatpush1.msra.mxu0 %v4058
      %4087 = vmatprep.subr.mxu0 0.0
      %4088 = vmatpush1.msra.mxu0 %v4059
      %4089 = vmatprep.subr.mxu0 0.0
      %4090 = vmatpush1.msra.mxu0 %v4060
      %4091 = vmatprep.subr.mxu0 0.0
      %4092 = vmatpush1.msra.mxu0 %v4061
      %4093 = vmatprep.subr.mxu0 0.0
      %4094 = vmatpush1.msra.mxu0 %v4062
      %4095 = vmatprep.subr.mxu0 0.0
      %4096 = vmatpush1.msra.mxu0 %v4063
      %4097 = vmatprep.subr.mxu0 0.0
      %4098 = vmatpush1.msra.mxu0 %v4064
      %4099 = vmatprep.subr.mxu0 0.0
      %4100 = vmatpush1.msra.mxu0 %v4067
      %4101 = vmatprep.subr.mxu0 0.0
      %4102 = vmatpush1.msra.mxu0 0.0
      %4103 = vmatprep.subr.mxu0 0.0
      %4104 = vmatpush1.msra.mxu0 0.0
      %4105 = vmatprep.subr.mxu0 0.0
      %4106 = vmatpush1.msra.mxu0 0.0
      %4107 = vmatprep.subr.mxu0 0.0
      %4108 = vmatpush1.msra.mxu0 0.0
      %4109 = vmatprep.subr.mxu0 0.0
      %4110 = vmatpush1.msra.mxu0 0.0
      %4111 = vmatprep.subr.mxu0 0.0
      %4112 = vmatpush1.msra.mxu0 0.0
      %4113 = vmatprep.subr.mxu0 0.0
      %4114 = vmatpush1.msra.mxu0 0.0
      %4115 = vmatprep.subr.mxu0 0.0
      %4116 = vmatpush1.msra.mxu0 0.0
      %4117 = vmatprep.subr.mxu0 0.0
      %4118 = vmatpush1.msra.mxu0 0.0
      %4119 = vmatprep.subr.mxu0 0.0
      %4120 = vmatpush1.msra.mxu0 0.0
      %4121 = vmatprep.subr.mxu0 0.0
      %4122 = vmatpush1.msra.mxu0 0.0
      %4123 = vmatprep.subr.mxu0 0.0
      %4124 = vmatpush1.msra.mxu0 0.0
      %4125 = vmatprep.subr.mxu0 0.0
      %4126 = vmatpush1.msra.mxu0 0.0
      %4127 = vmatprep.subr.mxu0 0.0
      %4128 = vmatpush1.msra.mxu0 0.0
      %4129 = vmatprep.subr.mxu0 0.0
      %4130 = vmatpush1.msra.mxu0 0.0
      %4131 = vmatprep.subr.mxu0 0.0
      %4132 = vmatpush1.msra.mxu0 0.0
      %4133 = vmatprep.mubr.f32.mxu0 0.0
      %4134 = vmatmul.mubr.f32.gmra.mrb[0].mxu0 %v697
      %v4135 = vpop.f32.mrb[0].mxu0
      %v4136 = vadd.f32 0.0, %v4135
      %v4137 = vpop.f32.mrb[0].mxu0
      %4138 = vdwg.mxu0
      %v4139 = vmax.f32 %v4048, %v4136
      %s4140 = scalar_lea.vmem %s6, 4864
      %v4141 = vld [vmem:[%s4140] sm:$0xff]
      %v4142 = vld [vmem:[%s4140 + $0x8] sm:$0xff]
      %v4143 = vld [vmem:[%s4140 + $0x10] sm:$0xff]
      %v4144 = vld [vmem:[%s4140 + $0x18] sm:$0xff]
      %v4145 = vld [vmem:[%s4140 + $0x20] sm:$0xff]
      %v4146 = vld [vmem:[%s4140 + $0x28] sm:$0xff]
      %v4147 = vld [vmem:[%s4140 + $0x30] sm:$0xff]
      %v4148 = vld [vmem:[%s4140 + $0x38] sm:$0xff]
      %v4149 = vld [vmem:[%s4140 + $0x40] sm:$0xff]
      %v4150 = vld [vmem:[%s4140 + $0x48] sm:$0xff]
      %v4151 = vld [vmem:[%s4140 + $0x50] sm:$0xff]
      %v4152 = vld [vmem:[%s4140 + $0x58] sm:$0xff]
      %v4153 = vld [vmem:[%s4140 + $0x60] sm:$0xff]
      %v4154 = vld [vmem:[%s4140 + $0x68] sm:$0xff]
      %v4155 = vld [vmem:[%s4140 + $0x70] sm:$0xff]
      %v4156 = vld [vmem:[%s4140 + $0x78] sm:$0x1]
      %v4158 = vsel %vm699, %v4156, 0
      %4160 = vmatprep.subr.mxu0 0.0
      %4161 = vmatpush1.msra.mxu0 %v4141
      %4162 = vmatprep.subr.mxu0 0.0
      %4163 = vmatpush1.msra.mxu0 %v4142
      %4164 = vmatprep.subr.mxu0 0.0
      %4165 = vmatpush1.msra.mxu0 %v4143
      %4166 = vmatprep.subr.mxu0 0.0
      %4167 = vmatpush1.msra.mxu0 %v4144
      %4168 = vmatprep.subr.mxu0 0.0
      %4169 = vmatpush1.msra.mxu0 %v4145
      %4170 = vmatprep.subr.mxu0 0.0
      %4171 = vmatpush1.msra.mxu0 %v4146
      %4172 = vmatprep.subr.mxu0 0.0
      %4173 = vmatpush1.msra.mxu0 %v4147
      %4174 = vmatprep.subr.mxu0 0.0
      %4175 = vmatpush1.msra.mxu0 %v4148
      %4176 = vmatprep.subr.mxu0 0.0
      %4177 = vmatpush1.msra.mxu0 %v4149
      %4178 = vmatprep.subr.mxu0 0.0
      %4179 = vmatpush1.msra.mxu0 %v4150
      %4180 = vmatprep.subr.mxu0 0.0
      %4181 = vmatpush1.msra.mxu0 %v4151
      %4182 = vmatprep.subr.mxu0 0.0
      %4183 = vmatpush1.msra.mxu0 %v4152
      %4184 = vmatprep.subr.mxu0 0.0
      %4185 = vmatpush1.msra.mxu0 %v4153
      %4186 = vmatprep.subr.mxu0 0.0
      %4187 = vmatpush1.msra.mxu0 %v4154
      %4188 = vmatprep.subr.mxu0 0.0
      %4189 = vmatpush1.msra.mxu0 %v4155
      %4190 = vmatprep.subr.mxu0 0.0
      %4191 = vmatpush1.msra.mxu0 %v4158
      %4192 = vmatprep.subr.mxu0 0.0
      %4193 = vmatpush1.msra.mxu0 0.0
      %4194 = vmatprep.subr.mxu0 0.0
      %4195 = vmatpush1.msra.mxu0 0.0
      %4196 = vmatprep.subr.mxu0 0.0
      %4197 = vmatpush1.msra.mxu0 0.0
      %4198 = vmatprep.subr.mxu0 0.0
      %4199 = vmatpush1.msra.mxu0 0.0
      %4200 = vmatprep.subr.mxu0 0.0
      %4201 = vmatpush1.msra.mxu0 0.0
      %4202 = vmatprep.subr.mxu0 0.0
      %4203 = vmatpush1.msra.mxu0 0.0
      %4204 = vmatprep.subr.mxu0 0.0
      %4205 = vmatpush1.msra.mxu0 0.0
      %4206 = vmatprep.subr.mxu0 0.0
      %4207 = vmatpush1.msra.mxu0 0.0
      %4208 = vmatprep.subr.mxu0 0.0
      %4209 = vmatpush1.msra.mxu0 0.0
      %4210 = vmatprep.subr.mxu0 0.0
      %4211 = vmatpush1.msra.mxu0 0.0
      %4212 = vmatprep.subr.mxu0 0.0
      %4213 = vmatpush1.msra.mxu0 0.0
      %4214 = vmatprep.subr.mxu0 0.0
      %4215 = vmatpush1.msra.mxu0 0.0
      %4216 = vmatprep.subr.mxu0 0.0
      %4217 = vmatpush1.msra.mxu0 0.0
      %4218 = vmatprep.subr.mxu0 0.0
      %4219 = vmatpush1.msra.mxu0 0.0
      %4220 = vmatprep.subr.mxu0 0.0
      %4221 = vmatpush1.msra.mxu0 0.0
      %4222 = vmatprep.subr.mxu0 0.0
      %4223 = vmatpush1.msra.mxu0 0.0
      %4224 = vmatprep.mubr.f32.mxu0 0.0
      %4225 = vmatmul.mubr.f32.gmra.mrb[0].mxu0 %v697
      %v4226 = vpop.f32.mrb[0].mxu0
      %v4227 = vadd.f32 0.0, %v4226
      %v4228 = vpop.f32.mrb[0].mxu0
      %4229 = vdwg.mxu0
      %v4230 = vmax.f32 %v4139, %v4227
      %s4231 = scalar_lea.vmem %s6, 4992
      %v4232 = vld [vmem:[%s4231] sm:$0xff]
      %v4233 = vld [vmem:[%s4231 + $0x8] sm:$0xff]
      %v4234 = vld [vmem:[%s4231 + $0x10] sm:$0xff]
      %v4235 = vld [vmem:[%s4231 + $0x18] sm:$0xff]
      %v4236 = vld [vmem:[%s4231 + $0x20] sm:$0xff]
      %v4237 = vld [vmem:[%s4231 + $0x28] sm:$0xff]
      %v4238 = vld [vmem:[%s4231 + $0x30] sm:$0xff]
      %v4239 = vld [vmem:[%s4231 + $0x38] sm:$0xff]
      %v4240 = vld [vmem:[%s4231 + $0x40] sm:$0xff]
      %v4241 = vld [vmem:[%s4231 + $0x48] sm:$0xff]
      %v4242 = vld [vmem:[%s4231 + $0x50] sm:$0xff]
      %v4243 = vld [vmem:[%s4231 + $0x58] sm:$0xff]
      %v4244 = vld [vmem:[%s4231 + $0x60] sm:$0xff]
      %v4245 = vld [vmem:[%s4231 + $0x68] sm:$0xff]
      %v4246 = vld [vmem:[%s4231 + $0x70] sm:$0xff]
      %v4247 = vld [vmem:[%s4231 + $0x78] sm:$0x1]
      %v4249 = vsel %vm699, %v4247, 0
      %4251 = vmatprep.subr.mxu0 0.0
      %4252 = vmatpush1.msra.mxu0 %v4232
      %4253 = vmatprep.subr.mxu0 0.0
      %4254 = vmatpush1.msra.mxu0 %v4233
      %4255 = vmatprep.subr.mxu0 0.0
      %4256 = vmatpush1.msra.mxu0 %v4234
      %4257 = vmatprep.subr.mxu0 0.0
      %4258 = vmatpush1.msra.mxu0 %v4235
      %4259 = vmatprep.subr.mxu0 0.0
      %4260 = vmatpush1.msra.mxu0 %v4236
      %4261 = vmatprep.subr.mxu0 0.0
      %4262 = vmatpush1.msra.mxu0 %v4237
      %4263 = vmatprep.subr.mxu0 0.0
      %4264 = vmatpush1.msra.mxu0 %v4238
      %4265 = vmatprep.subr.mxu0 0.0
      %4266 = vmatpush1.msra.mxu0 %v4239
      %4267 = vmatprep.subr.mxu0 0.0
      %4268 = vmatpush1.msra.mxu0 %v4240
      %4269 = vmatprep.subr.mxu0 0.0
      %4270 = vmatpush1.msra.mxu0 %v4241
      %4271 = vmatprep.subr.mxu0 0.0
      %4272 = vmatpush1.msra.mxu0 %v4242
      %4273 = vmatprep.subr.mxu0 0.0
      %4274 = vmatpush1.msra.mxu0 %v4243
      %4275 = vmatprep.subr.mxu0 0.0
      %4276 = vmatpush1.msra.mxu0 %v4244
      %4277 = vmatprep.subr.mxu0 0.0
      %4278 = vmatpush1.msra.mxu0 %v4245
      %4279 = vmatprep.subr.mxu0 0.0
      %4280 = vmatpush1.msra.mxu0 %v4246
      %4281 = vmatprep.subr.mxu0 0.0
      %4282 = vmatpush1.msra.mxu0 %v4249
      %4283 = vmatprep.subr.mxu0 0.0
      %4284 = vmatpush1.msra.mxu0 0.0
      %4285 = vmatprep.subr.mxu0 0.0
      %4286 = vmatpush1.msra.mxu0 0.0
      %4287 = vmatprep.subr.mxu0 0.0
      %4288 = vmatpush1.msra.mxu0 0.0
      %4289 = vmatprep.subr.mxu0 0.0
      %4290 = vmatpush1.msra.mxu0 0.0
      %4291 = vmatprep.subr.mxu0 0.0
      %4292 = vmatpush1.msra.mxu0 0.0
      %4293 = vmatprep.subr.mxu0 0.0
      %4294 = vmatpush1.msra.mxu0 0.0
      %4295 = vmatprep.subr.mxu0 0.0
      %4296 = vmatpush1.msra.mxu0 0.0
      %4297 = vmatprep.subr.mxu0 0.0
      %4298 = vmatpush1.msra.mxu0 0.0
      %4299 = vmatprep.subr.mxu0 0.0
      %4300 = vmatpush1.msra.mxu0 0.0
      %4301 = vmatprep.subr.mxu0 0.0
      %4302 = vmatpush1.msra.mxu0 0.0
      %4303 = vmatprep.subr.mxu0 0.0
      %4304 = vmatpush1.msra.mxu0 0.0
      %4305 = vmatprep.subr.mxu0 0.0
      %4306 = vmatpush1.msra.mxu0 0.0
      %4307 = vmatprep.subr.mxu0 0.0
      %4308 = vmatpush1.msra.mxu0 0.0
      %4309 = vmatprep.subr.mxu0 0.0
      %4310 = vmatpush1.msra.mxu0 0.0
      %4311 = vmatprep.subr.mxu0 0.0
      %4312 = vmatpush1.msra.mxu0 0.0
      %4313 = vmatprep.subr.mxu0 0.0
      %4314 = vmatpush1.msra.mxu0 0.0
      %4315 = vmatprep.mubr.f32.mxu0 0.0
      %4316 = vmatmul.mubr.f32.gmra.mrb[0].mxu0 %v697
      %v4317 = vpop.f32.mrb[0].mxu0
      %v4318 = vadd.f32 0.0, %v4317
      %v4319 = vpop.f32.mrb[0].mxu0
      %4320 = vdwg.mxu0
      %v4321 = vmax.f32 %v4230, %v4318
      %s4322 = scalar_lea.vmem %s6, 5120
      %v4323 = vld [vmem:[%s4322] sm:$0xff]
      %v4324 = vld [vmem:[%s4322 + $0x8] sm:$0xff]
      %v4325 = vld [vmem:[%s4322 + $0x10] sm:$0xff]
      %v4326 = vld [vmem:[%s4322 + $0x18] sm:$0xff]
      %v4327 = vld [vmem:[%s4322 + $0x20] sm:$0xff]
      %v4328 = vld [vmem:[%s4322 + $0x28] sm:$0xff]
      %v4329 = vld [vmem:[%s4322 + $0x30] sm:$0xff]
      %v4330 = vld [vmem:[%s4322 + $0x38] sm:$0xff]
      %v4331 = vld [vmem:[%s4322 + $0x40] sm:$0xff]
      %v4332 = vld [vmem:[%s4322 + $0x48] sm:$0xff]
      %v4333 = vld [vmem:[%s4322 + $0x50] sm:$0xff]
      %v4334 = vld [vmem:[%s4322 + $0x58] sm:$0xff]
      %v4335 = vld [vmem:[%s4322 + $0x60] sm:$0xff]
      %v4336 = vld [vmem:[%s4322 + $0x68] sm:$0xff]
      %v4337 = vld [vmem:[%s4322 + $0x70] sm:$0xff]
      %v4338 = vld [vmem:[%s4322 + $0x78] sm:$0x1]
      %v4340 = vsel %vm699, %v4338, 0
      %4342 = vmatprep.subr.mxu0 0.0
      %4343 = vmatpush1.msra.mxu0 %v4323
      %4344 = vmatprep.subr.mxu0 0.0
      %4345 = vmatpush1.msra.mxu0 %v4324
      %4346 = vmatprep.subr.mxu0 0.0
      %4347 = vmatpush1.msra.mxu0 %v4325
      %4348 = vmatprep.subr.mxu0 0.0
      %4349 = vmatpush1.msra.mxu0 %v4326
      %4350 = vmatprep.subr.mxu0 0.0
      %4351 = vmatpush1.msra.mxu0 %v4327
      %4352 = vmatprep.subr.mxu0 0.0
      %4353 = vmatpush1.msra.mxu0 %v4328
      %4354 = vmatprep.subr.mxu0 0.0
      %4355 = vmatpush1.msra.mxu0 %v4329
      %4356 = vmatprep.subr.mxu0 0.0
      %4357 = vmatpush1.msra.mxu0 %v4330
      %4358 = vmatprep.subr.mxu0 0.0
      %4359 = vmatpush1.msra.mxu0 %v4331
      %4360 = vmatprep.subr.mxu0 0.0
      %4361 = vmatpush1.msra.mxu0 %v4332
      %4362 = vmatprep.subr.mxu0 0.0
      %4363 = vmatpush1.msra.mxu0 %v4333
      %4364 = vmatprep.subr.mxu0 0.0
      %4365 = vmatpush1.msra.mxu0 %v4334
      %4366 = vmatprep.subr.mxu0 0.0
      %4367 = vmatpush1.msra.mxu0 %v4335
      %4368 = vmatprep.subr.mxu0 0.0
      %4369 = vmatpush1.msra.mxu0 %v4336
      %4370 = vmatprep.subr.mxu0 0.0
      %4371 = vmatpush1.msra.mxu0 %v4337
      %4372 = vmatprep.subr.mxu0 0.0
      %4373 = vmatpush1.msra.mxu0 %v4340
      %4374 = vmatprep.subr.mxu0 0.0
      %4375 = vmatpush1.msra.mxu0 0.0
      %4376 = vmatprep.subr.mxu0 0.0
      %4377 = vmatpush1.msra.mxu0 0.0
      %4378 = vmatprep.subr.mxu0 0.0
      %4379 = vmatpush1.msra.mxu0 0.0
      %4380 = vmatprep.subr.mxu0 0.0
      %4381 = vmatpush1.msra.mxu0 0.0
      %4382 = vmatprep.subr.mxu0 0.0
      %4383 = vmatpush1.msra.mxu0 0.0
      %4384 = vmatprep.subr.mxu0 0.0
      %4385 = vmatpush1.msra.mxu0 0.0
      %4386 = vmatprep.subr.mxu0 0.0
      %4387 = vmatpush1.msra.mxu0 0.0
      %4388 = vmatprep.subr.mxu0 0.0
      %4389 = vmatpush1.msra.mxu0 0.0
      %4390 = vmatprep.subr.mxu0 0.0
      %4391 = vmatpush1.msra.mxu0 0.0
      %4392 = vmatprep.subr.mxu0 0.0
      %4393 = vmatpush1.msra.mxu0 0.0
      %4394 = vmatprep.subr.mxu0 0.0
      %4395 = vmatpush1.msra.mxu0 0.0
      %4396 = vmatprep.subr.mxu0 0.0
      %4397 = vmatpush1.msra.mxu0 0.0
      %4398 = vmatprep.subr.mxu0 0.0
      %4399 = vmatpush1.msra.mxu0 0.0
      %4400 = vmatprep.subr.mxu0 0.0
      %4401 = vmatpush1.msra.mxu0 0.0
      %4402 = vmatprep.subr.mxu0 0.0
      %4403 = vmatpush1.msra.mxu0 0.0
      %4404 = vmatprep.subr.mxu0 0.0
      %4405 = vmatpush1.msra.mxu0 0.0
      %4406 = vmatprep.mubr.f32.mxu0 0.0
      %4407 = vmatmul.mubr.f32.gmra.mrb[0].mxu0 %v697
      %v4408 = vpop.f32.mrb[0].mxu0
      %v4409 = vadd.f32 0.0, %v4408
      %v4410 = vpop.f32.mrb[0].mxu0
      %4411 = vdwg.mxu0
      %v4412 = vmax.f32 %v4321, %v4409
      %s4413 = scalar_lea.vmem %s6, 5248
      %v4414 = vld [vmem:[%s4413] sm:$0xff]
      %v4415 = vld [vmem:[%s4413 + $0x8] sm:$0xff]
      %v4416 = vld [vmem:[%s4413 + $0x10] sm:$0xff]
      %v4417 = vld [vmem:[%s4413 + $0x18] sm:$0xff]
      %v4418 = vld [vmem:[%s4413 + $0x20] sm:$0xff]
      %v4419 = vld [vmem:[%s4413 + $0x28] sm:$0xff]
      %v4420 = vld [vmem:[%s4413 + $0x30] sm:$0xff]
      %v4421 = vld [vmem:[%s4413 + $0x38] sm:$0xff]
      %v4422 = vld [vmem:[%s4413 + $0x40] sm:$0xff]
      %v4423 = vld [vmem:[%s4413 + $0x48] sm:$0xff]
      %v4424 = vld [vmem:[%s4413 + $0x50] sm:$0xff]
      %v4425 = vld [vmem:[%s4413 + $0x58] sm:$0xff]
      %v4426 = vld [vmem:[%s4413 + $0x60] sm:$0xff]
      %v4427 = vld [vmem:[%s4413 + $0x68] sm:$0xff]
      %v4428 = vld [vmem:[%s4413 + $0x70] sm:$0xff]
      %v4429 = vld [vmem:[%s4413 + $0x78] sm:$0x1]
      %v4431 = vsel %vm699, %v4429, 0
      %4433 = vmatprep.subr.mxu0 0.0
      %4434 = vmatpush1.msra.mxu0 %v4414
      %4435 = vmatprep.subr.mxu0 0.0
      %4436 = vmatpush1.msra.mxu0 %v4415
      %4437 = vmatprep.subr.mxu0 0.0
      %4438 = vmatpush1.msra.mxu0 %v4416
      %4439 = vmatprep.subr.mxu0 0.0
      %4440 = vmatpush1.msra.mxu0 %v4417
      %4441 = vmatprep.subr.mxu0 0.0
      %4442 = vmatpush1.msra.mxu0 %v4418
      %4443 = vmatprep.subr.mxu0 0.0
      %4444 = vmatpush1.msra.mxu0 %v4419
      %4445 = vmatprep.subr.mxu0 0.0
      %4446 = vmatpush1.msra.mxu0 %v4420
      %4447 = vmatprep.subr.mxu0 0.0
      %4448 = vmatpush1.msra.mxu0 %v4421
      %4449 = vmatprep.subr.mxu0 0.0
      %4450 = vmatpush1.msra.mxu0 %v4422
      %4451 = vmatprep.subr.mxu0 0.0
      %4452 = vmatpush1.msra.mxu0 %v4423
      %4453 = vmatprep.subr.mxu0 0.0
      %4454 = vmatpush1.msra.mxu0 %v4424
      %4455 = vmatprep.subr.mxu0 0.0
      %4456 = vmatpush1.msra.mxu0 %v4425
      %4457 = vmatprep.subr.mxu0 0.0
      %4458 = vmatpush1.msra.mxu0 %v4426
      %4459 = vmatprep.subr.mxu0 0.0
      %4460 = vmatpush1.msra.mxu0 %v4427
      %4461 = vmatprep.subr.mxu0 0.0
      %4462 = vmatpush1.msra.mxu0 %v4428
      %4463 = vmatprep.subr.mxu0 0.0
      %4464 = vmatpush1.msra.mxu0 %v4431
      %4465 = vmatprep.subr.mxu0 0.0
      %4466 = vmatpush1.msra.mxu0 0.0
      %4467 = vmatprep.subr.mxu0 0.0
      %4468 = vmatpush1.msra.mxu0 0.0
      %4469 = vmatprep.subr.mxu0 0.0
      %4470 = vmatpush1.msra.mxu0 0.0
      %4471 = vmatprep.subr.mxu0 0.0
      %4472 = vmatpush1.msra.mxu0 0.0
      %4473 = vmatprep.subr.mxu0 0.0
      %4474 = vmatpush1.msra.mxu0 0.0
      %4475 = vmatprep.subr.mxu0 0.0
      %4476 = vmatpush1.msra.mxu0 0.0
      %4477 = vmatprep.subr.mxu0 0.0
      %4478 = vmatpush1.msra.mxu0 0.0
      %4479 = vmatprep.subr.mxu0 0.0
      %4480 = vmatpush1.msra.mxu0 0.0
      %4481 = vmatprep.subr.mxu0 0.0
      %4482 = vmatpush1.msra.mxu0 0.0
      %4483 = vmatprep.subr.mxu0 0.0
      %4484 = vmatpush1.msra.mxu0 0.0
      %4485 = vmatprep.subr.mxu0 0.0
      %4486 = vmatpush1.msra.mxu0 0.0
      %4487 = vmatprep.subr.mxu0 0.0
      %4488 = vmatpush1.msra.mxu0 0.0
      %4489 = vmatprep.subr.mxu0 0.0
      %4490 = vmatpush1.msra.mxu0 0.0
      %4491 = vmatprep.subr.mxu0 0.0
      %4492 = vmatpush1.msra.mxu0 0.0
      %4493 = vmatprep.subr.mxu0 0.0
      %4494 = vmatpush1.msra.mxu0 0.0
      %4495 = vmatprep.subr.mxu0 0.0
      %4496 = vmatpush1.msra.mxu0 0.0
      %4497 = vmatprep.mubr.f32.mxu0 0.0
      %4498 = vmatmul.mubr.f32.gmra.mrb[0].mxu0 %v697
      %v4499 = vpop.f32.mrb[0].mxu0
      %v4500 = vadd.f32 0.0, %v4499
      %v4501 = vpop.f32.mrb[0].mxu0
      %4502 = vdwg.mxu0
      %v4503 = vmax.f32 %v4412, %v4500
      %s4504 = scalar_lea.vmem %s6, 5376
      %v4505 = vld [vmem:[%s4504] sm:$0xff]
      %v4506 = vld [vmem:[%s4504 + $0x8] sm:$0xff]
      %v4507 = vld [vmem:[%s4504 + $0x10] sm:$0xff]
      %v4508 = vld [vmem:[%s4504 + $0x18] sm:$0xff]
      %v4509 = vld [vmem:[%s4504 + $0x20] sm:$0xff]
      %v4510 = vld [vmem:[%s4504 + $0x28] sm:$0xff]
      %v4511 = vld [vmem:[%s4504 + $0x30] sm:$0xff]
      %v4512 = vld [vmem:[%s4504 + $0x38] sm:$0xff]
      %v4513 = vld [vmem:[%s4504 + $0x40] sm:$0xff]
      %v4514 = vld [vmem:[%s4504 + $0x48] sm:$0xff]
      %v4515 = vld [vmem:[%s4504 + $0x50] sm:$0xff]
      %v4516 = vld [vmem:[%s4504 + $0x58] sm:$0xff]
      %v4517 = vld [vmem:[%s4504 + $0x60] sm:$0xff]
      %v4518 = vld [vmem:[%s4504 + $0x68] sm:$0xff]
      %v4519 = vld [vmem:[%s4504 + $0x70] sm:$0xff]
      %v4520 = vld [vmem:[%s4504 + $0x78] sm:$0x1]
      %v4522 = vsel %vm699, %v4520, 0
      %4524 = vmatprep.subr.mxu0 0.0
      %4525 = vmatpush1.msra.mxu0 %v4505
      %4526 = vmatprep.subr.mxu0 0.0
      %4527 = vmatpush1.msra.mxu0 %v4506
      %4528 = vmatprep.subr.mxu0 0.0
      %4529 = vmatpush1.msra.mxu0 %v4507
      %4530 = vmatprep.subr.mxu0 0.0
      %4531 = vmatpush1.msra.mxu0 %v4508
      %4532 = vmatprep.subr.mxu0 0.0
      %4533 = vmatpush1.msra.mxu0 %v4509
      %4534 = vmatprep.subr.mxu0 0.0
      %4535 = vmatpush1.msra.mxu0 %v4510
      %4536 = vmatprep.subr.mxu0 0.0
      %4537 = vmatpush1.msra.mxu0 %v4511
      %4538 = vmatprep.subr.mxu0 0.0
      %4539 = vmatpush1.msra.mxu0 %v4512
      %4540 = vmatprep.subr.mxu0 0.0
      %4541 = vmatpush1.msra.mxu0 %v4513
      %4542 = vmatprep.subr.mxu0 0.0
      %4543 = vmatpush1.msra.mxu0 %v4514
      %4544 = vmatprep.subr.mxu0 0.0
      %4545 = vmatpush1.msra.mxu0 %v4515
      %4546 = vmatprep.subr.mxu0 0.0
      %4547 = vmatpush1.msra.mxu0 %v4516
      %4548 = vmatprep.subr.mxu0 0.0
      %4549 = vmatpush1.msra.mxu0 %v4517
      %4550 = vmatprep.subr.mxu0 0.0
      %4551 = vmatpush1.msra.mxu0 %v4518
      %4552 = vmatprep.subr.mxu0 0.0
      %4553 = vmatpush1.msra.mxu0 %v4519
      %4554 = vmatprep.subr.mxu0 0.0
      %4555 = vmatpush1.msra.mxu0 %v4522
      %4556 = vmatprep.subr.mxu0 0.0
      %4557 = vmatpush1.msra.mxu0 0.0
      %4558 = vmatprep.subr.mxu0 0.0
      %4559 = vmatpush1.msra.mxu0 0.0
      %4560 = vmatprep.subr.mxu0 0.0
      %4561 = vmatpush1.msra.mxu0 0.0
      %4562 = vmatprep.subr.mxu0 0.0
      %4563 = vmatpush1.msra.mxu0 0.0
      %4564 = vmatprep.subr.mxu0 0.0
      %4565 = vmatpush1.msra.mxu0 0.0
      %4566 = vmatprep.subr.mxu0 0.0
      %4567 = vmatpush1.msra.mxu0 0.0
      %4568 = vmatprep.subr.mxu0 0.0
      %4569 = vmatpush1.msra.mxu0 0.0
      %4570 = vmatprep.subr.mxu0 0.0
      %4571 = vmatpush1.msra.mxu0 0.0
      %4572 = vmatprep.subr.mxu0 0.0
      %4573 = vmatpush1.msra.mxu0 0.0
      %4574 = vmatprep.subr.mxu0 0.0
      %4575 = vmatpush1.msra.mxu0 0.0
      %4576 = vmatprep.subr.mxu0 0.0
      %4577 = vmatpush1.msra.mxu0 0.0
      %4578 = vmatprep.subr.mxu0 0.0
      %4579 = vmatpush1.msra.mxu0 0.0
      %4580 = vmatprep.subr.mxu0 0.0
      %4581 = vmatpush1.msra.mxu0 0.0
      %4582 = vmatprep.subr.mxu0 0.0
      %4583 = vmatpush1.msra.mxu0 0.0
      %4584 = vmatprep.subr.mxu0 0.0
      %4585 = vmatpush1.msra.mxu0 0.0
      %4586 = vmatprep.subr.mxu0 0.0
      %4587 = vmatpush1.msra.mxu0 0.0
      %4588 = vmatprep.mubr.f32.mxu0 0.0
      %4589 = vmatmul.mubr.f32.gmra.mrb[0].mxu0 %v697
      %v4590 = vpop.f32.mrb[0].mxu0
      %v4591 = vadd.f32 0.0, %v4590
      %v4592 = vpop.f32.mrb[0].mxu0
      %4593 = vdwg.mxu0
      %v4594 = vmax.f32 %v4503, %v4591
      %s4595 = scalar_lea.vmem %s6, 5504
      %v4596 = vld [vmem:[%s4595] sm:$0xff]
      %v4597 = vld [vmem:[%s4595 + $0x8] sm:$0xff]
      %v4598 = vld [vmem:[%s4595 + $0x10] sm:$0xff]
      %v4599 = vld [vmem:[%s4595 + $0x18] sm:$0xff]
      %v4600 = vld [vmem:[%s4595 + $0x20] sm:$0xff]
      %v4601 = vld [vmem:[%s4595 + $0x28] sm:$0xff]
      %v4602 = vld [vmem:[%s4595 + $0x30] sm:$0xff]
      %v4603 = vld [vmem:[%s4595 + $0x38] sm:$0xff]
      %v4604 = vld [vmem:[%s4595 + $0x40] sm:$0xff]
      %v4605 = vld [vmem:[%s4595 + $0x48] sm:$0xff]
      %v4606 = vld [vmem:[%s4595 + $0x50] sm:$0xff]
      %v4607 = vld [vmem:[%s4595 + $0x58] sm:$0xff]
      %v4608 = vld [vmem:[%s4595 + $0x60] sm:$0xff]
      %v4609 = vld [vmem:[%s4595 + $0x68] sm:$0xff]
      %v4610 = vld [vmem:[%s4595 + $0x70] sm:$0xff]
      %v4611 = vld [vmem:[%s4595 + $0x78] sm:$0x1]
      %v4613 = vsel %vm699, %v4611, 0
      %4615 = vmatprep.subr.mxu0 0.0
      %4616 = vmatpush1.msra.mxu0 %v4596
      %4617 = vmatprep.subr.mxu0 0.0
      %4618 = vmatpush1.msra.mxu0 %v4597
      %4619 = vmatprep.subr.mxu0 0.0
      %4620 = vmatpush1.msra.mxu0 %v4598
      %4621 = vmatprep.subr.mxu0 0.0
      %4622 = vmatpush1.msra.mxu0 %v4599
      %4623 = vmatprep.subr.mxu0 0.0
      %4624 = vmatpush1.msra.mxu0 %v4600
      %4625 = vmatprep.subr.mxu0 0.0
      %4626 = vmatpush1.msra.mxu0 %v4601
      %4627 = vmatprep.subr.mxu0 0.0
      %4628 = vmatpush1.msra.mxu0 %v4602
      %4629 = vmatprep.subr.mxu0 0.0
      %4630 = vmatpush1.msra.mxu0 %v4603
      %4631 = vmatprep.subr.mxu0 0.0
      %4632 = vmatpush1.msra.mxu0 %v4604
      %4633 = vmatprep.subr.mxu0 0.0
      %4634 = vmatpush1.msra.mxu0 %v4605
      %4635 = vmatprep.subr.mxu0 0.0
      %4636 = vmatpush1.msra.mxu0 %v4606
      %4637 = vmatprep.subr.mxu0 0.0
      %4638 = vmatpush1.msra.mxu0 %v4607
      %4639 = vmatprep.subr.mxu0 0.0
      %4640 = vmatpush1.msra.mxu0 %v4608
      %4641 = vmatprep.subr.mxu0 0.0
      %4642 = vmatpush1.msra.mxu0 %v4609
      %4643 = vmatprep.subr.mxu0 0.0
      %4644 = vmatpush1.msra.mxu0 %v4610
      %4645 = vmatprep.subr.mxu0 0.0
      %4646 = vmatpush1.msra.mxu0 %v4613
      %4647 = vmatprep.subr.mxu0 0.0
      %4648 = vmatpush1.msra.mxu0 0.0
      %4649 = vmatprep.subr.mxu0 0.0
      %4650 = vmatpush1.msra.mxu0 0.0
      %4651 = vmatprep.subr.mxu0 0.0
      %4652 = vmatpush1.msra.mxu0 0.0
      %4653 = vmatprep.subr.mxu0 0.0
      %4654 = vmatpush1.msra.mxu0 0.0
      %4655 = vmatprep.subr.mxu0 0.0
      %4656 = vmatpush1.msra.mxu0 0.0
      %4657 = vmatprep.subr.mxu0 0.0
      %4658 = vmatpush1.msra.mxu0 0.0
      %4659 = vmatprep.subr.mxu0 0.0
      %4660 = vmatpush1.msra.mxu0 0.0
      %4661 = vmatprep.subr.mxu0 0.0
      %4662 = vmatpush1.msra.mxu0 0.0
      %4663 = vmatprep.subr.mxu0 0.0
      %4664 = vmatpush1.msra.mxu0 0.0
      %4665 = vmatprep.subr.mxu0 0.0
      %4666 = vmatpush1.msra.mxu0 0.0
      %4667 = vmatprep.subr.mxu0 0.0
      %4668 = vmatpush1.msra.mxu0 0.0
      %4669 = vmatprep.subr.mxu0 0.0
      %4670 = vmatpush1.msra.mxu0 0.0
      %4671 = vmatprep.subr.mxu0 0.0
      %4672 = vmatpush1.msra.mxu0 0.0
      %4673 = vmatprep.subr.mxu0 0.0
      %4674 = vmatpush1.msra.mxu0 0.0
      %4675 = vmatprep.subr.mxu0 0.0
      %4676 = vmatpush1.msra.mxu0 0.0
      %4677 = vmatprep.subr.mxu0 0.0
      %4678 = vmatpush1.msra.mxu0 0.0
      %4679 = vmatprep.mubr.f32.mxu0 0.0
      %4680 = vmatmul.mubr.f32.gmra.mrb[0].mxu0 %v697
      %v4681 = vpop.f32.mrb[0].mxu0
      %v4682 = vadd.f32 0.0, %v4681
      %v4683 = vpop.f32.mrb[0].mxu0
      %4684 = vdwg.mxu0
      %v4685 = vmax.f32 %v4594, %v4682
      %s4686 = scalar_lea.vmem %s6, 5632
      %v4687 = vld [vmem:[%s4686] sm:$0xff]
      %v4688 = vld [vmem:[%s4686 + $0x8] sm:$0xff]
      %v4689 = vld [vmem:[%s4686 + $0x10] sm:$0xff]
      %v4690 = vld [vmem:[%s4686 + $0x18] sm:$0xff]
      %v4691 = vld [vmem:[%s4686 + $0x20] sm:$0xff]
      %v4692 = vld [vmem:[%s4686 + $0x28] sm:$0xff]
      %v4693 = vld [vmem:[%s4686 + $0x30] sm:$0xff]
      %v4694 = vld [vmem:[%s4686 + $0x38] sm:$0xff]
      %v4695 = vld [vmem:[%s4686 + $0x40] sm:$0xff]
      %v4696 = vld [vmem:[%s4686 + $0x48] sm:$0xff]
      %v4697 = vld [vmem:[%s4686 + $0x50] sm:$0xff]
      %v4698 = vld [vmem:[%s4686 + $0x58] sm:$0xff]
      %v4699 = vld [vmem:[%s4686 + $0x60] sm:$0xff]
      %v4700 = vld [vmem:[%s4686 + $0x68] sm:$0xff]
      %v4701 = vld [vmem:[%s4686 + $0x70] sm:$0xff]
      %v4702 = vld [vmem:[%s4686 + $0x78] sm:$0x1]
      %v4704 = vsel %vm699, %v4702, 0
      %4706 = vmatprep.subr.mxu0 0.0
      %4707 = vmatpush1.msra.mxu0 %v4687
      %4708 = vmatprep.subr.mxu0 0.0
      %4709 = vmatpush1.msra.mxu0 %v4688
      %4710 = vmatprep.subr.mxu0 0.0
      %4711 = vmatpush1.msra.mxu0 %v4689
      %4712 = vmatprep.subr.mxu0 0.0
      %4713 = vmatpush1.msra.mxu0 %v4690
      %4714 = vmatprep.subr.mxu0 0.0
      %4715 = vmatpush1.msra.mxu0 %v4691
      %4716 = vmatprep.subr.mxu0 0.0
      %4717 = vmatpush1.msra.mxu0 %v4692
      %4718 = vmatprep.subr.mxu0 0.0
      %4719 = vmatpush1.msra.mxu0 %v4693
      %4720 = vmatprep.subr.mxu0 0.0
      %4721 = vmatpush1.msra.mxu0 %v4694
      %4722 = vmatprep.subr.mxu0 0.0
      %4723 = vmatpush1.msra.mxu0 %v4695
      %4724 = vmatprep.subr.mxu0 0.0
      %4725 = vmatpush1.msra.mxu0 %v4696
      %4726 = vmatprep.subr.mxu0 0.0
      %4727 = vmatpush1.msra.mxu0 %v4697
      %4728 = vmatprep.subr.mxu0 0.0
      %4729 = vmatpush1.msra.mxu0 %v4698
      %4730 = vmatprep.subr.mxu0 0.0
      %4731 = vmatpush1.msra.mxu0 %v4699
      %4732 = vmatprep.subr.mxu0 0.0
      %4733 = vmatpush1.msra.mxu0 %v4700
      %4734 = vmatprep.subr.mxu0 0.0
      %4735 = vmatpush1.msra.mxu0 %v4701
      %4736 = vmatprep.subr.mxu0 0.0
      %4737 = vmatpush1.msra.mxu0 %v4704
      %4738 = vmatprep.subr.mxu0 0.0
      %4739 = vmatpush1.msra.mxu0 0.0
      %4740 = vmatprep.subr.mxu0 0.0
      %4741 = vmatpush1.msra.mxu0 0.0
      %4742 = vmatprep.subr.mxu0 0.0
      %4743 = vmatpush1.msra.mxu0 0.0
      %4744 = vmatprep.subr.mxu0 0.0
      %4745 = vmatpush1.msra.mxu0 0.0
      %4746 = vmatprep.subr.mxu0 0.0
      %4747 = vmatpush1.msra.mxu0 0.0
      %4748 = vmatprep.subr.mxu0 0.0
      %4749 = vmatpush1.msra.mxu0 0.0
      %4750 = vmatprep.subr.mxu0 0.0
      %4751 = vmatpush1.msra.mxu0 0.0
      %4752 = vmatprep.subr.mxu0 0.0
      %4753 = vmatpush1.msra.mxu0 0.0
      %4754 = vmatprep.subr.mxu0 0.0
      %4755 = vmatpush1.msra.mxu0 0.0
      %4756 = vmatprep.subr.mxu0 0.0
      %4757 = vmatpush1.msra.mxu0 0.0
      %4758 = vmatprep.subr.mxu0 0.0
      %4759 = vmatpush1.msra.mxu0 0.0
      %4760 = vmatprep.subr.mxu0 0.0
      %4761 = vmatpush1.msra.mxu0 0.0
      %4762 = vmatprep.subr.mxu0 0.0
      %4763 = vmatpush1.msra.mxu0 0.0
      %4764 = vmatprep.subr.mxu0 0.0
      %4765 = vmatpush1.msra.mxu0 0.0
      %4766 = vmatprep.subr.mxu0 0.0
      %4767 = vmatpush1.msra.mxu0 0.0
      %4768 = vmatprep.subr.mxu0 0.0
      %4769 = vmatpush1.msra.mxu0 0.0
      %4770 = vmatprep.mubr.f32.mxu0 0.0
      %4771 = vmatmul.mubr.f32.gmra.mrb[0].mxu0 %v697
      %v4772 = vpop.f32.mrb[0].mxu0
      %v4773 = vadd.f32 0.0, %v4772
      %v4774 = vpop.f32.mrb[0].mxu0
      %4775 = vdwg.mxu0
      %v4776 = vmax.f32 %v4685, %v4773
      %s4777 = scalar_lea.vmem %s6, 5760
      %v4778 = vld [vmem:[%s4777] sm:$0xff]
      %v4779 = vld [vmem:[%s4777 + $0x8] sm:$0xff]
      %v4780 = vld [vmem:[%s4777 + $0x10] sm:$0xff]
      %v4781 = vld [vmem:[%s4777 + $0x18] sm:$0xff]
      %v4782 = vld [vmem:[%s4777 + $0x20] sm:$0xff]
      %v4783 = vld [vmem:[%s4777 + $0x28] sm:$0xff]
      %v4784 = vld [vmem:[%s4777 + $0x30] sm:$0xff]
      %v4785 = vld [vmem:[%s4777 + $0x38] sm:$0xff]
      %v4786 = vld [vmem:[%s4777 + $0x40] sm:$0xff]
      %v4787 = vld [vmem:[%s4777 + $0x48] sm:$0xff]
      %v4788 = vld [vmem:[%s4777 + $0x50] sm:$0xff]
      %v4789 = vld [vmem:[%s4777 + $0x58] sm:$0xff]
      %v4790 = vld [vmem:[%s4777 + $0x60] sm:$0xff]
      %v4791 = vld [vmem:[%s4777 + $0x68] sm:$0xff]
      %v4792 = vld [vmem:[%s4777 + $0x70] sm:$0xff]
      %v4793 = vld [vmem:[%s4777 + $0x78] sm:$0x1]
      %v4795 = vsel %vm699, %v4793, 0
      %4797 = vmatprep.subr.mxu0 0.0
      %4798 = vmatpush1.msra.mxu0 %v4778
      %4799 = vmatprep.subr.mxu0 0.0
      %4800 = vmatpush1.msra.mxu0 %v4779
      %4801 = vmatprep.subr.mxu0 0.0
      %4802 = vmatpush1.msra.mxu0 %v4780
      %4803 = vmatprep.subr.mxu0 0.0
      %4804 = vmatpush1.msra.mxu0 %v4781
      %4805 = vmatprep.subr.mxu0 0.0
      %4806 = vmatpush1.msra.mxu0 %v4782
      %4807 = vmatprep.subr.mxu0 0.0
      %4808 = vmatpush1.msra.mxu0 %v4783
      %4809 = vmatprep.subr.mxu0 0.0
      %4810 = vmatpush1.msra.mxu0 %v4784
      %4811 = vmatprep.subr.mxu0 0.0
      %4812 = vmatpush1.msra.mxu0 %v4785
      %4813 = vmatprep.subr.mxu0 0.0
      %4814 = vmatpush1.msra.mxu0 %v4786
      %4815 = vmatprep.subr.mxu0 0.0
      %4816 = vmatpush1.msra.mxu0 %v4787
      %4817 = vmatprep.subr.mxu0 0.0
      %4818 = vmatpush1.msra.mxu0 %v4788
      %4819 = vmatprep.subr.mxu0 0.0
      %4820 = vmatpush1.msra.mxu0 %v4789
      %4821 = vmatprep.subr.mxu0 0.0
      %4822 = vmatpush1.msra.mxu0 %v4790
      %4823 = vmatprep.subr.mxu0 0.0
      %4824 = vmatpush1.msra.mxu0 %v4791
      %4825 = vmatprep.subr.mxu0 0.0
      %4826 = vmatpush1.msra.mxu0 %v4792
      %4827 = vmatprep.subr.mxu0 0.0
      %4828 = vmatpush1.msra.mxu0 %v4795
      %4829 = vmatprep.subr.mxu0 0.0
      %4830 = vmatpush1.msra.mxu0 0.0
      %4831 = vmatprep.subr.mxu0 0.0
      %4832 = vmatpush1.msra.mxu0 0.0
      %4833 = vmatprep.subr.mxu0 0.0
      %4834 = vmatpush1.msra.mxu0 0.0
      %4835 = vmatprep.subr.mxu0 0.0
      %4836 = vmatpush1.msra.mxu0 0.0
      %4837 = vmatprep.subr.mxu0 0.0
      %4838 = vmatpush1.msra.mxu0 0.0
      %4839 = vmatprep.subr.mxu0 0.0
      %4840 = vmatpush1.msra.mxu0 0.0
      %4841 = vmatprep.subr.mxu0 0.0
      %4842 = vmatpush1.msra.mxu0 0.0
      %4843 = vmatprep.subr.mxu0 0.0
      %4844 = vmatpush1.msra.mxu0 0.0
      %4845 = vmatprep.subr.mxu0 0.0
      %4846 = vmatpush1.msra.mxu0 0.0
      %4847 = vmatprep.subr.mxu0 0.0
      %4848 = vmatpush1.msra.mxu0 0.0
      %4849 = vmatprep.subr.mxu0 0.0
      %4850 = vmatpush1.msra.mxu0 0.0
      %4851 = vmatprep.subr.mxu0 0.0
      %4852 = vmatpush1.msra.mxu0 0.0
      %4853 = vmatprep.subr.mxu0 0.0
      %4854 = vmatpush1.msra.mxu0 0.0
      %4855 = vmatprep.subr.mxu0 0.0
      %4856 = vmatpush1.msra.mxu0 0.0
      %4857 = vmatprep.subr.mxu0 0.0
      %4858 = vmatpush1.msra.mxu0 0.0
      %4859 = vmatprep.subr.mxu0 0.0
      %4860 = vmatpush1.msra.mxu0 0.0
      %4861 = vmatprep.mubr.f32.mxu0 0.0
      %4862 = vmatmul.mubr.f32.gmra.mrb[0].mxu0 %v697
      %v4863 = vpop.f32.mrb[0].mxu0
      %v4864 = vadd.f32 0.0, %v4863
      %v4865 = vpop.f32.mrb[0].mxu0
      %4866 = vdwg.mxu0
      %v4867 = vmax.f32 %v4776, %v4864
      %s4868 = scalar_lea.vmem %s6, 5888
      %v4869 = vld [vmem:[%s4868] sm:$0xff]
      %v4870 = vld [vmem:[%s4868 + $0x8] sm:$0xff]
      %v4871 = vld [vmem:[%s4868 + $0x10] sm:$0xff]
      %v4872 = vld [vmem:[%s4868 + $0x18] sm:$0xff]
      %v4873 = vld [vmem:[%s4868 + $0x20] sm:$0xff]
      %v4874 = vld [vmem:[%s4868 + $0x28] sm:$0xff]
      %v4875 = vld [vmem:[%s4868 + $0x30] sm:$0xff]
      %v4876 = vld [vmem:[%s4868 + $0x38] sm:$0xff]
      %v4877 = vld [vmem:[%s4868 + $0x40] sm:$0xff]
      %v4878 = vld [vmem:[%s4868 + $0x48] sm:$0xff]
      %v4879 = vld [vmem:[%s4868 + $0x50] sm:$0xff]
      %v4880 = vld [vmem:[%s4868 + $0x58] sm:$0xff]
      %v4881 = vld [vmem:[%s4868 + $0x60] sm:$0xff]
      %v4882 = vld [vmem:[%s4868 + $0x68] sm:$0xff]
      %v4883 = vld [vmem:[%s4868 + $0x70] sm:$0xff]
      %v4884 = vld [vmem:[%s4868 + $0x78] sm:$0x1]
      %v4886 = vsel %vm699, %v4884, 0
      %4888 = vmatprep.subr.mxu0 0.0
      %4889 = vmatpush1.msra.mxu0 %v4869
      %4890 = vmatprep.subr.mxu0 0.0
      %4891 = vmatpush1.msra.mxu0 %v4870
      %4892 = vmatprep.subr.mxu0 0.0
      %4893 = vmatpush1.msra.mxu0 %v4871
      %4894 = vmatprep.subr.mxu0 0.0
      %4895 = vmatpush1.msra.mxu0 %v4872
      %4896 = vmatprep.subr.mxu0 0.0
      %4897 = vmatpush1.msra.mxu0 %v4873
      %4898 = vmatprep.subr.mxu0 0.0
      %4899 = vmatpush1.msra.mxu0 %v4874
      %4900 = vmatprep.subr.mxu0 0.0
      %4901 = vmatpush1.msra.mxu0 %v4875
      %4902 = vmatprep.subr.mxu0 0.0
      %4903 = vmatpush1.msra.mxu0 %v4876
      %4904 = vmatprep.subr.mxu0 0.0
      %4905 = vmatpush1.msra.mxu0 %v4877
      %4906 = vmatprep.subr.mxu0 0.0
      %4907 = vmatpush1.msra.mxu0 %v4878
      %4908 = vmatprep.subr.mxu0 0.0
      %4909 = vmatpush1.msra.mxu0 %v4879
      %4910 = vmatprep.subr.mxu0 0.0
      %4911 = vmatpush1.msra.mxu0 %v4880
      %4912 = vmatprep.subr.mxu0 0.0
      %4913 = vmatpush1.msra.mxu0 %v4881
      %4914 = vmatprep.subr.mxu0 0.0
      %4915 = vmatpush1.msra.mxu0 %v4882
      %4916 = vmatprep.subr.mxu0 0.0
      %4917 = vmatpush1.msra.mxu0 %v4883
      %4918 = vmatprep.subr.mxu0 0.0
      %4919 = vmatpush1.msra.mxu0 %v4886
      %4920 = vmatprep.subr.mxu0 0.0
      %4921 = vmatpush1.msra.mxu0 0.0
      %4922 = vmatprep.subr.mxu0 0.0
      %4923 = vmatpush1.msra.mxu0 0.0
      %4924 = vmatprep.subr.mxu0 0.0
      %4925 = vmatpush1.msra.mxu0 0.0
      %4926 = vmatprep.subr.mxu0 0.0
      %4927 = vmatpush1.msra.mxu0 0.0
      %4928 = vmatprep.subr.mxu0 0.0
      %4929 = vmatpush1.msra.mxu0 0.0
      %4930 = vmatprep.subr.mxu0 0.0
      %4931 = vmatpush1.msra.mxu0 0.0
      %4932 = vmatprep.subr.mxu0 0.0
      %4933 = vmatpush1.msra.mxu0 0.0
      %4934 = vmatprep.subr.mxu0 0.0
      %4935 = vmatpush1.msra.mxu0 0.0
      %4936 = vmatprep.subr.mxu0 0.0
      %4937 = vmatpush1.msra.mxu0 0.0
      %4938 = vmatprep.subr.mxu0 0.0
      %4939 = vmatpush1.msra.mxu0 0.0
      %4940 = vmatprep.subr.mxu0 0.0
      %4941 = vmatpush1.msra.mxu0 0.0
      %4942 = vmatprep.subr.mxu0 0.0
      %4943 = vmatpush1.msra.mxu0 0.0
      %4944 = vmatprep.subr.mxu0 0.0
      %4945 = vmatpush1.msra.mxu0 0.0
      %4946 = vmatprep.subr.mxu0 0.0
      %4947 = vmatpush1.msra.mxu0 0.0
      %4948 = vmatprep.subr.mxu0 0.0
      %4949 = vmatpush1.msra.mxu0 0.0
      %4950 = vmatprep.subr.mxu0 0.0
      %4951 = vmatpush1.msra.mxu0 0.0
      %4952 = vmatprep.mubr.f32.mxu0 0.0
      %4953 = vmatmul.mubr.f32.gmra.mrb[0].mxu0 %v697
      %v4954 = vpop.f32.mrb[0].mxu0
      %v4955 = vadd.f32 0.0, %v4954
      %v4956 = vpop.f32.mrb[0].mxu0
      %4957 = vdwg.mxu0
      %v4958 = vmax.f32 %v4867, %v4955
      %s4959 = scalar_lea.vmem %s6, 6016
      %v4960 = vld [vmem:[%s4959] sm:$0xff]
      %v4961 = vld [vmem:[%s4959 + $0x8] sm:$0xff]
      %v4962 = vld [vmem:[%s4959 + $0x10] sm:$0xff]
      %v4963 = vld [vmem:[%s4959 + $0x18] sm:$0xff]
      %v4964 = vld [vmem:[%s4959 + $0x20] sm:$0xff]
      %v4965 = vld [vmem:[%s4959 + $0x28] sm:$0xff]
      %v4966 = vld [vmem:[%s4959 + $0x30] sm:$0xff]
      %v4967 = vld [vmem:[%s4959 + $0x38] sm:$0xff]
      %v4968 = vld [vmem:[%s4959 + $0x40] sm:$0xff]
      %v4969 = vld [vmem:[%s4959 + $0x48] sm:$0xff]
      %v4970 = vld [vmem:[%s4959 + $0x50] sm:$0xff]
      %v4971 = vld [vmem:[%s4959 + $0x58] sm:$0xff]
      %v4972 = vld [vmem:[%s4959 + $0x60] sm:$0xff]
      %v4973 = vld [vmem:[%s4959 + $0x68] sm:$0xff]
      %v4974 = vld [vmem:[%s4959 + $0x70] sm:$0xff]
      %v4975 = vld [vmem:[%s4959 + $0x78] sm:$0x1]
      %v4977 = vsel %vm699, %v4975, 0
      %4979 = vmatprep.subr.mxu0 0.0
      %4980 = vmatpush1.msra.mxu0 %v4960
      %4981 = vmatprep.subr.mxu0 0.0
      %4982 = vmatpush1.msra.mxu0 %v4961
      %4983 = vmatprep.subr.mxu0 0.0
      %4984 = vmatpush1.msra.mxu0 %v4962
      %4985 = vmatprep.subr.mxu0 0.0
      %4986 = vmatpush1.msra.mxu0 %v4963
      %4987 = vmatprep.subr.mxu0 0.0
      %4988 = vmatpush1.msra.mxu0 %v4964
      %4989 = vmatprep.subr.mxu0 0.0
      %4990 = vmatpush1.msra.mxu0 %v4965
      %4991 = vmatprep.subr.mxu0 0.0
      %4992 = vmatpush1.msra.mxu0 %v4966
      %4993 = vmatprep.subr.mxu0 0.0
      %4994 = vmatpush1.msra.mxu0 %v4967
      %4995 = vmatprep.subr.mxu0 0.0
      %4996 = vmatpush1.msra.mxu0 %v4968
      %4997 = vmatprep.subr.mxu0 0.0
      %4998 = vmatpush1.msra.mxu0 %v4969
      %4999 = vmatprep.subr.mxu0 0.0
      %5000 = vmatpush1.msra.mxu0 %v4970
      %5001 = vmatprep.subr.mxu0 0.0
      %5002 = vmatpush1.msra.mxu0 %v4971
      %5003 = vmatprep.subr.mxu0 0.0
      %5004 = vmatpush1.msra.mxu0 %v4972
      %5005 = vmatprep.subr.mxu0 0.0
      %5006 = vmatpush1.msra.mxu0 %v4973
      %5007 = vmatprep.subr.mxu0 0.0
      %5008 = vmatpush1.msra.mxu0 %v4974
      %5009 = vmatprep.subr.mxu0 0.0
      %5010 = vmatpush1.msra.mxu0 %v4977
      %5011 = vmatprep.subr.mxu0 0.0
      %5012 = vmatpush1.msra.mxu0 0.0
      %5013 = vmatprep.subr.mxu0 0.0
      %5014 = vmatpush1.msra.mxu0 0.0
      %5015 = vmatprep.subr.mxu0 0.0
      %5016 = vmatpush1.msra.mxu0 0.0
      %5017 = vmatprep.subr.mxu0 0.0
      %5018 = vmatpush1.msra.mxu0 0.0
      %5019 = vmatprep.subr.mxu0 0.0
      %5020 = vmatpush1.msra.mxu0 0.0
      %5021 = vmatprep.subr.mxu0 0.0
      %5022 = vmatpush1.msra.mxu0 0.0
      %5023 = vmatprep.subr.mxu0 0.0
      %5024 = vmatpush1.msra.mxu0 0.0
      %5025 = vmatprep.subr.mxu0 0.0
      %5026 = vmatpush1.msra.mxu0 0.0
      %5027 = vmatprep.subr.mxu0 0.0
      %5028 = vmatpush1.msra.mxu0 0.0
      %5029 = vmatprep.subr.mxu0 0.0
      %5030 = vmatpush1.msra.mxu0 0.0
      %5031 = vmatprep.subr.mxu0 0.0
      %5032 = vmatpush1.msra.mxu0 0.0
      %5033 = vmatprep.subr.mxu0 0.0
      %5034 = vmatpush1.msra.mxu0 0.0
      %5035 = vmatprep.subr.mxu0 0.0
      %5036 = vmatpush1.msra.mxu0 0.0
      %5037 = vmatprep.subr.mxu0 0.0
      %5038 = vmatpush1.msra.mxu0 0.0
      %5039 = vmatprep.subr.mxu0 0.0
      %5040 = vmatpush1.msra.mxu0 0.0
      %5041 = vmatprep.subr.mxu0 0.0
      %5042 = vmatpush1.msra.mxu0 0.0
      %5043 = vmatprep.mubr.f32.mxu0 0.0
      %5044 = vmatmul.mubr.f32.gmra.mrb[0].mxu0 %v697
      %v5045 = vpop.f32.mrb[0].mxu0
      %v5046 = vadd.f32 0.0, %v5045
      %v5047 = vpop.f32.mrb[0].mxu0
      %5048 = vdwg.mxu0
      %v5049 = vmax.f32 %v4958, %v5046
      %s5050 = scalar_lea.vmem %s6, 6144
      %v5051 = vld [vmem:[%s5050] sm:$0xff]
      %v5052 = vld [vmem:[%s5050 + $0x8] sm:$0xff]
      %v5053 = vld [vmem:[%s5050 + $0x10] sm:$0xff]
      %v5054 = vld [vmem:[%s5050 + $0x18] sm:$0xff]
      %v5055 = vld [vmem:[%s5050 + $0x20] sm:$0xff]
      %v5056 = vld [vmem:[%s5050 + $0x28] sm:$0xff]
      %v5057 = vld [vmem:[%s5050 + $0x30] sm:$0xff]
      %v5058 = vld [vmem:[%s5050 + $0x38] sm:$0xff]
      %v5059 = vld [vmem:[%s5050 + $0x40] sm:$0xff]
      %v5060 = vld [vmem:[%s5050 + $0x48] sm:$0xff]
      %v5061 = vld [vmem:[%s5050 + $0x50] sm:$0xff]
      %v5062 = vld [vmem:[%s5050 + $0x58] sm:$0xff]
      %v5063 = vld [vmem:[%s5050 + $0x60] sm:$0xff]
      %v5064 = vld [vmem:[%s5050 + $0x68] sm:$0xff]
      %v5065 = vld [vmem:[%s5050 + $0x70] sm:$0xff]
      %v5066 = vld [vmem:[%s5050 + $0x78] sm:$0x1]
      %v5068 = vsel %vm699, %v5066, 0
      %5070 = vmatprep.subr.mxu0 0.0
      %5071 = vmatpush1.msra.mxu0 %v5051
      %5072 = vmatprep.subr.mxu0 0.0
      %5073 = vmatpush1.msra.mxu0 %v5052
      %5074 = vmatprep.subr.mxu0 0.0
      %5075 = vmatpush1.msra.mxu0 %v5053
      %5076 = vmatprep.subr.mxu0 0.0
      %5077 = vmatpush1.msra.mxu0 %v5054
      %5078 = vmatprep.subr.mxu0 0.0
      %5079 = vmatpush1.msra.mxu0 %v5055
      %5080 = vmatprep.subr.mxu0 0.0
      %5081 = vmatpush1.msra.mxu0 %v5056
      %5082 = vmatprep.subr.mxu0 0.0
      %5083 = vmatpush1.msra.mxu0 %v5057
      %5084 = vmatprep.subr.mxu0 0.0
      %5085 = vmatpush1.msra.mxu0 %v5058
      %5086 = vmatprep.subr.mxu0 0.0
      %5087 = vmatpush1.msra.mxu0 %v5059
      %5088 = vmatprep.subr.mxu0 0.0
      %5089 = vmatpush1.msra.mxu0 %v5060
      %5090 = vmatprep.subr.mxu0 0.0
      %5091 = vmatpush1.msra.mxu0 %v5061
      %5092 = vmatprep.subr.mxu0 0.0
      %5093 = vmatpush1.msra.mxu0 %v5062
      %5094 = vmatprep.subr.mxu0 0.0
      %5095 = vmatpush1.msra.mxu0 %v5063
      %5096 = vmatprep.subr.mxu0 0.0
      %5097 = vmatpush1.msra.mxu0 %v5064
      %5098 = vmatprep.subr.mxu0 0.0
      %5099 = vmatpush1.msra.mxu0 %v5065
      %5100 = vmatprep.subr.mxu0 0.0
      %5101 = vmatpush1.msra.mxu0 %v5068
      %5102 = vmatprep.subr.mxu0 0.0
      %5103 = vmatpush1.msra.mxu0 0.0
      %5104 = vmatprep.subr.mxu0 0.0
      %5105 = vmatpush1.msra.mxu0 0.0
      %5106 = vmatprep.subr.mxu0 0.0
      %5107 = vmatpush1.msra.mxu0 0.0
      %5108 = vmatprep.subr.mxu0 0.0
      %5109 = vmatpush1.msra.mxu0 0.0
      %5110 = vmatprep.subr.mxu0 0.0
      %5111 = vmatpush1.msra.mxu0 0.0
      %5112 = vmatprep.subr.mxu0 0.0
      %5113 = vmatpush1.msra.mxu0 0.0
      %5114 = vmatprep.subr.mxu0 0.0
      %5115 = vmatpush1.msra.mxu0 0.0
      %5116 = vmatprep.subr.mxu0 0.0
      %5117 = vmatpush1.msra.mxu0 0.0
      %5118 = vmatprep.subr.mxu0 0.0
      %5119 = vmatpush1.msra.mxu0 0.0
      %5120 = vmatprep.subr.mxu0 0.0
      %5121 = vmatpush1.msra.mxu0 0.0
      %5122 = vmatprep.subr.mxu0 0.0
      %5123 = vmatpush1.msra.mxu0 0.0
      %5124 = vmatprep.subr.mxu0 0.0
      %5125 = vmatpush1.msra.mxu0 0.0
      %5126 = vmatprep.subr.mxu0 0.0
      %5127 = vmatpush1.msra.mxu0 0.0
      %5128 = vmatprep.subr.mxu0 0.0
      %5129 = vmatpush1.msra.mxu0 0.0
      %5130 = vmatprep.subr.mxu0 0.0
      %5131 = vmatpush1.msra.mxu0 0.0
      %5132 = vmatprep.subr.mxu0 0.0
      %5133 = vmatpush1.msra.mxu0 0.0
      %5134 = vmatprep.mubr.f32.mxu0 0.0
      %5135 = vmatmul.mubr.f32.gmra.mrb[0].mxu0 %v697
      %v5136 = vpop.f32.mrb[0].mxu0
      %v5137 = vadd.f32 0.0, %v5136
      %v5138 = vpop.f32.mrb[0].mxu0
      %5139 = vdwg.mxu0
      %v5140 = vmax.f32 %v5049, %v5137
      %v5141 = vld [vmem:[%s9] sm:$0xf]
      %v5142 = vld [vmem:[%s7] sm:$0xf]
      %vm5143 = vcmask 31744
      %v5145 = vsel %vm5143, %v5140, 0
      %vm5147 = vcmask 1043456
      %v5149 = vsel %vm5147, %v5142, 0
      %5151 = vmatprep.subr.mxu0 0.0
      %5152 = vmatpush1.msra.mxu0 %v5149
      %5153 = vmatprep.subr.mxu0 0.0
      %5154 = vmatpush1.msra.mxu0 0.0
      %5155 = vmatprep.subr.mxu0 0.0
      %5156 = vmatpush1.msra.mxu0 0.0
      %5157 = vmatprep.subr.mxu0 0.0
      %5158 = vmatpush1.msra.mxu0 0.0
      %5159 = vmatprep.subr.mxu0 0.0
      %5160 = vmatpush1.msra.mxu0 0.0
      %5161 = vmatprep.subr.mxu0 0.0
      %5162 = vmatpush1.msra.mxu0 0.0
      %5163 = vmatprep.subr.mxu0 0.0
      %5164 = vmatpush1.msra.mxu0 0.0
      %5165 = vmatprep.subr.mxu0 0.0
      %5166 = vmatpush1.msra.mxu0 0.0
      %5167 = vmatprep.subr.mxu0 0.0
      %5168 = vmatpush1.msra.mxu0 0.0
      %5169 = vmatprep.subr.mxu0 0.0
      %5170 = vmatpush1.msra.mxu0 0.0
      %5171 = vmatprep.subr.mxu0 0.0
      %5172 = vmatpush1.msra.mxu0 0.0
      %5173 = vmatprep.subr.mxu0 0.0
      %5174 = vmatpush1.msra.mxu0 0.0
      %5175 = vmatprep.subr.mxu0 0.0
      %5176 = vmatpush1.msra.mxu0 0.0
      %5177 = vmatprep.subr.mxu0 0.0
      %5178 = vmatpush1.msra.mxu0 0.0
      %5179 = vmatprep.subr.mxu0 0.0
      %5180 = vmatpush1.msra.mxu0 0.0
      %5181 = vmatprep.subr.mxu0 0.0
      %5182 = vmatpush1.msra.mxu0 0.0
      %5183 = vmatprep.subr.mxu0 0.0
      %5184 = vmatpush1.msra.mxu0 0.0
      %5185 = vmatprep.subr.mxu0 0.0
      %5186 = vmatpush1.msra.mxu0 0.0
      %5187 = vmatprep.subr.mxu0 0.0
      %5188 = vmatpush1.msra.mxu0 0.0
      %5189 = vmatprep.subr.mxu0 0.0
      %5190 = vmatpush1.msra.mxu0 0.0
      %5191 = vmatprep.subr.mxu0 0.0
      %5192 = vmatpush1.msra.mxu0 0.0
      %5193 = vmatprep.subr.mxu0 0.0
      %5194 = vmatpush1.msra.mxu0 0.0
      %5195 = vmatprep.subr.mxu0 0.0
      %5196 = vmatpush1.msra.mxu0 0.0
      %5197 = vmatprep.subr.mxu0 0.0
      %5198 = vmatpush1.msra.mxu0 0.0
      %5199 = vmatprep.subr.mxu0 0.0
      %5200 = vmatpush1.msra.mxu0 0.0
      %5201 = vmatprep.subr.mxu0 0.0
      %5202 = vmatpush1.msra.mxu0 0.0
      %5203 = vmatprep.subr.mxu0 0.0
      %5204 = vmatpush1.msra.mxu0 0.0
      %5205 = vmatprep.subr.mxu0 0.0
      %5206 = vmatpush1.msra.mxu0 0.0
      %5207 = vmatprep.subr.mxu0 0.0
      %5208 = vmatpush1.msra.mxu0 0.0
      %5209 = vmatprep.subr.mxu0 0.0
      %5210 = vmatpush1.msra.mxu0 0.0
      %5211 = vmatprep.subr.mxu0 0.0
      %5212 = vmatpush1.msra.mxu0 0.0
      %5213 = vmatprep.subr.mxu0 0.0
      %5214 = vmatpush1.msra.mxu0 0.0
      %5215 = vmatprep.mubr.f32.mxu0 0.0
      %5216 = vmatmul.mubr.f32.gmra.mrb[0].mxu0 %v5145
      %v5217 = vpop.f32.mrb[0].mxu0
      %v5218 = vadd.f32 0.0, %v5217
      %v5219 = vpop.f32.mrb[0].mxu0
      %5220 = vdwg.mxu0
      %v5221 = vld [vmem:[%s8] sm:$0xf]
      %v5223 = vsel %vm5143, %v5221, 0
      %v5226 = vsel %vm5147, %v5218, 0
      %5228 = vmatprep.subr.mxu0 0.0
      %5229 = vmatpush1.msra.mxu0 %v5226
      %5230 = vmatprep.subr.mxu0 0.0
      %5231 = vmatpush1.msra.mxu0 0.0
      %5232 = vmatprep.subr.mxu0 0.0
      %5233 = vmatpush1.msra.mxu0 0.0
      %5234 = vmatprep.subr.mxu0 0.0
      %5235 = vmatpush1.msra.mxu0 0.0
      %5236 = vmatprep.subr.mxu0 0.0
      %5237 = vmatpush1.msra.mxu0 0.0
      %5238 = vmatprep.subr.mxu0 0.0
      %5239 = vmatpush1.msra.mxu0 0.0
      %5240 = vmatprep.subr.mxu0 0.0
      %5241 = vmatpush1.msra.mxu0 0.0
      %5242 = vmatprep.subr.mxu0 0.0
      %5243 = vmatpush1.msra.mxu0 0.0
      %5244 = vmatprep.subr.mxu0 0.0
      %5245 = vmatpush1.msra.mxu0 0.0
      %5246 = vmatprep.subr.mxu0 0.0
      %5247 = vmatpush1.msra.mxu0 0.0
      %5248 = vmatprep.subr.mxu0 0.0
      %5249 = vmatpush1.msra.mxu0 0.0
      %5250 = vmatprep.subr.mxu0 0.0
      %5251 = vmatpush1.msra.mxu0 0.0
      %5252 = vmatprep.subr.mxu0 0.0
      %5253 = vmatpush1.msra.mxu0 0.0
      %5254 = vmatprep.subr.mxu0 0.0
      %5255 = vmatpush1.msra.mxu0 0.0
      %5256 = vmatprep.subr.mxu0 0.0
      %5257 = vmatpush1.msra.mxu0 0.0
      %5258 = vmatprep.subr.mxu0 0.0
      %5259 = vmatpush1.msra.mxu0 0.0
      %5260 = vmatprep.subr.mxu0 0.0
      %5261 = vmatpush1.msra.mxu0 0.0
      %5262 = vmatprep.subr.mxu0 0.0
      %5263 = vmatpush1.msra.mxu0 0.0
      %5264 = vmatprep.subr.mxu0 0.0
      %5265 = vmatpush1.msra.mxu0 0.0
      %5266 = vmatprep.subr.mxu0 0.0
      %5267 = vmatpush1.msra.mxu0 0.0
      %5268 = vmatprep.subr.mxu0 0.0
      %5269 = vmatpush1.msra.mxu0 0.0
      %5270 = vmatprep.subr.mxu0 0.0
      %5271 = vmatpush1.msra.mxu0 0.0
      %5272 = vmatprep.subr.mxu0 0.0
      %5273 = vmatpush1.msra.mxu0 0.0
      %5274 = vmatprep.subr.mxu0 0.0
      %5275 = vmatpush1.msra.mxu0 0.0
      %5276 = vmatprep.subr.mxu0 0.0
      %5277 = vmatpush1.msra.mxu0 0.0
      %5278 = vmatprep.subr.mxu0 0.0
      %5279 = vmatpush1.msra.mxu0 0.0
      %5280 = vmatprep.subr.mxu0 0.0
      %5281 = vmatpush1.msra.mxu0 0.0
      %5282 = vmatprep.subr.mxu0 0.0
      %5283 = vmatpush1.msra.mxu0 0.0
      %5284 = vmatprep.subr.mxu0 0.0
      %5285 = vmatpush1.msra.mxu0 0.0
      %5286 = vmatprep.subr.mxu0 0.0
      %5287 = vmatpush1.msra.mxu0 0.0
      %5288 = vmatprep.subr.mxu0 0.0
      %5289 = vmatpush1.msra.mxu0 0.0
      %5290 = vmatprep.subr.mxu0 0.0
      %5291 = vmatpush1.msra.mxu0 0.0
      %5292 = vmatprep.mubr.f32.mxu0 0.0
      %5293 = vmatmul.mubr.f32.gmra.mrb[0].mxu0 %v5223
      %v5294 = vpop.f32.mrb[0].mxu0
      %v5295 = vadd.f32 0.0, %v5294
      %v5296 = vpop.f32.mrb[0].mxu0
      %5297 = vdwg.mxu0
      %5299 = vset.pattern.permute.xlu0 0
      %5300 = vperm.xlu0 %5299, %v5141
      %v5301 = vpop.permute.xlu0 %5300
      %v5303 = vadd.f32 %v5301, %v5295
      %s5304 = scalar_lea.vmem %s7, 4
      %v5305 = vld [vmem:[%s5304] sm:$0xf]
      %v5307 = vsel %vm5147, %v5305, 0
      %5309 = vmatprep.subr.mxu0 0.0
      %5310 = vmatpush1.msra.mxu0 %v5307
      %5311 = vmatprep.subr.mxu0 0.0
      %5312 = vmatpush1.msra.mxu0 0.0
      %5313 = vmatprep.subr.mxu0 0.0
      %5314 = vmatpush1.msra.mxu0 0.0
      %5315 = vmatprep.subr.mxu0 0.0
      %5316 = vmatpush1.msra.mxu0 0.0
      %5317 = vmatprep.subr.mxu0 0.0
      %5318 = vmatpush1.msra.mxu0 0.0
      %5319 = vmatprep.subr.mxu0 0.0
      %5320 = vmatpush1.msra.mxu0 0.0
      %5321 = vmatprep.subr.mxu0 0.0
      %5322 = vmatpush1.msra.mxu0 0.0
      %5323 = vmatprep.subr.mxu0 0.0
      %5324 = vmatpush1.msra.mxu0 0.0
      %5325 = vmatprep.subr.mxu0 0.0
      %5326 = vmatpush1.msra.mxu0 0.0
      %5327 = vmatprep.subr.mxu0 0.0
      %5328 = vmatpush1.msra.mxu0 0.0
      %5329 = vmatprep.subr.mxu0 0.0
      %5330 = vmatpush1.msra.mxu0 0.0
      %5331 = vmatprep.subr.mxu0 0.0
      %5332 = vmatpush1.msra.mxu0 0.0
      %5333 = vmatprep.subr.mxu0 0.0
      %5334 = vmatpush1.msra.mxu0 0.0
      %5335 = vmatprep.subr.mxu0 0.0
      %5336 = vmatpush1.msra.mxu0 0.0
      %5337 = vmatprep.subr.mxu0 0.0
      %5338 = vmatpush1.msra.mxu0 0.0
      %5339 = vmatprep.subr.mxu0 0.0
      %5340 = vmatpush1.msra.mxu0 0.0
      %5341 = vmatprep.subr.mxu0 0.0
      %5342 = vmatpush1.msra.mxu0 0.0
      %5343 = vmatprep.subr.mxu0 0.0
      %5344 = vmatpush1.msra.mxu0 0.0
      %5345 = vmatprep.subr.mxu0 0.0
      %5346 = vmatpush1.msra.mxu0 0.0
      %5347 = vmatprep.subr.mxu0 0.0
      %5348 = vmatpush1.msra.mxu0 0.0
      %5349 = vmatprep.subr.mxu0 0.0
      %5350 = vmatpush1.msra.mxu0 0.0
      %5351 = vmatprep.subr.mxu0 0.0
      %5352 = vmatpush1.msra.mxu0 0.0
      %5353 = vmatprep.subr.mxu0 0.0
      %5354 = vmatpush1.msra.mxu0 0.0
      %5355 = vmatprep.subr.mxu0 0.0
      %5356 = vmatpush1.msra.mxu0 0.0
      %5357 = vmatprep.subr.mxu0 0.0
      %5358 = vmatpush1.msra.mxu0 0.0
      %5359 = vmatprep.subr.mxu0 0.0
      %5360 = vmatpush1.msra.mxu0 0.0
      %5361 = vmatprep.subr.mxu0 0.0
      %5362 = vmatpush1.msra.mxu0 0.0
      %5363 = vmatprep.subr.mxu0 0.0
      %5364 = vmatpush1.msra.mxu0 0.0
      %5365 = vmatprep.subr.mxu0 0.0
      %5366 = vmatpush1.msra.mxu0 0.0
      %5367 = vmatprep.subr.mxu0 0.0
      %5368 = vmatpush1.msra.mxu0 0.0
      %5369 = vmatprep.subr.mxu0 0.0
      %5370 = vmatpush1.msra.mxu0 0.0
      %5371 = vmatprep.subr.mxu0 0.0
      %5372 = vmatpush1.msra.mxu0 0.0
      %5373 = vmatprep.mubr.f32.mxu0 0.0
      %5374 = vmatmul.mubr.f32.gmra.mrb[0].mxu0 %v5145
      %v5375 = vpop.f32.mrb[0].mxu0
      %v5376 = vadd.f32 0.0, %v5375
      %v5377 = vpop.f32.mrb[0].mxu0
      %5378 = vdwg.mxu0
      %s5379 = scalar_lea.vmem %s8, 4
      %v5380 = vld [vmem:[%s5379] sm:$0xf]
      %v5382 = vsel %vm5143, %v5380, 0
      %v5385 = vsel %vm5147, %v5376, 0
      %5387 = vmatprep.subr.mxu0 0.0
      %5388 = vmatpush1.msra.mxu0 %v5385
      %5389 = vmatprep.subr.mxu0 0.0
      %5390 = vmatpush1.msra.mxu0 0.0
      %5391 = vmatprep.subr.mxu0 0.0
      %5392 = vmatpush1.msra.mxu0 0.0
      %5393 = vmatprep.subr.mxu0 0.0
      %5394 = vmatpush1.msra.mxu0 0.0
      %5395 = vmatprep.subr.mxu0 0.0
      %5396 = vmatpush1.msra.mxu0 0.0
      %5397 = vmatprep.subr.mxu0 0.0
      %5398 = vmatpush1.msra.mxu0 0.0
      %5399 = vmatprep.subr.mxu0 0.0
      %5400 = vmatpush1.msra.mxu0 0.0
      %5401 = vmatprep.subr.mxu0 0.0
      %5402 = vmatpush1.msra.mxu0 0.0
      %5403 = vmatprep.subr.mxu0 0.0
      %5404 = vmatpush1.msra.mxu0 0.0
      %5405 = vmatprep.subr.mxu0 0.0
      %5406 = vmatpush1.msra.mxu0 0.0
      %5407 = vmatprep.subr.mxu0 0.0
      %5408 = vmatpush1.msra.mxu0 0.0
      %5409 = vmatprep.subr.mxu0 0.0
      %5410 = vmatpush1.msra.mxu0 0.0
      %5411 = vmatprep.subr.mxu0 0.0
      %5412 = vmatpush1.msra.mxu0 0.0
      %5413 = vmatprep.subr.mxu0 0.0
      %5414 = vmatpush1.msra.mxu0 0.0
      %5415 = vmatprep.subr.mxu0 0.0
      %5416 = vmatpush1.msra.mxu0 0.0
      %5417 = vmatprep.subr.mxu0 0.0
      %5418 = vmatpush1.msra.mxu0 0.0
      %5419 = vmatprep.subr.mxu0 0.0
      %5420 = vmatpush1.msra.mxu0 0.0
      %5421 = vmatprep.subr.mxu0 0.0
      %5422 = vmatpush1.msra.mxu0 0.0
      %5423 = vmatprep.subr.mxu0 0.0
      %5424 = vmatpush1.msra.mxu0 0.0
      %5425 = vmatprep.subr.mxu0 0.0
      %5426 = vmatpush1.msra.mxu0 0.0
      %5427 = vmatprep.subr.mxu0 0.0
      %5428 = vmatpush1.msra.mxu0 0.0
      %5429 = vmatprep.subr.mxu0 0.0
      %5430 = vmatpush1.msra.mxu0 0.0
      %5431 = vmatprep.subr.mxu0 0.0
      %5432 = vmatpush1.msra.mxu0 0.0
      %5433 = vmatprep.subr.mxu0 0.0
      %5434 = vmatpush1.msra.mxu0 0.0
      %5435 = vmatprep.subr.mxu0 0.0
      %5436 = vmatpush1.msra.mxu0 0.0
      %5437 = vmatprep.subr.mxu0 0.0
      %5438 = vmatpush1.msra.mxu0 0.0
      %5439 = vmatprep.subr.mxu0 0.0
      %5440 = vmatpush1.msra.mxu0 0.0
      %5441 = vmatprep.subr.mxu0 0.0
      %5442 = vmatpush1.msra.mxu0 0.0
      %5443 = vmatprep.subr.mxu0 0.0
      %5444 = vmatpush1.msra.mxu0 0.0
      %5445 = vmatprep.subr.mxu0 0.0
      %5446 = vmatpush1.msra.mxu0 0.0
      %5447 = vmatprep.subr.mxu0 0.0
      %5448 = vmatpush1.msra.mxu0 0.0
      %5449 = vmatprep.subr.mxu0 0.0
      %5450 = vmatpush1.msra.mxu0 0.0
      %5451 = vmatprep.mubr.f32.mxu0 0.0
      %5452 = vmatmul.mubr.f32.gmra.mrb[0].mxu0 %v5382
      %v5453 = vpop.f32.mrb[0].mxu0
      %v5454 = vadd.f32 0.0, %v5453
      %v5455 = vpop.f32.mrb[0].mxu0
      %5456 = vdwg.mxu0
      %v5457 = vadd.f32 %v5303, %v5454
      %s5458 = scalar_lea.vmem %s7, 8
      %v5459 = vld [vmem:[%s5458] sm:$0xf]
      %v5461 = vsel %vm5147, %v5459, 0
      %5463 = vmatprep.subr.mxu0 0.0
      %5464 = vmatpush1.msra.mxu0 %v5461
      %5465 = vmatprep.subr.mxu0 0.0
      %5466 = vmatpush1.msra.mxu0 0.0
      %5467 = vmatprep.subr.mxu0 0.0
      %5468 = vmatpush1.msra.mxu0 0.0
      %5469 = vmatprep.subr.mxu0 0.0
      %5470 = vmatpush1.msra.mxu0 0.0
      %5471 = vmatprep.subr.mxu0 0.0
      %5472 = vmatpush1.msra.mxu0 0.0
      %5473 = vmatprep.subr.mxu0 0.0
      %5474 = vmatpush1.msra.mxu0 0.0
      %5475 = vmatprep.subr.mxu0 0.0
      %5476 = vmatpush1.msra.mxu0 0.0
      %5477 = vmatprep.subr.mxu0 0.0
      %5478 = vmatpush1.msra.mxu0 0.0
      %5479 = vmatprep.subr.mxu0 0.0
      %5480 = vmatpush1.msra.mxu0 0.0
      %5481 = vmatprep.subr.mxu0 0.0
      %5482 = vmatpush1.msra.mxu0 0.0
      %5483 = vmatprep.subr.mxu0 0.0
      %5484 = vmatpush1.msra.mxu0 0.0
      %5485 = vmatprep.subr.mxu0 0.0
      %5486 = vmatpush1.msra.mxu0 0.0
      %5487 = vmatprep.subr.mxu0 0.0
      %5488 = vmatpush1.msra.mxu0 0.0
      %5489 = vmatprep.subr.mxu0 0.0
      %5490 = vmatpush1.msra.mxu0 0.0
      %5491 = vmatprep.subr.mxu0 0.0
      %5492 = vmatpush1.msra.mxu0 0.0
      %5493 = vmatprep.subr.mxu0 0.0
      %5494 = vmatpush1.msra.mxu0 0.0
      %5495 = vmatprep.subr.mxu0 0.0
      %5496 = vmatpush1.msra.mxu0 0.0
      %5497 = vmatprep.subr.mxu0 0.0
      %5498 = vmatpush1.msra.mxu0 0.0
      %5499 = vmatprep.subr.mxu0 0.0
      %5500 = vmatpush1.msra.mxu0 0.0
      %5501 = vmatprep.subr.mxu0 0.0
      %5502 = vmatpush1.msra.mxu0 0.0
      %5503 = vmatprep.subr.mxu0 0.0
      %5504 = vmatpush1.msra.mxu0 0.0
      %5505 = vmatprep.subr.mxu0 0.0
      %5506 = vmatpush1.msra.mxu0 0.0
      %5507 = vmatprep.subr.mxu0 0.0
      %5508 = vmatpush1.msra.mxu0 0.0
      %5509 = vmatprep.subr.mxu0 0.0
      %5510 = vmatpush1.msra.mxu0 0.0
      %5511 = vmatprep.subr.mxu0 0.0
      %5512 = vmatpush1.msra.mxu0 0.0
      %5513 = vmatprep.subr.mxu0 0.0
      %5514 = vmatpush1.msra.mxu0 0.0
      %5515 = vmatprep.subr.mxu0 0.0
      %5516 = vmatpush1.msra.mxu0 0.0
      %5517 = vmatprep.subr.mxu0 0.0
      %5518 = vmatpush1.msra.mxu0 0.0
      %5519 = vmatprep.subr.mxu0 0.0
      %5520 = vmatpush1.msra.mxu0 0.0
      %5521 = vmatprep.subr.mxu0 0.0
      %5522 = vmatpush1.msra.mxu0 0.0
      %5523 = vmatprep.subr.mxu0 0.0
      %5524 = vmatpush1.msra.mxu0 0.0
      %5525 = vmatprep.subr.mxu0 0.0
      %5526 = vmatpush1.msra.mxu0 0.0
      %5527 = vmatprep.mubr.f32.mxu0 0.0
      %5528 = vmatmul.mubr.f32.gmra.mrb[0].mxu0 %v5145
      %v5529 = vpop.f32.mrb[0].mxu0
      %v5530 = vadd.f32 0.0, %v5529
      %v5531 = vpop.f32.mrb[0].mxu0
      %5532 = vdwg.mxu0
      %s5533 = scalar_lea.vmem %s8, 8
      %v5534 = vld [vmem:[%s5533] sm:$0xf]
      %v5536 = vsel %vm5143, %v5534, 0
      %v5539 = vsel %vm5147, %v5530, 0
      %5541 = vmatprep.subr.mxu0 0.0
      %5542 = vmatpush1.msra.mxu0 %v5539
      %5543 = vmatprep.subr.mxu0 0.0
      %5544 = vmatpush1.msra.mxu0 0.0
      %5545 = vmatprep.subr.mxu0 0.0
      %5546 = vmatpush1.msra.mxu0 0.0
      %5547 = vmatprep.subr.mxu0 0.0
      %5548 = vmatpush1.msra.mxu0 0.0
      %5549 = vmatprep.subr.mxu0 0.0
      %5550 = vmatpush1.msra.mxu0 0.0
      %5551 = vmatprep.subr.mxu0 0.0
      %5552 = vmatpush1.msra.mxu0 0.0
      %5553 = vmatprep.subr.mxu0 0.0
      %5554 = vmatpush1.msra.mxu0 0.0
      %5555 = vmatprep.subr.mxu0 0.0
      %5556 = vmatpush1.msra.mxu0 0.0
      %5557 = vmatprep.subr.mxu0 0.0
      %5558 = vmatpush1.msra.mxu0 0.0
      %5559 = vmatprep.subr.mxu0 0.0
      %5560 = vmatpush1.msra.mxu0 0.0
      %5561 = vmatprep.subr.mxu0 0.0
      %5562 = vmatpush1.msra.mxu0 0.0
      %5563 = vmatprep.subr.mxu0 0.0
      %5564 = vmatpush1.msra.mxu0 0.0
      %5565 = vmatprep.subr.mxu0 0.0
      %5566 = vmatpush1.msra.mxu0 0.0
      %5567 = vmatprep.subr.mxu0 0.0
      %5568 = vmatpush1.msra.mxu0 0.0
      %5569 = vmatprep.subr.mxu0 0.0
      %5570 = vmatpush1.msra.mxu0 0.0
      %5571 = vmatprep.subr.mxu0 0.0
      %5572 = vmatpush1.msra.mxu0 0.0
      %5573 = vmatprep.subr.mxu0 0.0
      %5574 = vmatpush1.msra.mxu0 0.0
      %5575 = vmatprep.subr.mxu0 0.0
      %5576 = vmatpush1.msra.mxu0 0.0
      %5577 = vmatprep.subr.mxu0 0.0
      %5578 = vmatpush1.msra.mxu0 0.0
      %5579 = vmatprep.subr.mxu0 0.0
      %5580 = vmatpush1.msra.mxu0 0.0
      %5581 = vmatprep.subr.mxu0 0.0
      %5582 = vmatpush1.msra.mxu0 0.0
      %5583 = vmatprep.subr.mxu0 0.0
      %5584 = vmatpush1.msra.mxu0 0.0
      %5585 = vmatprep.subr.mxu0 0.0
      %5586 = vmatpush1.msra.mxu0 0.0
      %5587 = vmatprep.subr.mxu0 0.0
      %5588 = vmatpush1.msra.mxu0 0.0
      %5589 = vmatprep.subr.mxu0 0.0
      %5590 = vmatpush1.msra.mxu0 0.0
      %5591 = vmatprep.subr.mxu0 0.0
      %5592 = vmatpush1.msra.mxu0 0.0
      %5593 = vmatprep.subr.mxu0 0.0
      %5594 = vmatpush1.msra.mxu0 0.0
      %5595 = vmatprep.subr.mxu0 0.0
      %5596 = vmatpush1.msra.mxu0 0.0
      %5597 = vmatprep.subr.mxu0 0.0
      %5598 = vmatpush1.msra.mxu0 0.0
      %5599 = vmatprep.subr.mxu0 0.0
      %5600 = vmatpush1.msra.mxu0 0.0
      %5601 = vmatprep.subr.mxu0 0.0
      %5602 = vmatpush1.msra.mxu0 0.0
      %5603 = vmatprep.subr.mxu0 0.0
      %5604 = vmatpush1.msra.mxu0 0.0
      %5605 = vmatprep.mubr.f32.mxu0 0.0
      %5606 = vmatmul.mubr.f32.gmra.mrb[0].mxu0 %v5536
      %v5607 = vpop.f32.mrb[0].mxu0
      %v5608 = vadd.f32 0.0, %v5607
      %v5609 = vpop.f32.mrb[0].mxu0
      %5610 = vdwg.mxu0
      %v5611 = vadd.f32 %v5457, %v5608
      %s5612 = scalar_lea.vmem %s7, 12
      %v5613 = vld [vmem:[%s5612] sm:$0xf]
      %v5615 = vsel %vm5147, %v5613, 0
      %5617 = vmatprep.subr.mxu0 0.0
      %5618 = vmatpush1.msra.mxu0 %v5615
      %5619 = vmatprep.subr.mxu0 0.0
      %5620 = vmatpush1.msra.mxu0 0.0
      %5621 = vmatprep.subr.mxu0 0.0
      %5622 = vmatpush1.msra.mxu0 0.0
      %5623 = vmatprep.subr.mxu0 0.0
      %5624 = vmatpush1.msra.mxu0 0.0
      %5625 = vmatprep.subr.mxu0 0.0
      %5626 = vmatpush1.msra.mxu0 0.0
      %5627 = vmatprep.subr.mxu0 0.0
      %5628 = vmatpush1.msra.mxu0 0.0
      %5629 = vmatprep.subr.mxu0 0.0
      %5630 = vmatpush1.msra.mxu0 0.0
      %5631 = vmatprep.subr.mxu0 0.0
      %5632 = vmatpush1.msra.mxu0 0.0
      %5633 = vmatprep.subr.mxu0 0.0
      %5634 = vmatpush1.msra.mxu0 0.0
      %5635 = vmatprep.subr.mxu0 0.0
      %5636 = vmatpush1.msra.mxu0 0.0
      %5637 = vmatprep.subr.mxu0 0.0
      %5638 = vmatpush1.msra.mxu0 0.0
      %5639 = vmatprep.subr.mxu0 0.0
      %5640 = vmatpush1.msra.mxu0 0.0
      %5641 = vmatprep.subr.mxu0 0.0
      %5642 = vmatpush1.msra.mxu0 0.0
      %5643 = vmatprep.subr.mxu0 0.0
      %5644 = vmatpush1.msra.mxu0 0.0
      %5645 = vmatprep.subr.mxu0 0.0
      %5646 = vmatpush1.msra.mxu0 0.0
      %5647 = vmatprep.subr.mxu0 0.0
      %5648 = vmatpush1.msra.mxu0 0.0
      %5649 = vmatprep.subr.mxu0 0.0
      %5650 = vmatpush1.msra.mxu0 0.0
      %5651 = vmatprep.subr.mxu0 0.0
      %5652 = vmatpush1.msra.mxu0 0.0
      %5653 = vmatprep.subr.mxu0 0.0
      %5654 = vmatpush1.msra.mxu0 0.0
      %5655 = vmatprep.subr.mxu0 0.0
      %5656 = vmatpush1.msra.mxu0 0.0
      %5657 = vmatprep.subr.mxu0 0.0
      %5658 = vmatpush1.msra.mxu0 0.0
      %5659 = vmatprep.subr.mxu0 0.0
      %5660 = vmatpush1.msra.mxu0 0.0
      %5661 = vmatprep.subr.mxu0 0.0
      %5662 = vmatpush1.msra.mxu0 0.0
      %5663 = vmatprep.subr.mxu0 0.0
      %5664 = vmatpush1.msra.mxu0 0.0
      %5665 = vmatprep.subr.mxu0 0.0
      %5666 = vmatpush1.msra.mxu0 0.0
      %5667 = vmatprep.subr.mxu0 0.0
      %5668 = vmatpush1.msra.mxu0 0.0
      %5669 = vmatprep.subr.mxu0 0.0
      %5670 = vmatpush1.msra.mxu0 0.0
      %5671 = vmatprep.subr.mxu0 0.0
      %5672 = vmatpush1.msra.mxu0 0.0
      %5673 = vmatprep.subr.mxu0 0.0
      %5674 = vmatpush1.msra.mxu0 0.0
      %5675 = vmatprep.subr.mxu0 0.0
      %5676 = vmatpush1.msra.mxu0 0.0
      %5677 = vmatprep.subr.mxu0 0.0
      %5678 = vmatpush1.msra.mxu0 0.0
      %5679 = vmatprep.subr.mxu0 0.0
      %5680 = vmatpush1.msra.mxu0 0.0
      %5681 = vmatprep.mubr.f32.mxu0 0.0
      %5682 = vmatmul.mubr.f32.gmra.mrb[0].mxu0 %v5145
      %v5683 = vpop.f32.mrb[0].mxu0
      %v5684 = vadd.f32 0.0, %v5683
      %v5685 = vpop.f32.mrb[0].mxu0
      %5686 = vdwg.mxu0
      %s5687 = scalar_lea.vmem %s8, 12
      %v5688 = vld [vmem:[%s5687] sm:$0xf]
      %v5690 = vsel %vm5143, %v5688, 0
      %v5693 = vsel %vm5147, %v5684, 0
      %5695 = vmatprep.subr.mxu0 0.0
      %5696 = vmatpush1.msra.mxu0 %v5693
      %5697 = vmatprep.subr.mxu0 0.0
      %5698 = vmatpush1.msra.mxu0 0.0
      %5699 = vmatprep.subr.mxu0 0.0
      %5700 = vmatpush1.msra.mxu0 0.0
      %5701 = vmatprep.subr.mxu0 0.0
      %5702 = vmatpush1.msra.mxu0 0.0
      %5703 = vmatprep.subr.mxu0 0.0
      %5704 = vmatpush1.msra.mxu0 0.0
      %5705 = vmatprep.subr.mxu0 0.0
      %5706 = vmatpush1.msra.mxu0 0.0
      %5707 = vmatprep.subr.mxu0 0.0
      %5708 = vmatpush1.msra.mxu0 0.0
      %5709 = vmatprep.subr.mxu0 0.0
      %5710 = vmatpush1.msra.mxu0 0.0
      %5711 = vmatprep.subr.mxu0 0.0
      %5712 = vmatpush1.msra.mxu0 0.0
      %5713 = vmatprep.subr.mxu0 0.0
      %5714 = vmatpush1.msra.mxu0 0.0
      %5715 = vmatprep.subr.mxu0 0.0
      %5716 = vmatpush1.msra.mxu0 0.0
      %5717 = vmatprep.subr.mxu0 0.0
      %5718 = vmatpush1.msra.mxu0 0.0
      %5719 = vmatprep.subr.mxu0 0.0
      %5720 = vmatpush1.msra.mxu0 0.0
      %5721 = vmatprep.subr.mxu0 0.0
      %5722 = vmatpush1.msra.mxu0 0.0
      %5723 = vmatprep.subr.mxu0 0.0
      %5724 = vmatpush1.msra.mxu0 0.0
      %5725 = vmatprep.subr.mxu0 0.0
      %5726 = vmatpush1.msra.mxu0 0.0
      %5727 = vmatprep.subr.mxu0 0.0
      %5728 = vmatpush1.msra.mxu0 0.0
      %5729 = vmatprep.subr.mxu0 0.0
      %5730 = vmatpush1.msra.mxu0 0.0
      %5731 = vmatprep.subr.mxu0 0.0
      %5732 = vmatpush1.msra.mxu0 0.0
      %5733 = vmatprep.subr.mxu0 0.0
      %5734 = vmatpush1.msra.mxu0 0.0
      %5735 = vmatprep.subr.mxu0 0.0
      %5736 = vmatpush1.msra.mxu0 0.0
      %5737 = vmatprep.subr.mxu0 0.0
      %5738 = vmatpush1.msra.mxu0 0.0
      %5739 = vmatprep.subr.mxu0 0.0
      %5740 = vmatpush1.msra.mxu0 0.0
      %5741 = vmatprep.subr.mxu0 0.0
      %5742 = vmatpush1.msra.mxu0 0.0
      %5743 = vmatprep.subr.mxu0 0.0
      %5744 = vmatpush1.msra.mxu0 0.0
      %5745 = vmatprep.subr.mxu0 0.0
      %5746 = vmatpush1.msra.mxu0 0.0
      %5747 = vmatprep.subr.mxu0 0.0
      %5748 = vmatpush1.msra.mxu0 0.0
      %5749 = vmatprep.subr.mxu0 0.0
      %5750 = vmatpush1.msra.mxu0 0.0
      %5751 = vmatprep.subr.mxu0 0.0
      %5752 = vmatpush1.msra.mxu0 0.0
      %5753 = vmatprep.subr.mxu0 0.0
      %5754 = vmatpush1.msra.mxu0 0.0
      %5755 = vmatprep.subr.mxu0 0.0
      %5756 = vmatpush1.msra.mxu0 0.0
      %5757 = vmatprep.subr.mxu0 0.0
      %5758 = vmatpush1.msra.mxu0 0.0
      %5759 = vmatprep.mubr.f32.mxu0 0.0
      %5760 = vmatmul.mubr.f32.gmra.mrb[0].mxu0 %v5690
      %v5761 = vpop.f32.mrb[0].mxu0
      %v5762 = vadd.f32 0.0, %v5761
      %v5763 = vpop.f32.mrb[0].mxu0
      %5764 = vdwg.mxu0
      %v5765 = vadd.f32 %v5611, %v5762
      %s5766 = scalar_lea.vmem %s7, 16
      %v5767 = vld [vmem:[%s5766] sm:$0xf]
      %v5769 = vsel %vm5147, %v5767, 0
      %5771 = vmatprep.subr.mxu0 0.0
      %5772 = vmatpush1.msra.mxu0 %v5769
      %5773 = vmatprep.subr.mxu0 0.0
      %5774 = vmatpush1.msra.mxu0 0.0
      %5775 = vmatprep.subr.mxu0 0.0
      %5776 = vmatpush1.msra.mxu0 0.0
      %5777 = vmatprep.subr.mxu0 0.0
      %5778 = vmatpush1.msra.mxu0 0.0
      %5779 = vmatprep.subr.mxu0 0.0
      %5780 = vmatpush1.msra.mxu0 0.0
      %5781 = vmatprep.subr.mxu0 0.0
      %5782 = vmatpush1.msra.mxu0 0.0
      %5783 = vmatprep.subr.mxu0 0.0
      %5784 = vmatpush1.msra.mxu0 0.0
      %5785 = vmatprep.subr.mxu0 0.0
      %5786 = vmatpush1.msra.mxu0 0.0
      %5787 = vmatprep.subr.mxu0 0.0
      %5788 = vmatpush1.msra.mxu0 0.0
      %5789 = vmatprep.subr.mxu0 0.0
      %5790 = vmatpush1.msra.mxu0 0.0
      %5791 = vmatprep.subr.mxu0 0.0
      %5792 = vmatpush1.msra.mxu0 0.0
      %5793 = vmatprep.subr.mxu0 0.0
      %5794 = vmatpush1.msra.mxu0 0.0
      %5795 = vmatprep.subr.mxu0 0.0
      %5796 = vmatpush1.msra.mxu0 0.0
      %5797 = vmatprep.subr.mxu0 0.0
      %5798 = vmatpush1.msra.mxu0 0.0
      %5799 = vmatprep.subr.mxu0 0.0
      %5800 = vmatpush1.msra.mxu0 0.0
      %5801 = vmatprep.subr.mxu0 0.0
      %5802 = vmatpush1.msra.mxu0 0.0
      %5803 = vmatprep.subr.mxu0 0.0
      %5804 = vmatpush1.msra.mxu0 0.0
      %5805 = vmatprep.subr.mxu0 0.0
      %5806 = vmatpush1.msra.mxu0 0.0
      %5807 = vmatprep.subr.mxu0 0.0
      %5808 = vmatpush1.msra.mxu0 0.0
      %5809 = vmatprep.subr.mxu0 0.0
      %5810 = vmatpush1.msra.mxu0 0.0
      %5811 = vmatprep.subr.mxu0 0.0
      %5812 = vmatpush1.msra.mxu0 0.0
      %5813 = vmatprep.subr.mxu0 0.0
      %5814 = vmatpush1.msra.mxu0 0.0
      %5815 = vmatprep.subr.mxu0 0.0
      %5816 = vmatpush1.msra.mxu0 0.0
      %5817 = vmatprep.subr.mxu0 0.0
      %5818 = vmatpush1.msra.mxu0 0.0
      %5819 = vmatprep.subr.mxu0 0.0
      %5820 = vmatpush1.msra.mxu0 0.0
      %5821 = vmatprep.subr.mxu0 0.0
      %5822 = vmatpush1.msra.mxu0 0.0
      %5823 = vmatprep.subr.mxu0 0.0
      %5824 = vmatpush1.msra.mxu0 0.0
      %5825 = vmatprep.subr.mxu0 0.0
      %5826 = vmatpush1.msra.mxu0 0.0
      %5827 = vmatprep.subr.mxu0 0.0
      %5828 = vmatpush1.msra.mxu0 0.0
      %5829 = vmatprep.subr.mxu0 0.0
      %5830 = vmatpush1.msra.mxu0 0.0
      %5831 = vmatprep.subr.mxu0 0.0
      %5832 = vmatpush1.msra.mxu0 0.0
      %5833 = vmatprep.subr.mxu0 0.0
      %5834 = vmatpush1.msra.mxu0 0.0
      %5835 = vmatprep.mubr.f32.mxu0 0.0
      %5836 = vmatmul.mubr.f32.gmra.mrb[0].mxu0 %v5145
      %v5837 = vpop.f32.mrb[0].mxu0
      %v5838 = vadd.f32 0.0, %v5837
      %v5839 = vpop.f32.mrb[0].mxu0
      %5840 = vdwg.mxu0
      %s5841 = scalar_lea.vmem %s8, 16
      %v5842 = vld [vmem:[%s5841] sm:$0xf]
      %v5844 = vsel %vm5143, %v5842, 0
      %v5847 = vsel %vm5147, %v5838, 0
      %5849 = vmatprep.subr.mxu0 0.0
      %5850 = vmatpush1.msra.mxu0 %v5847
      %5851 = vmatprep.subr.mxu0 0.0
      %5852 = vmatpush1.msra.mxu0 0.0
      %5853 = vmatprep.subr.mxu0 0.0
      %5854 = vmatpush1.msra.mxu0 0.0
      %5855 = vmatprep.subr.mxu0 0.0
      %5856 = vmatpush1.msra.mxu0 0.0
      %5857 = vmatprep.subr.mxu0 0.0
      %5858 = vmatpush1.msra.mxu0 0.0
      %5859 = vmatprep.subr.mxu0 0.0
      %5860 = vmatpush1.msra.mxu0 0.0
      %5861 = vmatprep.subr.mxu0 0.0
      %5862 = vmatpush1.msra.mxu0 0.0
      %5863 = vmatprep.subr.mxu0 0.0
      %5864 = vmatpush1.msra.mxu0 0.0
      %5865 = vmatprep.subr.mxu0 0.0
      %5866 = vmatpush1.msra.mxu0 0.0
      %5867 = vmatprep.subr.mxu0 0.0
      %5868 = vmatpush1.msra.mxu0 0.0
      %5869 = vmatprep.subr.mxu0 0.0
      %5870 = vmatpush1.msra.mxu0 0.0
      %5871 = vmatprep.subr.mxu0 0.0
      %5872 = vmatpush1.msra.mxu0 0.0
      %5873 = vmatprep.subr.mxu0 0.0
      %5874 = vmatpush1.msra.mxu0 0.0
      %5875 = vmatprep.subr.mxu0 0.0
      %5876 = vmatpush1.msra.mxu0 0.0
      %5877 = vmatprep.subr.mxu0 0.0
      %5878 = vmatpush1.msra.mxu0 0.0
      %5879 = vmatprep.subr.mxu0 0.0
      %5880 = vmatpush1.msra.mxu0 0.0
      %5881 = vmatprep.subr.mxu0 0.0
      %5882 = vmatpush1.msra.mxu0 0.0
      %5883 = vmatprep.subr.mxu0 0.0
      %5884 = vmatpush1.msra.mxu0 0.0
      %5885 = vmatprep.subr.mxu0 0.0
      %5886 = vmatpush1.msra.mxu0 0.0
      %5887 = vmatprep.subr.mxu0 0.0
      %5888 = vmatpush1.msra.mxu0 0.0
      %5889 = vmatprep.subr.mxu0 0.0
      %5890 = vmatpush1.msra.mxu0 0.0
      %5891 = vmatprep.subr.mxu0 0.0
      %5892 = vmatpush1.msra.mxu0 0.0
      %5893 = vmatprep.subr.mxu0 0.0
      %5894 = vmatpush1.msra.mxu0 0.0
      %5895 = vmatprep.subr.mxu0 0.0
      %5896 = vmatpush1.msra.mxu0 0.0
      %5897 = vmatprep.subr.mxu0 0.0
      %5898 = vmatpush1.msra.mxu0 0.0
      %5899 = vmatprep.subr.mxu0 0.0
      %5900 = vmatpush1.msra.mxu0 0.0
      %5901 = vmatprep.subr.mxu0 0.0
      %5902 = vmatpush1.msra.mxu0 0.0
      %5903 = vmatprep.subr.mxu0 0.0
      %5904 = vmatpush1.msra.mxu0 0.0
      %5905 = vmatprep.subr.mxu0 0.0
      %5906 = vmatpush1.msra.mxu0 0.0
      %5907 = vmatprep.subr.mxu0 0.0
      %5908 = vmatpush1.msra.mxu0 0.0
      %5909 = vmatprep.subr.mxu0 0.0
      %5910 = vmatpush1.msra.mxu0 0.0
      %5911 = vmatprep.subr.mxu0 0.0
      %5912 = vmatpush1.msra.mxu0 0.0
      %5913 = vmatprep.mubr.f32.mxu0 0.0
      %5914 = vmatmul.mubr.f32.gmra.mrb[0].mxu0 %v5844
      %v5915 = vpop.f32.mrb[0].mxu0
      %v5916 = vadd.f32 0.0, %v5915
      %v5917 = vpop.f32.mrb[0].mxu0
      %5918 = vdwg.mxu0
      %v5919 = vadd.f32 %v5765, %v5916
      %s5920 = scalar_lea.vmem %s7, 20
      %v5921 = vld [vmem:[%s5920] sm:$0xf]
      %v5923 = vsel %vm5147, %v5921, 0
      %5925 = vmatprep.subr.mxu0 0.0
      %5926 = vmatpush1.msra.mxu0 %v5923
      %5927 = vmatprep.subr.mxu0 0.0
      %5928 = vmatpush1.msra.mxu0 0.0
      %5929 = vmatprep.subr.mxu0 0.0
      %5930 = vmatpush1.msra.mxu0 0.0
      %5931 = vmatprep.subr.mxu0 0.0
      %5932 = vmatpush1.msra.mxu0 0.0
      %5933 = vmatprep.subr.mxu0 0.0
      %5934 = vmatpush1.msra.mxu0 0.0
      %5935 = vmatprep.subr.mxu0 0.0
      %5936 = vmatpush1.msra.mxu0 0.0
      %5937 = vmatprep.subr.mxu0 0.0
      %5938 = vmatpush1.msra.mxu0 0.0
      %5939 = vmatprep.subr.mxu0 0.0
      %5940 = vmatpush1.msra.mxu0 0.0
      %5941 = vmatprep.subr.mxu0 0.0
      %5942 = vmatpush1.msra.mxu0 0.0
      %5943 = vmatprep.subr.mxu0 0.0
      %5944 = vmatpush1.msra.mxu0 0.0
      %5945 = vmatprep.subr.mxu0 0.0
      %5946 = vmatpush1.msra.mxu0 0.0
      %5947 = vmatprep.subr.mxu0 0.0
      %5948 = vmatpush1.msra.mxu0 0.0
      %5949 = vmatprep.subr.mxu0 0.0
      %5950 = vmatpush1.msra.mxu0 0.0
      %5951 = vmatprep.subr.mxu0 0.0
      %5952 = vmatpush1.msra.mxu0 0.0
      %5953 = vmatprep.subr.mxu0 0.0
      %5954 = vmatpush1.msra.mxu0 0.0
      %5955 = vmatprep.subr.mxu0 0.0
      %5956 = vmatpush1.msra.mxu0 0.0
      %5957 = vmatprep.subr.mxu0 0.0
      %5958 = vmatpush1.msra.mxu0 0.0
      %5959 = vmatprep.subr.mxu0 0.0
      %5960 = vmatpush1.msra.mxu0 0.0
      %5961 = vmatprep.subr.mxu0 0.0
      %5962 = vmatpush1.msra.mxu0 0.0
      %5963 = vmatprep.subr.mxu0 0.0
      %5964 = vmatpush1.msra.mxu0 0.0
      %5965 = vmatprep.subr.mxu0 0.0
      %5966 = vmatpush1.msra.mxu0 0.0
      %5967 = vmatprep.subr.mxu0 0.0
      %5968 = vmatpush1.msra.mxu0 0.0
      %5969 = vmatprep.subr.mxu0 0.0
      %5970 = vmatpush1.msra.mxu0 0.0
      %5971 = vmatprep.subr.mxu0 0.0
      %5972 = vmatpush1.msra.mxu0 0.0
      %5973 = vmatprep.subr.mxu0 0.0
      %5974 = vmatpush1.msra.mxu0 0.0
      %5975 = vmatprep.subr.mxu0 0.0
      %5976 = vmatpush1.msra.mxu0 0.0
      %5977 = vmatprep.subr.mxu0 0.0
      %5978 = vmatpush1.msra.mxu0 0.0
      %5979 = vmatprep.subr.mxu0 0.0
      %5980 = vmatpush1.msra.mxu0 0.0
      %5981 = vmatprep.subr.mxu0 0.0
      %5982 = vmatpush1.msra.mxu0 0.0
      %5983 = vmatprep.subr.mxu0 0.0
      %5984 = vmatpush1.msra.mxu0 0.0
      %5985 = vmatprep.subr.mxu0 0.0
      %5986 = vmatpush1.msra.mxu0 0.0
      %5987 = vmatprep.subr.mxu0 0.0
      %5988 = vmatpush1.msra.mxu0 0.0
      %5989 = vmatprep.mubr.f32.mxu0 0.0
      %5990 = vmatmul.mubr.f32.gmra.mrb[0].mxu0 %v5145
      %v5991 = vpop.f32.mrb[0].mxu0
      %v5992 = vadd.f32 0.0, %v5991
      %v5993 = vpop.f32.mrb[0].mxu0
      %5994 = vdwg.mxu0
      %s5995 = scalar_lea.vmem %s8, 20
      %v5996 = vld [vmem:[%s5995] sm:$0xf]
      %v5998 = vsel %vm5143, %v5996, 0
      %v6001 = vsel %vm5147, %v5992, 0
      %6003 = vmatprep.subr.mxu0 0.0
      %6004 = vmatpush1.msra.mxu0 %v6001
      %6005 = vmatprep.subr.mxu0 0.0
      %6006 = vmatpush1.msra.mxu0 0.0
      %6007 = vmatprep.subr.mxu0 0.0
      %6008 = vmatpush1.msra.mxu0 0.0
      %6009 = vmatprep.subr.mxu0 0.0
      %6010 = vmatpush1.msra.mxu0 0.0
      %6011 = vmatprep.subr.mxu0 0.0
      %6012 = vmatpush1.msra.mxu0 0.0
      %6013 = vmatprep.subr.mxu0 0.0
      %6014 = vmatpush1.msra.mxu0 0.0
      %6015 = vmatprep.subr.mxu0 0.0
      %6016 = vmatpush1.msra.mxu0 0.0
      %6017 = vmatprep.subr.mxu0 0.0
      %6018 = vmatpush1.msra.mxu0 0.0
      %6019 = vmatprep.subr.mxu0 0.0
      %6020 = vmatpush1.msra.mxu0 0.0
      %6021 = vmatprep.subr.mxu0 0.0
      %6022 = vmatpush1.msra.mxu0 0.0
      %6023 = vmatprep.subr.mxu0 0.0
      %6024 = vmatpush1.msra.mxu0 0.0
      %6025 = vmatprep.subr.mxu0 0.0
      %6026 = vmatpush1.msra.mxu0 0.0
      %6027 = vmatprep.subr.mxu0 0.0
      %6028 = vmatpush1.msra.mxu0 0.0
      %6029 = vmatprep.subr.mxu0 0.0
      %6030 = vmatpush1.msra.mxu0 0.0
      %6031 = vmatprep.subr.mxu0 0.0
      %6032 = vmatpush1.msra.mxu0 0.0
      %6033 = vmatprep.subr.mxu0 0.0
      %6034 = vmatpush1.msra.mxu0 0.0
      %6035 = vmatprep.subr.mxu0 0.0
      %6036 = vmatpush1.msra.mxu0 0.0
      %6037 = vmatprep.subr.mxu0 0.0
      %6038 = vmatpush1.msra.mxu0 0.0
      %6039 = vmatprep.subr.mxu0 0.0
      %6040 = vmatpush1.msra.mxu0 0.0
      %6041 = vmatprep.subr.mxu0 0.0
      %6042 = vmatpush1.msra.mxu0 0.0
      %6043 = vmatprep.subr.mxu0 0.0
      %6044 = vmatpush1.msra.mxu0 0.0
      %6045 = vmatprep.subr.mxu0 0.0
      %6046 = vmatpush1.msra.mxu0 0.0
      %6047 = vmatprep.subr.mxu0 0.0
      %6048 = vmatpush1.msra.mxu0 0.0
      %6049 = vmatprep.subr.mxu0 0.0
      %6050 = vmatpush1.msra.mxu0 0.0
      %6051 = vmatprep.subr.mxu0 0.0
      %6052 = vmatpush1.msra.mxu0 0.0
      %6053 = vmatprep.subr.mxu0 0.0
      %6054 = vmatpush1.msra.mxu0 0.0
      %6055 = vmatprep.subr.mxu0 0.0
      %6056 = vmatpush1.msra.mxu0 0.0
      %6057 = vmatprep.subr.mxu0 0.0
      %6058 = vmatpush1.msra.mxu0 0.0
      %6059 = vmatprep.subr.mxu0 0.0
      %6060 = vmatpush1.msra.mxu0 0.0
      %6061 = vmatprep.subr.mxu0 0.0
      %6062 = vmatpush1.msra.mxu0 0.0
      %6063 = vmatprep.subr.mxu0 0.0
      %6064 = vmatpush1.msra.mxu0 0.0
      %6065 = vmatprep.subr.mxu0 0.0
      %6066 = vmatpush1.msra.mxu0 0.0
      %6067 = vmatprep.mubr.f32.mxu0 0.0
      %6068 = vmatmul.mubr.f32.gmra.mrb[0].mxu0 %v5998
      %v6069 = vpop.f32.mrb[0].mxu0
      %v6070 = vadd.f32 0.0, %v6069
      %v6071 = vpop.f32.mrb[0].mxu0
      %6072 = vdwg.mxu0
      %v6073 = vadd.f32 %v5919, %v6070
      %s6074 = scalar_lea.vmem %s7, 24
      %v6075 = vld [vmem:[%s6074] sm:$0xf]
      %v6077 = vsel %vm5147, %v6075, 0
      %6079 = vmatprep.subr.mxu0 0.0
      %6080 = vmatpush1.msra.mxu0 %v6077
      %6081 = vmatprep.subr.mxu0 0.0
      %6082 = vmatpush1.msra.mxu0 0.0
      %6083 = vmatprep.subr.mxu0 0.0
      %6084 = vmatpush1.msra.mxu0 0.0
      %6085 = vmatprep.subr.mxu0 0.0
      %6086 = vmatpush1.msra.mxu0 0.0
      %6087 = vmatprep.subr.mxu0 0.0
      %6088 = vmatpush1.msra.mxu0 0.0
      %6089 = vmatprep.subr.mxu0 0.0
      %6090 = vmatpush1.msra.mxu0 0.0
      %6091 = vmatprep.subr.mxu0 0.0
      %6092 = vmatpush1.msra.mxu0 0.0
      %6093 = vmatprep.subr.mxu0 0.0
      %6094 = vmatpush1.msra.mxu0 0.0
      %6095 = vmatprep.subr.mxu0 0.0
      %6096 = vmatpush1.msra.mxu0 0.0
      %6097 = vmatprep.subr.mxu0 0.0
      %6098 = vmatpush1.msra.mxu0 0.0
      %6099 = vmatprep.subr.mxu0 0.0
      %6100 = vmatpush1.msra.mxu0 0.0
      %6101 = vmatprep.subr.mxu0 0.0
      %6102 = vmatpush1.msra.mxu0 0.0
      %6103 = vmatprep.subr.mxu0 0.0
      %6104 = vmatpush1.msra.mxu0 0.0
      %6105 = vmatprep.subr.mxu0 0.0
      %6106 = vmatpush1.msra.mxu0 0.0
      %6107 = vmatprep.subr.mxu0 0.0
      %6108 = vmatpush1.msra.mxu0 0.0
      %6109 = vmatprep.subr.mxu0 0.0
      %6110 = vmatpush1.msra.mxu0 0.0
      %6111 = vmatprep.subr.mxu0 0.0
      %6112 = vmatpush1.msra.mxu0 0.0
      %6113 = vmatprep.subr.mxu0 0.0
      %6114 = vmatpush1.msra.mxu0 0.0
      %6115 = vmatprep.subr.mxu0 0.0
      %6116 = vmatpush1.msra.mxu0 0.0
      %6117 = vmatprep.subr.mxu0 0.0
      %6118 = vmatpush1.msra.mxu0 0.0
      %6119 = vmatprep.subr.mxu0 0.0
      %6120 = vmatpush1.msra.mxu0 0.0
      %6121 = vmatprep.subr.mxu0 0.0
      %6122 = vmatpush1.msra.mxu0 0.0
      %6123 = vmatprep.subr.mxu0 0.0
      %6124 = vmatpush1.msra.mxu0 0.0
      %6125 = vmatprep.subr.mxu0 0.0
      %6126 = vmatpush1.msra.mxu0 0.0
      %6127 = vmatprep.subr.mxu0 0.0
      %6128 = vmatpush1.msra.mxu0 0.0
      %6129 = vmatprep.subr.mxu0 0.0
      %6130 = vmatpush1.msra.mxu0 0.0
      %6131 = vmatprep.subr.mxu0 0.0
      %6132 = vmatpush1.msra.mxu0 0.0
      %6133 = vmatprep.subr.mxu0 0.0
      %6134 = vmatpush1.msra.mxu0 0.0
      %6135 = vmatprep.subr.mxu0 0.0
      %6136 = vmatpush1.msra.mxu0 0.0
      %6137 = vmatprep.subr.mxu0 0.0
      %6138 = vmatpush1.msra.mxu0 0.0
      %6139 = vmatprep.subr.mxu0 0.0
      %6140 = vmatpush1.msra.mxu0 0.0
      %6141 = vmatprep.subr.mxu0 0.0
      %6142 = vmatpush1.msra.mxu0 0.0
      %6143 = vmatprep.mubr.f32.mxu0 0.0
      %6144 = vmatmul.mubr.f32.gmra.mrb[0].mxu0 %v5145
      %v6145 = vpop.f32.mrb[0].mxu0
      %v6146 = vadd.f32 0.0, %v6145
      %v6147 = vpop.f32.mrb[0].mxu0
      %6148 = vdwg.mxu0
      %s6149 = scalar_lea.vmem %s8, 24
      %v6150 = vld [vmem:[%s6149] sm:$0xf]
      %v6152 = vsel %vm5143, %v6150, 0
      %v6155 = vsel %vm5147, %v6146, 0
      %6157 = vmatprep.subr.mxu0 0.0
      %6158 = vmatpush1.msra.mxu0 %v6155
      %6159 = vmatprep.subr.mxu0 0.0
      %6160 = vmatpush1.msra.mxu0 0.0
      %6161 = vmatprep.subr.mxu0 0.0
      %6162 = vmatpush1.msra.mxu0 0.0
      %6163 = vmatprep.subr.mxu0 0.0
      %6164 = vmatpush1.msra.mxu0 0.0
      %6165 = vmatprep.subr.mxu0 0.0
      %6166 = vmatpush1.msra.mxu0 0.0
      %6167 = vmatprep.subr.mxu0 0.0
      %6168 = vmatpush1.msra.mxu0 0.0
      %6169 = vmatprep.subr.mxu0 0.0
      %6170 = vmatpush1.msra.mxu0 0.0
      %6171 = vmatprep.subr.mxu0 0.0
      %6172 = vmatpush1.msra.mxu0 0.0
      %6173 = vmatprep.subr.mxu0 0.0
      %6174 = vmatpush1.msra.mxu0 0.0
      %6175 = vmatprep.subr.mxu0 0.0
      %6176 = vmatpush1.msra.mxu0 0.0
      %6177 = vmatprep.subr.mxu0 0.0
      %6178 = vmatpush1.msra.mxu0 0.0
      %6179 = vmatprep.subr.mxu0 0.0
      %6180 = vmatpush1.msra.mxu0 0.0
      %6181 = vmatprep.subr.mxu0 0.0
      %6182 = vmatpush1.msra.mxu0 0.0
      %6183 = vmatprep.subr.mxu0 0.0
      %6184 = vmatpush1.msra.mxu0 0.0
      %6185 = vmatprep.subr.mxu0 0.0
      %6186 = vmatpush1.msra.mxu0 0.0
      %6187 = vmatprep.subr.mxu0 0.0
      %6188 = vmatpush1.msra.mxu0 0.0
      %6189 = vmatprep.subr.mxu0 0.0
      %6190 = vmatpush1.msra.mxu0 0.0
      %6191 = vmatprep.subr.mxu0 0.0
      %6192 = vmatpush1.msra.mxu0 0.0
      %6193 = vmatprep.subr.mxu0 0.0
      %6194 = vmatpush1.msra.mxu0 0.0
      %6195 = vmatprep.subr.mxu0 0.0
      %6196 = vmatpush1.msra.mxu0 0.0
      %6197 = vmatprep.subr.mxu0 0.0
      %6198 = vmatpush1.msra.mxu0 0.0
      %6199 = vmatprep.subr.mxu0 0.0
      %6200 = vmatpush1.msra.mxu0 0.0
      %6201 = vmatprep.subr.mxu0 0.0
      %6202 = vmatpush1.msra.mxu0 0.0
      %6203 = vmatprep.subr.mxu0 0.0
      %6204 = vmatpush1.msra.mxu0 0.0
      %6205 = vmatprep.subr.mxu0 0.0
      %6206 = vmatpush1.msra.mxu0 0.0
      %6207 = vmatprep.subr.mxu0 0.0
      %6208 = vmatpush1.msra.mxu0 0.0
      %6209 = vmatprep.subr.mxu0 0.0
      %6210 = vmatpush1.msra.mxu0 0.0
      %6211 = vmatprep.subr.mxu0 0.0
      %6212 = vmatpush1.msra.mxu0 0.0
      %6213 = vmatprep.subr.mxu0 0.0
      %6214 = vmatpush1.msra.mxu0 0.0
      %6215 = vmatprep.subr.mxu0 0.0
      %6216 = vmatpush1.msra.mxu0 0.0
      %6217 = vmatprep.subr.mxu0 0.0
      %6218 = vmatpush1.msra.mxu0 0.0
      %6219 = vmatprep.subr.mxu0 0.0
      %6220 = vmatpush1.msra.mxu0 0.0
      %6221 = vmatprep.mubr.f32.mxu0 0.0
      %6222 = vmatmul.mubr.f32.gmra.mrb[0].mxu0 %v6152
      %v6223 = vpop.f32.mrb[0].mxu0
      %v6224 = vadd.f32 0.0, %v6223
      %v6225 = vpop.f32.mrb[0].mxu0
      %6226 = vdwg.mxu0
      %v6227 = vadd.f32 %v6073, %v6224
      %s6228 = scalar_lea.vmem %s7, 28
      %v6229 = vld [vmem:[%s6228] sm:$0xf]
      %v6231 = vsel %vm5147, %v6229, 0
      %6233 = vmatprep.subr.mxu0 0.0
      %6234 = vmatpush1.msra.mxu0 %v6231
      %6235 = vmatprep.subr.mxu0 0.0
      %6236 = vmatpush1.msra.mxu0 0.0
      %6237 = vmatprep.subr.mxu0 0.0
      %6238 = vmatpush1.msra.mxu0 0.0
      %6239 = vmatprep.subr.mxu0 0.0
      %6240 = vmatpush1.msra.mxu0 0.0
      %6241 = vmatprep.subr.mxu0 0.0
      %6242 = vmatpush1.msra.mxu0 0.0
      %6243 = vmatprep.subr.mxu0 0.0
      %6244 = vmatpush1.msra.mxu0 0.0
      %6245 = vmatprep.subr.mxu0 0.0
      %6246 = vmatpush1.msra.mxu0 0.0
      %6247 = vmatprep.subr.mxu0 0.0
      %6248 = vmatpush1.msra.mxu0 0.0
      %6249 = vmatprep.subr.mxu0 0.0
      %6250 = vmatpush1.msra.mxu0 0.0
      %6251 = vmatprep.subr.mxu0 0.0
      %6252 = vmatpush1.msra.mxu0 0.0
      %6253 = vmatprep.subr.mxu0 0.0
      %6254 = vmatpush1.msra.mxu0 0.0
      %6255 = vmatprep.subr.mxu0 0.0
      %6256 = vmatpush1.msra.mxu0 0.0
      %6257 = vmatprep.subr.mxu0 0.0
      %6258 = vmatpush1.msra.mxu0 0.0
      %6259 = vmatprep.subr.mxu0 0.0
      %6260 = vmatpush1.msra.mxu0 0.0
      %6261 = vmatprep.subr.mxu0 0.0
      %6262 = vmatpush1.msra.mxu0 0.0
      %6263 = vmatprep.subr.mxu0 0.0
      %6264 = vmatpush1.msra.mxu0 0.0
      %6265 = vmatprep.subr.mxu0 0.0
      %6266 = vmatpush1.msra.mxu0 0.0
      %6267 = vmatprep.subr.mxu0 0.0
      %6268 = vmatpush1.msra.mxu0 0.0
      %6269 = vmatprep.subr.mxu0 0.0
      %6270 = vmatpush1.msra.mxu0 0.0
      %6271 = vmatprep.subr.mxu0 0.0
      %6272 = vmatpush1.msra.mxu0 0.0
      %6273 = vmatprep.subr.mxu0 0.0
      %6274 = vmatpush1.msra.mxu0 0.0
      %6275 = vmatprep.subr.mxu0 0.0
      %6276 = vmatpush1.msra.mxu0 0.0
      %6277 = vmatprep.subr.mxu0 0.0
      %6278 = vmatpush1.msra.mxu0 0.0
      %6279 = vmatprep.subr.mxu0 0.0
      %6280 = vmatpush1.msra.mxu0 0.0
      %6281 = vmatprep.subr.mxu0 0.0
      %6282 = vmatpush1.msra.mxu0 0.0
      %6283 = vmatprep.subr.mxu0 0.0
      %6284 = vmatpush1.msra.mxu0 0.0
      %6285 = vmatprep.subr.mxu0 0.0
      %6286 = vmatpush1.msra.mxu0 0.0
      %6287 = vmatprep.subr.mxu0 0.0
      %6288 = vmatpush1.msra.mxu0 0.0
      %6289 = vmatprep.subr.mxu0 0.0
      %6290 = vmatpush1.msra.mxu0 0.0
      %6291 = vmatprep.subr.mxu0 0.0
      %6292 = vmatpush1.msra.mxu0 0.0
      %6293 = vmatprep.subr.mxu0 0.0
      %6294 = vmatpush1.msra.mxu0 0.0
      %6295 = vmatprep.subr.mxu0 0.0
      %6296 = vmatpush1.msra.mxu0 0.0
      %6297 = vmatprep.mubr.f32.mxu0 0.0
      %6298 = vmatmul.mubr.f32.gmra.mrb[0].mxu0 %v5145
      %v6299 = vpop.f32.mrb[0].mxu0
      %v6300 = vadd.f32 0.0, %v6299
      %v6301 = vpop.f32.mrb[0].mxu0
      %6302 = vdwg.mxu0
      %s6303 = scalar_lea.vmem %s8, 28
      %v6304 = vld [vmem:[%s6303] sm:$0xf]
      %v6306 = vsel %vm5143, %v6304, 0
      %v6309 = vsel %vm5147, %v6300, 0
      %6311 = vmatprep.subr.mxu0 0.0
      %6312 = vmatpush1.msra.mxu0 %v6309
      %6313 = vmatprep.subr.mxu0 0.0
      %6314 = vmatpush1.msra.mxu0 0.0
      %6315 = vmatprep.subr.mxu0 0.0
      %6316 = vmatpush1.msra.mxu0 0.0
      %6317 = vmatprep.subr.mxu0 0.0
      %6318 = vmatpush1.msra.mxu0 0.0
      %6319 = vmatprep.subr.mxu0 0.0
      %6320 = vmatpush1.msra.mxu0 0.0
      %6321 = vmatprep.subr.mxu0 0.0
      %6322 = vmatpush1.msra.mxu0 0.0
      %6323 = vmatprep.subr.mxu0 0.0
      %6324 = vmatpush1.msra.mxu0 0.0
      %6325 = vmatprep.subr.mxu0 0.0
      %6326 = vmatpush1.msra.mxu0 0.0
      %6327 = vmatprep.subr.mxu0 0.0
      %6328 = vmatpush1.msra.mxu0 0.0
      %6329 = vmatprep.subr.mxu0 0.0
      %6330 = vmatpush1.msra.mxu0 0.0
      %6331 = vmatprep.subr.mxu0 0.0
      %6332 = vmatpush1.msra.mxu0 0.0
      %6333 = vmatprep.subr.mxu0 0.0
      %6334 = vmatpush1.msra.mxu0 0.0
      %6335 = vmatprep.subr.mxu0 0.0
      %6336 = vmatpush1.msra.mxu0 0.0
      %6337 = vmatprep.subr.mxu0 0.0
      %6338 = vmatpush1.msra.mxu0 0.0
      %6339 = vmatprep.subr.mxu0 0.0
      %6340 = vmatpush1.msra.mxu0 0.0
      %6341 = vmatprep.subr.mxu0 0.0
      %6342 = vmatpush1.msra.mxu0 0.0
      %6343 = vmatprep.subr.mxu0 0.0
      %6344 = vmatpush1.msra.mxu0 0.0
      %6345 = vmatprep.subr.mxu0 0.0
      %6346 = vmatpush1.msra.mxu0 0.0
      %6347 = vmatprep.subr.mxu0 0.0
      %6348 = vmatpush1.msra.mxu0 0.0
      %6349 = vmatprep.subr.mxu0 0.0
      %6350 = vmatpush1.msra.mxu0 0.0
      %6351 = vmatprep.subr.mxu0 0.0
      %6352 = vmatpush1.msra.mxu0 0.0
      %6353 = vmatprep.subr.mxu0 0.0
      %6354 = vmatpush1.msra.mxu0 0.0
      %6355 = vmatprep.subr.mxu0 0.0
      %6356 = vmatpush1.msra.mxu0 0.0
      %6357 = vmatprep.subr.mxu0 0.0
      %6358 = vmatpush1.msra.mxu0 0.0
      %6359 = vmatprep.subr.mxu0 0.0
      %6360 = vmatpush1.msra.mxu0 0.0
      %6361 = vmatprep.subr.mxu0 0.0
      %6362 = vmatpush1.msra.mxu0 0.0
      %6363 = vmatprep.subr.mxu0 0.0
      %6364 = vmatpush1.msra.mxu0 0.0
      %6365 = vmatprep.subr.mxu0 0.0
      %6366 = vmatpush1.msra.mxu0 0.0
      %6367 = vmatprep.subr.mxu0 0.0
      %6368 = vmatpush1.msra.mxu0 0.0
      %6369 = vmatprep.subr.mxu0 0.0
      %6370 = vmatpush1.msra.mxu0 0.0
      %6371 = vmatprep.subr.mxu0 0.0
      %6372 = vmatpush1.msra.mxu0 0.0
      %6373 = vmatprep.subr.mxu0 0.0
      %6374 = vmatpush1.msra.mxu0 0.0
      %6375 = vmatprep.mubr.f32.mxu0 0.0
      %6376 = vmatmul.mubr.f32.gmra.mrb[0].mxu0 %v6306
      %v6377 = vpop.f32.mrb[0].mxu0
      %v6378 = vadd.f32 0.0, %v6377
      %v6379 = vpop.f32.mrb[0].mxu0
      %6380 = vdwg.mxu0
      %v6381 = vadd.f32 %v6227, %v6378
      %s6382 = scalar_lea.vmem %s7, 32
      %v6383 = vld [vmem:[%s6382] sm:$0xf]
      %v6385 = vsel %vm5147, %v6383, 0
      %6387 = vmatprep.subr.mxu0 0.0
      %6388 = vmatpush1.msra.mxu0 %v6385
      %6389 = vmatprep.subr.mxu0 0.0
      %6390 = vmatpush1.msra.mxu0 0.0
      %6391 = vmatprep.subr.mxu0 0.0
      %6392 = vmatpush1.msra.mxu0 0.0
      %6393 = vmatprep.subr.mxu0 0.0
      %6394 = vmatpush1.msra.mxu0 0.0
      %6395 = vmatprep.subr.mxu0 0.0
      %6396 = vmatpush1.msra.mxu0 0.0
      %6397 = vmatprep.subr.mxu0 0.0
      %6398 = vmatpush1.msra.mxu0 0.0
      %6399 = vmatprep.subr.mxu0 0.0
      %6400 = vmatpush1.msra.mxu0 0.0
      %6401 = vmatprep.subr.mxu0 0.0
      %6402 = vmatpush1.msra.mxu0 0.0
      %6403 = vmatprep.subr.mxu0 0.0
      %6404 = vmatpush1.msra.mxu0 0.0
      %6405 = vmatprep.subr.mxu0 0.0
      %6406 = vmatpush1.msra.mxu0 0.0
      %6407 = vmatprep.subr.mxu0 0.0
      %6408 = vmatpush1.msra.mxu0 0.0
      %6409 = vmatprep.subr.mxu0 0.0
      %6410 = vmatpush1.msra.mxu0 0.0
      %6411 = vmatprep.subr.mxu0 0.0
      %6412 = vmatpush1.msra.mxu0 0.0
      %6413 = vmatprep.subr.mxu0 0.0
      %6414 = vmatpush1.msra.mxu0 0.0
      %6415 = vmatprep.subr.mxu0 0.0
      %6416 = vmatpush1.msra.mxu0 0.0
      %6417 = vmatprep.subr.mxu0 0.0
      %6418 = vmatpush1.msra.mxu0 0.0
      %6419 = vmatprep.subr.mxu0 0.0
      %6420 = vmatpush1.msra.mxu0 0.0
      %6421 = vmatprep.subr.mxu0 0.0
      %6422 = vmatpush1.msra.mxu0 0.0
      %6423 = vmatprep.subr.mxu0 0.0
      %6424 = vmatpush1.msra.mxu0 0.0
      %6425 = vmatprep.subr.mxu0 0.0
      %6426 = vmatpush1.msra.mxu0 0.0
      %6427 = vmatprep.subr.mxu0 0.0
      %6428 = vmatpush1.msra.mxu0 0.0
      %6429 = vmatprep.subr.mxu0 0.0
      %6430 = vmatpush1.msra.mxu0 0.0
      %6431 = vmatprep.subr.mxu0 0.0
      %6432 = vmatpush1.msra.mxu0 0.0
      %6433 = vmatprep.subr.mxu0 0.0
      %6434 = vmatpush1.msra.mxu0 0.0
      %6435 = vmatprep.subr.mxu0 0.0
      %6436 = vmatpush1.msra.mxu0 0.0
      %6437 = vmatprep.subr.mxu0 0.0
      %6438 = vmatpush1.msra.mxu0 0.0
      %6439 = vmatprep.subr.mxu0 0.0
      %6440 = vmatpush1.msra.mxu0 0.0
      %6441 = vmatprep.subr.mxu0 0.0
      %6442 = vmatpush1.msra.mxu0 0.0
      %6443 = vmatprep.subr.mxu0 0.0
      %6444 = vmatpush1.msra.mxu0 0.0
      %6445 = vmatprep.subr.mxu0 0.0
      %6446 = vmatpush1.msra.mxu0 0.0
      %6447 = vmatprep.subr.mxu0 0.0
      %6448 = vmatpush1.msra.mxu0 0.0
      %6449 = vmatprep.subr.mxu0 0.0
      %6450 = vmatpush1.msra.mxu0 0.0
      %6451 = vmatprep.mubr.f32.mxu0 0.0
      %6452 = vmatmul.mubr.f32.gmra.mrb[0].mxu0 %v5145
      %v6453 = vpop.f32.mrb[0].mxu0
      %v6454 = vadd.f32 0.0, %v6453
      %v6455 = vpop.f32.mrb[0].mxu0
      %6456 = vdwg.mxu0
      %s6457 = scalar_lea.vmem %s8, 32
      %v6458 = vld [vmem:[%s6457] sm:$0xf]
      %v6460 = vsel %vm5143, %v6458, 0
      %v6463 = vsel %vm5147, %v6454, 0
      %6465 = vmatprep.subr.mxu0 0.0
      %6466 = vmatpush1.msra.mxu0 %v6463
      %6467 = vmatprep.subr.mxu0 0.0
      %6468 = vmatpush1.msra.mxu0 0.0
      %6469 = vmatprep.subr.mxu0 0.0
      %6470 = vmatpush1.msra.mxu0 0.0
      %6471 = vmatprep.subr.mxu0 0.0
      %6472 = vmatpush1.msra.mxu0 0.0
      %6473 = vmatprep.subr.mxu0 0.0
      %6474 = vmatpush1.msra.mxu0 0.0
      %6475 = vmatprep.subr.mxu0 0.0
      %6476 = vmatpush1.msra.mxu0 0.0
      %6477 = vmatprep.subr.mxu0 0.0
      %6478 = vmatpush1.msra.mxu0 0.0
      %6479 = vmatprep.subr.mxu0 0.0
      %6480 = vmatpush1.msra.mxu0 0.0
      %6481 = vmatprep.subr.mxu0 0.0
      %6482 = vmatpush1.msra.mxu0 0.0
      %6483 = vmatprep.subr.mxu0 0.0
      %6484 = vmatpush1.msra.mxu0 0.0
      %6485 = vmatprep.subr.mxu0 0.0
      %6486 = vmatpush1.msra.mxu0 0.0
      %6487 = vmatprep.subr.mxu0 0.0
      %6488 = vmatpush1.msra.mxu0 0.0
      %6489 = vmatprep.subr.mxu0 0.0
      %6490 = vmatpush1.msra.mxu0 0.0
      %6491 = vmatprep.subr.mxu0 0.0
      %6492 = vmatpush1.msra.mxu0 0.0
      %6493 = vmatprep.subr.mxu0 0.0
      %6494 = vmatpush1.msra.mxu0 0.0
      %6495 = vmatprep.subr.mxu0 0.0
      %6496 = vmatpush1.msra.mxu0 0.0
      %6497 = vmatprep.subr.mxu0 0.0
      %6498 = vmatpush1.msra.mxu0 0.0
      %6499 = vmatprep.subr.mxu0 0.0
      %6500 = vmatpush1.msra.mxu0 0.0
      %6501 = vmatprep.subr.mxu0 0.0
      %6502 = vmatpush1.msra.mxu0 0.0
      %6503 = vmatprep.subr.mxu0 0.0
      %6504 = vmatpush1.msra.mxu0 0.0
      %6505 = vmatprep.subr.mxu0 0.0
      %6506 = vmatpush1.msra.mxu0 0.0
      %6507 = vmatprep.subr.mxu0 0.0
      %6508 = vmatpush1.msra.mxu0 0.0
      %6509 = vmatprep.subr.mxu0 0.0
      %6510 = vmatpush1.msra.mxu0 0.0
      %6511 = vmatprep.subr.mxu0 0.0
      %6512 = vmatpush1.msra.mxu0 0.0
      %6513 = vmatprep.subr.mxu0 0.0
      %6514 = vmatpush1.msra.mxu0 0.0
      %6515 = vmatprep.subr.mxu0 0.0
      %6516 = vmatpush1.msra.mxu0 0.0
      %6517 = vmatprep.subr.mxu0 0.0
      %6518 = vmatpush1.msra.mxu0 0.0
      %6519 = vmatprep.subr.mxu0 0.0
      %6520 = vmatpush1.msra.mxu0 0.0
      %6521 = vmatprep.subr.mxu0 0.0
      %6522 = vmatpush1.msra.mxu0 0.0
      %6523 = vmatprep.subr.mxu0 0.0
      %6524 = vmatpush1.msra.mxu0 0.0
      %6525 = vmatprep.subr.mxu0 0.0
      %6526 = vmatpush1.msra.mxu0 0.0
      %6527 = vmatprep.subr.mxu0 0.0
      %6528 = vmatpush1.msra.mxu0 0.0
      %6529 = vmatprep.mubr.f32.mxu0 0.0
      %6530 = vmatmul.mubr.f32.gmra.mrb[0].mxu0 %v6460
      %v6531 = vpop.f32.mrb[0].mxu0
      %v6532 = vadd.f32 0.0, %v6531
      %v6533 = vpop.f32.mrb[0].mxu0
      %6534 = vdwg.mxu0
      %v6535 = vadd.f32 %v6381, %v6532
      %v6536 = vmax.f32 %v6535, 0.0
      %v6537 = vld [vmem:[%s11] sm:$0xf]
      %v6539 = vsel %vm5143, %v6536, 0
      %6541 = vmatprep.subr.mxu0 0.0
      %6542 = vmatpush1.msra.mxu0 %v5149
      %6543 = vmatprep.subr.mxu0 0.0
      %6544 = vmatpush1.msra.mxu0 0.0
      %6545 = vmatprep.subr.mxu0 0.0
      %6546 = vmatpush1.msra.mxu0 0.0
      %6547 = vmatprep.subr.mxu0 0.0
      %6548 = vmatpush1.msra.mxu0 0.0
      %6549 = vmatprep.subr.mxu0 0.0
      %6550 = vmatpush1.msra.mxu0 0.0
      %6551 = vmatprep.subr.mxu0 0.0
      %6552 = vmatpush1.msra.mxu0 0.0
      %6553 = vmatprep.subr.mxu0 0.0
      %6554 = vmatpush1.msra.mxu0 0.0
      %6555 = vmatprep.subr.mxu0 0.0
      %6556 = vmatpush1.msra.mxu0 0.0
      %6557 = vmatprep.subr.mxu0 0.0
      %6558 = vmatpush1.msra.mxu0 0.0
      %6559 = vmatprep.subr.mxu0 0.0
      %6560 = vmatpush1.msra.mxu0 0.0
      %6561 = vmatprep.subr.mxu0 0.0
      %6562 = vmatpush1.msra.mxu0 0.0
      %6563 = vmatprep.subr.mxu0 0.0
      %6564 = vmatpush1.msra.mxu0 0.0
      %6565 = vmatprep.subr.mxu0 0.0
      %6566 = vmatpush1.msra.mxu0 0.0
      %6567 = vmatprep.subr.mxu0 0.0
      %6568 = vmatpush1.msra.mxu0 0.0
      %6569 = vmatprep.subr.mxu0 0.0
      %6570 = vmatpush1.msra.mxu0 0.0
      %6571 = vmatprep.subr.mxu0 0.0
      %6572 = vmatpush1.msra.mxu0 0.0
      %6573 = vmatprep.subr.mxu0 0.0
      %6574 = vmatpush1.msra.mxu0 0.0
      %6575 = vmatprep.subr.mxu0 0.0
      %6576 = vmatpush1.msra.mxu0 0.0
      %6577 = vmatprep.subr.mxu0 0.0
      %6578 = vmatpush1.msra.mxu0 0.0
      %6579 = vmatprep.subr.mxu0 0.0
      %6580 = vmatpush1.msra.mxu0 0.0
      %6581 = vmatprep.subr.mxu0 0.0
      %6582 = vmatpush1.msra.mxu0 0.0
      %6583 = vmatprep.subr.mxu0 0.0
      %6584 = vmatpush1.msra.mxu0 0.0
      %6585 = vmatprep.subr.mxu0 0.0
      %6586 = vmatpush1.msra.mxu0 0.0
      %6587 = vmatprep.subr.mxu0 0.0
      %6588 = vmatpush1.msra.mxu0 0.0
      %6589 = vmatprep.subr.mxu0 0.0
      %6590 = vmatpush1.msra.mxu0 0.0
      %6591 = vmatprep.subr.mxu0 0.0
      %6592 = vmatpush1.msra.mxu0 0.0
      %6593 = vmatprep.subr.mxu0 0.0
      %6594 = vmatpush1.msra.mxu0 0.0
      %6595 = vmatprep.subr.mxu0 0.0
      %6596 = vmatpush1.msra.mxu0 0.0
      %6597 = vmatprep.subr.mxu0 0.0
      %6598 = vmatpush1.msra.mxu0 0.0
      %6599 = vmatprep.subr.mxu0 0.0
      %6600 = vmatpush1.msra.mxu0 0.0
      %6601 = vmatprep.subr.mxu0 0.0
      %6602 = vmatpush1.msra.mxu0 0.0
      %6603 = vmatprep.subr.mxu0 0.0
      %6604 = vmatpush1.msra.mxu0 0.0
      %6605 = vmatprep.mubr.f32.mxu0 0.0
      %6606 = vmatmul.mubr.f32.gmra.mrb[0].mxu0 %v6539
      %v6607 = vpop.f32.mrb[0].mxu0
      %v6608 = vadd.f32 0.0, %v6607
      %v6609 = vpop.f32.mrb[0].mxu0
      %6610 = vdwg.mxu0
      %v6611 = vld [vmem:[%s10] sm:$0xf]
      %v6613 = vsel %vm5143, %v6611, 0
      %v6616 = vsel %vm5147, %v6608, 0
      %6618 = vmatprep.subr.mxu0 0.0
      %6619 = vmatpush1.msra.mxu0 %v6616
      %6620 = vmatprep.subr.mxu0 0.0
      %6621 = vmatpush1.msra.mxu0 0.0
      %6622 = vmatprep.subr.mxu0 0.0
      %6623 = vmatpush1.msra.mxu0 0.0
      %6624 = vmatprep.subr.mxu0 0.0
      %6625 = vmatpush1.msra.mxu0 0.0
      %6626 = vmatprep.subr.mxu0 0.0
      %6627 = vmatpush1.msra.mxu0 0.0
      %6628 = vmatprep.subr.mxu0 0.0
      %6629 = vmatpush1.msra.mxu0 0.0
      %6630 = vmatprep.subr.mxu0 0.0
      %6631 = vmatpush1.msra.mxu0 0.0
      %6632 = vmatprep.subr.mxu0 0.0
      %6633 = vmatpush1.msra.mxu0 0.0
      %6634 = vmatprep.subr.mxu0 0.0
      %6635 = vmatpush1.msra.mxu0 0.0
      %6636 = vmatprep.subr.mxu0 0.0
      %6637 = vmatpush1.msra.mxu0 0.0
      %6638 = vmatprep.subr.mxu0 0.0
      %6639 = vmatpush1.msra.mxu0 0.0
      %6640 = vmatprep.subr.mxu0 0.0
      %6641 = vmatpush1.msra.mxu0 0.0
      %6642 = vmatprep.subr.mxu0 0.0
      %6643 = vmatpush1.msra.mxu0 0.0
      %6644 = vmatprep.subr.mxu0 0.0
      %6645 = vmatpush1.msra.mxu0 0.0
      %6646 = vmatprep.subr.mxu0 0.0
      %6647 = vmatpush1.msra.mxu0 0.0
      %6648 = vmatprep.subr.mxu0 0.0
      %6649 = vmatpush1.msra.mxu0 0.0
      %6650 = vmatprep.subr.mxu0 0.0
      %6651 = vmatpush1.msra.mxu0 0.0
      %6652 = vmatprep.subr.mxu0 0.0
      %6653 = vmatpush1.msra.mxu0 0.0
      %6654 = vmatprep.subr.mxu0 0.0
      %6655 = vmatpush1.msra.mxu0 0.0
      %6656 = vmatprep.subr.mxu0 0.0
      %6657 = vmatpush1.msra.mxu0 0.0
      %6658 = vmatprep.subr.mxu0 0.0
      %6659 = vmatpush1.msra.mxu0 0.0
      %6660 = vmatprep.subr.mxu0 0.0
      %6661 = vmatpush1.msra.mxu0 0.0
      %6662 = vmatprep.subr.mxu0 0.0
      %6663 = vmatpush1.msra.mxu0 0.0
      %6664 = vmatprep.subr.mxu0 0.0
      %6665 = vmatpush1.msra.mxu0 0.0
      %6666 = vmatprep.subr.mxu0 0.0
      %6667 = vmatpush1.msra.mxu0 0.0
      %6668 = vmatprep.subr.mxu0 0.0
      %6669 = vmatpush1.msra.mxu0 0.0
      %6670 = vmatprep.subr.mxu0 0.0
      %6671 = vmatpush1.msra.mxu0 0.0
      %6672 = vmatprep.subr.mxu0 0.0
      %6673 = vmatpush1.msra.mxu0 0.0
      %6674 = vmatprep.subr.mxu0 0.0
      %6675 = vmatpush1.msra.mxu0 0.0
      %6676 = vmatprep.subr.mxu0 0.0
      %6677 = vmatpush1.msra.mxu0 0.0
      %6678 = vmatprep.subr.mxu0 0.0
      %6679 = vmatpush1.msra.mxu0 0.0
      %6680 = vmatprep.subr.mxu0 0.0
      %6681 = vmatpush1.msra.mxu0 0.0
      %6682 = vmatprep.mubr.f32.mxu0 0.0
      %6683 = vmatmul.mubr.f32.gmra.mrb[0].mxu0 %v6613
      %v6684 = vpop.f32.mrb[0].mxu0
      %v6685 = vadd.f32 0.0, %v6684
      %v6686 = vpop.f32.mrb[0].mxu0
      %6687 = vdwg.mxu0
      %6689 = vset.pattern.permute.xlu0 0
      %6690 = vperm.xlu0 %6689, %v6537
      %v6691 = vpop.permute.xlu0 %6690
      %v6693 = vadd.f32 %v6691, %v6685
      %6694 = vmatprep.subr.mxu0 0.0
      %6695 = vmatpush1.msra.mxu0 %v5307
      %6696 = vmatprep.subr.mxu0 0.0
      %6697 = vmatpush1.msra.mxu0 0.0
      %6698 = vmatprep.subr.mxu0 0.0
      %6699 = vmatpush1.msra.mxu0 0.0
      %6700 = vmatprep.subr.mxu0 0.0
      %6701 = vmatpush1.msra.mxu0 0.0
      %6702 = vmatprep.subr.mxu0 0.0
      %6703 = vmatpush1.msra.mxu0 0.0
      %6704 = vmatprep.subr.mxu0 0.0
      %6705 = vmatpush1.msra.mxu0 0.0
      %6706 = vmatprep.subr.mxu0 0.0
      %6707 = vmatpush1.msra.mxu0 0.0
      %6708 = vmatprep.subr.mxu0 0.0
      %6709 = vmatpush1.msra.mxu0 0.0
      %6710 = vmatprep.subr.mxu0 0.0
      %6711 = vmatpush1.msra.mxu0 0.0
      %6712 = vmatprep.subr.mxu0 0.0
      %6713 = vmatpush1.msra.mxu0 0.0
      %6714 = vmatprep.subr.mxu0 0.0
      %6715 = vmatpush1.msra.mxu0 0.0
      %6716 = vmatprep.subr.mxu0 0.0
      %6717 = vmatpush1.msra.mxu0 0.0
      %6718 = vmatprep.subr.mxu0 0.0
      %6719 = vmatpush1.msra.mxu0 0.0
      %6720 = vmatprep.subr.mxu0 0.0
      %6721 = vmatpush1.msra.mxu0 0.0
      %6722 = vmatprep.subr.mxu0 0.0
      %6723 = vmatpush1.msra.mxu0 0.0
      %6724 = vmatprep.subr.mxu0 0.0
      %6725 = vmatpush1.msra.mxu0 0.0
      %6726 = vmatprep.subr.mxu0 0.0
      %6727 = vmatpush1.msra.mxu0 0.0
      %6728 = vmatprep.subr.mxu0 0.0
      %6729 = vmatpush1.msra.mxu0 0.0
      %6730 = vmatprep.subr.mxu0 0.0
      %6731 = vmatpush1.msra.mxu0 0.0
      %6732 = vmatprep.subr.mxu0 0.0
      %6733 = vmatpush1.msra.mxu0 0.0
      %6734 = vmatprep.subr.mxu0 0.0
      %6735 = vmatpush1.msra.mxu0 0.0
      %6736 = vmatprep.subr.mxu0 0.0
      %6737 = vmatpush1.msra.mxu0 0.0
      %6738 = vmatprep.subr.mxu0 0.0
      %6739 = vmatpush1.msra.mxu0 0.0
      %6740 = vmatprep.subr.mxu0 0.0
      %6741 = vmatpush1.msra.mxu0 0.0
      %6742 = vmatprep.subr.mxu0 0.0
      %6743 = vmatpush1.msra.mxu0 0.0
      %6744 = vmatprep.subr.mxu0 0.0
      %6745 = vmatpush1.msra.mxu0 0.0
      %6746 = vmatprep.subr.mxu0 0.0
      %6747 = vmatpush1.msra.mxu0 0.0
      %6748 = vmatprep.subr.mxu0 0.0
      %6749 = vmatpush1.msra.mxu0 0.0
      %6750 = vmatprep.subr.mxu0 0.0
      %6751 = vmatpush1.msra.mxu0 0.0
      %6752 = vmatprep.subr.mxu0 0.0
      %6753 = vmatpush1.msra.mxu0 0.0
      %6754 = vmatprep.subr.mxu0 0.0
      %6755 = vmatpush1.msra.mxu0 0.0
      %6756 = vmatprep.subr.mxu0 0.0
      %6757 = vmatpush1.msra.mxu0 0.0
      %6758 = vmatprep.mubr.f32.mxu0 0.0
      %6759 = vmatmul.mubr.f32.gmra.mrb[0].mxu0 %v6539
      %v6760 = vpop.f32.mrb[0].mxu0
      %v6761 = vadd.f32 0.0, %v6760
      %v6762 = vpop.f32.mrb[0].mxu0
      %6763 = vdwg.mxu0
      %s6764 = scalar_lea.vmem %s10, 4
      %v6765 = vld [vmem:[%s6764] sm:$0xf]
      %v6767 = vsel %vm5143, %v6765, 0
      %v6770 = vsel %vm5147, %v6761, 0
      %6772 = vmatprep.subr.mxu0 0.0
      %6773 = vmatpush1.msra.mxu0 %v6770
      %6774 = vmatprep.subr.mxu0 0.0
      %6775 = vmatpush1.msra.mxu0 0.0
      %6776 = vmatprep.subr.mxu0 0.0
      %6777 = vmatpush1.msra.mxu0 0.0
      %6778 = vmatprep.subr.mxu0 0.0
      %6779 = vmatpush1.msra.mxu0 0.0
      %6780 = vmatprep.subr.mxu0 0.0
      %6781 = vmatpush1.msra.mxu0 0.0
      %6782 = vmatprep.subr.mxu0 0.0
      %6783 = vmatpush1.msra.mxu0 0.0
      %6784 = vmatprep.subr.mxu0 0.0
      %6785 = vmatpush1.msra.mxu0 0.0
      %6786 = vmatprep.subr.mxu0 0.0
      %6787 = vmatpush1.msra.mxu0 0.0
      %6788 = vmatprep.subr.mxu0 0.0
      %6789 = vmatpush1.msra.mxu0 0.0
      %6790 = vmatprep.subr.mxu0 0.0
      %6791 = vmatpush1.msra.mxu0 0.0
      %6792 = vmatprep.subr.mxu0 0.0
      %6793 = vmatpush1.msra.mxu0 0.0
      %6794 = vmatprep.subr.mxu0 0.0
      %6795 = vmatpush1.msra.mxu0 0.0
      %6796 = vmatprep.subr.mxu0 0.0
      %6797 = vmatpush1.msra.mxu0 0.0
      %6798 = vmatprep.subr.mxu0 0.0
      %6799 = vmatpush1.msra.mxu0 0.0
      %6800 = vmatprep.subr.mxu0 0.0
      %6801 = vmatpush1.msra.mxu0 0.0
      %6802 = vmatprep.subr.mxu0 0.0
      %6803 = vmatpush1.msra.mxu0 0.0
      %6804 = vmatprep.subr.mxu0 0.0
      %6805 = vmatpush1.msra.mxu0 0.0
      %6806 = vmatprep.subr.mxu0 0.0
      %6807 = vmatpush1.msra.mxu0 0.0
      %6808 = vmatprep.subr.mxu0 0.0
      %6809 = vmatpush1.msra.mxu0 0.0
      %6810 = vmatprep.subr.mxu0 0.0
      %6811 = vmatpush1.msra.mxu0 0.0
      %6812 = vmatprep.subr.mxu0 0.0
      %6813 = vmatpush1.msra.mxu0 0.0
      %6814 = vmatprep.subr.mxu0 0.0
      %6815 = vmatpush1.msra.mxu0 0.0
      %6816 = vmatprep.subr.mxu0 0.0
      %6817 = vmatpush1.msra.mxu0 0.0
      %6818 = vmatprep.subr.mxu0 0.0
      %6819 = vmatpush1.msra.mxu0 0.0
      %6820 = vmatprep.subr.mxu0 0.0
      %6821 = vmatpush1.msra.mxu0 0.0
      %6822 = vmatprep.subr.mxu0 0.0
      %6823 = vmatpush1.msra.mxu0 0.0
      %6824 = vmatprep.subr.mxu0 0.0
      %6825 = vmatpush1.msra.mxu0 0.0
      %6826 = vmatprep.subr.mxu0 0.0
      %6827 = vmatpush1.msra.mxu0 0.0
      %6828 = vmatprep.subr.mxu0 0.0
      %6829 = vmatpush1.msra.mxu0 0.0
      %6830 = vmatprep.subr.mxu0 0.0
      %6831 = vmatpush1.msra.mxu0 0.0
      %6832 = vmatprep.subr.mxu0 0.0
      %6833 = vmatpush1.msra.mxu0 0.0
      %6834 = vmatprep.subr.mxu0 0.0
      %6835 = vmatpush1.msra.mxu0 0.0
      %6836 = vmatprep.mubr.f32.mxu0 0.0
      %6837 = vmatmul.mubr.f32.gmra.mrb[0].mxu0 %v6767
      %v6838 = vpop.f32.mrb[0].mxu0
      %v6839 = vadd.f32 0.0, %v6838
      %v6840 = vpop.f32.mrb[0].mxu0
      %6841 = vdwg.mxu0
      %v6842 = vadd.f32 %v6693, %v6839
      %6843 = vmatprep.subr.mxu0 0.0
      %6844 = vmatpush1.msra.mxu0 %v5461
      %6845 = vmatprep.subr.mxu0 0.0
      %6846 = vmatpush1.msra.mxu0 0.0
      %6847 = vmatprep.subr.mxu0 0.0
      %6848 = vmatpush1.msra.mxu0 0.0
      %6849 = vmatprep.subr.mxu0 0.0
      %6850 = vmatpush1.msra.mxu0 0.0
      %6851 = vmatprep.subr.mxu0 0.0
      %6852 = vmatpush1.msra.mxu0 0.0
      %6853 = vmatprep.subr.mxu0 0.0
      %6854 = vmatpush1.msra.mxu0 0.0
      %6855 = vmatprep.subr.mxu0 0.0
      %6856 = vmatpush1.msra.mxu0 0.0
      %6857 = vmatprep.subr.mxu0 0.0
      %6858 = vmatpush1.msra.mxu0 0.0
      %6859 = vmatprep.subr.mxu0 0.0
      %6860 = vmatpush1.msra.mxu0 0.0
      %6861 = vmatprep.subr.mxu0 0.0
      %6862 = vmatpush1.msra.mxu0 0.0
      %6863 = vmatprep.subr.mxu0 0.0
      %6864 = vmatpush1.msra.mxu0 0.0
      %6865 = vmatprep.subr.mxu0 0.0
      %6866 = vmatpush1.msra.mxu0 0.0
      %6867 = vmatprep.subr.mxu0 0.0
      %6868 = vmatpush1.msra.mxu0 0.0
      %6869 = vmatprep.subr.mxu0 0.0
      %6870 = vmatpush1.msra.mxu0 0.0
      %6871 = vmatprep.subr.mxu0 0.0
      %6872 = vmatpush1.msra.mxu0 0.0
      %6873 = vmatprep.subr.mxu0 0.0
      %6874 = vmatpush1.msra.mxu0 0.0
      %6875 = vmatprep.subr.mxu0 0.0
      %6876 = vmatpush1.msra.mxu0 0.0
      %6877 = vmatprep.subr.mxu0 0.0
      %6878 = vmatpush1.msra.mxu0 0.0
      %6879 = vmatprep.subr.mxu0 0.0
      %6880 = vmatpush1.msra.mxu0 0.0
      %6881 = vmatprep.subr.mxu0 0.0
      %6882 = vmatpush1.msra.mxu0 0.0
      %6883 = vmatprep.subr.mxu0 0.0
      %6884 = vmatpush1.msra.mxu0 0.0
      %6885 = vmatprep.subr.mxu0 0.0
      %6886 = vmatpush1.msra.mxu0 0.0
      %6887 = vmatprep.subr.mxu0 0.0
      %6888 = vmatpush1.msra.mxu0 0.0
      %6889 = vmatprep.subr.mxu0 0.0
      %6890 = vmatpush1.msra.mxu0 0.0
      %6891 = vmatprep.subr.mxu0 0.0
      %6892 = vmatpush1.msra.mxu0 0.0
      %6893 = vmatprep.subr.mxu0 0.0
      %6894 = vmatpush1.msra.mxu0 0.0
      %6895 = vmatprep.subr.mxu0 0.0
      %6896 = vmatpush1.msra.mxu0 0.0
      %6897 = vmatprep.subr.mxu0 0.0
      %6898 = vmatpush1.msra.mxu0 0.0
      %6899 = vmatprep.subr.mxu0 0.0
      %6900 = vmatpush1.msra.mxu0 0.0
      %6901 = vmatprep.subr.mxu0 0.0
      %6902 = vmatpush1.msra.mxu0 0.0
      %6903 = vmatprep.subr.mxu0 0.0
      %6904 = vmatpush1.msra.mxu0 0.0
      %6905 = vmatprep.subr.mxu0 0.0
      %6906 = vmatpush1.msra.mxu0 0.0
      %6907 = vmatprep.mubr.f32.mxu0 0.0
      %6908 = vmatmul.mubr.f32.gmra.mrb[0].mxu0 %v6539
      %v6909 = vpop.f32.mrb[0].mxu0
      %v6910 = vadd.f32 0.0, %v6909
      %v6911 = vpop.f32.mrb[0].mxu0
      %6912 = vdwg.mxu0
      %s6913 = scalar_lea.vmem %s10, 8
      %v6914 = vld [vmem:[%s6913] sm:$0xf]
      %v6916 = vsel %vm5143, %v6914, 0
      %v6919 = vsel %vm5147, %v6910, 0
      %6921 = vmatprep.subr.mxu0 0.0
      %6922 = vmatpush1.msra.mxu0 %v6919
      %6923 = vmatprep.subr.mxu0 0.0
      %6924 = vmatpush1.msra.mxu0 0.0
      %6925 = vmatprep.subr.mxu0 0.0
      %6926 = vmatpush1.msra.mxu0 0.0
      %6927 = vmatprep.subr.mxu0 0.0
      %6928 = vmatpush1.msra.mxu0 0.0
      %6929 = vmatprep.subr.mxu0 0.0
      %6930 = vmatpush1.msra.mxu0 0.0
      %6931 = vmatprep.subr.mxu0 0.0
      %6932 = vmatpush1.msra.mxu0 0.0
      %6933 = vmatprep.subr.mxu0 0.0
      %6934 = vmatpush1.msra.mxu0 0.0
      %6935 = vmatprep.subr.mxu0 0.0
      %6936 = vmatpush1.msra.mxu0 0.0
      %6937 = vmatprep.subr.mxu0 0.0
      %6938 = vmatpush1.msra.mxu0 0.0
      %6939 = vmatprep.subr.mxu0 0.0
      %6940 = vmatpush1.msra.mxu0 0.0
      %6941 = vmatprep.subr.mxu0 0.0
      %6942 = vmatpush1.msra.mxu0 0.0
      %6943 = vmatprep.subr.mxu0 0.0
      %6944 = vmatpush1.msra.mxu0 0.0
      %6945 = vmatprep.subr.mxu0 0.0
      %6946 = vmatpush1.msra.mxu0 0.0
      %6947 = vmatprep.subr.mxu0 0.0
      %6948 = vmatpush1.msra.mxu0 0.0
      %6949 = vmatprep.subr.mxu0 0.0
      %6950 = vmatpush1.msra.mxu0 0.0
      %6951 = vmatprep.subr.mxu0 0.0
      %6952 = vmatpush1.msra.mxu0 0.0
      %6953 = vmatprep.subr.mxu0 0.0
      %6954 = vmatpush1.msra.mxu0 0.0
      %6955 = vmatprep.subr.mxu0 0.0
      %6956 = vmatpush1.msra.mxu0 0.0
      %6957 = vmatprep.subr.mxu0 0.0
      %6958 = vmatpush1.msra.mxu0 0.0
      %6959 = vmatprep.subr.mxu0 0.0
      %6960 = vmatpush1.msra.mxu0 0.0
      %6961 = vmatprep.subr.mxu0 0.0
      %6962 = vmatpush1.msra.mxu0 0.0
      %6963 = vmatprep.subr.mxu0 0.0
      %6964 = vmatpush1.msra.mxu0 0.0
      %6965 = vmatprep.subr.mxu0 0.0
      %6966 = vmatpush1.msra.mxu0 0.0
      %6967 = vmatprep.subr.mxu0 0.0
      %6968 = vmatpush1.msra.mxu0 0.0
      %6969 = vmatprep.subr.mxu0 0.0
      %6970 = vmatpush1.msra.mxu0 0.0
      %6971 = vmatprep.subr.mxu0 0.0
      %6972 = vmatpush1.msra.mxu0 0.0
      %6973 = vmatprep.subr.mxu0 0.0
      %6974 = vmatpush1.msra.mxu0 0.0
      %6975 = vmatprep.subr.mxu0 0.0
      %6976 = vmatpush1.msra.mxu0 0.0
      %6977 = vmatprep.subr.mxu0 0.0
      %6978 = vmatpush1.msra.mxu0 0.0
      %6979 = vmatprep.subr.mxu0 0.0
      %6980 = vmatpush1.msra.mxu0 0.0
      %6981 = vmatprep.subr.mxu0 0.0
      %6982 = vmatpush1.msra.mxu0 0.0
      %6983 = vmatprep.subr.mxu0 0.0
      %6984 = vmatpush1.msra.mxu0 0.0
      %6985 = vmatprep.mubr.f32.mxu0 0.0
      %6986 = vmatmul.mubr.f32.gmra.mrb[0].mxu0 %v6916
      %v6987 = vpop.f32.mrb[0].mxu0
      %v6988 = vadd.f32 0.0, %v6987
      %v6989 = vpop.f32.mrb[0].mxu0
      %6990 = vdwg.mxu0
      %v6991 = vadd.f32 %v6842, %v6988
      %6992 = vmatprep.subr.mxu0 0.0
      %6993 = vmatpush1.msra.mxu0 %v5615
      %6994 = vmatprep.subr.mxu0 0.0
      %6995 = vmatpush1.msra.mxu0 0.0
      %6996 = vmatprep.subr.mxu0 0.0
      %6997 = vmatpush1.msra.mxu0 0.0
      %6998 = vmatprep.subr.mxu0 0.0
      %6999 = vmatpush1.msra.mxu0 0.0
      %7000 = vmatprep.subr.mxu0 0.0
      %7001 = vmatpush1.msra.mxu0 0.0
      %7002 = vmatprep.subr.mxu0 0.0
      %7003 = vmatpush1.msra.mxu0 0.0
      %7004 = vmatprep.subr.mxu0 0.0
      %7005 = vmatpush1.msra.mxu0 0.0
      %7006 = vmatprep.subr.mxu0 0.0
      %7007 = vmatpush1.msra.mxu0 0.0
      %7008 = vmatprep.subr.mxu0 0.0
      %7009 = vmatpush1.msra.mxu0 0.0
      %7010 = vmatprep.subr.mxu0 0.0
      %7011 = vmatpush1.msra.mxu0 0.0
      %7012 = vmatprep.subr.mxu0 0.0
      %7013 = vmatpush1.msra.mxu0 0.0
      %7014 = vmatprep.subr.mxu0 0.0
      %7015 = vmatpush1.msra.mxu0 0.0
      %7016 = vmatprep.subr.mxu0 0.0
      %7017 = vmatpush1.msra.mxu0 0.0
      %7018 = vmatprep.subr.mxu0 0.0
      %7019 = vmatpush1.msra.mxu0 0.0
      %7020 = vmatprep.subr.mxu0 0.0
      %7021 = vmatpush1.msra.mxu0 0.0
      %7022 = vmatprep.subr.mxu0 0.0
      %7023 = vmatpush1.msra.mxu0 0.0
      %7024 = vmatprep.subr.mxu0 0.0
      %7025 = vmatpush1.msra.mxu0 0.0
      %7026 = vmatprep.subr.mxu0 0.0
      %7027 = vmatpush1.msra.mxu0 0.0
      %7028 = vmatprep.subr.mxu0 0.0
      %7029 = vmatpush1.msra.mxu0 0.0
      %7030 = vmatprep.subr.mxu0 0.0
      %7031 = vmatpush1.msra.mxu0 0.0
      %7032 = vmatprep.subr.mxu0 0.0
      %7033 = vmatpush1.msra.mxu0 0.0
      %7034 = vmatprep.subr.mxu0 0.0
      %7035 = vmatpush1.msra.mxu0 0.0
      %7036 = vmatprep.subr.mxu0 0.0
      %7037 = vmatpush1.msra.mxu0 0.0
      %7038 = vmatprep.subr.mxu0 0.0
      %7039 = vmatpush1.msra.mxu0 0.0
      %7040 = vmatprep.subr.mxu0 0.0
      %7041 = vmatpush1.msra.mxu0 0.0
      %7042 = vmatprep.subr.mxu0 0.0
      %7043 = vmatpush1.msra.mxu0 0.0
      %7044 = vmatprep.subr.mxu0 0.0
      %7045 = vmatpush1.msra.mxu0 0.0
      %7046 = vmatprep.subr.mxu0 0.0
      %7047 = vmatpush1.msra.mxu0 0.0
      %7048 = vmatprep.subr.mxu0 0.0
      %7049 = vmatpush1.msra.mxu0 0.0
      %7050 = vmatprep.subr.mxu0 0.0
      %7051 = vmatpush1.msra.mxu0 0.0
      %7052 = vmatprep.subr.mxu0 0.0
      %7053 = vmatpush1.msra.mxu0 0.0
      %7054 = vmatprep.subr.mxu0 0.0
      %7055 = vmatpush1.msra.mxu0 0.0
      %7056 = vmatprep.mubr.f32.mxu0 0.0
      %7057 = vmatmul.mubr.f32.gmra.mrb[0].mxu0 %v6539
      %v7058 = vpop.f32.mrb[0].mxu0
      %v7059 = vadd.f32 0.0, %v7058
      %v7060 = vpop.f32.mrb[0].mxu0
      %7061 = vdwg.mxu0
      %s7062 = scalar_lea.vmem %s10, 12
      %v7063 = vld [vmem:[%s7062] sm:$0xf]
      %v7065 = vsel %vm5143, %v7063, 0
      %v7068 = vsel %vm5147, %v7059, 0
      %7070 = vmatprep.subr.mxu0 0.0
      %7071 = vmatpush1.msra.mxu0 %v7068
      %7072 = vmatprep.subr.mxu0 0.0
      %7073 = vmatpush1.msra.mxu0 0.0
      %7074 = vmatprep.subr.mxu0 0.0
      %7075 = vmatpush1.msra.mxu0 0.0
      %7076 = vmatprep.subr.mxu0 0.0
      %7077 = vmatpush1.msra.mxu0 0.0
      %7078 = vmatprep.subr.mxu0 0.0
      %7079 = vmatpush1.msra.mxu0 0.0
      %7080 = vmatprep.subr.mxu0 0.0
      %7081 = vmatpush1.msra.mxu0 0.0
      %7082 = vmatprep.subr.mxu0 0.0
      %7083 = vmatpush1.msra.mxu0 0.0
      %7084 = vmatprep.subr.mxu0 0.0
      %7085 = vmatpush1.msra.mxu0 0.0
      %7086 = vmatprep.subr.mxu0 0.0
      %7087 = vmatpush1.msra.mxu0 0.0
      %7088 = vmatprep.subr.mxu0 0.0
      %7089 = vmatpush1.msra.mxu0 0.0
      %7090 = vmatprep.subr.mxu0 0.0
      %7091 = vmatpush1.msra.mxu0 0.0
      %7092 = vmatprep.subr.mxu0 0.0
      %7093 = vmatpush1.msra.mxu0 0.0
      %7094 = vmatprep.subr.mxu0 0.0
      %7095 = vmatpush1.msra.mxu0 0.0
      %7096 = vmatprep.subr.mxu0 0.0
      %7097 = vmatpush1.msra.mxu0 0.0
      %7098 = vmatprep.subr.mxu0 0.0
      %7099 = vmatpush1.msra.mxu0 0.0
      %7100 = vmatprep.subr.mxu0 0.0
      %7101 = vmatpush1.msra.mxu0 0.0
      %7102 = vmatprep.subr.mxu0 0.0
      %7103 = vmatpush1.msra.mxu0 0.0
      %7104 = vmatprep.subr.mxu0 0.0
      %7105 = vmatpush1.msra.mxu0 0.0
      %7106 = vmatprep.subr.mxu0 0.0
      %7107 = vmatpush1.msra.mxu0 0.0
      %7108 = vmatprep.subr.mxu0 0.0
      %7109 = vmatpush1.msra.mxu0 0.0
      %7110 = vmatprep.subr.mxu0 0.0
      %7111 = vmatpush1.msra.mxu0 0.0
      %7112 = vmatprep.subr.mxu0 0.0
      %7113 = vmatpush1.msra.mxu0 0.0
      %7114 = vmatprep.subr.mxu0 0.0
      %7115 = vmatpush1.msra.mxu0 0.0
      %7116 = vmatprep.subr.mxu0 0.0
      %7117 = vmatpush1.msra.mxu0 0.0
      %7118 = vmatprep.subr.mxu0 0.0
      %7119 = vmatpush1.msra.mxu0 0.0
      %7120 = vmatprep.subr.mxu0 0.0
      %7121 = vmatpush1.msra.mxu0 0.0
      %7122 = vmatprep.subr.mxu0 0.0
      %7123 = vmatpush1.msra.mxu0 0.0
      %7124 = vmatprep.subr.mxu0 0.0
      %7125 = vmatpush1.msra.mxu0 0.0
      %7126 = vmatprep.subr.mxu0 0.0
      %7127 = vmatpush1.msra.mxu0 0.0
      %7128 = vmatprep.subr.mxu0 0.0
      %7129 = vmatpush1.msra.mxu0 0.0
      %7130 = vmatprep.subr.mxu0 0.0
      %7131 = vmatpush1.msra.mxu0 0.0
      %7132 = vmatprep.subr.mxu0 0.0
      %7133 = vmatpush1.msra.mxu0 0.0
      %7134 = vmatprep.mubr.f32.mxu0 0.0
      %7135 = vmatmul.mubr.f32.gmra.mrb[0].mxu0 %v7065
      %v7136 = vpop.f32.mrb[0].mxu0
      %v7137 = vadd.f32 0.0, %v7136
      %v7138 = vpop.f32.mrb[0].mxu0
      %7139 = vdwg.mxu0
      %v7140 = vadd.f32 %v6991, %v7137
      %7141 = vmatprep.subr.mxu0 0.0
      %7142 = vmatpush1.msra.mxu0 %v5769
      %7143 = vmatprep.subr.mxu0 0.0
      %7144 = vmatpush1.msra.mxu0 0.0
      %7145 = vmatprep.subr.mxu0 0.0
      %7146 = vmatpush1.msra.mxu0 0.0
      %7147 = vmatprep.subr.mxu0 0.0
      %7148 = vmatpush1.msra.mxu0 0.0
      %7149 = vmatprep.subr.mxu0 0.0
      %7150 = vmatpush1.msra.mxu0 0.0
      %7151 = vmatprep.subr.mxu0 0.0
      %7152 = vmatpush1.msra.mxu0 0.0
      %7153 = vmatprep.subr.mxu0 0.0
      %7154 = vmatpush1.msra.mxu0 0.0
      %7155 = vmatprep.subr.mxu0 0.0
      %7156 = vmatpush1.msra.mxu0 0.0
      %7157 = vmatprep.subr.mxu0 0.0
      %7158 = vmatpush1.msra.mxu0 0.0
      %7159 = vmatprep.subr.mxu0 0.0
      %7160 = vmatpush1.msra.mxu0 0.0
      %7161 = vmatprep.subr.mxu0 0.0
      %7162 = vmatpush1.msra.mxu0 0.0
      %7163 = vmatprep.subr.mxu0 0.0
      %7164 = vmatpush1.msra.mxu0 0.0
      %7165 = vmatprep.subr.mxu0 0.0
      %7166 = vmatpush1.msra.mxu0 0.0
      %7167 = vmatprep.subr.mxu0 0.0
      %7168 = vmatpush1.msra.mxu0 0.0
      %7169 = vmatprep.subr.mxu0 0.0
      %7170 = vmatpush1.msra.mxu0 0.0
      %7171 = vmatprep.subr.mxu0 0.0
      %7172 = vmatpush1.msra.mxu0 0.0
      %7173 = vmatprep.subr.mxu0 0.0
      %7174 = vmatpush1.msra.mxu0 0.0
      %7175 = vmatprep.subr.mxu0 0.0
      %7176 = vmatpush1.msra.mxu0 0.0
      %7177 = vmatprep.subr.mxu0 0.0
      %7178 = vmatpush1.msra.mxu0 0.0
      %7179 = vmatprep.subr.mxu0 0.0
      %7180 = vmatpush1.msra.mxu0 0.0
      %7181 = vmatprep.subr.mxu0 0.0
      %7182 = vmatpush1.msra.mxu0 0.0
      %7183 = vmatprep.subr.mxu0 0.0
      %7184 = vmatpush1.msra.mxu0 0.0
      %7185 = vmatprep.subr.mxu0 0.0
      %7186 = vmatpush1.msra.mxu0 0.0
      %7187 = vmatprep.subr.mxu0 0.0
      %7188 = vmatpush1.msra.mxu0 0.0
      %7189 = vmatprep.subr.mxu0 0.0
      %7190 = vmatpush1.msra.mxu0 0.0
      %7191 = vmatprep.subr.mxu0 0.0
      %7192 = vmatpush1.msra.mxu0 0.0
      %7193 = vmatprep.subr.mxu0 0.0
      %7194 = vmatpush1.msra.mxu0 0.0
      %7195 = vmatprep.subr.mxu0 0.0
      %7196 = vmatpush1.msra.mxu0 0.0
      %7197 = vmatprep.subr.mxu0 0.0
      %7198 = vmatpush1.msra.mxu0 0.0
      %7199 = vmatprep.subr.mxu0 0.0
      %7200 = vmatpush1.msra.mxu0 0.0
      %7201 = vmatprep.subr.mxu0 0.0
      %7202 = vmatpush1.msra.mxu0 0.0
      %7203 = vmatprep.subr.mxu0 0.0
      %7204 = vmatpush1.msra.mxu0 0.0
      %7205 = vmatprep.mubr.f32.mxu0 0.0
      %7206 = vmatmul.mubr.f32.gmra.mrb[0].mxu0 %v6539
      %v7207 = vpop.f32.mrb[0].mxu0
      %v7208 = vadd.f32 0.0, %v7207
      %v7209 = vpop.f32.mrb[0].mxu0
      %7210 = vdwg.mxu0
      %s7211 = scalar_lea.vmem %s10, 16
      %v7212 = vld [vmem:[%s7211] sm:$0xf]
      %v7214 = vsel %vm5143, %v7212, 0
      %v7217 = vsel %vm5147, %v7208, 0
      %7219 = vmatprep.subr.mxu0 0.0
      %7220 = vmatpush1.msra.mxu0 %v7217
      %7221 = vmatprep.subr.mxu0 0.0
      %7222 = vmatpush1.msra.mxu0 0.0
      %7223 = vmatprep.subr.mxu0 0.0
      %7224 = vmatpush1.msra.mxu0 0.0
      %7225 = vmatprep.subr.mxu0 0.0
      %7226 = vmatpush1.msra.mxu0 0.0
      %7227 = vmatprep.subr.mxu0 0.0
      %7228 = vmatpush1.msra.mxu0 0.0
      %7229 = vmatprep.subr.mxu0 0.0
      %7230 = vmatpush1.msra.mxu0 0.0
      %7231 = vmatprep.subr.mxu0 0.0
      %7232 = vmatpush1.msra.mxu0 0.0
      %7233 = vmatprep.subr.mxu0 0.0
      %7234 = vmatpush1.msra.mxu0 0.0
      %7235 = vmatprep.subr.mxu0 0.0
      %7236 = vmatpush1.msra.mxu0 0.0
      %7237 = vmatprep.subr.mxu0 0.0
      %7238 = vmatpush1.msra.mxu0 0.0
      %7239 = vmatprep.subr.mxu0 0.0
      %7240 = vmatpush1.msra.mxu0 0.0
      %7241 = vmatprep.subr.mxu0 0.0
      %7242 = vmatpush1.msra.mxu0 0.0
      %7243 = vmatprep.subr.mxu0 0.0
      %7244 = vmatpush1.msra.mxu0 0.0
      %7245 = vmatprep.subr.mxu0 0.0
      %7246 = vmatpush1.msra.mxu0 0.0
      %7247 = vmatprep.subr.mxu0 0.0
      %7248 = vmatpush1.msra.mxu0 0.0
      %7249 = vmatprep.subr.mxu0 0.0
      %7250 = vmatpush1.msra.mxu0 0.0
      %7251 = vmatprep.subr.mxu0 0.0
      %7252 = vmatpush1.msra.mxu0 0.0
      %7253 = vmatprep.subr.mxu0 0.0
      %7254 = vmatpush1.msra.mxu0 0.0
      %7255 = vmatprep.subr.mxu0 0.0
      %7256 = vmatpush1.msra.mxu0 0.0
      %7257 = vmatprep.subr.mxu0 0.0
      %7258 = vmatpush1.msra.mxu0 0.0
      %7259 = vmatprep.subr.mxu0 0.0
      %7260 = vmatpush1.msra.mxu0 0.0
      %7261 = vmatprep.subr.mxu0 0.0
      %7262 = vmatpush1.msra.mxu0 0.0
      %7263 = vmatprep.subr.mxu0 0.0
      %7264 = vmatpush1.msra.mxu0 0.0
      %7265 = vmatprep.subr.mxu0 0.0
      %7266 = vmatpush1.msra.mxu0 0.0
      %7267 = vmatprep.subr.mxu0 0.0
      %7268 = vmatpush1.msra.mxu0 0.0
      %7269 = vmatprep.subr.mxu0 0.0
      %7270 = vmatpush1.msra.mxu0 0.0
      %7271 = vmatprep.subr.mxu0 0.0
      %7272 = vmatpush1.msra.mxu0 0.0
      %7273 = vmatprep.subr.mxu0 0.0
      %7274 = vmatpush1.msra.mxu0 0.0
      %7275 = vmatprep.subr.mxu0 0.0
      %7276 = vmatpush1.msra.mxu0 0.0
      %7277 = vmatprep.subr.mxu0 0.0
      %7278 = vmatpush1.msra.mxu0 0.0
      %7279 = vmatprep.subr.mxu0 0.0
      %7280 = vmatpush1.msra.mxu0 0.0
      %7281 = vmatprep.subr.mxu0 0.0
      %7282 = vmatpush1.msra.mxu0 0.0
      %7283 = vmatprep.mubr.f32.mxu0 0.0
      %7284 = vmatmul.mubr.f32.gmra.mrb[0].mxu0 %v7214
      %v7285 = vpop.f32.mrb[0].mxu0
      %v7286 = vadd.f32 0.0, %v7285
      %v7287 = vpop.f32.mrb[0].mxu0
      %7288 = vdwg.mxu0
      %v7289 = vadd.f32 %v7140, %v7286
      %7290 = vmatprep.subr.mxu0 0.0
      %7291 = vmatpush1.msra.mxu0 %v5923
      %7292 = vmatprep.subr.mxu0 0.0
      %7293 = vmatpush1.msra.mxu0 0.0
      %7294 = vmatprep.subr.mxu0 0.0
      %7295 = vmatpush1.msra.mxu0 0.0
      %7296 = vmatprep.subr.mxu0 0.0
      %7297 = vmatpush1.msra.mxu0 0.0
      %7298 = vmatprep.subr.mxu0 0.0
      %7299 = vmatpush1.msra.mxu0 0.0
      %7300 = vmatprep.subr.mxu0 0.0
      %7301 = vmatpush1.msra.mxu0 0.0
      %7302 = vmatprep.subr.mxu0 0.0
      %7303 = vmatpush1.msra.mxu0 0.0
      %7304 = vmatprep.subr.mxu0 0.0
      %7305 = vmatpush1.msra.mxu0 0.0
      %7306 = vmatprep.subr.mxu0 0.0
      %7307 = vmatpush1.msra.mxu0 0.0
      %7308 = vmatprep.subr.mxu0 0.0
      %7309 = vmatpush1.msra.mxu0 0.0
      %7310 = vmatprep.subr.mxu0 0.0
      %7311 = vmatpush1.msra.mxu0 0.0
      %7312 = vmatprep.subr.mxu0 0.0
      %7313 = vmatpush1.msra.mxu0 0.0
      %7314 = vmatprep.subr.mxu0 0.0
      %7315 = vmatpush1.msra.mxu0 0.0
      %7316 = vmatprep.subr.mxu0 0.0
      %7317 = vmatpush1.msra.mxu0 0.0
      %7318 = vmatprep.subr.mxu0 0.0
      %7319 = vmatpush1.msra.mxu0 0.0
      %7320 = vmatprep.subr.mxu0 0.0
      %7321 = vmatpush1.msra.mxu0 0.0
      %7322 = vmatprep.subr.mxu0 0.0
      %7323 = vmatpush1.msra.mxu0 0.0
      %7324 = vmatprep.subr.mxu0 0.0
      %7325 = vmatpush1.msra.mxu0 0.0
      %7326 = vmatprep.subr.mxu0 0.0
      %7327 = vmatpush1.msra.mxu0 0.0
      %7328 = vmatprep.subr.mxu0 0.0
      %7329 = vmatpush1.msra.mxu0 0.0
      %7330 = vmatprep.subr.mxu0 0.0
      %7331 = vmatpush1.msra.mxu0 0.0
      %7332 = vmatprep.subr.mxu0 0.0
      %7333 = vmatpush1.msra.mxu0 0.0
      %7334 = vmatprep.subr.mxu0 0.0
      %7335 = vmatpush1.msra.mxu0 0.0
      %7336 = vmatprep.subr.mxu0 0.0
      %7337 = vmatpush1.msra.mxu0 0.0
      %7338 = vmatprep.subr.mxu0 0.0
      %7339 = vmatpush1.msra.mxu0 0.0
      %7340 = vmatprep.subr.mxu0 0.0
      %7341 = vmatpush1.msra.mxu0 0.0
      %7342 = vmatprep.subr.mxu0 0.0
      %7343 = vmatpush1.msra.mxu0 0.0
      %7344 = vmatprep.subr.mxu0 0.0
      %7345 = vmatpush1.msra.mxu0 0.0
      %7346 = vmatprep.subr.mxu0 0.0
      %7347 = vmatpush1.msra.mxu0 0.0
      %7348 = vmatprep.subr.mxu0 0.0
      %7349 = vmatpush1.msra.mxu0 0.0
      %7350 = vmatprep.subr.mxu0 0.0
      %7351 = vmatpush1.msra.mxu0 0.0
      %7352 = vmatprep.subr.mxu0 0.0
      %7353 = vmatpush1.msra.mxu0 0.0
      %7354 = vmatprep.mubr.f32.mxu0 0.0
      %7355 = vmatmul.mubr.f32.gmra.mrb[0].mxu0 %v6539
      %v7356 = vpop.f32.mrb[0].mxu0
      %v7357 = vadd.f32 0.0, %v7356
      %v7358 = vpop.f32.mrb[0].mxu0
      %7359 = vdwg.mxu0
      %s7360 = scalar_lea.vmem %s10, 20
      %v7361 = vld [vmem:[%s7360] sm:$0xf]
      %v7363 = vsel %vm5143, %v7361, 0
      %v7366 = vsel %vm5147, %v7357, 0
      %7368 = vmatprep.subr.mxu0 0.0
      %7369 = vmatpush1.msra.mxu0 %v7366
      %7370 = vmatprep.subr.mxu0 0.0
      %7371 = vmatpush1.msra.mxu0 0.0
      %7372 = vmatprep.subr.mxu0 0.0
      %7373 = vmatpush1.msra.mxu0 0.0
      %7374 = vmatprep.subr.mxu0 0.0
      %7375 = vmatpush1.msra.mxu0 0.0
      %7376 = vmatprep.subr.mxu0 0.0
      %7377 = vmatpush1.msra.mxu0 0.0
      %7378 = vmatprep.subr.mxu0 0.0
      %7379 = vmatpush1.msra.mxu0 0.0
      %7380 = vmatprep.subr.mxu0 0.0
      %7381 = vmatpush1.msra.mxu0 0.0
      %7382 = vmatprep.subr.mxu0 0.0
      %7383 = vmatpush1.msra.mxu0 0.0
      %7384 = vmatprep.subr.mxu0 0.0
      %7385 = vmatpush1.msra.mxu0 0.0
      %7386 = vmatprep.subr.mxu0 0.0
      %7387 = vmatpush1.msra.mxu0 0.0
      %7388 = vmatprep.subr.mxu0 0.0
      %7389 = vmatpush1.msra.mxu0 0.0
      %7390 = vmatprep.subr.mxu0 0.0
      %7391 = vmatpush1.msra.mxu0 0.0
      %7392 = vmatprep.subr.mxu0 0.0
      %7393 = vmatpush1.msra.mxu0 0.0
      %7394 = vmatprep.subr.mxu0 0.0
      %7395 = vmatpush1.msra.mxu0 0.0
      %7396 = vmatprep.subr.mxu0 0.0
      %7397 = vmatpush1.msra.mxu0 0.0
      %7398 = vmatprep.subr.mxu0 0.0
      %7399 = vmatpush1.msra.mxu0 0.0
      %7400 = vmatprep.subr.mxu0 0.0
      %7401 = vmatpush1.msra.mxu0 0.0
      %7402 = vmatprep.subr.mxu0 0.0
      %7403 = vmatpush1.msra.mxu0 0.0
      %7404 = vmatprep.subr.mxu0 0.0
      %7405 = vmatpush1.msra.mxu0 0.0
      %7406 = vmatprep.subr.mxu0 0.0
      %7407 = vmatpush1.msra.mxu0 0.0
      %7408 = vmatprep.subr.mxu0 0.0
      %7409 = vmatpush1.msra.mxu0 0.0
      %7410 = vmatprep.subr.mxu0 0.0
      %7411 = vmatpush1.msra.mxu0 0.0
      %7412 = vmatprep.subr.mxu0 0.0
      %7413 = vmatpush1.msra.mxu0 0.0
      %7414 = vmatprep.subr.mxu0 0.0
      %7415 = vmatpush1.msra.mxu0 0.0
      %7416 = vmatprep.subr.mxu0 0.0
      %7417 = vmatpush1.msra.mxu0 0.0
      %7418 = vmatprep.subr.mxu0 0.0
      %7419 = vmatpush1.msra.mxu0 0.0
      %7420 = vmatprep.subr.mxu0 0.0
      %7421 = vmatpush1.msra.mxu0 0.0
      %7422 = vmatprep.subr.mxu0 0.0
      %7423 = vmatpush1.msra.mxu0 0.0
      %7424 = vmatprep.subr.mxu0 0.0
      %7425 = vmatpush1.msra.mxu0 0.0
      %7426 = vmatprep.subr.mxu0 0.0
      %7427 = vmatpush1.msra.mxu0 0.0
      %7428 = vmatprep.subr.mxu0 0.0
      %7429 = vmatpush1.msra.mxu0 0.0
      %7430 = vmatprep.subr.mxu0 0.0
      %7431 = vmatpush1.msra.mxu0 0.0
      %7432 = vmatprep.mubr.f32.mxu0 0.0
      %7433 = vmatmul.mubr.f32.gmra.mrb[0].mxu0 %v7363
      %v7434 = vpop.f32.mrb[0].mxu0
      %v7435 = vadd.f32 0.0, %v7434
      %v7436 = vpop.f32.mrb[0].mxu0
      %7437 = vdwg.mxu0
      %v7438 = vadd.f32 %v7289, %v7435
      %7439 = vmatprep.subr.mxu0 0.0
      %7440 = vmatpush1.msra.mxu0 %v6077
      %7441 = vmatprep.subr.mxu0 0.0
      %7442 = vmatpush1.msra.mxu0 0.0
      %7443 = vmatprep.subr.mxu0 0.0
      %7444 = vmatpush1.msra.mxu0 0.0
      %7445 = vmatprep.subr.mxu0 0.0
      %7446 = vmatpush1.msra.mxu0 0.0
      %7447 = vmatprep.subr.mxu0 0.0
      %7448 = vmatpush1.msra.mxu0 0.0
      %7449 = vmatprep.subr.mxu0 0.0
      %7450 = vmatpush1.msra.mxu0 0.0
      %7451 = vmatprep.subr.mxu0 0.0
      %7452 = vmatpush1.msra.mxu0 0.0
      %7453 = vmatprep.subr.mxu0 0.0
      %7454 = vmatpush1.msra.mxu0 0.0
      %7455 = vmatprep.subr.mxu0 0.0
      %7456 = vmatpush1.msra.mxu0 0.0
      %7457 = vmatprep.subr.mxu0 0.0
      %7458 = vmatpush1.msra.mxu0 0.0
      %7459 = vmatprep.subr.mxu0 0.0
      %7460 = vmatpush1.msra.mxu0 0.0
      %7461 = vmatprep.subr.mxu0 0.0
      %7462 = vmatpush1.msra.mxu0 0.0
      %7463 = vmatprep.subr.mxu0 0.0
      %7464 = vmatpush1.msra.mxu0 0.0
      %7465 = vmatprep.subr.mxu0 0.0
      %7466 = vmatpush1.msra.mxu0 0.0
      %7467 = vmatprep.subr.mxu0 0.0
      %7468 = vmatpush1.msra.mxu0 0.0
      %7469 = vmatprep.subr.mxu0 0.0
      %7470 = vmatpush1.msra.mxu0 0.0
      %7471 = vmatprep.subr.mxu0 0.0
      %7472 = vmatpush1.msra.mxu0 0.0
      %7473 = vmatprep.subr.mxu0 0.0
      %7474 = vmatpush1.msra.mxu0 0.0
      %7475 = vmatprep.subr.mxu0 0.0
      %7476 = vmatpush1.msra.mxu0 0.0
      %7477 = vmatprep.subr.mxu0 0.0
      %7478 = vmatpush1.msra.mxu0 0.0
      %7479 = vmatprep.subr.mxu0 0.0
      %7480 = vmatpush1.msra.mxu0 0.0
      %7481 = vmatprep.subr.mxu0 0.0
      %7482 = vmatpush1.msra.mxu0 0.0
      %7483 = vmatprep.subr.mxu0 0.0
      %7484 = vmatpush1.msra.mxu0 0.0
      %7485 = vmatprep.subr.mxu0 0.0
      %7486 = vmatpush1.msra.mxu0 0.0
      %7487 = vmatprep.subr.mxu0 0.0
      %7488 = vmatpush1.msra.mxu0 0.0
      %7489 = vmatprep.subr.mxu0 0.0
      %7490 = vmatpush1.msra.mxu0 0.0
      %7491 = vmatprep.subr.mxu0 0.0
      %7492 = vmatpush1.msra.mxu0 0.0
      %7493 = vmatprep.subr.mxu0 0.0
      %7494 = vmatpush1.msra.mxu0 0.0
      %7495 = vmatprep.subr.mxu0 0.0
      %7496 = vmatpush1.msra.mxu0 0.0
      %7497 = vmatprep.subr.mxu0 0.0
      %7498 = vmatpush1.msra.mxu0 0.0
      %7499 = vmatprep.subr.mxu0 0.0
      %7500 = vmatpush1.msra.mxu0 0.0
      %7501 = vmatprep.subr.mxu0 0.0
      %7502 = vmatpush1.msra.mxu0 0.0
      %7503 = vmatprep.mubr.f32.mxu0 0.0
      %7504 = vmatmul.mubr.f32.gmra.mrb[0].mxu0 %v6539
      %v7505 = vpop.f32.mrb[0].mxu0
      %v7506 = vadd.f32 0.0, %v7505
      %v7507 = vpop.f32.mrb[0].mxu0
      %7508 = vdwg.mxu0
      %s7509 = scalar_lea.vmem %s10, 24
      %v7510 = vld [vmem:[%s7509] sm:$0xf]
      %v7512 = vsel %vm5143, %v7510, 0
      %v7515 = vsel %vm5147, %v7506, 0
      %7517 = vmatprep.subr.mxu0 0.0
      %7518 = vmatpush1.msra.mxu0 %v7515
      %7519 = vmatprep.subr.mxu0 0.0
      %7520 = vmatpush1.msra.mxu0 0.0
      %7521 = vmatprep.subr.mxu0 0.0
      %7522 = vmatpush1.msra.mxu0 0.0
      %7523 = vmatprep.subr.mxu0 0.0
      %7524 = vmatpush1.msra.mxu0 0.0
      %7525 = vmatprep.subr.mxu0 0.0
      %7526 = vmatpush1.msra.mxu0 0.0
      %7527 = vmatprep.subr.mxu0 0.0
      %7528 = vmatpush1.msra.mxu0 0.0
      %7529 = vmatprep.subr.mxu0 0.0
      %7530 = vmatpush1.msra.mxu0 0.0
      %7531 = vmatprep.subr.mxu0 0.0
      %7532 = vmatpush1.msra.mxu0 0.0
      %7533 = vmatprep.subr.mxu0 0.0
      %7534 = vmatpush1.msra.mxu0 0.0
      %7535 = vmatprep.subr.mxu0 0.0
      %7536 = vmatpush1.msra.mxu0 0.0
      %7537 = vmatprep.subr.mxu0 0.0
      %7538 = vmatpush1.msra.mxu0 0.0
      %7539 = vmatprep.subr.mxu0 0.0
      %7540 = vmatpush1.msra.mxu0 0.0
      %7541 = vmatprep.subr.mxu0 0.0
      %7542 = vmatpush1.msra.mxu0 0.0
      %7543 = vmatprep.subr.mxu0 0.0
      %7544 = vmatpush1.msra.mxu0 0.0
      %7545 = vmatprep.subr.mxu0 0.0
      %7546 = vmatpush1.msra.mxu0 0.0
      %7547 = vmatprep.subr.mxu0 0.0
      %7548 = vmatpush1.msra.mxu0 0.0
      %7549 = vmatprep.subr.mxu0 0.0
      %7550 = vmatpush1.msra.mxu0 0.0
      %7551 = vmatprep.subr.mxu0 0.0
      %7552 = vmatpush1.msra.mxu0 0.0
      %7553 = vmatprep.subr.mxu0 0.0
      %7554 = vmatpush1.msra.mxu0 0.0
      %7555 = vmatprep.subr.mxu0 0.0
      %7556 = vmatpush1.msra.mxu0 0.0
      %7557 = vmatprep.subr.mxu0 0.0
      %7558 = vmatpush1.msra.mxu0 0.0
      %7559 = vmatprep.subr.mxu0 0.0
      %7560 = vmatpush1.msra.mxu0 0.0
      %7561 = vmatprep.subr.mxu0 0.0
      %7562 = vmatpush1.msra.mxu0 0.0
      %7563 = vmatprep.subr.mxu0 0.0
      %7564 = vmatpush1.msra.mxu0 0.0
      %7565 = vmatprep.subr.mxu0 0.0
      %7566 = vmatpush1.msra.mxu0 0.0
      %7567 = vmatprep.subr.mxu0 0.0
      %7568 = vmatpush1.msra.mxu0 0.0
      %7569 = vmatprep.subr.mxu0 0.0
      %7570 = vmatpush1.msra.mxu0 0.0
      %7571 = vmatprep.subr.mxu0 0.0
      %7572 = vmatpush1.msra.mxu0 0.0
      %7573 = vmatprep.subr.mxu0 0.0
      %7574 = vmatpush1.msra.mxu0 0.0
      %7575 = vmatprep.subr.mxu0 0.0
      %7576 = vmatpush1.msra.mxu0 0.0
      %7577 = vmatprep.subr.mxu0 0.0
      %7578 = vmatpush1.msra.mxu0 0.0
      %7579 = vmatprep.subr.mxu0 0.0
      %7580 = vmatpush1.msra.mxu0 0.0
      %7581 = vmatprep.mubr.f32.mxu0 0.0
      %7582 = vmatmul.mubr.f32.gmra.mrb[0].mxu0 %v7512
      %v7583 = vpop.f32.mrb[0].mxu0
      %v7584 = vadd.f32 0.0, %v7583
      %v7585 = vpop.f32.mrb[0].mxu0
      %7586 = vdwg.mxu0
      %v7587 = vadd.f32 %v7438, %v7584
      %7588 = vmatprep.subr.mxu0 0.0
      %7589 = vmatpush1.msra.mxu0 %v6231
      %7590 = vmatprep.subr.mxu0 0.0
      %7591 = vmatpush1.msra.mxu0 0.0
      %7592 = vmatprep.subr.mxu0 0.0
      %7593 = vmatpush1.msra.mxu0 0.0
      %7594 = vmatprep.subr.mxu0 0.0
      %7595 = vmatpush1.msra.mxu0 0.0
      %7596 = vmatprep.subr.mxu0 0.0
      %7597 = vmatpush1.msra.mxu0 0.0
      %7598 = vmatprep.subr.mxu0 0.0
      %7599 = vmatpush1.msra.mxu0 0.0
      %7600 = vmatprep.subr.mxu0 0.0
      %7601 = vmatpush1.msra.mxu0 0.0
      %7602 = vmatprep.subr.mxu0 0.0
      %7603 = vmatpush1.msra.mxu0 0.0
      %7604 = vmatprep.subr.mxu0 0.0
      %7605 = vmatpush1.msra.mxu0 0.0
      %7606 = vmatprep.subr.mxu0 0.0
      %7607 = vmatpush1.msra.mxu0 0.0
      %7608 = vmatprep.subr.mxu0 0.0
      %7609 = vmatpush1.msra.mxu0 0.0
      %7610 = vmatprep.subr.mxu0 0.0
      %7611 = vmatpush1.msra.mxu0 0.0
      %7612 = vmatprep.subr.mxu0 0.0
      %7613 = vmatpush1.msra.mxu0 0.0
      %7614 = vmatprep.subr.mxu0 0.0
      %7615 = vmatpush1.msra.mxu0 0.0
      %7616 = vmatprep.subr.mxu0 0.0
      %7617 = vmatpush1.msra.mxu0 0.0
      %7618 = vmatprep.subr.mxu0 0.0
      %7619 = vmatpush1.msra.mxu0 0.0
      %7620 = vmatprep.subr.mxu0 0.0
      %7621 = vmatpush1.msra.mxu0 0.0
      %7622 = vmatprep.subr.mxu0 0.0
      %7623 = vmatpush1.msra.mxu0 0.0
      %7624 = vmatprep.subr.mxu0 0.0
      %7625 = vmatpush1.msra.mxu0 0.0
      %7626 = vmatprep.subr.mxu0 0.0
      %7627 = vmatpush1.msra.mxu0 0.0
      %7628 = vmatprep.subr.mxu0 0.0
      %7629 = vmatpush1.msra.mxu0 0.0
      %7630 = vmatprep.subr.mxu0 0.0
      %7631 = vmatpush1.msra.mxu0 0.0
      %7632 = vmatprep.subr.mxu0 0.0
      %7633 = vmatpush1.msra.mxu0 0.0
      %7634 = vmatprep.subr.mxu0 0.0
      %7635 = vmatpush1.msra.mxu0 0.0
      %7636 = vmatprep.subr.mxu0 0.0
      %7637 = vmatpush1.msra.mxu0 0.0
      %7638 = vmatprep.subr.mxu0 0.0
      %7639 = vmatpush1.msra.mxu0 0.0
      %7640 = vmatprep.subr.mxu0 0.0
      %7641 = vmatpush1.msra.mxu0 0.0
      %7642 = vmatprep.subr.mxu0 0.0
      %7643 = vmatpush1.msra.mxu0 0.0
      %7644 = vmatprep.subr.mxu0 0.0
      %7645 = vmatpush1.msra.mxu0 0.0
      %7646 = vmatprep.subr.mxu0 0.0
      %7647 = vmatpush1.msra.mxu0 0.0
      %7648 = vmatprep.subr.mxu0 0.0
      %7649 = vmatpush1.msra.mxu0 0.0
      %7650 = vmatprep.subr.mxu0 0.0
      %7651 = vmatpush1.msra.mxu0 0.0
      %7652 = vmatprep.mubr.f32.mxu0 0.0
      %7653 = vmatmul.mubr.f32.gmra.mrb[0].mxu0 %v6539
      %v7654 = vpop.f32.mrb[0].mxu0
      %v7655 = vadd.f32 0.0, %v7654
      %v7656 = vpop.f32.mrb[0].mxu0
      %7657 = vdwg.mxu0
      %s7658 = scalar_lea.vmem %s10, 28
      %v7659 = vld [vmem:[%s7658] sm:$0xf]
      %v7661 = vsel %vm5143, %v7659, 0
      %v7664 = vsel %vm5147, %v7655, 0
      %7666 = vmatprep.subr.mxu0 0.0
      %7667 = vmatpush1.msra.mxu0 %v7664
      %7668 = vmatprep.subr.mxu0 0.0
      %7669 = vmatpush1.msra.mxu0 0.0
      %7670 = vmatprep.subr.mxu0 0.0
      %7671 = vmatpush1.msra.mxu0 0.0
      %7672 = vmatprep.subr.mxu0 0.0
      %7673 = vmatpush1.msra.mxu0 0.0
      %7674 = vmatprep.subr.mxu0 0.0
      %7675 = vmatpush1.msra.mxu0 0.0
      %7676 = vmatprep.subr.mxu0 0.0
      %7677 = vmatpush1.msra.mxu0 0.0
      %7678 = vmatprep.subr.mxu0 0.0
      %7679 = vmatpush1.msra.mxu0 0.0
      %7680 = vmatprep.subr.mxu0 0.0
      %7681 = vmatpush1.msra.mxu0 0.0
      %7682 = vmatprep.subr.mxu0 0.0
      %7683 = vmatpush1.msra.mxu0 0.0
      %7684 = vmatprep.subr.mxu0 0.0
      %7685 = vmatpush1.msra.mxu0 0.0
      %7686 = vmatprep.subr.mxu0 0.0
      %7687 = vmatpush1.msra.mxu0 0.0
      %7688 = vmatprep.subr.mxu0 0.0
      %7689 = vmatpush1.msra.mxu0 0.0
      %7690 = vmatprep.subr.mxu0 0.0
      %7691 = vmatpush1.msra.mxu0 0.0
      %7692 = vmatprep.subr.mxu0 0.0
      %7693 = vmatpush1.msra.mxu0 0.0
      %7694 = vmatprep.subr.mxu0 0.0
      %7695 = vmatpush1.msra.mxu0 0.0
      %7696 = vmatprep.subr.mxu0 0.0
      %7697 = vmatpush1.msra.mxu0 0.0
      %7698 = vmatprep.subr.mxu0 0.0
      %7699 = vmatpush1.msra.mxu0 0.0
      %7700 = vmatprep.subr.mxu0 0.0
      %7701 = vmatpush1.msra.mxu0 0.0
      %7702 = vmatprep.subr.mxu0 0.0
      %7703 = vmatpush1.msra.mxu0 0.0
      %7704 = vmatprep.subr.mxu0 0.0
      %7705 = vmatpush1.msra.mxu0 0.0
      %7706 = vmatprep.subr.mxu0 0.0
      %7707 = vmatpush1.msra.mxu0 0.0
      %7708 = vmatprep.subr.mxu0 0.0
      %7709 = vmatpush1.msra.mxu0 0.0
      %7710 = vmatprep.subr.mxu0 0.0
      %7711 = vmatpush1.msra.mxu0 0.0
      %7712 = vmatprep.subr.mxu0 0.0
      %7713 = vmatpush1.msra.mxu0 0.0
      %7714 = vmatprep.subr.mxu0 0.0
      %7715 = vmatpush1.msra.mxu0 0.0
      %7716 = vmatprep.subr.mxu0 0.0
      %7717 = vmatpush1.msra.mxu0 0.0
      %7718 = vmatprep.subr.mxu0 0.0
      %7719 = vmatpush1.msra.mxu0 0.0
      %7720 = vmatprep.subr.mxu0 0.0
      %7721 = vmatpush1.msra.mxu0 0.0
      %7722 = vmatprep.subr.mxu0 0.0
      %7723 = vmatpush1.msra.mxu0 0.0
      %7724 = vmatprep.subr.mxu0 0.0
      %7725 = vmatpush1.msra.mxu0 0.0
      %7726 = vmatprep.subr.mxu0 0.0
      %7727 = vmatpush1.msra.mxu0 0.0
      %7728 = vmatprep.subr.mxu0 0.0
      %7729 = vmatpush1.msra.mxu0 0.0
      %7730 = vmatprep.mubr.f32.mxu0 0.0
      %7731 = vmatmul.mubr.f32.gmra.mrb[0].mxu0 %v7661
      %v7732 = vpop.f32.mrb[0].mxu0
      %v7733 = vadd.f32 0.0, %v7732
      %v7734 = vpop.f32.mrb[0].mxu0
      %7735 = vdwg.mxu0
      %v7736 = vadd.f32 %v7587, %v7733
      %7737 = vmatprep.subr.mxu0 0.0
      %7738 = vmatpush1.msra.mxu0 %v6385
      %7739 = vmatprep.subr.mxu0 0.0
      %7740 = vmatpush1.msra.mxu0 0.0
      %7741 = vmatprep.subr.mxu0 0.0
      %7742 = vmatpush1.msra.mxu0 0.0
      %7743 = vmatprep.subr.mxu0 0.0
      %7744 = vmatpush1.msra.mxu0 0.0
      %7745 = vmatprep.subr.mxu0 0.0
      %7746 = vmatpush1.msra.mxu0 0.0
      %7747 = vmatprep.subr.mxu0 0.0
      %7748 = vmatpush1.msra.mxu0 0.0
      %7749 = vmatprep.subr.mxu0 0.0
      %7750 = vmatpush1.msra.mxu0 0.0
      %7751 = vmatprep.subr.mxu0 0.0
      %7752 = vmatpush1.msra.mxu0 0.0
      %7753 = vmatprep.subr.mxu0 0.0
      %7754 = vmatpush1.msra.mxu0 0.0
      %7755 = vmatprep.subr.mxu0 0.0
      %7756 = vmatpush1.msra.mxu0 0.0
      %7757 = vmatprep.subr.mxu0 0.0
      %7758 = vmatpush1.msra.mxu0 0.0
      %7759 = vmatprep.subr.mxu0 0.0
      %7760 = vmatpush1.msra.mxu0 0.0
      %7761 = vmatprep.subr.mxu0 0.0
      %7762 = vmatpush1.msra.mxu0 0.0
      %7763 = vmatprep.subr.mxu0 0.0
      %7764 = vmatpush1.msra.mxu0 0.0
      %7765 = vmatprep.subr.mxu0 0.0
      %7766 = vmatpush1.msra.mxu0 0.0
      %7767 = vmatprep.subr.mxu0 0.0
      %7768 = vmatpush1.msra.mxu0 0.0
      %7769 = vmatprep.subr.mxu0 0.0
      %7770 = vmatpush1.msra.mxu0 0.0
      %7771 = vmatprep.subr.mxu0 0.0
      %7772 = vmatpush1.msra.mxu0 0.0
      %7773 = vmatprep.subr.mxu0 0.0
      %7774 = vmatpush1.msra.mxu0 0.0
      %7775 = vmatprep.subr.mxu0 0.0
      %7776 = vmatpush1.msra.mxu0 0.0
      %7777 = vmatprep.subr.mxu0 0.0
      %7778 = vmatpush1.msra.mxu0 0.0
      %7779 = vmatprep.subr.mxu0 0.0
      %7780 = vmatpush1.msra.mxu0 0.0
      %7781 = vmatprep.subr.mxu0 0.0
      %7782 = vmatpush1.msra.mxu0 0.0
      %7783 = vmatprep.subr.mxu0 0.0
      %7784 = vmatpush1.msra.mxu0 0.0
      %7785 = vmatprep.subr.mxu0 0.0
      %7786 = vmatpush1.msra.mxu0 0.0
      %7787 = vmatprep.subr.mxu0 0.0
      %7788 = vmatpush1.msra.mxu0 0.0
      %7789 = vmatprep.subr.mxu0 0.0
      %7790 = vmatpush1.msra.mxu0 0.0
      %7791 = vmatprep.subr.mxu0 0.0
      %7792 = vmatpush1.msra.mxu0 0.0
      %7793 = vmatprep.subr.mxu0 0.0
      %7794 = vmatpush1.msra.mxu0 0.0
      %7795 = vmatprep.subr.mxu0 0.0
      %7796 = vmatpush1.msra.mxu0 0.0
      %7797 = vmatprep.subr.mxu0 0.0
      %7798 = vmatpush1.msra.mxu0 0.0
      %7799 = vmatprep.subr.mxu0 0.0
      %7800 = vmatpush1.msra.mxu0 0.0
      %7801 = vmatprep.mubr.f32.mxu0 0.0
      %7802 = vmatmul.mubr.f32.gmra.mrb[0].mxu0 %v6539
      %v7803 = vpop.f32.mrb[0].mxu0
      %v7804 = vadd.f32 0.0, %v7803
      %v7805 = vpop.f32.mrb[0].mxu0
      %7806 = vdwg.mxu0
      %s7807 = scalar_lea.vmem %s10, 32
      %v7808 = vld [vmem:[%s7807] sm:$0xf]
      %v7810 = vsel %vm5143, %v7808, 0
      %v7813 = vsel %vm5147, %v7804, 0
      %7815 = vmatprep.subr.mxu0 0.0
      %7816 = vmatpush1.msra.mxu0 %v7813
      %7817 = vmatprep.subr.mxu0 0.0
      %7818 = vmatpush1.msra.mxu0 0.0
      %7819 = vmatprep.subr.mxu0 0.0
      %7820 = vmatpush1.msra.mxu0 0.0
      %7821 = vmatprep.subr.mxu0 0.0
      %7822 = vmatpush1.msra.mxu0 0.0
      %7823 = vmatprep.subr.mxu0 0.0
      %7824 = vmatpush1.msra.mxu0 0.0
      %7825 = vmatprep.subr.mxu0 0.0
      %7826 = vmatpush1.msra.mxu0 0.0
      %7827 = vmatprep.subr.mxu0 0.0
      %7828 = vmatpush1.msra.mxu0 0.0
      %7829 = vmatprep.subr.mxu0 0.0
      %7830 = vmatpush1.msra.mxu0 0.0
      %7831 = vmatprep.subr.mxu0 0.0
      %7832 = vmatpush1.msra.mxu0 0.0
      %7833 = vmatprep.subr.mxu0 0.0
      %7834 = vmatpush1.msra.mxu0 0.0
      %7835 = vmatprep.subr.mxu0 0.0
      %7836 = vmatpush1.msra.mxu0 0.0
      %7837 = vmatprep.subr.mxu0 0.0
      %7838 = vmatpush1.msra.mxu0 0.0
      %7839 = vmatprep.subr.mxu0 0.0
      %7840 = vmatpush1.msra.mxu0 0.0
      %7841 = vmatprep.subr.mxu0 0.0
      %7842 = vmatpush1.msra.mxu0 0.0
      %7843 = vmatprep.subr.mxu0 0.0
      %7844 = vmatpush1.msra.mxu0 0.0
      %7845 = vmatprep.subr.mxu0 0.0
      %7846 = vmatpush1.msra.mxu0 0.0
      %7847 = vmatprep.subr.mxu0 0.0
      %7848 = vmatpush1.msra.mxu0 0.0
      %7849 = vmatprep.subr.mxu0 0.0
      %7850 = vmatpush1.msra.mxu0 0.0
      %7851 = vmatprep.subr.mxu0 0.0
      %7852 = vmatpush1.msra.mxu0 0.0
      %7853 = vmatprep.subr.mxu0 0.0
      %7854 = vmatpush1.msra.mxu0 0.0
      %7855 = vmatprep.subr.mxu0 0.0
      %7856 = vmatpush1.msra.mxu0 0.0
      %7857 = vmatprep.subr.mxu0 0.0
      %7858 = vmatpush1.msra.mxu0 0.0
      %7859 = vmatprep.subr.mxu0 0.0
      %7860 = vmatpush1.msra.mxu0 0.0
      %7861 = vmatprep.subr.mxu0 0.0
      %7862 = vmatpush1.msra.mxu0 0.0
      %7863 = vmatprep.subr.mxu0 0.0
      %7864 = vmatpush1.msra.mxu0 0.0
      %7865 = vmatprep.subr.mxu0 0.0
      %7866 = vmatpush1.msra.mxu0 0.0
      %7867 = vmatprep.subr.mxu0 0.0
      %7868 = vmatpush1.msra.mxu0 0.0
      %7869 = vmatprep.subr.mxu0 0.0
      %7870 = vmatpush1.msra.mxu0 0.0
      %7871 = vmatprep.subr.mxu0 0.0
      %7872 = vmatpush1.msra.mxu0 0.0
      %7873 = vmatprep.subr.mxu0 0.0
      %7874 = vmatpush1.msra.mxu0 0.0
      %7875 = vmatprep.subr.mxu0 0.0
      %7876 = vmatpush1.msra.mxu0 0.0
      %7877 = vmatprep.subr.mxu0 0.0
      %7878 = vmatpush1.msra.mxu0 0.0
      %7879 = vmatprep.mubr.f32.mxu0 0.0
      %7880 = vmatmul.mubr.f32.gmra.mrb[0].mxu0 %v7810
      %v7881 = vpop.f32.mrb[0].mxu0
      %v7882 = vadd.f32 0.0, %v7881
      %v7883 = vpop.f32.mrb[0].mxu0
      %7884 = vdwg.mxu0
      %v7885 = vadd.f32 %v7736, %v7882
      %v7886 = vmax.f32 %v7885, 0.0
      %v7887 = vld [vmem:[%s13] sm:$0xf]
      %v7889 = vsel %vm5143, %v7886, 0
      %7891 = vmatprep.subr.mxu0 0.0
      %7892 = vmatpush1.msra.mxu0 %v5149
      %7893 = vmatprep.subr.mxu0 0.0
      %7894 = vmatpush1.msra.mxu0 0.0
      %7895 = vmatprep.subr.mxu0 0.0
      %7896 = vmatpush1.msra.mxu0 0.0
      %7897 = vmatprep.subr.mxu0 0.0
      %7898 = vmatpush1.msra.mxu0 0.0
      %7899 = vmatprep.subr.mxu0 0.0
      %7900 = vmatpush1.msra.mxu0 0.0
      %7901 = vmatprep.subr.mxu0 0.0
      %7902 = vmatpush1.msra.mxu0 0.0
      %7903 = vmatprep.subr.mxu0 0.0
      %7904 = vmatpush1.msra.mxu0 0.0
      %7905 = vmatprep.subr.mxu0 0.0
      %7906 = vmatpush1.msra.mxu0 0.0
      %7907 = vmatprep.subr.mxu0 0.0
      %7908 = vmatpush1.msra.mxu0 0.0
      %7909 = vmatprep.subr.mxu0 0.0
      %7910 = vmatpush1.msra.mxu0 0.0
      %7911 = vmatprep.subr.mxu0 0.0
      %7912 = vmatpush1.msra.mxu0 0.0
      %7913 = vmatprep.subr.mxu0 0.0
      %7914 = vmatpush1.msra.mxu0 0.0
      %7915 = vmatprep.subr.mxu0 0.0
      %7916 = vmatpush1.msra.mxu0 0.0
      %7917 = vmatprep.subr.mxu0 0.0
      %7918 = vmatpush1.msra.mxu0 0.0
      %7919 = vmatprep.subr.mxu0 0.0
      %7920 = vmatpush1.msra.mxu0 0.0
      %7921 = vmatprep.subr.mxu0 0.0
      %7922 = vmatpush1.msra.mxu0 0.0
      %7923 = vmatprep.subr.mxu0 0.0
      %7924 = vmatpush1.msra.mxu0 0.0
      %7925 = vmatprep.subr.mxu0 0.0
      %7926 = vmatpush1.msra.mxu0 0.0
      %7927 = vmatprep.subr.mxu0 0.0
      %7928 = vmatpush1.msra.mxu0 0.0
      %7929 = vmatprep.subr.mxu0 0.0
      %7930 = vmatpush1.msra.mxu0 0.0
      %7931 = vmatprep.subr.mxu0 0.0
      %7932 = vmatpush1.msra.mxu0 0.0
      %7933 = vmatprep.subr.mxu0 0.0
      %7934 = vmatpush1.msra.mxu0 0.0
      %7935 = vmatprep.subr.mxu0 0.0
      %7936 = vmatpush1.msra.mxu0 0.0
      %7937 = vmatprep.subr.mxu0 0.0
      %7938 = vmatpush1.msra.mxu0 0.0
      %7939 = vmatprep.subr.mxu0 0.0
      %7940 = vmatpush1.msra.mxu0 0.0
      %7941 = vmatprep.subr.mxu0 0.0
      %7942 = vmatpush1.msra.mxu0 0.0
      %7943 = vmatprep.subr.mxu0 0.0
      %7944 = vmatpush1.msra.mxu0 0.0
      %7945 = vmatprep.subr.mxu0 0.0
      %7946 = vmatpush1.msra.mxu0 0.0
      %7947 = vmatprep.subr.mxu0 0.0
      %7948 = vmatpush1.msra.mxu0 0.0
      %7949 = vmatprep.subr.mxu0 0.0
      %7950 = vmatpush1.msra.mxu0 0.0
      %7951 = vmatprep.subr.mxu0 0.0
      %7952 = vmatpush1.msra.mxu0 0.0
      %7953 = vmatprep.subr.mxu0 0.0
      %7954 = vmatpush1.msra.mxu0 0.0
      %7955 = vmatprep.mubr.f32.mxu0 0.0
      %7956 = vmatmul.mubr.f32.gmra.mrb[0].mxu0 %v7889
      %v7957 = vpop.f32.mrb[0].mxu0
      %v7958 = vadd.f32 0.0, %v7957
      %v7959 = vpop.f32.mrb[0].mxu0
      %7960 = vdwg.mxu0
      %v7961 = vld [vmem:[%s12] sm:$0xf]
      %v7963 = vsel %vm5143, %v7961, 0
      %v7966 = vsel %vm5147, %v7958, 0
      %7968 = vmatprep.subr.mxu0 0.0
      %7969 = vmatpush1.msra.mxu0 %v7966
      %7970 = vmatprep.subr.mxu0 0.0
      %7971 = vmatpush1.msra.mxu0 0.0
      %7972 = vmatprep.subr.mxu0 0.0
      %7973 = vmatpush1.msra.mxu0 0.0
      %7974 = vmatprep.subr.mxu0 0.0
      %7975 = vmatpush1.msra.mxu0 0.0
      %7976 = vmatprep.subr.mxu0 0.0
      %7977 = vmatpush1.msra.mxu0 0.0
      %7978 = vmatprep.subr.mxu0 0.0
      %7979 = vmatpush1.msra.mxu0 0.0
      %7980 = vmatprep.subr.mxu0 0.0
      %7981 = vmatpush1.msra.mxu0 0.0
      %7982 = vmatprep.subr.mxu0 0.0
      %7983 = vmatpush1.msra.mxu0 0.0
      %7984 = vmatprep.subr.mxu0 0.0
      %7985 = vmatpush1.msra.mxu0 0.0
      %7986 = vmatprep.subr.mxu0 0.0
      %7987 = vmatpush1.msra.mxu0 0.0
      %7988 = vmatprep.subr.mxu0 0.0
      %7989 = vmatpush1.msra.mxu0 0.0
      %7990 = vmatprep.subr.mxu0 0.0
      %7991 = vmatpush1.msra.mxu0 0.0
      %7992 = vmatprep.subr.mxu0 0.0
      %7993 = vmatpush1.msra.mxu0 0.0
      %7994 = vmatprep.subr.mxu0 0.0
      %7995 = vmatpush1.msra.mxu0 0.0
      %7996 = vmatprep.subr.mxu0 0.0
      %7997 = vmatpush1.msra.mxu0 0.0
      %7998 = vmatprep.subr.mxu0 0.0
      %7999 = vmatpush1.msra.mxu0 0.0
      %8000 = vmatprep.subr.mxu0 0.0
      %8001 = vmatpush1.msra.mxu0 0.0
      %8002 = vmatprep.subr.mxu0 0.0
      %8003 = vmatpush1.msra.mxu0 0.0
      %8004 = vmatprep.subr.mxu0 0.0
      %8005 = vmatpush1.msra.mxu0 0.0
      %8006 = vmatprep.subr.mxu0 0.0
      %8007 = vmatpush1.msra.mxu0 0.0
      %8008 = vmatprep.subr.mxu0 0.0
      %8009 = vmatpush1.msra.mxu0 0.0
      %8010 = vmatprep.subr.mxu0 0.0
      %8011 = vmatpush1.msra.mxu0 0.0
      %8012 = vmatprep.subr.mxu0 0.0
      %8013 = vmatpush1.msra.mxu0 0.0
      %8014 = vmatprep.subr.mxu0 0.0
      %8015 = vmatpush1.msra.mxu0 0.0
      %8016 = vmatprep.subr.mxu0 0.0
      %8017 = vmatpush1.msra.mxu0 0.0
      %8018 = vmatprep.subr.mxu0 0.0
      %8019 = vmatpush1.msra.mxu0 0.0
      %8020 = vmatprep.subr.mxu0 0.0
      %8021 = vmatpush1.msra.mxu0 0.0
      %8022 = vmatprep.subr.mxu0 0.0
      %8023 = vmatpush1.msra.mxu0 0.0
      %8024 = vmatprep.subr.mxu0 0.0
      %8025 = vmatpush1.msra.mxu0 0.0
      %8026 = vmatprep.subr.mxu0 0.0
      %8027 = vmatpush1.msra.mxu0 0.0
      %8028 = vmatprep.subr.mxu0 0.0
      %8029 = vmatpush1.msra.mxu0 0.0
      %8030 = vmatprep.subr.mxu0 0.0
      %8031 = vmatpush1.msra.mxu0 0.0
      %8032 = vmatprep.mubr.f32.mxu0 0.0
      %8033 = vmatmul.mubr.f32.gmra.mrb[0].mxu0 %v7963
      %v8034 = vpop.f32.mrb[0].mxu0
      %v8035 = vadd.f32 0.0, %v8034
      %v8036 = vpop.f32.mrb[0].mxu0
      %8037 = vdwg.mxu0
      %8039 = vset.pattern.permute.xlu0 0
      %8040 = vperm.xlu0 %8039, %v7887
      %v8041 = vpop.permute.xlu0 %8040
      %v8043 = vadd.f32 %v8041, %v8035
      %8044 = vmatprep.subr.mxu0 0.0
      %8045 = vmatpush1.msra.mxu0 %v5307
      %8046 = vmatprep.subr.mxu0 0.0
      %8047 = vmatpush1.msra.mxu0 0.0
      %8048 = vmatprep.subr.mxu0 0.0
      %8049 = vmatpush1.msra.mxu0 0.0
      %8050 = vmatprep.subr.mxu0 0.0
      %8051 = vmatpush1.msra.mxu0 0.0
      %8052 = vmatprep.subr.mxu0 0.0
      %8053 = vmatpush1.msra.mxu0 0.0
      %8054 = vmatprep.subr.mxu0 0.0
      %8055 = vmatpush1.msra.mxu0 0.0
      %8056 = vmatprep.subr.mxu0 0.0
      %8057 = vmatpush1.msra.mxu0 0.0
      %8058 = vmatprep.subr.mxu0 0.0
      %8059 = vmatpush1.msra.mxu0 0.0
      %8060 = vmatprep.subr.mxu0 0.0
      %8061 = vmatpush1.msra.mxu0 0.0
      %8062 = vmatprep.subr.mxu0 0.0
      %8063 = vmatpush1.msra.mxu0 0.0
      %8064 = vmatprep.subr.mxu0 0.0
      %8065 = vmatpush1.msra.mxu0 0.0
      %8066 = vmatprep.subr.mxu0 0.0
      %8067 = vmatpush1.msra.mxu0 0.0
      %8068 = vmatprep.subr.mxu0 0.0
      %8069 = vmatpush1.msra.mxu0 0.0
      %8070 = vmatprep.subr.mxu0 0.0
      %8071 = vmatpush1.msra.mxu0 0.0
      %8072 = vmatprep.subr.mxu0 0.0
      %8073 = vmatpush1.msra.mxu0 0.0
      %8074 = vmatprep.subr.mxu0 0.0
      %8075 = vmatpush1.msra.mxu0 0.0
      %8076 = vmatprep.subr.mxu0 0.0
      %8077 = vmatpush1.msra.mxu0 0.0
      %8078 = vmatprep.subr.mxu0 0.0
      %8079 = vmatpush1.msra.mxu0 0.0
      %8080 = vmatprep.subr.mxu0 0.0
      %8081 = vmatpush1.msra.mxu0 0.0
      %8082 = vmatprep.subr.mxu0 0.0
      %8083 = vmatpush1.msra.mxu0 0.0
      %8084 = vmatprep.subr.mxu0 0.0
      %8085 = vmatpush1.msra.mxu0 0.0
      %8086 = vmatprep.subr.mxu0 0.0
      %8087 = vmatpush1.msra.mxu0 0.0
      %8088 = vmatprep.subr.mxu0 0.0
      %8089 = vmatpush1.msra.mxu0 0.0
      %8090 = vmatprep.subr.mxu0 0.0
      %8091 = vmatpush1.msra.mxu0 0.0
      %8092 = vmatprep.subr.mxu0 0.0
      %8093 = vmatpush1.msra.mxu0 0.0
      %8094 = vmatprep.subr.mxu0 0.0
      %8095 = vmatpush1.msra.mxu0 0.0
      %8096 = vmatprep.subr.mxu0 0.0
      %8097 = vmatpush1.msra.mxu0 0.0
      %8098 = vmatprep.subr.mxu0 0.0
      %8099 = vmatpush1.msra.mxu0 0.0
      %8100 = vmatprep.subr.mxu0 0.0
      %8101 = vmatpush1.msra.mxu0 0.0
      %8102 = vmatprep.subr.mxu0 0.0
      %8103 = vmatpush1.msra.mxu0 0.0
      %8104 = vmatprep.subr.mxu0 0.0
      %8105 = vmatpush1.msra.mxu0 0.0
      %8106 = vmatprep.subr.mxu0 0.0
      %8107 = vmatpush1.msra.mxu0 0.0
      %8108 = vmatprep.mubr.f32.mxu0 0.0
      %8109 = vmatmul.mubr.f32.gmra.mrb[0].mxu0 %v7889
      %v8110 = vpop.f32.mrb[0].mxu0
      %v8111 = vadd.f32 0.0, %v8110
      %v8112 = vpop.f32.mrb[0].mxu0
      %8113 = vdwg.mxu0
      %s8114 = scalar_lea.vmem %s12, 4
      %v8115 = vld [vmem:[%s8114] sm:$0xf]
      %v8117 = vsel %vm5143, %v8115, 0
      %v8120 = vsel %vm5147, %v8111, 0
      %8122 = vmatprep.subr.mxu0 0.0
      %8123 = vmatpush1.msra.mxu0 %v8120
      %8124 = vmatprep.subr.mxu0 0.0
      %8125 = vmatpush1.msra.mxu0 0.0
      %8126 = vmatprep.subr.mxu0 0.0
      %8127 = vmatpush1.msra.mxu0 0.0
      %8128 = vmatprep.subr.mxu0 0.0
      %8129 = vmatpush1.msra.mxu0 0.0
      %8130 = vmatprep.subr.mxu0 0.0
      %8131 = vmatpush1.msra.mxu0 0.0
      %8132 = vmatprep.subr.mxu0 0.0
      %8133 = vmatpush1.msra.mxu0 0.0
      %8134 = vmatprep.subr.mxu0 0.0
      %8135 = vmatpush1.msra.mxu0 0.0
      %8136 = vmatprep.subr.mxu0 0.0
      %8137 = vmatpush1.msra.mxu0 0.0
      %8138 = vmatprep.subr.mxu0 0.0
      %8139 = vmatpush1.msra.mxu0 0.0
      %8140 = vmatprep.subr.mxu0 0.0
      %8141 = vmatpush1.msra.mxu0 0.0
      %8142 = vmatprep.subr.mxu0 0.0
      %8143 = vmatpush1.msra.mxu0 0.0
      %8144 = vmatprep.subr.mxu0 0.0
      %8145 = vmatpush1.msra.mxu0 0.0
      %8146 = vmatprep.subr.mxu0 0.0
      %8147 = vmatpush1.msra.mxu0 0.0
      %8148 = vmatprep.subr.mxu0 0.0
      %8149 = vmatpush1.msra.mxu0 0.0
      %8150 = vmatprep.subr.mxu0 0.0
      %8151 = vmatpush1.msra.mxu0 0.0
      %8152 = vmatprep.subr.mxu0 0.0
      %8153 = vmatpush1.msra.mxu0 0.0
      %8154 = vmatprep.subr.mxu0 0.0
      %8155 = vmatpush1.msra.mxu0 0.0
      %8156 = vmatprep.subr.mxu0 0.0
      %8157 = vmatpush1.msra.mxu0 0.0
      %8158 = vmatprep.subr.mxu0 0.0
      %8159 = vmatpush1.msra.mxu0 0.0
      %8160 = vmatprep.subr.mxu0 0.0
      %8161 = vmatpush1.msra.mxu0 0.0
      %8162 = vmatprep.subr.mxu0 0.0
      %8163 = vmatpush1.msra.mxu0 0.0
      %8164 = vmatprep.subr.mxu0 0.0
      %8165 = vmatpush1.msra.mxu0 0.0
      %8166 = vmatprep.subr.mxu0 0.0
      %8167 = vmatpush1.msra.mxu0 0.0
      %8168 = vmatprep.subr.mxu0 0.0
      %8169 = vmatpush1.msra.mxu0 0.0
      %8170 = vmatprep.subr.mxu0 0.0
      %8171 = vmatpush1.msra.mxu0 0.0
      %8172 = vmatprep.subr.mxu0 0.0
      %8173 = vmatpush1.msra.mxu0 0.0
      %8174 = vmatprep.subr.mxu0 0.0
      %8175 = vmatpush1.msra.mxu0 0.0
      %8176 = vmatprep.subr.mxu0 0.0
      %8177 = vmatpush1.msra.mxu0 0.0
      %8178 = vmatprep.subr.mxu0 0.0
      %8179 = vmatpush1.msra.mxu0 0.0
      %8180 = vmatprep.subr.mxu0 0.0
      %8181 = vmatpush1.msra.mxu0 0.0
      %8182 = vmatprep.subr.mxu0 0.0
      %8183 = vmatpush1.msra.mxu0 0.0
      %8184 = vmatprep.subr.mxu0 0.0
      %8185 = vmatpush1.msra.mxu0 0.0
      %8186 = vmatprep.mubr.f32.mxu0 0.0
      %8187 = vmatmul.mubr.f32.gmra.mrb[0].mxu0 %v8117
      %v8188 = vpop.f32.mrb[0].mxu0
      %v8189 = vadd.f32 0.0, %v8188
      %v8190 = vpop.f32.mrb[0].mxu0
      %8191 = vdwg.mxu0
      %v8192 = vadd.f32 %v8043, %v8189
      %8193 = vmatprep.subr.mxu0 0.0
      %8194 = vmatpush1.msra.mxu0 %v5461
      %8195 = vmatprep.subr.mxu0 0.0
      %8196 = vmatpush1.msra.mxu0 0.0
      %8197 = vmatprep.subr.mxu0 0.0
      %8198 = vmatpush1.msra.mxu0 0.0
      %8199 = vmatprep.subr.mxu0 0.0
      %8200 = vmatpush1.msra.mxu0 0.0
      %8201 = vmatprep.subr.mxu0 0.0
      %8202 = vmatpush1.msra.mxu0 0.0
      %8203 = vmatprep.subr.mxu0 0.0
      %8204 = vmatpush1.msra.mxu0 0.0
      %8205 = vmatprep.subr.mxu0 0.0
      %8206 = vmatpush1.msra.mxu0 0.0
      %8207 = vmatprep.subr.mxu0 0.0
      %8208 = vmatpush1.msra.mxu0 0.0
      %8209 = vmatprep.subr.mxu0 0.0
      %8210 = vmatpush1.msra.mxu0 0.0
      %8211 = vmatprep.subr.mxu0 0.0
      %8212 = vmatpush1.msra.mxu0 0.0
      %8213 = vmatprep.subr.mxu0 0.0
      %8214 = vmatpush1.msra.mxu0 0.0
      %8215 = vmatprep.subr.mxu0 0.0
      %8216 = vmatpush1.msra.mxu0 0.0
      %8217 = vmatprep.subr.mxu0 0.0
      %8218 = vmatpush1.msra.mxu0 0.0
      %8219 = vmatprep.subr.mxu0 0.0
      %8220 = vmatpush1.msra.mxu0 0.0
      %8221 = vmatprep.subr.mxu0 0.0
      %8222 = vmatpush1.msra.mxu0 0.0
      %8223 = vmatprep.subr.mxu0 0.0
      %8224 = vmatpush1.msra.mxu0 0.0
      %8225 = vmatprep.subr.mxu0 0.0
      %8226 = vmatpush1.msra.mxu0 0.0
      %8227 = vmatprep.subr.mxu0 0.0
      %8228 = vmatpush1.msra.mxu0 0.0
      %8229 = vmatprep.subr.mxu0 0.0
      %8230 = vmatpush1.msra.mxu0 0.0
      %8231 = vmatprep.subr.mxu0 0.0
      %8232 = vmatpush1.msra.mxu0 0.0
      %8233 = vmatprep.subr.mxu0 0.0
      %8234 = vmatpush1.msra.mxu0 0.0
      %8235 = vmatprep.subr.mxu0 0.0
      %8236 = vmatpush1.msra.mxu0 0.0
      %8237 = vmatprep.subr.mxu0 0.0
      %8238 = vmatpush1.msra.mxu0 0.0
      %8239 = vmatprep.subr.mxu0 0.0
      %8240 = vmatpush1.msra.mxu0 0.0
      %8241 = vmatprep.subr.mxu0 0.0
      %8242 = vmatpush1.msra.mxu0 0.0
      %8243 = vmatprep.subr.mxu0 0.0
      %8244 = vmatpush1.msra.mxu0 0.0
      %8245 = vmatprep.subr.mxu0 0.0
      %8246 = vmatpush1.msra.mxu0 0.0
      %8247 = vmatprep.subr.mxu0 0.0
      %8248 = vmatpush1.msra.mxu0 0.0
      %8249 = vmatprep.subr.mxu0 0.0
      %8250 = vmatpush1.msra.mxu0 0.0
      %8251 = vmatprep.subr.mxu0 0.0
      %8252 = vmatpush1.msra.mxu0 0.0
      %8253 = vmatprep.subr.mxu0 0.0
      %8254 = vmatpush1.msra.mxu0 0.0
      %8255 = vmatprep.subr.mxu0 0.0
      %8256 = vmatpush1.msra.mxu0 0.0
      %8257 = vmatprep.mubr.f32.mxu0 0.0
      %8258 = vmatmul.mubr.f32.gmra.mrb[0].mxu0 %v7889
      %v8259 = vpop.f32.mrb[0].mxu0
      %v8260 = vadd.f32 0.0, %v8259
      %v8261 = vpop.f32.mrb[0].mxu0
      %8262 = vdwg.mxu0
      %s8263 = scalar_lea.vmem %s12, 8
      %v8264 = vld [vmem:[%s8263] sm:$0xf]
      %v8266 = vsel %vm5143, %v8264, 0
      %v8269 = vsel %vm5147, %v8260, 0
      %8271 = vmatprep.subr.mxu0 0.0
      %8272 = vmatpush1.msra.mxu0 %v8269
      %8273 = vmatprep.subr.mxu0 0.0
      %8274 = vmatpush1.msra.mxu0 0.0
      %8275 = vmatprep.subr.mxu0 0.0
      %8276 = vmatpush1.msra.mxu0 0.0
      %8277 = vmatprep.subr.mxu0 0.0
      %8278 = vmatpush1.msra.mxu0 0.0
      %8279 = vmatprep.subr.mxu0 0.0
      %8280 = vmatpush1.msra.mxu0 0.0
      %8281 = vmatprep.subr.mxu0 0.0
      %8282 = vmatpush1.msra.mxu0 0.0
      %8283 = vmatprep.subr.mxu0 0.0
      %8284 = vmatpush1.msra.mxu0 0.0
      %8285 = vmatprep.subr.mxu0 0.0
      %8286 = vmatpush1.msra.mxu0 0.0
      %8287 = vmatprep.subr.mxu0 0.0
      %8288 = vmatpush1.msra.mxu0 0.0
      %8289 = vmatprep.subr.mxu0 0.0
      %8290 = vmatpush1.msra.mxu0 0.0
      %8291 = vmatprep.subr.mxu0 0.0
      %8292 = vmatpush1.msra.mxu0 0.0
      %8293 = vmatprep.subr.mxu0 0.0
      %8294 = vmatpush1.msra.mxu0 0.0
      %8295 = vmatprep.subr.mxu0 0.0
      %8296 = vmatpush1.msra.mxu0 0.0
      %8297 = vmatprep.subr.mxu0 0.0
      %8298 = vmatpush1.msra.mxu0 0.0
      %8299 = vmatprep.subr.mxu0 0.0
      %8300 = vmatpush1.msra.mxu0 0.0
      %8301 = vmatprep.subr.mxu0 0.0
      %8302 = vmatpush1.msra.mxu0 0.0
      %8303 = vmatprep.subr.mxu0 0.0
      %8304 = vmatpush1.msra.mxu0 0.0
      %8305 = vmatprep.subr.mxu0 0.0
      %8306 = vmatpush1.msra.mxu0 0.0
      %8307 = vmatprep.subr.mxu0 0.0
      %8308 = vmatpush1.msra.mxu0 0.0
      %8309 = vmatprep.subr.mxu0 0.0
      %8310 = vmatpush1.msra.mxu0 0.0
      %8311 = vmatprep.subr.mxu0 0.0
      %8312 = vmatpush1.msra.mxu0 0.0
      %8313 = vmatprep.subr.mxu0 0.0
      %8314 = vmatpush1.msra.mxu0 0.0
      %8315 = vmatprep.subr.mxu0 0.0
      %8316 = vmatpush1.msra.mxu0 0.0
      %8317 = vmatprep.subr.mxu0 0.0
      %8318 = vmatpush1.msra.mxu0 0.0
      %8319 = vmatprep.subr.mxu0 0.0
      %8320 = vmatpush1.msra.mxu0 0.0
      %8321 = vmatprep.subr.mxu0 0.0
      %8322 = vmatpush1.msra.mxu0 0.0
      %8323 = vmatprep.subr.mxu0 0.0
      %8324 = vmatpush1.msra.mxu0 0.0
      %8325 = vmatprep.subr.mxu0 0.0
      %8326 = vmatpush1.msra.mxu0 0.0
      %8327 = vmatprep.subr.mxu0 0.0
      %8328 = vmatpush1.msra.mxu0 0.0
      %8329 = vmatprep.subr.mxu0 0.0
      %8330 = vmatpush1.msra.mxu0 0.0
      %8331 = vmatprep.subr.mxu0 0.0
      %8332 = vmatpush1.msra.mxu0 0.0
      %8333 = vmatprep.subr.mxu0 0.0
      %8334 = vmatpush1.msra.mxu0 0.0
      %8335 = vmatprep.mubr.f32.mxu0 0.0
      %8336 = vmatmul.mubr.f32.gmra.mrb[0].mxu0 %v8266
      %v8337 = vpop.f32.mrb[0].mxu0
      %v8338 = vadd.f32 0.0, %v8337
      %v8339 = vpop.f32.mrb[0].mxu0
      %8340 = vdwg.mxu0
      %v8341 = vadd.f32 %v8192, %v8338
      %8342 = vmatprep.subr.mxu0 0.0
      %8343 = vmatpush1.msra.mxu0 %v5615
      %8344 = vmatprep.subr.mxu0 0.0
      %8345 = vmatpush1.msra.mxu0 0.0
      %8346 = vmatprep.subr.mxu0 0.0
      %8347 = vmatpush1.msra.mxu0 0.0
      %8348 = vmatprep.subr.mxu0 0.0
      %8349 = vmatpush1.msra.mxu0 0.0
      %8350 = vmatprep.subr.mxu0 0.0
      %8351 = vmatpush1.msra.mxu0 0.0
      %8352 = vmatprep.subr.mxu0 0.0
      %8353 = vmatpush1.msra.mxu0 0.0
      %8354 = vmatprep.subr.mxu0 0.0
      %8355 = vmatpush1.msra.mxu0 0.0
      %8356 = vmatprep.subr.mxu0 0.0
      %8357 = vmatpush1.msra.mxu0 0.0
      %8358 = vmatprep.subr.mxu0 0.0
      %8359 = vmatpush1.msra.mxu0 0.0
      %8360 = vmatprep.subr.mxu0 0.0
      %8361 = vmatpush1.msra.mxu0 0.0
      %8362 = vmatprep.subr.mxu0 0.0
      %8363 = vmatpush1.msra.mxu0 0.0
      %8364 = vmatprep.subr.mxu0 0.0
      %8365 = vmatpush1.msra.mxu0 0.0
      %8366 = vmatprep.subr.mxu0 0.0
      %8367 = vmatpush1.msra.mxu0 0.0
      %8368 = vmatprep.subr.mxu0 0.0
      %8369 = vmatpush1.msra.mxu0 0.0
      %8370 = vmatprep.subr.mxu0 0.0
      %8371 = vmatpush1.msra.mxu0 0.0
      %8372 = vmatprep.subr.mxu0 0.0
      %8373 = vmatpush1.msra.mxu0 0.0
      %8374 = vmatprep.subr.mxu0 0.0
      %8375 = vmatpush1.msra.mxu0 0.0
      %8376 = vmatprep.subr.mxu0 0.0
      %8377 = vmatpush1.msra.mxu0 0.0
      %8378 = vmatprep.subr.mxu0 0.0
      %8379 = vmatpush1.msra.mxu0 0.0
      %8380 = vmatprep.subr.mxu0 0.0
      %8381 = vmatpush1.msra.mxu0 0.0
      %8382 = vmatprep.subr.mxu0 0.0
      %8383 = vmatpush1.msra.mxu0 0.0
      %8384 = vmatprep.subr.mxu0 0.0
      %8385 = vmatpush1.msra.mxu0 0.0
      %8386 = vmatprep.subr.mxu0 0.0
      %8387 = vmatpush1.msra.mxu0 0.0
      %8388 = vmatprep.subr.mxu0 0.0
      %8389 = vmatpush1.msra.mxu0 0.0
      %8390 = vmatprep.subr.mxu0 0.0
      %8391 = vmatpush1.msra.mxu0 0.0
      %8392 = vmatprep.subr.mxu0 0.0
      %8393 = vmatpush1.msra.mxu0 0.0
      %8394 = vmatprep.subr.mxu0 0.0
      %8395 = vmatpush1.msra.mxu0 0.0
      %8396 = vmatprep.subr.mxu0 0.0
      %8397 = vmatpush1.msra.mxu0 0.0
      %8398 = vmatprep.subr.mxu0 0.0
      %8399 = vmatpush1.msra.mxu0 0.0
      %8400 = vmatprep.subr.mxu0 0.0
      %8401 = vmatpush1.msra.mxu0 0.0
      %8402 = vmatprep.subr.mxu0 0.0
      %8403 = vmatpush1.msra.mxu0 0.0
      %8404 = vmatprep.subr.mxu0 0.0
      %8405 = vmatpush1.msra.mxu0 0.0
      %8406 = vmatprep.mubr.f32.mxu0 0.0
      %8407 = vmatmul.mubr.f32.gmra.mrb[0].mxu0 %v7889
      %v8408 = vpop.f32.mrb[0].mxu0
      %v8409 = vadd.f32 0.0, %v8408
      %v8410 = vpop.f32.mrb[0].mxu0
      %8411 = vdwg.mxu0
      %s8412 = scalar_lea.vmem %s12, 12
      %v8413 = vld [vmem:[%s8412] sm:$0xf]
      %v8415 = vsel %vm5143, %v8413, 0
      %v8418 = vsel %vm5147, %v8409, 0
      %8420 = vmatprep.subr.mxu0 0.0
      %8421 = vmatpush1.msra.mxu0 %v8418
      %8422 = vmatprep.subr.mxu0 0.0
      %8423 = vmatpush1.msra.mxu0 0.0
      %8424 = vmatprep.subr.mxu0 0.0
      %8425 = vmatpush1.msra.mxu0 0.0
      %8426 = vmatprep.subr.mxu0 0.0
      %8427 = vmatpush1.msra.mxu0 0.0
      %8428 = vmatprep.subr.mxu0 0.0
      %8429 = vmatpush1.msra.mxu0 0.0
      %8430 = vmatprep.subr.mxu0 0.0
      %8431 = vmatpush1.msra.mxu0 0.0
      %8432 = vmatprep.subr.mxu0 0.0
      %8433 = vmatpush1.msra.mxu0 0.0
      %8434 = vmatprep.subr.mxu0 0.0
      %8435 = vmatpush1.msra.mxu0 0.0
      %8436 = vmatprep.subr.mxu0 0.0
      %8437 = vmatpush1.msra.mxu0 0.0
      %8438 = vmatprep.subr.mxu0 0.0
      %8439 = vmatpush1.msra.mxu0 0.0
      %8440 = vmatprep.subr.mxu0 0.0
      %8441 = vmatpush1.msra.mxu0 0.0
      %8442 = vmatprep.subr.mxu0 0.0
      %8443 = vmatpush1.msra.mxu0 0.0
      %8444 = vmatprep.subr.mxu0 0.0
      %8445 = vmatpush1.msra.mxu0 0.0
      %8446 = vmatprep.subr.mxu0 0.0
      %8447 = vmatpush1.msra.mxu0 0.0
      %8448 = vmatprep.subr.mxu0 0.0
      %8449 = vmatpush1.msra.mxu0 0.0
      %8450 = vmatprep.subr.mxu0 0.0
      %8451 = vmatpush1.msra.mxu0 0.0
      %8452 = vmatprep.subr.mxu0 0.0
      %8453 = vmatpush1.msra.mxu0 0.0
      %8454 = vmatprep.subr.mxu0 0.0
      %8455 = vmatpush1.msra.mxu0 0.0
      %8456 = vmatprep.subr.mxu0 0.0
      %8457 = vmatpush1.msra.mxu0 0.0
      %8458 = vmatprep.subr.mxu0 0.0
      %8459 = vmatpush1.msra.mxu0 0.0
      %8460 = vmatprep.subr.mxu0 0.0
      %8461 = vmatpush1.msra.mxu0 0.0
      %8462 = vmatprep.subr.mxu0 0.0
      %8463 = vmatpush1.msra.mxu0 0.0
      %8464 = vmatprep.subr.mxu0 0.0
      %8465 = vmatpush1.msra.mxu0 0.0
      %8466 = vmatprep.subr.mxu0 0.0
      %8467 = vmatpush1.msra.mxu0 0.0
      %8468 = vmatprep.subr.mxu0 0.0
      %8469 = vmatpush1.msra.mxu0 0.0
      %8470 = vmatprep.subr.mxu0 0.0
      %8471 = vmatpush1.msra.mxu0 0.0
      %8472 = vmatprep.subr.mxu0 0.0
      %8473 = vmatpush1.msra.mxu0 0.0
      %8474 = vmatprep.subr.mxu0 0.0
      %8475 = vmatpush1.msra.mxu0 0.0
      %8476 = vmatprep.subr.mxu0 0.0
      %8477 = vmatpush1.msra.mxu0 0.0
      %8478 = vmatprep.subr.mxu0 0.0
      %8479 = vmatpush1.msra.mxu0 0.0
      %8480 = vmatprep.subr.mxu0 0.0
      %8481 = vmatpush1.msra.mxu0 0.0
      %8482 = vmatprep.subr.mxu0 0.0
      %8483 = vmatpush1.msra.mxu0 0.0
      %8484 = vmatprep.mubr.f32.mxu0 0.0
      %8485 = vmatmul.mubr.f32.gmra.mrb[0].mxu0 %v8415
      %v8486 = vpop.f32.mrb[0].mxu0
      %v8487 = vadd.f32 0.0, %v8486
      %v8488 = vpop.f32.mrb[0].mxu0
      %8489 = vdwg.mxu0
      %v8490 = vadd.f32 %v8341, %v8487
      %8491 = vmatprep.subr.mxu0 0.0
      %8492 = vmatpush1.msra.mxu0 %v5769
      %8493 = vmatprep.subr.mxu0 0.0
      %8494 = vmatpush1.msra.mxu0 0.0
      %8495 = vmatprep.subr.mxu0 0.0
      %8496 = vmatpush1.msra.mxu0 0.0
      %8497 = vmatprep.subr.mxu0 0.0
      %8498 = vmatpush1.msra.mxu0 0.0
      %8499 = vmatprep.subr.mxu0 0.0
      %8500 = vmatpush1.msra.mxu0 0.0
      %8501 = vmatprep.subr.mxu0 0.0
      %8502 = vmatpush1.msra.mxu0 0.0
      %8503 = vmatprep.subr.mxu0 0.0
      %8504 = vmatpush1.msra.mxu0 0.0
      %8505 = vmatprep.subr.mxu0 0.0
      %8506 = vmatpush1.msra.mxu0 0.0
      %8507 = vmatprep.subr.mxu0 0.0
      %8508 = vmatpush1.msra.mxu0 0.0
      %8509 = vmatprep.subr.mxu0 0.0
      %8510 = vmatpush1.msra.mxu0 0.0
      %8511 = vmatprep.subr.mxu0 0.0
      %8512 = vmatpush1.msra.mxu0 0.0
      %8513 = vmatprep.subr.mxu0 0.0
      %8514 = vmatpush1.msra.mxu0 0.0
      %8515 = vmatprep.subr.mxu0 0.0
      %8516 = vmatpush1.msra.mxu0 0.0
      %8517 = vmatprep.subr.mxu0 0.0
      %8518 = vmatpush1.msra.mxu0 0.0
      %8519 = vmatprep.subr.mxu0 0.0
      %8520 = vmatpush1.msra.mxu0 0.0
      %8521 = vmatprep.subr.mxu0 0.0
      %8522 = vmatpush1.msra.mxu0 0.0
      %8523 = vmatprep.subr.mxu0 0.0
      %8524 = vmatpush1.msra.mxu0 0.0
      %8525 = vmatprep.subr.mxu0 0.0
      %8526 = vmatpush1.msra.mxu0 0.0
      %8527 = vmatprep.subr.mxu0 0.0
      %8528 = vmatpush1.msra.mxu0 0.0
      %8529 = vmatprep.subr.mxu0 0.0
      %8530 = vmatpush1.msra.mxu0 0.0
      %8531 = vmatprep.subr.mxu0 0.0
      %8532 = vmatpush1.msra.mxu0 0.0
      %8533 = vmatprep.subr.mxu0 0.0
      %8534 = vmatpush1.msra.mxu0 0.0
      %8535 = vmatprep.subr.mxu0 0.0
      %8536 = vmatpush1.msra.mxu0 0.0
      %8537 = vmatprep.subr.mxu0 0.0
      %8538 = vmatpush1.msra.mxu0 0.0
      %8539 = vmatprep.subr.mxu0 0.0
      %8540 = vmatpush1.msra.mxu0 0.0
      %8541 = vmatprep.subr.mxu0 0.0
      %8542 = vmatpush1.msra.mxu0 0.0
      %8543 = vmatprep.subr.mxu0 0.0
      %8544 = vmatpush1.msra.mxu0 0.0
      %8545 = vmatprep.subr.mxu0 0.0
      %8546 = vmatpush1.msra.mxu0 0.0
      %8547 = vmatprep.subr.mxu0 0.0
      %8548 = vmatpush1.msra.mxu0 0.0
      %8549 = vmatprep.subr.mxu0 0.0
      %8550 = vmatpush1.msra.mxu0 0.0
      %8551 = vmatprep.subr.mxu0 0.0
      %8552 = vmatpush1.msra.mxu0 0.0
      %8553 = vmatprep.subr.mxu0 0.0
      %8554 = vmatpush1.msra.mxu0 0.0
      %8555 = vmatprep.mubr.f32.mxu0 0.0
      %8556 = vmatmul.mubr.f32.gmra.mrb[0].mxu0 %v7889
      %v8557 = vpop.f32.mrb[0].mxu0
      %v8558 = vadd.f32 0.0, %v8557
      %v8559 = vpop.f32.mrb[0].mxu0
      %8560 = vdwg.mxu0
      %s8561 = scalar_lea.vmem %s12, 16
      %v8562 = vld [vmem:[%s8561] sm:$0xf]
      %v8564 = vsel %vm5143, %v8562, 0
      %v8567 = vsel %vm5147, %v8558, 0
      %8569 = vmatprep.subr.mxu0 0.0
      %8570 = vmatpush1.msra.mxu0 %v8567
      %8571 = vmatprep.subr.mxu0 0.0
      %8572 = vmatpush1.msra.mxu0 0.0
      %8573 = vmatprep.subr.mxu0 0.0
      %8574 = vmatpush1.msra.mxu0 0.0
      %8575 = vmatprep.subr.mxu0 0.0
      %8576 = vmatpush1.msra.mxu0 0.0
      %8577 = vmatprep.subr.mxu0 0.0
      %8578 = vmatpush1.msra.mxu0 0.0
      %8579 = vmatprep.subr.mxu0 0.0
      %8580 = vmatpush1.msra.mxu0 0.0
      %8581 = vmatprep.subr.mxu0 0.0
      %8582 = vmatpush1.msra.mxu0 0.0
      %8583 = vmatprep.subr.mxu0 0.0
      %8584 = vmatpush1.msra.mxu0 0.0
      %8585 = vmatprep.subr.mxu0 0.0
      %8586 = vmatpush1.msra.mxu0 0.0
      %8587 = vmatprep.subr.mxu0 0.0
      %8588 = vmatpush1.msra.mxu0 0.0
      %8589 = vmatprep.subr.mxu0 0.0
      %8590 = vmatpush1.msra.mxu0 0.0
      %8591 = vmatprep.subr.mxu0 0.0
      %8592 = vmatpush1.msra.mxu0 0.0
      %8593 = vmatprep.subr.mxu0 0.0
      %8594 = vmatpush1.msra.mxu0 0.0
      %8595 = vmatprep.subr.mxu0 0.0
      %8596 = vmatpush1.msra.mxu0 0.0
      %8597 = vmatprep.subr.mxu0 0.0
      %8598 = vmatpush1.msra.mxu0 0.0
      %8599 = vmatprep.subr.mxu0 0.0
      %8600 = vmatpush1.msra.mxu0 0.0
      %8601 = vmatprep.subr.mxu0 0.0
      %8602 = vmatpush1.msra.mxu0 0.0
      %8603 = vmatprep.subr.mxu0 0.0
      %8604 = vmatpush1.msra.mxu0 0.0
      %8605 = vmatprep.subr.mxu0 0.0
      %8606 = vmatpush1.msra.mxu0 0.0
      %8607 = vmatprep.subr.mxu0 0.0
      %8608 = vmatpush1.msra.mxu0 0.0
      %8609 = vmatprep.subr.mxu0 0.0
      %8610 = vmatpush1.msra.mxu0 0.0
      %8611 = vmatprep.subr.mxu0 0.0
      %8612 = vmatpush1.msra.mxu0 0.0
      %8613 = vmatprep.subr.mxu0 0.0
      %8614 = vmatpush1.msra.mxu0 0.0
      %8615 = vmatprep.subr.mxu0 0.0
      %8616 = vmatpush1.msra.mxu0 0.0
      %8617 = vmatprep.subr.mxu0 0.0
      %8618 = vmatpush1.msra.mxu0 0.0
      %8619 = vmatprep.subr.mxu0 0.0
      %8620 = vmatpush1.msra.mxu0 0.0
      %8621 = vmatprep.subr.mxu0 0.0
      %8622 = vmatpush1.msra.mxu0 0.0
      %8623 = vmatprep.subr.mxu0 0.0
      %8624 = vmatpush1.msra.mxu0 0.0
      %8625 = vmatprep.subr.mxu0 0.0
      %8626 = vmatpush1.msra.mxu0 0.0
      %8627 = vmatprep.subr.mxu0 0.0
      %8628 = vmatpush1.msra.mxu0 0.0
      %8629 = vmatprep.subr.mxu0 0.0
      %8630 = vmatpush1.msra.mxu0 0.0
      %8631 = vmatprep.subr.mxu0 0.0
      %8632 = vmatpush1.msra.mxu0 0.0
      %8633 = vmatprep.mubr.f32.mxu0 0.0
      %8634 = vmatmul.mubr.f32.gmra.mrb[0].mxu0 %v8564
      %v8635 = vpop.f32.mrb[0].mxu0
      %v8636 = vadd.f32 0.0, %v8635
      %v8637 = vpop.f32.mrb[0].mxu0
      %8638 = vdwg.mxu0
      %v8639 = vadd.f32 %v8490, %v8636
      %8640 = vmatprep.subr.mxu0 0.0
      %8641 = vmatpush1.msra.mxu0 %v5923
      %8642 = vmatprep.subr.mxu0 0.0
      %8643 = vmatpush1.msra.mxu0 0.0
      %8644 = vmatprep.subr.mxu0 0.0
      %8645 = vmatpush1.msra.mxu0 0.0
      %8646 = vmatprep.subr.mxu0 0.0
      %8647 = vmatpush1.msra.mxu0 0.0
      %8648 = vmatprep.subr.mxu0 0.0
      %8649 = vmatpush1.msra.mxu0 0.0
      %8650 = vmatprep.subr.mxu0 0.0
      %8651 = vmatpush1.msra.mxu0 0.0
      %8652 = vmatprep.subr.mxu0 0.0
      %8653 = vmatpush1.msra.mxu0 0.0
      %8654 = vmatprep.subr.mxu0 0.0
      %8655 = vmatpush1.msra.mxu0 0.0
      %8656 = vmatprep.subr.mxu0 0.0
      %8657 = vmatpush1.msra.mxu0 0.0
      %8658 = vmatprep.subr.mxu0 0.0
      %8659 = vmatpush1.msra.mxu0 0.0
      %8660 = vmatprep.subr.mxu0 0.0
      %8661 = vmatpush1.msra.mxu0 0.0
      %8662 = vmatprep.subr.mxu0 0.0
      %8663 = vmatpush1.msra.mxu0 0.0
      %8664 = vmatprep.subr.mxu0 0.0
      %8665 = vmatpush1.msra.mxu0 0.0
      %8666 = vmatprep.subr.mxu0 0.0
      %8667 = vmatpush1.msra.mxu0 0.0
      %8668 = vmatprep.subr.mxu0 0.0
      %8669 = vmatpush1.msra.mxu0 0.0
      %8670 = vmatprep.subr.mxu0 0.0
      %8671 = vmatpush1.msra.mxu0 0.0
      %8672 = vmatprep.subr.mxu0 0.0
      %8673 = vmatpush1.msra.mxu0 0.0
      %8674 = vmatprep.subr.mxu0 0.0
      %8675 = vmatpush1.msra.mxu0 0.0
      %8676 = vmatprep.subr.mxu0 0.0
      %8677 = vmatpush1.msra.mxu0 0.0
      %8678 = vmatprep.subr.mxu0 0.0
      %8679 = vmatpush1.msra.mxu0 0.0
      %8680 = vmatprep.subr.mxu0 0.0
      %8681 = vmatpush1.msra.mxu0 0.0
      %8682 = vmatprep.subr.mxu0 0.0
      %8683 = vmatpush1.msra.mxu0 0.0
      %8684 = vmatprep.subr.mxu0 0.0
      %8685 = vmatpush1.msra.mxu0 0.0
      %8686 = vmatprep.subr.mxu0 0.0
      %8687 = vmatpush1.msra.mxu0 0.0
      %8688 = vmatprep.subr.mxu0 0.0
      %8689 = vmatpush1.msra.mxu0 0.0
      %8690 = vmatprep.subr.mxu0 0.0
      %8691 = vmatpush1.msra.mxu0 0.0
      %8692 = vmatprep.subr.mxu0 0.0
      %8693 = vmatpush1.msra.mxu0 0.0
      %8694 = vmatprep.subr.mxu0 0.0
      %8695 = vmatpush1.msra.mxu0 0.0
      %8696 = vmatprep.subr.mxu0 0.0
      %8697 = vmatpush1.msra.mxu0 0.0
      %8698 = vmatprep.subr.mxu0 0.0
      %8699 = vmatpush1.msra.mxu0 0.0
      %8700 = vmatprep.subr.mxu0 0.0
      %8701 = vmatpush1.msra.mxu0 0.0
      %8702 = vmatprep.subr.mxu0 0.0
      %8703 = vmatpush1.msra.mxu0 0.0
      %8704 = vmatprep.mubr.f32.mxu0 0.0
      %8705 = vmatmul.mubr.f32.gmra.mrb[0].mxu0 %v7889
      %v8706 = vpop.f32.mrb[0].mxu0
      %v8707 = vadd.f32 0.0, %v8706
      %v8708 = vpop.f32.mrb[0].mxu0
      %8709 = vdwg.mxu0
      %s8710 = scalar_lea.vmem %s12, 20
      %v8711 = vld [vmem:[%s8710] sm:$0xf]
      %v8713 = vsel %vm5143, %v8711, 0
      %v8716 = vsel %vm5147, %v8707, 0
      %8718 = vmatprep.subr.mxu0 0.0
      %8719 = vmatpush1.msra.mxu0 %v8716
      %8720 = vmatprep.subr.mxu0 0.0
      %8721 = vmatpush1.msra.mxu0 0.0
      %8722 = vmatprep.subr.mxu0 0.0
      %8723 = vmatpush1.msra.mxu0 0.0
      %8724 = vmatprep.subr.mxu0 0.0
      %8725 = vmatpush1.msra.mxu0 0.0
      %8726 = vmatprep.subr.mxu0 0.0
      %8727 = vmatpush1.msra.mxu0 0.0
      %8728 = vmatprep.subr.mxu0 0.0
      %8729 = vmatpush1.msra.mxu0 0.0
      %8730 = vmatprep.subr.mxu0 0.0
      %8731 = vmatpush1.msra.mxu0 0.0
      %8732 = vmatprep.subr.mxu0 0.0
      %8733 = vmatpush1.msra.mxu0 0.0
      %8734 = vmatprep.subr.mxu0 0.0
      %8735 = vmatpush1.msra.mxu0 0.0
      %8736 = vmatprep.subr.mxu0 0.0
      %8737 = vmatpush1.msra.mxu0 0.0
      %8738 = vmatprep.subr.mxu0 0.0
      %8739 = vmatpush1.msra.mxu0 0.0
      %8740 = vmatprep.subr.mxu0 0.0
      %8741 = vmatpush1.msra.mxu0 0.0
      %8742 = vmatprep.subr.mxu0 0.0
      %8743 = vmatpush1.msra.mxu0 0.0
      %8744 = vmatprep.subr.mxu0 0.0
      %8745 = vmatpush1.msra.mxu0 0.0
      %8746 = vmatprep.subr.mxu0 0.0
      %8747 = vmatpush1.msra.mxu0 0.0
      %8748 = vmatprep.subr.mxu0 0.0
      %8749 = vmatpush1.msra.mxu0 0.0
      %8750 = vmatprep.subr.mxu0 0.0
      %8751 = vmatpush1.msra.mxu0 0.0
      %8752 = vmatprep.subr.mxu0 0.0
      %8753 = vmatpush1.msra.mxu0 0.0
      %8754 = vmatprep.subr.mxu0 0.0
      %8755 = vmatpush1.msra.mxu0 0.0
      %8756 = vmatprep.subr.mxu0 0.0
      %8757 = vmatpush1.msra.mxu0 0.0
      %8758 = vmatprep.subr.mxu0 0.0
      %8759 = vmatpush1.msra.mxu0 0.0
      %8760 = vmatprep.subr.mxu0 0.0
      %8761 = vmatpush1.msra.mxu0 0.0
      %8762 = vmatprep.subr.mxu0 0.0
      %8763 = vmatpush1.msra.mxu0 0.0
      %8764 = vmatprep.subr.mxu0 0.0
      %8765 = vmatpush1.msra.mxu0 0.0
      %8766 = vmatprep.subr.mxu0 0.0
      %8767 = vmatpush1.msra.mxu0 0.0
      %8768 = vmatprep.subr.mxu0 0.0
      %8769 = vmatpush1.msra.mxu0 0.0
      %8770 = vmatprep.subr.mxu0 0.0
      %8771 = vmatpush1.msra.mxu0 0.0
      %8772 = vmatprep.subr.mxu0 0.0
      %8773 = vmatpush1.msra.mxu0 0.0
      %8774 = vmatprep.subr.mxu0 0.0
      %8775 = vmatpush1.msra.mxu0 0.0
      %8776 = vmatprep.subr.mxu0 0.0
      %8777 = vmatpush1.msra.mxu0 0.0
      %8778 = vmatprep.subr.mxu0 0.0
      %8779 = vmatpush1.msra.mxu0 0.0
      %8780 = vmatprep.subr.mxu0 0.0
      %8781 = vmatpush1.msra.mxu0 0.0
      %8782 = vmatprep.mubr.f32.mxu0 0.0
      %8783 = vmatmul.mubr.f32.gmra.mrb[0].mxu0 %v8713
      %v8784 = vpop.f32.mrb[0].mxu0
      %v8785 = vadd.f32 0.0, %v8784
      %v8786 = vpop.f32.mrb[0].mxu0
      %8787 = vdwg.mxu0
      %v8788 = vadd.f32 %v8639, %v8785
      %8789 = vmatprep.subr.mxu0 0.0
      %8790 = vmatpush1.msra.mxu0 %v6077
      %8791 = vmatprep.subr.mxu0 0.0
      %8792 = vmatpush1.msra.mxu0 0.0
      %8793 = vmatprep.subr.mxu0 0.0
      %8794 = vmatpush1.msra.mxu0 0.0
      %8795 = vmatprep.subr.mxu0 0.0
      %8796 = vmatpush1.msra.mxu0 0.0
      %8797 = vmatprep.subr.mxu0 0.0
      %8798 = vmatpush1.msra.mxu0 0.0
      %8799 = vmatprep.subr.mxu0 0.0
      %8800 = vmatpush1.msra.mxu0 0.0
      %8801 = vmatprep.subr.mxu0 0.0
      %8802 = vmatpush1.msra.mxu0 0.0
      %8803 = vmatprep.subr.mxu0 0.0
      %8804 = vmatpush1.msra.mxu0 0.0
      %8805 = vmatprep.subr.mxu0 0.0
      %8806 = vmatpush1.msra.mxu0 0.0
      %8807 = vmatprep.subr.mxu0 0.0
      %8808 = vmatpush1.msra.mxu0 0.0
      %8809 = vmatprep.subr.mxu0 0.0
      %8810 = vmatpush1.msra.mxu0 0.0
      %8811 = vmatprep.subr.mxu0 0.0
      %8812 = vmatpush1.msra.mxu0 0.0
      %8813 = vmatprep.subr.mxu0 0.0
      %8814 = vmatpush1.msra.mxu0 0.0
      %8815 = vmatprep.subr.mxu0 0.0
      %8816 = vmatpush1.msra.mxu0 0.0
      %8817 = vmatprep.subr.mxu0 0.0
      %8818 = vmatpush1.msra.mxu0 0.0
      %8819 = vmatprep.subr.mxu0 0.0
      %8820 = vmatpush1.msra.mxu0 0.0
      %8821 = vmatprep.subr.mxu0 0.0
      %8822 = vmatpush1.msra.mxu0 0.0
      %8823 = vmatprep.subr.mxu0 0.0
      %8824 = vmatpush1.msra.mxu0 0.0
      %8825 = vmatprep.subr.mxu0 0.0
      %8826 = vmatpush1.msra.mxu0 0.0
      %8827 = vmatprep.subr.mxu0 0.0
      %8828 = vmatpush1.msra.mxu0 0.0
      %8829 = vmatprep.subr.mxu0 0.0
      %8830 = vmatpush1.msra.mxu0 0.0
      %8831 = vmatprep.subr.mxu0 0.0
      %8832 = vmatpush1.msra.mxu0 0.0
      %8833 = vmatprep.subr.mxu0 0.0
      %8834 = vmatpush1.msra.mxu0 0.0
      %8835 = vmatprep.subr.mxu0 0.0
      %8836 = vmatpush1.msra.mxu0 0.0
      %8837 = vmatprep.subr.mxu0 0.0
      %8838 = vmatpush1.msra.mxu0 0.0
      %8839 = vmatprep.subr.mxu0 0.0
      %8840 = vmatpush1.msra.mxu0 0.0
      %8841 = vmatprep.subr.mxu0 0.0
      %8842 = vmatpush1.msra.mxu0 0.0
      %8843 = vmatprep.subr.mxu0 0.0
      %8844 = vmatpush1.msra.mxu0 0.0
      %8845 = vmatprep.subr.mxu0 0.0
      %8846 = vmatpush1.msra.mxu0 0.0
      %8847 = vmatprep.subr.mxu0 0.0
      %8848 = vmatpush1.msra.mxu0 0.0
      %8849 = vmatprep.subr.mxu0 0.0
      %8850 = vmatpush1.msra.mxu0 0.0
      %8851 = vmatprep.subr.mxu0 0.0
      %8852 = vmatpush1.msra.mxu0 0.0
      %8853 = vmatprep.mubr.f32.mxu0 0.0
      %8854 = vmatmul.mubr.f32.gmra.mrb[0].mxu0 %v7889
      %v8855 = vpop.f32.mrb[0].mxu0
      %v8856 = vadd.f32 0.0, %v8855
      %v8857 = vpop.f32.mrb[0].mxu0
      %8858 = vdwg.mxu0
      %s8859 = scalar_lea.vmem %s12, 24
      %v8860 = vld [vmem:[%s8859] sm:$0xf]
      %v8862 = vsel %vm5143, %v8860, 0
      %v8865 = vsel %vm5147, %v8856, 0
      %8867 = vmatprep.subr.mxu0 0.0
      %8868 = vmatpush1.msra.mxu0 %v8865
      %8869 = vmatprep.subr.mxu0 0.0
      %8870 = vmatpush1.msra.mxu0 0.0
      %8871 = vmatprep.subr.mxu0 0.0
      %8872 = vmatpush1.msra.mxu0 0.0
      %8873 = vmatprep.subr.mxu0 0.0
      %8874 = vmatpush1.msra.mxu0 0.0
      %8875 = vmatprep.subr.mxu0 0.0
      %8876 = vmatpush1.msra.mxu0 0.0
      %8877 = vmatprep.subr.mxu0 0.0
      %8878 = vmatpush1.msra.mxu0 0.0
      %8879 = vmatprep.subr.mxu0 0.0
      %8880 = vmatpush1.msra.mxu0 0.0
      %8881 = vmatprep.subr.mxu0 0.0
      %8882 = vmatpush1.msra.mxu0 0.0
      %8883 = vmatprep.subr.mxu0 0.0
      %8884 = vmatpush1.msra.mxu0 0.0
      %8885 = vmatprep.subr.mxu0 0.0
      %8886 = vmatpush1.msra.mxu0 0.0
      %8887 = vmatprep.subr.mxu0 0.0
      %8888 = vmatpush1.msra.mxu0 0.0
      %8889 = vmatprep.subr.mxu0 0.0
      %8890 = vmatpush1.msra.mxu0 0.0
      %8891 = vmatprep.subr.mxu0 0.0
      %8892 = vmatpush1.msra.mxu0 0.0
      %8893 = vmatprep.subr.mxu0 0.0
      %8894 = vmatpush1.msra.mxu0 0.0
      %8895 = vmatprep.subr.mxu0 0.0
      %8896 = vmatpush1.msra.mxu0 0.0
      %8897 = vmatprep.subr.mxu0 0.0
      %8898 = vmatpush1.msra.mxu0 0.0
      %8899 = vmatprep.subr.mxu0 0.0
      %8900 = vmatpush1.msra.mxu0 0.0
      %8901 = vmatprep.subr.mxu0 0.0
      %8902 = vmatpush1.msra.mxu0 0.0
      %8903 = vmatprep.subr.mxu0 0.0
      %8904 = vmatpush1.msra.mxu0 0.0
      %8905 = vmatprep.subr.mxu0 0.0
      %8906 = vmatpush1.msra.mxu0 0.0
      %8907 = vmatprep.subr.mxu0 0.0
      %8908 = vmatpush1.msra.mxu0 0.0
      %8909 = vmatprep.subr.mxu0 0.0
      %8910 = vmatpush1.msra.mxu0 0.0
      %8911 = vmatprep.subr.mxu0 0.0
      %8912 = vmatpush1.msra.mxu0 0.0
      %8913 = vmatprep.subr.mxu0 0.0
      %8914 = vmatpush1.msra.mxu0 0.0
      %8915 = vmatprep.subr.mxu0 0.0
      %8916 = vmatpush1.msra.mxu0 0.0
      %8917 = vmatprep.subr.mxu0 0.0
      %8918 = vmatpush1.msra.mxu0 0.0
      %8919 = vmatprep.subr.mxu0 0.0
      %8920 = vmatpush1.msra.mxu0 0.0
      %8921 = vmatprep.subr.mxu0 0.0
      %8922 = vmatpush1.msra.mxu0 0.0
      %8923 = vmatprep.subr.mxu0 0.0
      %8924 = vmatpush1.msra.mxu0 0.0
      %8925 = vmatprep.subr.mxu0 0.0
      %8926 = vmatpush1.msra.mxu0 0.0
      %8927 = vmatprep.subr.mxu0 0.0
      %8928 = vmatpush1.msra.mxu0 0.0
      %8929 = vmatprep.subr.mxu0 0.0
      %8930 = vmatpush1.msra.mxu0 0.0
      %8931 = vmatprep.mubr.f32.mxu0 0.0
      %8932 = vmatmul.mubr.f32.gmra.mrb[0].mxu0 %v8862
      %v8933 = vpop.f32.mrb[0].mxu0
      %v8934 = vadd.f32 0.0, %v8933
      %v8935 = vpop.f32.mrb[0].mxu0
      %8936 = vdwg.mxu0
      %v8937 = vadd.f32 %v8788, %v8934
      %8938 = vmatprep.subr.mxu0 0.0
      %8939 = vmatpush1.msra.mxu0 %v6231
      %8940 = vmatprep.subr.mxu0 0.0
      %8941 = vmatpush1.msra.mxu0 0.0
      %8942 = vmatprep.subr.mxu0 0.0
      %8943 = vmatpush1.msra.mxu0 0.0
      %8944 = vmatprep.subr.mxu0 0.0
      %8945 = vmatpush1.msra.mxu0 0.0
      %8946 = vmatprep.subr.mxu0 0.0
      %8947 = vmatpush1.msra.mxu0 0.0
      %8948 = vmatprep.subr.mxu0 0.0
      %8949 = vmatpush1.msra.mxu0 0.0
      %8950 = vmatprep.subr.mxu0 0.0
      %8951 = vmatpush1.msra.mxu0 0.0
      %8952 = vmatprep.subr.mxu0 0.0
      %8953 = vmatpush1.msra.mxu0 0.0
      %8954 = vmatprep.subr.mxu0 0.0
      %8955 = vmatpush1.msra.mxu0 0.0
      %8956 = vmatprep.subr.mxu0 0.0
      %8957 = vmatpush1.msra.mxu0 0.0
      %8958 = vmatprep.subr.mxu0 0.0
      %8959 = vmatpush1.msra.mxu0 0.0
      %8960 = vmatprep.subr.mxu0 0.0
      %8961 = vmatpush1.msra.mxu0 0.0
      %8962 = vmatprep.subr.mxu0 0.0
      %8963 = vmatpush1.msra.mxu0 0.0
      %8964 = vmatprep.subr.mxu0 0.0
      %8965 = vmatpush1.msra.mxu0 0.0
      %8966 = vmatprep.subr.mxu0 0.0
      %8967 = vmatpush1.msra.mxu0 0.0
      %8968 = vmatprep.subr.mxu0 0.0
      %8969 = vmatpush1.msra.mxu0 0.0
      %8970 = vmatprep.subr.mxu0 0.0
      %8971 = vmatpush1.msra.mxu0 0.0
      %8972 = vmatprep.subr.mxu0 0.0
      %8973 = vmatpush1.msra.mxu0 0.0
      %8974 = vmatprep.subr.mxu0 0.0
      %8975 = vmatpush1.msra.mxu0 0.0
      %8976 = vmatprep.subr.mxu0 0.0
      %8977 = vmatpush1.msra.mxu0 0.0
      %8978 = vmatprep.subr.mxu0 0.0
      %8979 = vmatpush1.msra.mxu0 0.0
      %8980 = vmatprep.subr.mxu0 0.0
      %8981 = vmatpush1.msra.mxu0 0.0
      %8982 = vmatprep.subr.mxu0 0.0
      %8983 = vmatpush1.msra.mxu0 0.0
      %8984 = vmatprep.subr.mxu0 0.0
      %8985 = vmatpush1.msra.mxu0 0.0
      %8986 = vmatprep.subr.mxu0 0.0
      %8987 = vmatpush1.msra.mxu0 0.0
      %8988 = vmatprep.subr.mxu0 0.0
      %8989 = vmatpush1.msra.mxu0 0.0
      %8990 = vmatprep.subr.mxu0 0.0
      %8991 = vmatpush1.msra.mxu0 0.0
      %8992 = vmatprep.subr.mxu0 0.0
      %8993 = vmatpush1.msra.mxu0 0.0
      %8994 = vmatprep.subr.mxu0 0.0
      %8995 = vmatpush1.msra.mxu0 0.0
      %8996 = vmatprep.subr.mxu0 0.0
      %8997 = vmatpush1.msra.mxu0 0.0
      %8998 = vmatprep.subr.mxu0 0.0
      %8999 = vmatpush1.msra.mxu0 0.0
      %9000 = vmatprep.subr.mxu0 0.0
      %9001 = vmatpush1.msra.mxu0 0.0
      %9002 = vmatprep.mubr.f32.mxu0 0.0
      %9003 = vmatmul.mubr.f32.gmra.mrb[0].mxu0 %v7889
      %v9004 = vpop.f32.mrb[0].mxu0
      %v9005 = vadd.f32 0.0, %v9004
      %v9006 = vpop.f32.mrb[0].mxu0
      %9007 = vdwg.mxu0
      %s9008 = scalar_lea.vmem %s12, 28
      %v9009 = vld [vmem:[%s9008] sm:$0xf]
      %v9011 = vsel %vm5143, %v9009, 0
      %v9014 = vsel %vm5147, %v9005, 0
      %9016 = vmatprep.subr.mxu0 0.0
      %9017 = vmatpush1.msra.mxu0 %v9014
      %9018 = vmatprep.subr.mxu0 0.0
      %9019 = vmatpush1.msra.mxu0 0.0
      %9020 = vmatprep.subr.mxu0 0.0
      %9021 = vmatpush1.msra.mxu0 0.0
      %9022 = vmatprep.subr.mxu0 0.0
      %9023 = vmatpush1.msra.mxu0 0.0
      %9024 = vmatprep.subr.mxu0 0.0
      %9025 = vmatpush1.msra.mxu0 0.0
      %9026 = vmatprep.subr.mxu0 0.0
      %9027 = vmatpush1.msra.mxu0 0.0
      %9028 = vmatprep.subr.mxu0 0.0
      %9029 = vmatpush1.msra.mxu0 0.0
      %9030 = vmatprep.subr.mxu0 0.0
      %9031 = vmatpush1.msra.mxu0 0.0
      %9032 = vmatprep.subr.mxu0 0.0
      %9033 = vmatpush1.msra.mxu0 0.0
      %9034 = vmatprep.subr.mxu0 0.0
      %9035 = vmatpush1.msra.mxu0 0.0
      %9036 = vmatprep.subr.mxu0 0.0
      %9037 = vmatpush1.msra.mxu0 0.0
      %9038 = vmatprep.subr.mxu0 0.0
      %9039 = vmatpush1.msra.mxu0 0.0
      %9040 = vmatprep.subr.mxu0 0.0
      %9041 = vmatpush1.msra.mxu0 0.0
      %9042 = vmatprep.subr.mxu0 0.0
      %9043 = vmatpush1.msra.mxu0 0.0
      %9044 = vmatprep.subr.mxu0 0.0
      %9045 = vmatpush1.msra.mxu0 0.0
      %9046 = vmatprep.subr.mxu0 0.0
      %9047 = vmatpush1.msra.mxu0 0.0
      %9048 = vmatprep.subr.mxu0 0.0
      %9049 = vmatpush1.msra.mxu0 0.0
      %9050 = vmatprep.subr.mxu0 0.0
      %9051 = vmatpush1.msra.mxu0 0.0
      %9052 = vmatprep.subr.mxu0 0.0
      %9053 = vmatpush1.msra.mxu0 0.0
      %9054 = vmatprep.subr.mxu0 0.0
      %9055 = vmatpush1.msra.mxu0 0.0
      %9056 = vmatprep.subr.mxu0 0.0
      %9057 = vmatpush1.msra.mxu0 0.0
      %9058 = vmatprep.subr.mxu0 0.0
      %9059 = vmatpush1.msra.mxu0 0.0
      %9060 = vmatprep.subr.mxu0 0.0
      %9061 = vmatpush1.msra.mxu0 0.0
      %9062 = vmatprep.subr.mxu0 0.0
      %9063 = vmatpush1.msra.mxu0 0.0
      %9064 = vmatprep.subr.mxu0 0.0
      %9065 = vmatpush1.msra.mxu0 0.0
      %9066 = vmatprep.subr.mxu0 0.0
      %9067 = vmatpush1.msra.mxu0 0.0
      %9068 = vmatprep.subr.mxu0 0.0
      %9069 = vmatpush1.msra.mxu0 0.0
      %9070 = vmatprep.subr.mxu0 0.0
      %9071 = vmatpush1.msra.mxu0 0.0
      %9072 = vmatprep.subr.mxu0 0.0
      %9073 = vmatpush1.msra.mxu0 0.0
      %9074 = vmatprep.subr.mxu0 0.0
      %9075 = vmatpush1.msra.mxu0 0.0
      %9076 = vmatprep.subr.mxu0 0.0
      %9077 = vmatpush1.msra.mxu0 0.0
      %9078 = vmatprep.subr.mxu0 0.0
      %9079 = vmatpush1.msra.mxu0 0.0
      %9080 = vmatprep.mubr.f32.mxu0 0.0
      %9081 = vmatmul.mubr.f32.gmra.mrb[0].mxu0 %v9011
      %v9082 = vpop.f32.mrb[0].mxu0
      %v9083 = vadd.f32 0.0, %v9082
      %v9084 = vpop.f32.mrb[0].mxu0
      %9085 = vdwg.mxu0
      %v9086 = vadd.f32 %v8937, %v9083
      %9087 = vmatprep.subr.mxu0 0.0
      %9088 = vmatpush1.msra.mxu0 %v6385
      %9089 = vmatprep.subr.mxu0 0.0
      %9090 = vmatpush1.msra.mxu0 0.0
      %9091 = vmatprep.subr.mxu0 0.0
      %9092 = vmatpush1.msra.mxu0 0.0
      %9093 = vmatprep.subr.mxu0 0.0
      %9094 = vmatpush1.msra.mxu0 0.0
      %9095 = vmatprep.subr.mxu0 0.0
      %9096 = vmatpush1.msra.mxu0 0.0
      %9097 = vmatprep.subr.mxu0 0.0
      %9098 = vmatpush1.msra.mxu0 0.0
      %9099 = vmatprep.subr.mxu0 0.0
      %9100 = vmatpush1.msra.mxu0 0.0
      %9101 = vmatprep.subr.mxu0 0.0
      %9102 = vmatpush1.msra.mxu0 0.0
      %9103 = vmatprep.subr.mxu0 0.0
      %9104 = vmatpush1.msra.mxu0 0.0
      %9105 = vmatprep.subr.mxu0 0.0
      %9106 = vmatpush1.msra.mxu0 0.0
      %9107 = vmatprep.subr.mxu0 0.0
      %9108 = vmatpush1.msra.mxu0 0.0
      %9109 = vmatprep.subr.mxu0 0.0
      %9110 = vmatpush1.msra.mxu0 0.0
      %9111 = vmatprep.subr.mxu0 0.0
      %9112 = vmatpush1.msra.mxu0 0.0
      %9113 = vmatprep.subr.mxu0 0.0
      %9114 = vmatpush1.msra.mxu0 0.0
      %9115 = vmatprep.subr.mxu0 0.0
      %9116 = vmatpush1.msra.mxu0 0.0
      %9117 = vmatprep.subr.mxu0 0.0
      %9118 = vmatpush1.msra.mxu0 0.0
      %9119 = vmatprep.subr.mxu0 0.0
      %9120 = vmatpush1.msra.mxu0 0.0
      %9121 = vmatprep.subr.mxu0 0.0
      %9122 = vmatpush1.msra.mxu0 0.0
      %9123 = vmatprep.subr.mxu0 0.0
      %9124 = vmatpush1.msra.mxu0 0.0
      %9125 = vmatprep.subr.mxu0 0.0
      %9126 = vmatpush1.msra.mxu0 0.0
      %9127 = vmatprep.subr.mxu0 0.0
      %9128 = vmatpush1.msra.mxu0 0.0
      %9129 = vmatprep.subr.mxu0 0.0
      %9130 = vmatpush1.msra.mxu0 0.0
      %9131 = vmatprep.subr.mxu0 0.0
      %9132 = vmatpush1.msra.mxu0 0.0
      %9133 = vmatprep.subr.mxu0 0.0
      %9134 = vmatpush1.msra.mxu0 0.0
      %9135 = vmatprep.subr.mxu0 0.0
      %9136 = vmatpush1.msra.mxu0 0.0
      %9137 = vmatprep.subr.mxu0 0.0
      %9138 = vmatpush1.msra.mxu0 0.0
      %9139 = vmatprep.subr.mxu0 0.0
      %9140 = vmatpush1.msra.mxu0 0.0
      %9141 = vmatprep.subr.mxu0 0.0
      %9142 = vmatpush1.msra.mxu0 0.0
      %9143 = vmatprep.subr.mxu0 0.0
      %9144 = vmatpush1.msra.mxu0 0.0
      %9145 = vmatprep.subr.mxu0 0.0
      %9146 = vmatpush1.msra.mxu0 0.0
      %9147 = vmatprep.subr.mxu0 0.0
      %9148 = vmatpush1.msra.mxu0 0.0
      %9149 = vmatprep.subr.mxu0 0.0
      %9150 = vmatpush1.msra.mxu0 0.0
      %9151 = vmatprep.mubr.f32.mxu0 0.0
      %9152 = vmatmul.mubr.f32.gmra.mrb[0].mxu0 %v7889
      %v9153 = vpop.f32.mrb[0].mxu0
      %v9154 = vadd.f32 0.0, %v9153
      %v9155 = vpop.f32.mrb[0].mxu0
      %9156 = vdwg.mxu0
      %s9157 = scalar_lea.vmem %s12, 32
      %v9158 = vld [vmem:[%s9157] sm:$0xf]
      %v9160 = vsel %vm5143, %v9158, 0
      %v9163 = vsel %vm5147, %v9154, 0
      %9165 = vmatprep.subr.mxu0 0.0
      %9166 = vmatpush1.msra.mxu0 %v9163
      %9167 = vmatprep.subr.mxu0 0.0
      %9168 = vmatpush1.msra.mxu0 0.0
      %9169 = vmatprep.subr.mxu0 0.0
      %9170 = vmatpush1.msra.mxu0 0.0
      %9171 = vmatprep.subr.mxu0 0.0
      %9172 = vmatpush1.msra.mxu0 0.0
      %9173 = vmatprep.subr.mxu0 0.0
      %9174 = vmatpush1.msra.mxu0 0.0
      %9175 = vmatprep.subr.mxu0 0.0
      %9176 = vmatpush1.msra.mxu0 0.0
      %9177 = vmatprep.subr.mxu0 0.0
      %9178 = vmatpush1.msra.mxu0 0.0
      %9179 = vmatprep.subr.mxu0 0.0
      %9180 = vmatpush1.msra.mxu0 0.0
      %9181 = vmatprep.subr.mxu0 0.0
      %9182 = vmatpush1.msra.mxu0 0.0
      %9183 = vmatprep.subr.mxu0 0.0
      %9184 = vmatpush1.msra.mxu0 0.0
      %9185 = vmatprep.subr.mxu0 0.0
      %9186 = vmatpush1.msra.mxu0 0.0
      %9187 = vmatprep.subr.mxu0 0.0
      %9188 = vmatpush1.msra.mxu0 0.0
      %9189 = vmatprep.subr.mxu0 0.0
      %9190 = vmatpush1.msra.mxu0 0.0
      %9191 = vmatprep.subr.mxu0 0.0
      %9192 = vmatpush1.msra.mxu0 0.0
      %9193 = vmatprep.subr.mxu0 0.0
      %9194 = vmatpush1.msra.mxu0 0.0
      %9195 = vmatprep.subr.mxu0 0.0
      %9196 = vmatpush1.msra.mxu0 0.0
      %9197 = vmatprep.subr.mxu0 0.0
      %9198 = vmatpush1.msra.mxu0 0.0
      %9199 = vmatprep.subr.mxu0 0.0
      %9200 = vmatpush1.msra.mxu0 0.0
      %9201 = vmatprep.subr.mxu0 0.0
      %9202 = vmatpush1.msra.mxu0 0.0
      %9203 = vmatprep.subr.mxu0 0.0
      %9204 = vmatpush1.msra.mxu0 0.0
      %9205 = vmatprep.subr.mxu0 0.0
      %9206 = vmatpush1.msra.mxu0 0.0
      %9207 = vmatprep.subr.mxu0 0.0
      %9208 = vmatpush1.msra.mxu0 0.0
      %9209 = vmatprep.subr.mxu0 0.0
      %9210 = vmatpush1.msra.mxu0 0.0
      %9211 = vmatprep.subr.mxu0 0.0
      %9212 = vmatpush1.msra.mxu0 0.0
      %9213 = vmatprep.subr.mxu0 0.0
      %9214 = vmatpush1.msra.mxu0 0.0
      %9215 = vmatprep.subr.mxu0 0.0
      %9216 = vmatpush1.msra.mxu0 0.0
      %9217 = vmatprep.subr.mxu0 0.0
      %9218 = vmatpush1.msra.mxu0 0.0
      %9219 = vmatprep.subr.mxu0 0.0
      %9220 = vmatpush1.msra.mxu0 0.0
      %9221 = vmatprep.subr.mxu0 0.0
      %9222 = vmatpush1.msra.mxu0 0.0
      %9223 = vmatprep.subr.mxu0 0.0
      %9224 = vmatpush1.msra.mxu0 0.0
      %9225 = vmatprep.subr.mxu0 0.0
      %9226 = vmatpush1.msra.mxu0 0.0
      %9227 = vmatprep.subr.mxu0 0.0
      %9228 = vmatpush1.msra.mxu0 0.0
      %9229 = vmatprep.mubr.f32.mxu0 0.0
      %9230 = vmatmul.mubr.f32.gmra.mrb[0].mxu0 %v9160
      %v9231 = vpop.f32.mrb[0].mxu0
      %v9232 = vadd.f32 0.0, %v9231
      %v9233 = vpop.f32.mrb[0].mxu0
      %9234 = vdwg.mxu0
      %v9235 = vadd.f32 %v9086, %v9232
      %v9236 = vld [vmem:[%s16] sm:$0xff]
      %v9237 = vld [vmem:[%s16 + $0x8] sm:$0xff]
      %v9238 = vld [vmem:[%s16 + $0x10] sm:$0xf]
      %v9239 = vld [vmem:[%s2] sm:$0xf]
      %v9240 = vld [vmem:[%s3] sm:$0xf]
      %9242 = vset.pattern.permute.xlu0 0
      %9243 = vperm.xlu0 %9242, %v9240
      %v9244 = vpop.permute.xlu0 %9243
      %v9247 = vsel %vm606, %v9239, 0
      %9249 = vmatprep.subr.mxu0 %v570
      %9250 = vmatpush1.msra.mxu0 %v569
      %9251 = vmatprep.subr.mxu0 %v575
      %9252 = vmatpush1.msra.mxu0 %v574
      %9253 = vmatprep.subr.mxu0 0.0
      %9254 = vmatpush1.msra.mxu0 0.0
      %9255 = vmatprep.subr.mxu0 0.0
      %9256 = vmatpush1.msra.mxu0 0.0
      %9257 = vmatprep.subr.mxu0 0.0
      %9258 = vmatpush1.msra.mxu0 0.0
      %9259 = vmatprep.subr.mxu0 0.0
      %9260 = vmatpush1.msra.mxu0 0.0
      %9261 = vmatprep.subr.mxu0 0.0
      %9262 = vmatpush1.msra.mxu0 0.0
      %9263 = vmatprep.subr.mxu0 0.0
      %9264 = vmatpush1.msra.mxu0 0.0
      %9265 = vmatprep.subr.mxu0 0.0
      %9266 = vmatpush1.msra.mxu0 0.0
      %9267 = vmatprep.subr.mxu0 0.0
      %9268 = vmatpush1.msra.mxu0 0.0
      %9269 = vmatprep.subr.mxu0 0.0
      %9270 = vmatpush1.msra.mxu0 0.0
      %9271 = vmatprep.subr.mxu0 0.0
      %9272 = vmatpush1.msra.mxu0 0.0
      %9273 = vmatprep.subr.mxu0 0.0
      %9274 = vmatpush1.msra.mxu0 0.0
      %9275 = vmatprep.subr.mxu0 0.0
      %9276 = vmatpush1.msra.mxu0 0.0
      %9277 = vmatprep.subr.mxu0 0.0
      %9278 = vmatpush1.msra.mxu0 0.0
      %9279 = vmatprep.subr.mxu0 0.0
      %9280 = vmatpush1.msra.mxu0 0.0
      %9281 = vmatprep.subr.mxu0 0.0
      %9282 = vmatpush1.msra.mxu0 0.0
      %9283 = vmatprep.subr.mxu0 0.0
      %9284 = vmatpush1.msra.mxu0 0.0
      %9285 = vmatprep.subr.mxu0 0.0
      %9286 = vmatpush1.msra.mxu0 0.0
      %9287 = vmatprep.subr.mxu0 0.0
      %9288 = vmatpush1.msra.mxu0 0.0
      %9289 = vmatprep.subr.mxu0 0.0
      %9290 = vmatpush1.msra.mxu0 0.0
      %9291 = vmatprep.subr.mxu0 0.0
      %9292 = vmatpush1.msra.mxu0 0.0
      %9293 = vmatprep.subr.mxu0 0.0
      %9294 = vmatpush1.msra.mxu0 0.0
      %9295 = vmatprep.subr.mxu0 0.0
      %9296 = vmatpush1.msra.mxu0 0.0
      %9297 = vmatprep.subr.mxu0 0.0
      %9298 = vmatpush1.msra.mxu0 0.0
      %9299 = vmatprep.subr.mxu0 0.0
      %9300 = vmatpush1.msra.mxu0 0.0
      %9301 = vmatprep.subr.mxu0 0.0
      %9302 = vmatpush1.msra.mxu0 0.0
      %9303 = vmatprep.subr.mxu0 0.0
      %9304 = vmatpush1.msra.mxu0 0.0
      %9305 = vmatprep.subr.mxu0 0.0
      %9306 = vmatpush1.msra.mxu0 0.0
      %9307 = vmatprep.subr.mxu0 0.0
      %9308 = vmatpush1.msra.mxu0 0.0
      %9309 = vmatprep.subr.mxu0 0.0
      %9310 = vmatpush1.msra.mxu0 0.0
      %9311 = vmatprep.subr.mxu0 0.0
      %9312 = vmatpush1.msra.mxu0 0.0
      %9313 = vmatprep.mubr.f32.mxu0 0.0
      %9314 = vmatmul.mubr.f32.gmra.mrb[0].mxu0 %v9247
      %v9315 = vpop.f32.mrb[0].mxu0
      %v9316 = vadd.f32 %v9244, %v9315
      %v9317 = vpop.f32.mrb[0].mxu0
      %v9318 = vadd.f32 %v9244, %v9317
      %9319 = vdwg.mxu0
      %9320 = vmatprep.subr.mxu0 %v572
      %9321 = vmatpush1.msra.mxu0 %v571
      %9322 = vmatprep.subr.mxu0 %v577
      %9323 = vmatpush1.msra.mxu0 %v576
      %9324 = vmatprep.subr.mxu0 0.0
      %9325 = vmatpush1.msra.mxu0 0.0
      %9326 = vmatprep.subr.mxu0 0.0
      %9327 = vmatpush1.msra.mxu0 0.0
      %9328 = vmatprep.subr.mxu0 0.0
      %9329 = vmatpush1.msra.mxu0 0.0
      %9330 = vmatprep.subr.mxu0 0.0
      %9331 = vmatpush1.msra.mxu0 0.0
      %9332 = vmatprep.subr.mxu0 0.0
      %9333 = vmatpush1.msra.mxu0 0.0
      %9334 = vmatprep.subr.mxu0 0.0
      %9335 = vmatpush1.msra.mxu0 0.0
      %9336 = vmatprep.subr.mxu0 0.0
      %9337 = vmatpush1.msra.mxu0 0.0
      %9338 = vmatprep.subr.mxu0 0.0
      %9339 = vmatpush1.msra.mxu0 0.0
      %9340 = vmatprep.subr.mxu0 0.0
      %9341 = vmatpush1.msra.mxu0 0.0
      %9342 = vmatprep.subr.mxu0 0.0
      %9343 = vmatpush1.msra.mxu0 0.0
      %9344 = vmatprep.subr.mxu0 0.0
      %9345 = vmatpush1.msra.mxu0 0.0
      %9346 = vmatprep.subr.mxu0 0.0
      %9347 = vmatpush1.msra.mxu0 0.0
      %9348 = vmatprep.subr.mxu0 0.0
      %9349 = vmatpush1.msra.mxu0 0.0
      %9350 = vmatprep.subr.mxu0 0.0
      %9351 = vmatpush1.msra.mxu0 0.0
      %9352 = vmatprep.subr.mxu0 0.0
      %9353 = vmatpush1.msra.mxu0 0.0
      %9354 = vmatprep.subr.mxu0 0.0
      %9355 = vmatpush1.msra.mxu0 0.0
      %9356 = vmatprep.subr.mxu0 0.0
      %9357 = vmatpush1.msra.mxu0 0.0
      %9358 = vmatprep.subr.mxu0 0.0
      %9359 = vmatpush1.msra.mxu0 0.0
      %9360 = vmatprep.subr.mxu0 0.0
      %9361 = vmatpush1.msra.mxu0 0.0
      %9362 = vmatprep.subr.mxu0 0.0
      %9363 = vmatpush1.msra.mxu0 0.0
      %9364 = vmatprep.subr.mxu0 0.0
      %9365 = vmatpush1.msra.mxu0 0.0
      %9366 = vmatprep.subr.mxu0 0.0
      %9367 = vmatpush1.msra.mxu0 0.0
      %9368 = vmatprep.subr.mxu0 0.0
      %9369 = vmatpush1.msra.mxu0 0.0
      %9370 = vmatprep.subr.mxu0 0.0
      %9371 = vmatpush1.msra.mxu0 0.0
      %9372 = vmatprep.subr.mxu0 0.0
      %9373 = vmatpush1.msra.mxu0 0.0
      %9374 = vmatprep.subr.mxu0 0.0
      %9375 = vmatpush1.msra.mxu0 0.0
      %9376 = vmatprep.subr.mxu0 0.0
      %9377 = vmatpush1.msra.mxu0 0.0
      %9378 = vmatprep.subr.mxu0 0.0
      %9379 = vmatpush1.msra.mxu0 0.0
      %9380 = vmatprep.subr.mxu0 0.0
      %9381 = vmatpush1.msra.mxu0 0.0
      %9382 = vmatprep.subr.mxu0 0.0
      %9383 = vmatpush1.msra.mxu0 0.0
      %9384 = vmatprep.mubr.f32.mxu0 0.0
      %9385 = vmatmul.mubr.f32.gmra.mrb[0].mxu0 %v9247
      %v9386 = vpop.f32.mrb[0].mxu0
      %v9387 = vadd.f32 %v9244, %v9386
      %v9388 = vpop.f32.mrb[0].mxu0
      %v9389 = vadd.f32 %v9244, %v9388
      %9390 = vdwg.mxu0
      %9391 = vmatprep.subr.mxu0 0.0
      %9392 = vmatpush1.msra.mxu0 %v573
      %9393 = vmatprep.subr.mxu0 0.0
      %9394 = vmatpush1.msra.mxu0 %v578
      %9395 = vmatprep.subr.mxu0 0.0
      %9396 = vmatpush1.msra.mxu0 0.0
      %9397 = vmatprep.subr.mxu0 0.0
      %9398 = vmatpush1.msra.mxu0 0.0
      %9399 = vmatprep.subr.mxu0 0.0
      %9400 = vmatpush1.msra.mxu0 0.0
      %9401 = vmatprep.subr.mxu0 0.0
      %9402 = vmatpush1.msra.mxu0 0.0
      %9403 = vmatprep.subr.mxu0 0.0
      %9404 = vmatpush1.msra.mxu0 0.0
      %9405 = vmatprep.subr.mxu0 0.0
      %9406 = vmatpush1.msra.mxu0 0.0
      %9407 = vmatprep.subr.mxu0 0.0
      %9408 = vmatpush1.msra.mxu0 0.0
      %9409 = vmatprep.subr.mxu0 0.0
      %9410 = vmatpush1.msra.mxu0 0.0
      %9411 = vmatprep.subr.mxu0 0.0
      %9412 = vmatpush1.msra.mxu0 0.0
      %9413 = vmatprep.subr.mxu0 0.0
      %9414 = vmatpush1.msra.mxu0 0.0
      %9415 = vmatprep.subr.mxu0 0.0
      %9416 = vmatpush1.msra.mxu0 0.0
      %9417 = vmatprep.subr.mxu0 0.0
      %9418 = vmatpush1.msra.mxu0 0.0
      %9419 = vmatprep.subr.mxu0 0.0
      %9420 = vmatpush1.msra.mxu0 0.0
      %9421 = vmatprep.subr.mxu0 0.0
      %9422 = vmatpush1.msra.mxu0 0.0
      %9423 = vmatprep.subr.mxu0 0.0
      %9424 = vmatpush1.msra.mxu0 0.0
      %9425 = vmatprep.subr.mxu0 0.0
      %9426 = vmatpush1.msra.mxu0 0.0
      %9427 = vmatprep.subr.mxu0 0.0
      %9428 = vmatpush1.msra.mxu0 0.0
      %9429 = vmatprep.subr.mxu0 0.0
      %9430 = vmatpush1.msra.mxu0 0.0
      %9431 = vmatprep.subr.mxu0 0.0
      %9432 = vmatpush1.msra.mxu0 0.0
      %9433 = vmatprep.subr.mxu0 0.0
      %9434 = vmatpush1.msra.mxu0 0.0
      %9435 = vmatprep.subr.mxu0 0.0
      %9436 = vmatpush1.msra.mxu0 0.0
      %9437 = vmatprep.subr.mxu0 0.0
      %9438 = vmatpush1.msra.mxu0 0.0
      %9439 = vmatprep.subr.mxu0 0.0
      %9440 = vmatpush1.msra.mxu0 0.0
      %9441 = vmatprep.subr.mxu0 0.0
      %9442 = vmatpush1.msra.mxu0 0.0
      %9443 = vmatprep.subr.mxu0 0.0
      %9444 = vmatpush1.msra.mxu0 0.0
      %9445 = vmatprep.subr.mxu0 0.0
      %9446 = vmatpush1.msra.mxu0 0.0
      %9447 = vmatprep.subr.mxu0 0.0
      %9448 = vmatpush1.msra.mxu0 0.0
      %9449 = vmatprep.subr.mxu0 0.0
      %9450 = vmatpush1.msra.mxu0 0.0
      %9451 = vmatprep.subr.mxu0 0.0
      %9452 = vmatpush1.msra.mxu0 0.0
      %9453 = vmatprep.subr.mxu0 0.0
      %9454 = vmatpush1.msra.mxu0 0.0
      %9455 = vmatprep.mubr.f32.mxu0 0.0
      %9456 = vmatmul.mubr.f32.gmra.mrb[0].mxu0 %v9247
      %v9457 = vpop.f32.mrb[0].mxu0
      %v9458 = vadd.f32 %v9244, %v9457
      %v9459 = vpop.f32.mrb[0].mxu0
      %9460 = vdwg.mxu0
      %v9461 = vld [vmem:[%s14] sm:$0xff]
      %v9462 = vld [vmem:[%s14 + $0x8] sm:$0xff]
      %v9466 = vcombine.high %v9236, %v9236
      %v9467 = vcombine.high %v9237, %v9237
      %v9469 = vsel %vm5143, %v9235, 0
      %v9471 = vsel %vm5147, %v9236, 0
      %v9473 = vsel %vm5147, %v9466, 0
      %v9475 = vsel %vm5147, %v9237, 0
      %v9477 = vsel %vm5147, %v9467, 0
      %v9479 = vsel %vm5147, %v9238, 0
      %9481 = vmatprep.subr.mxu0 %v9473
      %9482 = vmatpush1.msra.mxu0 %v9471
      %9483 = vmatprep.subr.mxu0 0.0
      %9484 = vmatpush1.msra.mxu0 0.0
      %9485 = vmatprep.subr.mxu0 0.0
      %9486 = vmatpush1.msra.mxu0 0.0
      %9487 = vmatprep.subr.mxu0 0.0
      %9488 = vmatpush1.msra.mxu0 0.0
      %9489 = vmatprep.subr.mxu0 0.0
      %9490 = vmatpush1.msra.mxu0 0.0
      %9491 = vmatprep.subr.mxu0 0.0
      %9492 = vmatpush1.msra.mxu0 0.0
      %9493 = vmatprep.subr.mxu0 0.0
      %9494 = vmatpush1.msra.mxu0 0.0
      %9495 = vmatprep.subr.mxu0 0.0
      %9496 = vmatpush1.msra.mxu0 0.0
      %9497 = vmatprep.subr.mxu0 0.0
      %9498 = vmatpush1.msra.mxu0 0.0
      %9499 = vmatprep.subr.mxu0 0.0
      %9500 = vmatpush1.msra.mxu0 0.0
      %9501 = vmatprep.subr.mxu0 0.0
      %9502 = vmatpush1.msra.mxu0 0.0
      %9503 = vmatprep.subr.mxu0 0.0
      %9504 = vmatpush1.msra.mxu0 0.0
      %9505 = vmatprep.subr.mxu0 0.0
      %9506 = vmatpush1.msra.mxu0 0.0
      %9507 = vmatprep.subr.mxu0 0.0
      %9508 = vmatpush1.msra.mxu0 0.0
      %9509 = vmatprep.subr.mxu0 0.0
      %9510 = vmatpush1.msra.mxu0 0.0
      %9511 = vmatprep.subr.mxu0 0.0
      %9512 = vmatpush1.msra.mxu0 0.0
      %9513 = vmatprep.subr.mxu0 0.0
      %9514 = vmatpush1.msra.mxu0 0.0
      %9515 = vmatprep.subr.mxu0 0.0
      %9516 = vmatpush1.msra.mxu0 0.0
      %9517 = vmatprep.subr.mxu0 0.0
      %9518 = vmatpush1.msra.mxu0 0.0
      %9519 = vmatprep.subr.mxu0 0.0
      %9520 = vmatpush1.msra.mxu0 0.0
      %9521 = vmatprep.subr.mxu0 0.0
      %9522 = vmatpush1.msra.mxu0 0.0
      %9523 = vmatprep.subr.mxu0 0.0
      %9524 = vmatpush1.msra.mxu0 0.0
      %9525 = vmatprep.subr.mxu0 0.0
      %9526 = vmatpush1.msra.mxu0 0.0
      %9527 = vmatprep.subr.mxu0 0.0
      %9528 = vmatpush1.msra.mxu0 0.0
      %9529 = vmatprep.subr.mxu0 0.0
      %9530 = vmatpush1.msra.mxu0 0.0
      %9531 = vmatprep.subr.mxu0 0.0
      %9532 = vmatpush1.msra.mxu0 0.0
      %9533 = vmatprep.subr.mxu0 0.0
      %9534 = vmatpush1.msra.mxu0 0.0
      %9535 = vmatprep.subr.mxu0 0.0
      %9536 = vmatpush1.msra.mxu0 0.0
      %9537 = vmatprep.subr.mxu0 0.0
      %9538 = vmatpush1.msra.mxu0 0.0
      %9539 = vmatprep.subr.mxu0 0.0
      %9540 = vmatpush1.msra.mxu0 0.0
      %9541 = vmatprep.subr.mxu0 0.0
      %9542 = vmatpush1.msra.mxu0 0.0
      %9543 = vmatprep.subr.mxu0 0.0
      %9544 = vmatpush1.msra.mxu0 0.0
      %9545 = vmatprep.mubr.f32.mxu0 0.0
      %9546 = vmatmul.mubr.f32.gmra.mrb[0].mxu0 %v9469
      %v9547 = vpop.f32.mrb[0].mxu0
      %v9548 = vadd.f32 %v9316, %v9547
      %v9549 = vpop.f32.mrb[0].mxu0
      %v9550 = vadd.f32 %v9318, %v9549
      %9551 = vdwg.mxu0
      %9552 = vmatprep.subr.mxu0 %v9477
      %9553 = vmatpush1.msra.mxu0 %v9475
      %9554 = vmatprep.subr.mxu0 0.0
      %9555 = vmatpush1.msra.mxu0 0.0
      %9556 = vmatprep.subr.mxu0 0.0
      %9557 = vmatpush1.msra.mxu0 0.0
      %9558 = vmatprep.subr.mxu0 0.0
      %9559 = vmatpush1.msra.mxu0 0.0
      %9560 = vmatprep.subr.mxu0 0.0
      %9561 = vmatpush1.msra.mxu0 0.0
      %9562 = vmatprep.subr.mxu0 0.0
      %9563 = vmatpush1.msra.mxu0 0.0
      %9564 = vmatprep.subr.mxu0 0.0
      %9565 = vmatpush1.msra.mxu0 0.0
      %9566 = vmatprep.subr.mxu0 0.0
      %9567 = vmatpush1.msra.mxu0 0.0
      %9568 = vmatprep.subr.mxu0 0.0
      %9569 = vmatpush1.msra.mxu0 0.0
      %9570 = vmatprep.subr.mxu0 0.0
      %9571 = vmatpush1.msra.mxu0 0.0
      %9572 = vmatprep.subr.mxu0 0.0
      %9573 = vmatpush1.msra.mxu0 0.0
      %9574 = vmatprep.subr.mxu0 0.0
      %9575 = vmatpush1.msra.mxu0 0.0
      %9576 = vmatprep.subr.mxu0 0.0
      %9577 = vmatpush1.msra.mxu0 0.0
      %9578 = vmatprep.subr.mxu0 0.0
      %9579 = vmatpush1.msra.mxu0 0.0
      %9580 = vmatprep.subr.mxu0 0.0
      %9581 = vmatpush1.msra.mxu0 0.0
      %9582 = vmatprep.subr.mxu0 0.0
      %9583 = vmatpush1.msra.mxu0 0.0
      %9584 = vmatprep.subr.mxu0 0.0
      %9585 = vmatpush1.msra.mxu0 0.0
      %9586 = vmatprep.subr.mxu0 0.0
      %9587 = vmatpush1.msra.mxu0 0.0
      %9588 = vmatprep.subr.mxu0 0.0
      %9589 = vmatpush1.msra.mxu0 0.0
      %9590 = vmatprep.subr.mxu0 0.0
      %9591 = vmatpush1.msra.mxu0 0.0
      %9592 = vmatprep.subr.mxu0 0.0
      %9593 = vmatpush1.msra.mxu0 0.0
      %9594 = vmatprep.subr.mxu0 0.0
      %9595 = vmatpush1.msra.mxu0 0.0
      %9596 = vmatprep.subr.mxu0 0.0
      %9597 = vmatpush1.msra.mxu0 0.0
      %9598 = vmatprep.subr.mxu0 0.0
      %9599 = vmatpush1.msra.mxu0 0.0
      %9600 = vmatprep.subr.mxu0 0.0
      %9601 = vmatpush1.msra.mxu0 0.0
      %9602 = vmatprep.subr.mxu0 0.0
      %9603 = vmatpush1.msra.mxu0 0.0
      %9604 = vmatprep.subr.mxu0 0.0
      %9605 = vmatpush1.msra.mxu0 0.0
      %9606 = vmatprep.subr.mxu0 0.0
      %9607 = vmatpush1.msra.mxu0 0.0
      %9608 = vmatprep.subr.mxu0 0.0
      %9609 = vmatpush1.msra.mxu0 0.0
      %9610 = vmatprep.subr.mxu0 0.0
      %9611 = vmatpush1.msra.mxu0 0.0
      %9612 = vmatprep.subr.mxu0 0.0
      %9613 = vmatpush1.msra.mxu0 0.0
      %9614 = vmatprep.subr.mxu0 0.0
      %9615 = vmatpush1.msra.mxu0 0.0
      %9616 = vmatprep.mubr.f32.mxu0 0.0
      %9617 = vmatmul.mubr.f32.gmra.mrb[0].mxu0 %v9469
      %v9618 = vpop.f32.mrb[0].mxu0
      %v9619 = vadd.f32 %v9387, %v9618
      %v9620 = vpop.f32.mrb[0].mxu0
      %v9621 = vadd.f32 %v9389, %v9620
      %9622 = vdwg.mxu0
      %9623 = vmatprep.subr.mxu0 0.0
      %9624 = vmatpush1.msra.mxu0 %v9479
      %9625 = vmatprep.subr.mxu0 0.0
      %9626 = vmatpush1.msra.mxu0 0.0
      %9627 = vmatprep.subr.mxu0 0.0
      %9628 = vmatpush1.msra.mxu0 0.0
      %9629 = vmatprep.subr.mxu0 0.0
      %9630 = vmatpush1.msra.mxu0 0.0
      %9631 = vmatprep.subr.mxu0 0.0
      %9632 = vmatpush1.msra.mxu0 0.0
      %9633 = vmatprep.subr.mxu0 0.0
      %9634 = vmatpush1.msra.mxu0 0.0
      %9635 = vmatprep.subr.mxu0 0.0
      %9636 = vmatpush1.msra.mxu0 0.0
      %9637 = vmatprep.subr.mxu0 0.0
      %9638 = vmatpush1.msra.mxu0 0.0
      %9639 = vmatprep.subr.mxu0 0.0
      %9640 = vmatpush1.msra.mxu0 0.0
      %9641 = vmatprep.subr.mxu0 0.0
      %9642 = vmatpush1.msra.mxu0 0.0
      %9643 = vmatprep.subr.mxu0 0.0
      %9644 = vmatpush1.msra.mxu0 0.0
      %9645 = vmatprep.subr.mxu0 0.0
      %9646 = vmatpush1.msra.mxu0 0.0
      %9647 = vmatprep.subr.mxu0 0.0
      %9648 = vmatpush1.msra.mxu0 0.0
      %9649 = vmatprep.subr.mxu0 0.0
      %9650 = vmatpush1.msra.mxu0 0.0
      %9651 = vmatprep.subr.mxu0 0.0
      %9652 = vmatpush1.msra.mxu0 0.0
      %9653 = vmatprep.subr.mxu0 0.0
      %9654 = vmatpush1.msra.mxu0 0.0
      %9655 = vmatprep.subr.mxu0 0.0
      %9656 = vmatpush1.msra.mxu0 0.0
      %9657 = vmatprep.subr.mxu0 0.0
      %9658 = vmatpush1.msra.mxu0 0.0
      %9659 = vmatprep.subr.mxu0 0.0
      %9660 = vmatpush1.msra.mxu0 0.0
      %9661 = vmatprep.subr.mxu0 0.0
      %9662 = vmatpush1.msra.mxu0 0.0
      %9663 = vmatprep.subr.mxu0 0.0
      %9664 = vmatpush1.msra.mxu0 0.0
      %9665 = vmatprep.subr.mxu0 0.0
      %9666 = vmatpush1.msra.mxu0 0.0
      %9667 = vmatprep.subr.mxu0 0.0
      %9668 = vmatpush1.msra.mxu0 0.0
      %9669 = vmatprep.subr.mxu0 0.0
      %9670 = vmatpush1.msra.mxu0 0.0
      %9671 = vmatprep.subr.mxu0 0.0
      %9672 = vmatpush1.msra.mxu0 0.0
      %9673 = vmatprep.subr.mxu0 0.0
      %9674 = vmatpush1.msra.mxu0 0.0
      %9675 = vmatprep.subr.mxu0 0.0
      %9676 = vmatpush1.msra.mxu0 0.0
      %9677 = vmatprep.subr.mxu0 0.0
      %9678 = vmatpush1.msra.mxu0 0.0
      %9679 = vmatprep.subr.mxu0 0.0
      %9680 = vmatpush1.msra.mxu0 0.0
      %9681 = vmatprep.subr.mxu0 0.0
      %9682 = vmatpush1.msra.mxu0 0.0
      %9683 = vmatprep.subr.mxu0 0.0
      %9684 = vmatpush1.msra.mxu0 0.0
      %9685 = vmatprep.subr.mxu0 0.0
      %9686 = vmatpush1.msra.mxu0 0.0
      %9687 = vmatprep.mubr.f32.mxu0 0.0
      %9688 = vmatmul.mubr.f32.gmra.mrb[0].mxu0 %v9469
      %v9689 = vpop.f32.mrb[0].mxu0
      %v9690 = vadd.f32 %v9458, %v9689
      %v9691 = vpop.f32.mrb[0].mxu0
      %9692 = vdwg.mxu0
      %v9693 = vld [vmem:[%s15] sm:$0xff]
      %v9694 = vld [vmem:[%s15 + $0x8] sm:$0xff]
      %9696 = vset.pattern.permute.xlu0 0
      %9697 = vperm.xlu0 %9696, %v9693
      %v9698 = vpop.permute.xlu0 %9697
      %9701 = vset.pattern.permute.xlu0 0
      %9702 = vperm.xlu0 %9701, %v9694
      %v9703 = vpop.permute.xlu0 %9702
      %v9706 = vsel %vm5143, %v9461, 0
      %v9709 = vsel %vm5143, %v9462, 0
      %v9712 = vsel %vm5147, %v9548, 0
      %v9715 = vsel %vm5147, %v9550, 0
      %v9718 = vsel %vm5147, %v9619, 0
      %v9721 = vsel %vm5147, %v9621, 0
      %v9724 = vsel %vm5147, %v9690, 0
      %9726 = vmatprep.subr.mxu0 %v9715
      %9727 = vmatpush1.msra.mxu0 %v9712
      %9728 = vmatprep.subr.mxu0 0.0
      %9729 = vmatpush1.msra.mxu0 0.0
      %9730 = vmatprep.subr.mxu0 0.0
      %9731 = vmatpush1.msra.mxu0 0.0
      %9732 = vmatprep.subr.mxu0 0.0
      %9733 = vmatpush1.msra.mxu0 0.0
      %9734 = vmatprep.subr.mxu0 0.0
      %9735 = vmatpush1.msra.mxu0 0.0
      %9736 = vmatprep.subr.mxu0 0.0
      %9737 = vmatpush1.msra.mxu0 0.0
      %9738 = vmatprep.subr.mxu0 0.0
      %9739 = vmatpush1.msra.mxu0 0.0
      %9740 = vmatprep.subr.mxu0 0.0
      %9741 = vmatpush1.msra.mxu0 0.0
      %9742 = vmatprep.subr.mxu0 0.0
      %9743 = vmatpush1.msra.mxu0 0.0
      %9744 = vmatprep.subr.mxu0 0.0
      %9745 = vmatpush1.msra.mxu0 0.0
      %9746 = vmatprep.subr.mxu0 0.0
      %9747 = vmatpush1.msra.mxu0 0.0
      %9748 = vmatprep.subr.mxu0 0.0
      %9749 = vmatpush1.msra.mxu0 0.0
      %9750 = vmatprep.subr.mxu0 0.0
      %9751 = vmatpush1.msra.mxu0 0.0
      %9752 = vmatprep.subr.mxu0 0.0
      %9753 = vmatpush1.msra.mxu0 0.0
      %9754 = vmatprep.subr.mxu0 0.0
      %9755 = vmatpush1.msra.mxu0 0.0
      %9756 = vmatprep.subr.mxu0 0.0
      %9757 = vmatpush1.msra.mxu0 0.0
      %9758 = vmatprep.subr.mxu0 0.0
      %9759 = vmatpush1.msra.mxu0 0.0
      %9760 = vmatprep.subr.mxu0 0.0
      %9761 = vmatpush1.msra.mxu0 0.0
      %9762 = vmatprep.subr.mxu0 0.0
      %9763 = vmatpush1.msra.mxu0 0.0
      %9764 = vmatprep.subr.mxu0 0.0
      %9765 = vmatpush1.msra.mxu0 0.0
      %9766 = vmatprep.subr.mxu0 0.0
      %9767 = vmatpush1.msra.mxu0 0.0
      %9768 = vmatprep.subr.mxu0 0.0
      %9769 = vmatpush1.msra.mxu0 0.0
      %9770 = vmatprep.subr.mxu0 0.0
      %9771 = vmatpush1.msra.mxu0 0.0
      %9772 = vmatprep.subr.mxu0 0.0
      %9773 = vmatpush1.msra.mxu0 0.0
      %9774 = vmatprep.subr.mxu0 0.0
      %9775 = vmatpush1.msra.mxu0 0.0
      %9776 = vmatprep.subr.mxu0 0.0
      %9777 = vmatpush1.msra.mxu0 0.0
      %9778 = vmatprep.subr.mxu0 0.0
      %9779 = vmatpush1.msra.mxu0 0.0
      %9780 = vmatprep.subr.mxu0 0.0
      %9781 = vmatpush1.msra.mxu0 0.0
      %9782 = vmatprep.subr.mxu0 0.0
      %9783 = vmatpush1.msra.mxu0 0.0
      %9784 = vmatprep.subr.mxu0 0.0
      %9785 = vmatpush1.msra.mxu0 0.0
      %9786 = vmatprep.subr.mxu0 0.0
      %9787 = vmatpush1.msra.mxu0 0.0
      %9788 = vmatprep.subr.mxu0 0.0
      %9789 = vmatpush1.msra.mxu0 0.0
      %9790 = vmatprep.mubr.f32.mxu0 0.0
      %9791 = vmatmul.mubr.f32.gmra.mrb[0].mxu0 %v9706
      %v9792 = vpop.f32.mrb[0].mxu0
      %v9793 = vadd.f32 %v9698, %v9792
      %v9794 = vpop.f32.mrb[0].mxu0
      %v9795 = vadd.f32 %v9698, %v9794
      %9796 = vmatprep.mubr.f32.mxu0 0.0
      %9797 = vmatmul.mubr.f32.gmra.mrb[0].mxu0 %v9709
      %v9798 = vpop.f32.mrb[0].mxu0
      %v9799 = vadd.f32 %v9703, %v9798
      %v9800 = vpop.f32.mrb[0].mxu0
      %v9801 = vadd.f32 %v9703, %v9800
      %9802 = vdwg.mxu0
      %9803 = vmatprep.subr.mxu0 %v9721
      %9804 = vmatpush1.msra.mxu0 %v9718
      %9805 = vmatprep.subr.mxu0 0.0
      %9806 = vmatpush1.msra.mxu0 0.0
      %9807 = vmatprep.subr.mxu0 0.0
      %9808 = vmatpush1.msra.mxu0 0.0
      %9809 = vmatprep.subr.mxu0 0.0
      %9810 = vmatpush1.msra.mxu0 0.0
      %9811 = vmatprep.subr.mxu0 0.0
      %9812 = vmatpush1.msra.mxu0 0.0
      %9813 = vmatprep.subr.mxu0 0.0
      %9814 = vmatpush1.msra.mxu0 0.0
      %9815 = vmatprep.subr.mxu0 0.0
      %9816 = vmatpush1.msra.mxu0 0.0
      %9817 = vmatprep.subr.mxu0 0.0
      %9818 = vmatpush1.msra.mxu0 0.0
      %9819 = vmatprep.subr.mxu0 0.0
      %9820 = vmatpush1.msra.mxu0 0.0
      %9821 = vmatprep.subr.mxu0 0.0
      %9822 = vmatpush1.msra.mxu0 0.0
      %9823 = vmatprep.subr.mxu0 0.0
      %9824 = vmatpush1.msra.mxu0 0.0
      %9825 = vmatprep.subr.mxu0 0.0
      %9826 = vmatpush1.msra.mxu0 0.0
      %9827 = vmatprep.subr.mxu0 0.0
      %9828 = vmatpush1.msra.mxu0 0.0
      %9829 = vmatprep.subr.mxu0 0.0
      %9830 = vmatpush1.msra.mxu0 0.0
      %9831 = vmatprep.subr.mxu0 0.0
      %9832 = vmatpush1.msra.mxu0 0.0
      %9833 = vmatprep.subr.mxu0 0.0
      %9834 = vmatpush1.msra.mxu0 0.0
      %9835 = vmatprep.subr.mxu0 0.0
      %9836 = vmatpush1.msra.mxu0 0.0
      %9837 = vmatprep.subr.mxu0 0.0
      %9838 = vmatpush1.msra.mxu0 0.0
      %9839 = vmatprep.subr.mxu0 0.0
      %9840 = vmatpush1.msra.mxu0 0.0
      %9841 = vmatprep.subr.mxu0 0.0
      %9842 = vmatpush1.msra.mxu0 0.0
      %9843 = vmatprep.subr.mxu0 0.0
      %9844 = vmatpush1.msra.mxu0 0.0
      %9845 = vmatprep.subr.mxu0 0.0
      %9846 = vmatpush1.msra.mxu0 0.0
      %9847 = vmatprep.subr.mxu0 0.0
      %9848 = vmatpush1.msra.mxu0 0.0
      %9849 = vmatprep.subr.mxu0 0.0
      %9850 = vmatpush1.msra.mxu0 0.0
      %9851 = vmatprep.subr.mxu0 0.0
      %9852 = vmatpush1.msra.mxu0 0.0
      %9853 = vmatprep.subr.mxu0 0.0
      %9854 = vmatpush1.msra.mxu0 0.0
      %9855 = vmatprep.subr.mxu0 0.0
      %9856 = vmatpush1.msra.mxu0 0.0
      %9857 = vmatprep.subr.mxu0 0.0
      %9858 = vmatpush1.msra.mxu0 0.0
      %9859 = vmatprep.subr.mxu0 0.0
      %9860 = vmatpush1.msra.mxu0 0.0
      %9861 = vmatprep.subr.mxu0 0.0
      %9862 = vmatpush1.msra.mxu0 0.0
      %9863 = vmatprep.subr.mxu0 0.0
      %9864 = vmatpush1.msra.mxu0 0.0
      %9865 = vmatprep.subr.mxu0 0.0
      %9866 = vmatpush1.msra.mxu0 0.0
      %9867 = vmatprep.mubr.f32.mxu0 0.0
      %9868 = vmatmul.mubr.f32.gmra.mrb[0].mxu0 %v9706
      %v9869 = vpop.f32.mrb[0].mxu0
      %v9870 = vadd.f32 %v9698, %v9869
      %v9871 = vpop.f32.mrb[0].mxu0
      %v9872 = vadd.f32 %v9698, %v9871
      %9873 = vmatprep.mubr.f32.mxu0 0.0
      %9874 = vmatmul.mubr.f32.gmra.mrb[0].mxu0 %v9709
      %v9875 = vpop.f32.mrb[0].mxu0
      %v9876 = vadd.f32 %v9703, %v9875
      %v9877 = vpop.f32.mrb[0].mxu0
      %v9878 = vadd.f32 %v9703, %v9877
      %9879 = vdwg.mxu0
      %9880 = vmatprep.subr.mxu0 0.0
      %9881 = vmatpush1.msra.mxu0 %v9724
      %9882 = vmatprep.subr.mxu0 0.0
      %9883 = vmatpush1.msra.mxu0 0.0
      %9884 = vmatprep.subr.mxu0 0.0
      %9885 = vmatpush1.msra.mxu0 0.0
      %9886 = vmatprep.subr.mxu0 0.0
      %9887 = vmatpush1.msra.mxu0 0.0
      %9888 = vmatprep.subr.mxu0 0.0
      %9889 = vmatpush1.msra.mxu0 0.0
      %9890 = vmatprep.subr.mxu0 0.0
      %9891 = vmatpush1.msra.mxu0 0.0
      %9892 = vmatprep.subr.mxu0 0.0
      %9893 = vmatpush1.msra.mxu0 0.0
      %9894 = vmatprep.subr.mxu0 0.0
      %9895 = vmatpush1.msra.mxu0 0.0
      %9896 = vmatprep.subr.mxu0 0.0
      %9897 = vmatpush1.msra.mxu0 0.0
      %9898 = vmatprep.subr.mxu0 0.0
      %9899 = vmatpush1.msra.mxu0 0.0
      %9900 = vmatprep.subr.mxu0 0.0
      %9901 = vmatpush1.msra.mxu0 0.0
      %9902 = vmatprep.subr.mxu0 0.0
      %9903 = vmatpush1.msra.mxu0 0.0
      %9904 = vmatprep.subr.mxu0 0.0
      %9905 = vmatpush1.msra.mxu0 0.0
      %9906 = vmatprep.subr.mxu0 0.0
      %9907 = vmatpush1.msra.mxu0 0.0
      %9908 = vmatprep.subr.mxu0 0.0
      %9909 = vmatpush1.msra.mxu0 0.0
      %9910 = vmatprep.subr.mxu0 0.0
      %9911 = vmatpush1.msra.mxu0 0.0
      %9912 = vmatprep.subr.mxu0 0.0
      %9913 = vmatpush1.msra.mxu0 0.0
      %9914 = vmatprep.subr.mxu0 0.0
      %9915 = vmatpush1.msra.mxu0 0.0
      %9916 = vmatprep.subr.mxu0 0.0
      %9917 = vmatpush1.msra.mxu0 0.0
      %9918 = vmatprep.subr.mxu0 0.0
      %9919 = vmatpush1.msra.mxu0 0.0
      %9920 = vmatprep.subr.mxu0 0.0
      %9921 = vmatpush1.msra.mxu0 0.0
      %9922 = vmatprep.subr.mxu0 0.0
      %9923 = vmatpush1.msra.mxu0 0.0
      %9924 = vmatprep.subr.mxu0 0.0
      %9925 = vmatpush1.msra.mxu0 0.0
      %9926 = vmatprep.subr.mxu0 0.0
      %9927 = vmatpush1.msra.mxu0 0.0
      %9928 = vmatprep.subr.mxu0 0.0
      %9929 = vmatpush1.msra.mxu0 0.0
      %9930 = vmatprep.subr.mxu0 0.0
      %9931 = vmatpush1.msra.mxu0 0.0
      %9932 = vmatprep.subr.mxu0 0.0
      %9933 = vmatpush1.msra.mxu0 0.0
      %9934 = vmatprep.subr.mxu0 0.0
      %9935 = vmatpush1.msra.mxu0 0.0
      %9936 = vmatprep.subr.mxu0 0.0
      %9937 = vmatpush1.msra.mxu0 0.0
      %9938 = vmatprep.subr.mxu0 0.0
      %9939 = vmatpush1.msra.mxu0 0.0
      %9940 = vmatprep.subr.mxu0 0.0
      %9941 = vmatpush1.msra.mxu0 0.0
      %9942 = vmatprep.subr.mxu0 0.0
      %9943 = vmatpush1.msra.mxu0 0.0
      %9944 = vmatprep.mubr.f32.mxu0 0.0
      %9945 = vmatmul.mubr.f32.gmra.mrb[0].mxu0 %v9706
      %v9946 = vpop.f32.mrb[0].mxu0
      %v9947 = vadd.f32 %v9698, %v9946
      %v9948 = vpop.f32.mrb[0].mxu0
      %9949 = vmatprep.mubr.f32.mxu0 0.0
      %9950 = vmatmul.mubr.f32.gmra.mrb[0].mxu0 %v9709
      %v9951 = vpop.f32.mrb[0].mxu0
      %v9952 = vadd.f32 %v9703, %v9951
      %v9953 = vpop.f32.mrb[0].mxu0
      %9954 = vdwg.mxu0
      %v9955 = vsub.f32 0.0, %v9793
      %v9956 = vsub.f32 0.0, %v9795
      %v9957 = vsub.f32 0.0, %v9870
      %v9958 = vsub.f32 0.0, %v9872
      %v9959 = vsub.f32 0.0, %v9947
      %v9960 = vsub.f32 0.0, %v9799
      %v9961 = vsub.f32 0.0, %v9801
      %v9962 = vsub.f32 0.0, %v9876
      %v9963 = vsub.f32 0.0, %v9878
      %v9964 = vsub.f32 0.0, %v9952
      %v9965 = vmul.f32 %v9955, 1.442695
      %v9966 = vpow.pop %v9965
      %v9967 = vmul.f32 %v9956, 1.442695
      %v9968 = vpow.pop %v9967
      %v9969 = vmul.f32 %v9957, 1.442695
      %v9970 = vpow.pop %v9969
      %v9971 = vmul.f32 %v9958, 1.442695
      %v9972 = vpow.pop %v9971
      %v9973 = vmul.f32 %v9959, 1.442695
      %v9974 = vpow.pop %v9973
      %v9975 = vmul.f32 %v9960, 1.442695
      %v9976 = vpow.pop %v9975
      %v9977 = vmul.f32 %v9961, 1.442695
      %v9978 = vpow.pop %v9977
      %v9979 = vmul.f32 %v9962, 1.442695
      %v9980 = vpow.pop %v9979
      %v9981 = vmul.f32 %v9963, 1.442695
      %v9982 = vpow.pop %v9981
      %v9983 = vmul.f32 %v9964, 1.442695
      %v9984 = vpow.pop %v9983
      %v9985 = vadd.f32 %v9966, 1.0
      %v9986 = vadd.f32 %v9968, 1.0
      %v9987 = vadd.f32 %v9970, 1.0
      %v9988 = vadd.f32 %v9972, 1.0
      %v9989 = vadd.f32 %v9974, 1.0
      %v9990 = vadd.f32 %v9976, 1.0
      %v9991 = vadd.f32 %v9978, 1.0
      %v9992 = vadd.f32 %v9980, 1.0
      %v9993 = vadd.f32 %v9982, 1.0
      %v9994 = vadd.f32 %v9984, 1.0
      %v9995 = vrcp.pop %v9985
      %v9996 = vmul.f32 1.0, %v9995
      %v9997 = vrcp.pop %v9986
      %v9998 = vmul.f32 1.0, %v9997
      %v9999 = vrcp.pop %v9987
      %v10000 = vmul.f32 1.0, %v9999
      %v10001 = vrcp.pop %v9988
      %v10002 = vmul.f32 1.0, %v10001
      %v10003 = vrcp.pop %v9989
      %v10004 = vmul.f32 1.0, %v10003
      %v10005 = vrcp.pop %v9990
      %v10006 = vmul.f32 1.0, %v10005
      %v10007 = vrcp.pop %v9991
      %v10008 = vmul.f32 1.0, %v10007
      %v10009 = vrcp.pop %v9992
      %v10010 = vmul.f32 1.0, %v10009
      %v10011 = vrcp.pop %v9993
      %v10012 = vmul.f32 1.0, %v10011
      %v10013 = vrcp.pop %v9994
      %v10014 = vmul.f32 1.0, %v10013
      %v10015 = vmul.f32 %v569, %v9996
      %v10016 = vmul.f32 %v570, %v9998
      %v10017 = vmul.f32 %v571, %v10000
      %v10018 = vmul.f32 %v572, %v10002
      %v10019 = vmul.f32 %v573, %v10004
      %v10020 = vmul.f32 %v574, %v10006
      %v10021 = vmul.f32 %v575, %v10008
      %v10022 = vmul.f32 %v576, %v10010
      %v10023 = vmul.f32 %v577, %v10012
      %v10024 = vmul.f32 %v578, %v10014
      %10025 = vst [vmem:[%s568] sm:$0xff] %v10015
      %10026 = vst [vmem:[%s568 + $0x8] sm:$0xff] %v10016
      %10027 = vst [vmem:[%s568 + $0x10] sm:$0xff] %v10017
      %10028 = vst [vmem:[%s568 + $0x18] sm:$0xff] %v10018
      %vm10029 = vcmask 523264
      %10030 = vst.msk [vmem:[%s568 + $0x20] sm:$0xff] %vm10029, %v10019
      %10031 = vst [vmem:[%s568 + $0x28] sm:$0xff] %v10020
      %10032 = vst [vmem:[%s568 + $0x30] sm:$0xff] %v10021
      %10033 = vst [vmem:[%s568 + $0x38] sm:$0xff] %v10022
      %10034 = vst [vmem:[%s568 + $0x40] sm:$0xff] %v10023
      %10035 = vst.msk [vmem:[%s568 + $0x48] sm:$0xff] %vm10029, %v10024
      %p10036 = scmp.lt.s32.totalorder %s28, 1
      %s10037 = scalar_select %p10036, %s28, 1
      %s10038 = smul.addr %s10037, 10
      %s10039 = smul.addr %s10038, 8
      %s10040 = scalar_lea.vmem %s17, %s10039
      // Predicated region
      $region89: #{esa_forward.1} parent=87 // pred_check
        %p10041 = pneg %p413
      $region90: #{esa_forward.1} parent=87 // pred_check_branch
        %10043 = sbr.rel (%p10041) target = $region92
      $region91: #{esa_forward.1} parent=87 // pred_region
        _
      $region92: #{esa_forward.1} parent=87 // pred_fallthru
        _
    $region88: #{esa_forward.1} parent=5 // pred_fallthru
      _
    %p10044 = scmp.le.s32.totalorder 2, %s23
    // Predicated region
    $region93: #{esa_forward.1} parent=5 // pred_check
      %p10045 = pneg %p10044
    $region94: #{esa_forward.1} parent=5 // pred_check_branch
      %10047 = sbr.rel (%p10045) target = $region96
    $region95: #{esa_forward.1} parent=5 // pred_region
      %s10048 = ssub.s32 %s23, 2
      // Predicated region
      $region97: #{esa_forward.1} parent=95 // pred_check
        %p10049 = pneg %p419
      $region98: #{esa_forward.1} parent=95 // pred_check_branch
        %10051 = sbr.rel (%p10049) target = $region100
      $region99: #{esa_forward.1} parent=95 // pred_region
        %p10052 = scmp.lt.s32.totalorder %s29, 1
        %s10053 = scalar_select %p10052, %s29, 1
        %s10054 = smul.addr %s10053, 10
        %s10055 = smul.addr %s10054, 8
        %s10056 = scalar_lea.vmem %s17, %s10055
      $region100: #{esa_forward.1} parent=95 // pred_fallthru
        _
    $region96: #{esa_forward.1} parent=5 // pred_fallthru
      _
  $region6: #{esa_forward.1} parent=0 // loop_footer
    %s27 = sadd.s32 1, %s23
  $region7: #{esa_forward.1} parent=0 // loop_footer_branch
    %22 = sbr.rel target = $region3
  $region8: #{esa_forward.1} parent=0 // loop_exit
    _

</llo_original>
